<compile_context>
chip_gen: v6e
topology: v6e:2x2x1
jax: 0.10.0
libtpu: 0.0.40
codegen_flags: <defaults>
</compile_context>

<pallas_src>
import functools

import jax
import jax.numpy as jnp
from jax.experimental import pallas as pl
from jax.experimental.pallas import tpu as pltpu

# ----------------------------- synthetic config --------------------------------
NUM_CLASSES = 3                      # background, body, face
CLASS_NUM = NUM_CLASSES - 1
EMB_DIM = 32
POOL_H, POOL_W = 7, 7
FPN_CH = 64                          # scaled down from 256 for the small test
FC_IN = FPN_CH * POOL_H * POOL_W     # 64*7*7 = 3136   (module: 256*7*7 = 12544)
HIDDEN = 256                         # scaled down from 1024
N_ROIS = 16

# MXU / lane friendly padded sizes
N_PAD = 128                          # ROI rows padded to a full MXU row block
TK = 896                             # K tile (7*128); FC_IN padded to a multiple of TK
K_TILES = -(-FC_IN // TK)            # = 4
FC_IN_PAD = K_TILES * TK             # = 3584
HEAD_COLS = NUM_CLASSES * (1 + 4 + 2)  # cls(3) + delta(12) + pos(6) = 21
HEAD_PAD = 128                       # packed head weight padded to a full lane
OUT_PAD = 128                        # single lane-dense output slab width

IMAGE_MEAN = (103.530, 116.280, 123.675)
IMAGE_STD = (57.375, 57.120, 58.395)
BBOX_STDS = (0.1, 0.1, 0.2, 0.2, 0.1, 0.1)
BBOX_MEANS = (0.0, 0.0, 0.0, 0.0, 0.0, 0.0)   # all zero -> adds fold away


# ------------------ 1) fused image normalization + pad-to-64 kernel ------------
def _normalize_pad_kernel(mean_ref, inv_std_ref, img_ref, out_ref, *, h, w):
    c = pl.program_id(1)
    m = mean_ref[c]
    s = inv_std_ref[c]
    # zero the whole padded tile, then write the normalized valid region
    out_ref[...] = jnp.zeros_like(out_ref)
    out_ref[:, :, 0:h, 0:w] = (img_ref[...] - m) * s


def normalize_and_pad_image(image, mean, inv_std, multiple=64):
    n, c, h, w = image.shape
    ph = pl.cdiv(h, multiple) * multiple
    pw = pl.cdiv(w, multiple) * multiple
    kernel = functools.partial(_normalize_pad_kernel, h=h, w=w)
    return pl.pallas_call(
        kernel,
        out_shape=jax.ShapeDtypeStruct((n, c, ph, pw), image.dtype),
        grid=(n, c),
        in_specs=[
            pl.BlockSpec(memory_space=pltpu.MemorySpace.SMEM),   # mean
            pl.BlockSpec(memory_space=pltpu.MemorySpace.SMEM),   # 1/std
            pl.BlockSpec((1, 1, h, w), lambda i, j: (i, j, 0, 0)),
        ],
        out_specs=pl.BlockSpec((1, 1, ph, pw), lambda i, j: (i, j, 0, 0)),
        compiler_params=pltpu.CompilerParams(
            dimension_semantics=("parallel", "parallel")),
    )(mean, inv_std, image)


# ------------- 2) fused RCNN head (K-tiled matmuls + post-proc epilogue) --------
def _rcnn_head_fused_kernel(x_ref, w1_ref, w3_ref,
                            b1_ref, w2_ref, b2_ref, b3_ref, w4_ref, b4_ref,
                            wh_ref, bh_ref, we_ref, be_ref, rois_ref,
                            out_ref, acc1_ref, acc3_ref):
    k = pl.program_id(0)

    @pl.when(k == 0)
    def _():
        acc1_ref[...] = jnp.zeros_like(acc1_ref)
        acc3_ref[...] = jnp.zeros_like(acc3_ref)

    # K-tiled fc1 / fc3 contractions (bf16 inputs, f32 accumulation)
    x = x_ref[...]                                                # (N_PAD, TK) bf16
    acc1_ref[...] += jnp.dot(x, w1_ref[...], preferred_element_type=jnp.float32)
    acc3_ref[...] += jnp.dot(x, w3_ref[...], preferred_element_type=jnp.float32)

    @pl.when(k == pl.num_programs(0) - 1)
    def _():
        # fc1/fc2 (+ReLU) branch -> cls / delta / pos heads
        f1 = jnp.maximum(acc1_ref[...] + b1_ref[...], 0.0)
        f1 = jnp.maximum(
            jnp.dot(f1.astype(jnp.bfloat16), w2_ref[...],
                    preferred_element_type=jnp.float32) + b2_ref[...], 0.0)
        # fc3/fc4 (+ReLU) branch -> emb head
        e = jnp.maximum(acc3_ref[...] + b3_ref[...], 0.0)
        e = jnp.maximum(
            jnp.dot(e.astype(jnp.bfloat16), w4_ref[...],
                    preferred_element_type=jnp.float32) + b4_ref[...], 0.0)

        # one lane-dense packed head matmul: [cls(3) | delta(12) | pos(6) | 0-pad]
        heads = jnp.dot(f1.astype(jnp.bfloat16), wh_ref[...],
                        preferred_element_type=jnp.float32) + bh_ref[...]
        emb = jnp.dot(e.astype(jnp.bfloat16), we_ref[...],
                      preferred_element_type=jnp.float32) + be_ref[...]

        cls = heads[:, 0:NUM_CLASSES]
        delta = heads[:, NUM_CLASSES:5 * NUM_CLASSES]
        pos = heads[:, 5 * NUM_CLASSES:7 * NUM_CLASSES]

        # softmax over classes (EUP reciprocal for the denominator)
        mx = jnp.max(cls, axis=-1, keepdims=True)
        ecls = jnp.exp(cls - mx)
        probs = ecls * pl.reciprocal(jnp.sum(ecls, axis=-1, keepdims=True),
                                     approx=True)

        # restore_bbox: un-normalize deltas + bbox_transform_inv_v2
        rois = rois_ref[...]                                      # (N_PAD, 5)
        x1 = rois[:, 1:2]
        y1 = rois[:, 2:3]
        x2 = rois[:, 3:4]
        y2 = rois[:, 4:5]
        bw = x2 - x1 + 1.0
        bh = y2 - y1 + 1.0
        cx = x1 + 0.5 * bw
        cy = y1 + 0.5 * bh

        blocks = []
        for kk in range(1, NUM_CLASSES):                          # foreground classes
            d = delta[:, 4 * kk:4 * kk + 4]
            p = pos[:, 2 * kk:2 * kk + 2]
            dx = d[:, 0:1] * BBOX_STDS[0] + BBOX_MEANS[0]
            dy = d[:, 1:2] * BBOX_STDS[1] + BBOX_MEANS[1]
            dw = d[:, 2:3] * BBOX_STDS[2] + BBOX_MEANS[2]
            dh = d[:, 3:4] * BBOX_STDS[3] + BBOX_MEANS[3]
            dpx = p[:, 0:1] * BBOX_STDS[4] + BBOX_MEANS[4]
            dpy = p[:, 1:2] * BBOX_STDS[5] + BBOX_MEANS[5]

            pcx = cx + dx * bw
            pcy = cy + dy * bh
            pw = bw * jnp.exp(dw)
            ph = bh * jnp.exp(dh)
            ppx = cx + dpx * bw
            ppy = cy + dpy * bh

            score = probs[:, kk:kk + 1]
            tag = jnp.full_like(score, float(kk))
            blocks.append(jnp.concatenate(
                [pcx - 0.5 * pw, pcy - 0.5 * ph, pcx + 0.5 * pw, pcy + 0.5 * ph,
                 ppx, ppy, score, tag], axis=1))

        # single lane-dense (N_PAD, 128) store: [bbox(16) | emb(32) | zeros(80)]
        padcols = jnp.zeros((N_PAD, OUT_PAD - CLASS_NUM * 8 - EMB_DIM), jnp.float32)
        out_ref[...] = jnp.concatenate(blocks + [emb, padcols], axis=1)


def rcnn_head_fused(flat_feature, rois, params):
    n = flat_feature.shape[0]
    x = jnp.pad(flat_feature, ((0, N_PAD - n), (0, FC_IN_PAD - FC_IN)))
    x = x.astype(jnp.bfloat16)
    rois_p = jnp.pad(rois, ((0, N_PAD - n), (0, 0)))

    grid_spec = pltpu.PrefetchScalarGridSpec(
        num_scalar_prefetch=0,
        grid=(K_TILES,),
        in_specs=[
            pl.BlockSpec((N_PAD, TK), lambda k: (0, k)),        # x tile
            pl.BlockSpec((TK, HIDDEN), lambda k: (k, 0)),       # w1 tile
            pl.BlockSpec((TK, HIDDEN), lambda k: (k, 0)),       # w3 tile
            pl.BlockSpec((1, HIDDEN), lambda k: (0, 0)),        # b1
            pl.BlockSpec((HIDDEN, HIDDEN), lambda k: (0, 0)),   # w2
            pl.BlockSpec((1, HIDDEN), lambda k: (0, 0)),        # b2
            pl.BlockSpec((1, HIDDEN), lambda k: (0, 0)),        # b3
            pl.BlockSpec((HIDDEN, HIDDEN), lambda k: (0, 0)),   # w4
            pl.BlockSpec((1, HIDDEN), lambda k: (0, 0)),        # b4
            pl.BlockSpec((HIDDEN, HEAD_PAD), lambda k: (0, 0)), # packed cls|delta|pos
            pl.BlockSpec((1, HEAD_PAD), lambda k: (0, 0)),      # packed head bias
            pl.BlockSpec((HIDDEN, EMB_DIM), lambda k: (0, 0)),  # emb weight
            pl.BlockSpec((1, EMB_DIM), lambda k: (0, 0)),       # emb bias
            pl.BlockSpec((N_PAD, 5), lambda k: (0, 0)),         # rois
        ],
        out_specs=pl.BlockSpec((N_PAD, OUT_PAD), lambda k: (0, 0)),
        scratch_shapes=[pltpu.VMEM((N_PAD, HIDDEN), jnp.float32),
                        pltpu.VMEM((N_PAD, HIDDEN), jnp.float32)],
    )

    out = pl.pallas_call(
        _rcnn_head_fused_kernel,
        out_shape=jax.ShapeDtypeStruct((N_PAD, OUT_PAD), jnp.float32),
        grid_spec=grid_spec,
        compiler_params=pltpu.CompilerParams(
            dimension_semantics=("arbitrary",)),
    )(x, params["w1"], params["w3"],
      params["b1"], params["w2"], params["b2"],
      params["b3"], params["w4"], params["b4"],
      params["wh"], params["bh"], params["we"], params["be"], rois_p)

    # roi-major, class-minor order (matches pred_delta[:, 4:].reshape(-1, 4) in torch)
    pred_bbox = out[:n, :CLASS_NUM * 8].reshape(n * CLASS_NUM, 8)
    pred_emb = out[:n, CLASS_NUM * 8:CLASS_NUM * 8 + EMB_DIM]
    return pred_bbox, pred_emb


# ----------------------------- parameter construction ---------------------------
def _kaiming_uniform(key, fan_in, fan_out, a=1.0):
    bound = (6.0 / ((1.0 + a * a) * fan_in)) ** 0.5
    return jax.random.uniform(key, (fan_in, fan_out), jnp.float32, -bound, bound)


def _normal(key, fan_in, fan_out, std):
    return jax.random.normal(key, (fan_in, fan_out), jnp.float32) * std


def make_rcnn_params(key):
    ks = jax.random.split(key, 8)
    w1 = _kaiming_uniform(ks[0], FC_IN, HIDDEN)
    w2 = _kaiming_uniform(ks[1], HIDDEN, HIDDEN)
    w3 = _kaiming_uniform(ks[2], FC_IN, HIDDEN)
    w4 = _kaiming_uniform(ks[3], HIDDEN, HIDDEN)
    wc = _normal(ks[4], HIDDEN, NUM_CLASSES, 0.01)
    wd = _normal(ks[5], HIDDEN, NUM_CLASSES * 4, 0.001)
    wp = _normal(ks[6], HIDDEN, NUM_CLASSES * 2, 0.001)
    we = _normal(ks[7], HIDDEN, EMB_DIM, 0.01)

    kpad = FC_IN_PAD - FC_IN
    zeros = lambda m: jnp.zeros((1, m), jnp.float32)
    # pack the three f1-driven heads into one lane-dense (HIDDEN, 128) weight
    wh = jnp.concatenate([wc, wd, wp], axis=1)
    wh = jnp.pad(wh, ((0, 0), (0, HEAD_PAD - HEAD_COLS)))

    return dict(
        w1=jnp.pad(w1, ((0, kpad), (0, 0))).astype(jnp.bfloat16),
        w3=jnp.pad(w3, ((0, kpad), (0, 0))).astype(jnp.bfloat16),
        w2=w2.astype(jnp.bfloat16),
        w4=w4.astype(jnp.bfloat16),
        b1=zeros(HIDDEN), b2=zeros(HIDDEN), b3=zeros(HIDDEN), b4=zeros(HIDDEN),
        wh=wh.astype(jnp.bfloat16), bh=zeros(HEAD_PAD),
        we=we.astype(jnp.bfloat16), be=zeros(EMB_DIM),
    )


# ----------------------------- Network forward (test) ---------------------------
@jax.jit
def network_forward_test(image, pool_features, rcnn_rois, params):
    mean = jnp.asarray(IMAGE_MEAN, jnp.float32)
    inv_std = 1.0 / jnp.asarray(IMAGE_STD, jnp.float32)
    padded_image = normalize_and_pad_image(image, mean, inv_std, 64)

    # TODO(synk): FPN / RPN / ROIAlignV2 not provided; `pool_features` and `rcnn_rois`
    # play the role of roi_pooler(fpn_fms, rpn_rois, ...) output on `padded_image`.
    flat = pool_features.reshape(pool_features.shape[0], -1)      # flatten(start_dim=1)
    pred_bbox, pred_emb = rcnn_head_fused(flat, rcnn_rois, params)
    pred_emb = jnp.repeat(pred_emb, CLASS_NUM, axis=0)            # repeat(1,C).reshape(-1,32)
    return pred_bbox, pred_emb, padded_image


# --------------------------------------- main -----------------------------------
if __name__ == "__main__":
    key = jax.random.PRNGKey(0)
    k_img, k_feat, k_roi, k_par = jax.random.split(key, 4)

    image = jax.random.uniform(k_img, (2, 3, 32, 48), jnp.float32) * 255.0
    pool_features = jax.random.normal(k_feat, (N_ROIS, FPN_CH, POOL_H, POOL_W), jnp.float32)

    xy = jax.random.uniform(k_roi, (N_ROIS, 2), jnp.float32) * 30.0
    wh = jax.random.uniform(jax.random.fold_in(k_roi, 1), (N_ROIS, 2), jnp.float32) * 20.0 + 4.0
    batch_idx = jnp.zeros((N_ROIS, 1), jnp.float32)
    rcnn_rois = jnp.concatenate([batch_idx, xy, xy + wh], axis=1)  # (N, 5)

    params = make_rcnn_params(k_par)

    pred_bbox, pred_emb, padded_image = network_forward_test(
        image, pool_features, rcnn_rois, params)
    jax.block_until_ready((pred_bbox, pred_emb, padded_image))

    assert pred_bbox.shape == (N_ROIS * CLASS_NUM, 8)
    assert pred_emb.shape == (N_ROIS * CLASS_NUM, EMB_DIM)
    assert padded_image.shape == (2, 3, 64, 64)
    assert bool(jnp.all(jnp.isfinite(pred_bbox)))
    print("KERNEL_OK")
</pallas_src>

<mosaic_0001>
module attributes {stable_mosaic.version = 11 : i64} {
  func.func @_rcnn_head_fused_kernel(%arg0: i32, %arg1: memref<128x896xbf16, #tpu.memory_space<vmem>>, %arg2: memref<896x256xbf16, #tpu.memory_space<vmem>>, %arg3: memref<896x256xbf16, #tpu.memory_space<vmem>>, %arg4: memref<1x256xf32, #tpu.memory_space<vmem>>, %arg5: memref<256x256xbf16, #tpu.memory_space<vmem>>, %arg6: memref<1x256xf32, #tpu.memory_space<vmem>>, %arg7: memref<1x256xf32, #tpu.memory_space<vmem>>, %arg8: memref<256x256xbf16, #tpu.memory_space<vmem>>, %arg9: memref<1x256xf32, #tpu.memory_space<vmem>>, %arg10: memref<256x128xbf16, #tpu.memory_space<vmem>>, %arg11: memref<1x128xf32, #tpu.memory_space<vmem>>, %arg12: memref<256x32xbf16, #tpu.memory_space<vmem>>, %arg13: memref<1x32xf32, #tpu.memory_space<vmem>>, %arg14: memref<128x5xf32, #tpu.memory_space<vmem>>, %arg15: memref<128x128xf32, #tpu.memory_space<vmem>>, %arg16: memref<128x256xf32, #tpu.memory_space<vmem>>, %arg17: memref<128x256xf32, #tpu.memory_space<vmem>>) attributes {dimension_semantics = [#tpu.dimension_semantics<arbitrary>], iteration_bounds = array<i64: 4>, scalar_prefetch = 0 : i64, scratch_operands = 2 : i64, tpu.core_type = #tpu.core_type<tc>, window_params = [{transform_indices = @transform_0, window_bounds = array<i64: 128, 896>}, {transform_indices = @transform_1, window_bounds = array<i64: 896, 256>}, {transform_indices = @transform_2, window_bounds = array<i64: 896, 256>}, {pipeline_mode = #tpu.pipeline_mode<synchronous>, transform_indices = @transform_3, window_bounds = array<i64: 1, 256>}, {pipeline_mode = #tpu.pipeline_mode<synchronous>, transform_indices = @transform_4, window_bounds = array<i64: 256, 256>}, {pipeline_mode = #tpu.pipeline_mode<synchronous>, transform_indices = @transform_5, window_bounds = array<i64: 1, 256>}, {pipeline_mode = #tpu.pipeline_mode<synchronous>, transform_indices = @transform_6, window_bounds = array<i64: 1, 256>}, {pipeline_mode = #tpu.pipeline_mode<synchronous>, transform_indices = @transform_7, window_bounds = array<i64: 256, 256>}, {pipeline_mode = #tpu.pipeline_mode<synchronous>, transform_indices = @transform_8, window_bounds = array<i64: 1, 256>}, {pipeline_mode = #tpu.pipeline_mode<synchronous>, transform_indices = @transform_9, window_bounds = array<i64: 256, 128>}, {pipeline_mode = #tpu.pipeline_mode<synchronous>, transform_indices = @transform_10, window_bounds = array<i64: 1, 128>}, {pipeline_mode = #tpu.pipeline_mode<synchronous>, transform_indices = @transform_11, window_bounds = array<i64: 256, 32>}, {pipeline_mode = #tpu.pipeline_mode<synchronous>, transform_indices = @transform_12, window_bounds = array<i64: 1, 32>}, {pipeline_mode = #tpu.pipeline_mode<synchronous>, transform_indices = @transform_13, window_bounds = array<i64: 128, 5>}, {pipeline_mode = #tpu.pipeline_mode<synchronous>, transform_indices = @transform_14, window_bounds = array<i64: 128, 128>}]} {
    %c0_i32 = arith.constant 0 : i32
    %0 = arith.cmpi eq, %arg0, %c0_i32 : i32
    %1 = arith.extui %0 : i1 to i32
    %c0_i32_0 = arith.constant 0 : i32
    %2 = arith.cmpi ne, %1, %c0_i32_0 : i32
    scf.if %2 {
      %cst_16 = arith.constant 0.000000e+00 : f32
      %17 = vector.broadcast %cst_16 : f32 to vector<128x256xf32>
      %c0_17 = arith.constant 0 : index
      %c0_18 = arith.constant 0 : index
      %18 = vector.load %arg16[%c0_17, %c0_18] : memref<128x256xf32, #tpu.memory_space<vmem>>, vector<128x256xf32>
      tpu.vector_store %arg16[%c0_17, %c0_18], %17 {strides = array<i32>} : memref<128x256xf32, #tpu.memory_space<vmem>>, vector<128x256xf32>,
      %cst_19 = arith.constant 0.000000e+00 : f32
      %19 = vector.broadcast %cst_19 : f32 to vector<128x256xf32>
      %c0_20 = arith.constant 0 : index
      %c0_21 = arith.constant 0 : index
      %20 = vector.load %arg17[%c0_20, %c0_21] : memref<128x256xf32, #tpu.memory_space<vmem>>, vector<128x256xf32>
      tpu.vector_store %arg17[%c0_20, %c0_21], %19 {strides = array<i32>} : memref<128x256xf32, #tpu.memory_space<vmem>>, vector<128x256xf32>,
    } else {
    }
    %c0 = arith.constant 0 : index
    %c0_1 = arith.constant 0 : index
    %3 = vector.load %arg1[%c0, %c0_1] : memref<128x896xbf16, #tpu.memory_space<vmem>>, vector<128x896xbf16>
    %c0_2 = arith.constant 0 : index
    %c0_3 = arith.constant 0 : index
    %4 = vector.load %arg16[%c0_2, %c0_3] : memref<128x256xf32, #tpu.memory_space<vmem>>, vector<128x256xf32>
    %c0_4 = arith.constant 0 : index
    %c0_5 = arith.constant 0 : index
    %5 = vector.load %arg2[%c0_4, %c0_5] : memref<896x256xbf16, #tpu.memory_space<vmem>>, vector<896x256xbf16>
    %cst = arith.constant dense<0.000000e+00> : vector<128x256xf32>
    %6 = tpu.matmul %3, %5, %cst {dimension_numbers = #tpu.dot_dimension_numbers<[1], [0], [0], [1], [0, 0, 1, 1], [], []>} : vector<128x896xbf16>, vector<896x256xbf16>, vector<128x256xf32> -> vector<128x256xf32>
    %7 = arith.addf %4, %6 : vector<128x256xf32>
    %c0_6 = arith.constant 0 : index
    %c0_7 = arith.constant 0 : index
    %8 = vector.load %arg16[%c0_6, %c0_7] : memref<128x256xf32, #tpu.memory_space<vmem>>, vector<128x256xf32>
    tpu.vector_store %arg16[%c0_6, %c0_7], %7 {strides = array<i32>} : memref<128x256xf32, #tpu.memory_space<vmem>>, vector<128x256xf32>,
    %c0_8 = arith.constant 0 : index
    %c0_9 = arith.constant 0 : index
    %9 = vector.load %arg17[%c0_8, %c0_9] : memref<128x256xf32, #tpu.memory_space<vmem>>, vector<128x256xf32>
    %c0_10 = arith.constant 0 : index
    %c0_11 = arith.constant 0 : index
    %10 = vector.load %arg3[%c0_10, %c0_11] : memref<896x256xbf16, #tpu.memory_space<vmem>>, vector<896x256xbf16>
    %cst_12 = arith.constant dense<0.000000e+00> : vector<128x256xf32>
    %11 = tpu.matmul %3, %10, %cst_12 {dimension_numbers = #tpu.dot_dimension_numbers<[1], [0], [0], [1], [0, 0, 1, 1], [], []>} : vector<128x896xbf16>, vector<896x256xbf16>, vector<128x256xf32> -> vector<128x256xf32>
    %12 = arith.addf %9, %11 : vector<128x256xf32>
    %c0_13 = arith.constant 0 : index
    %c0_14 = arith.constant 0 : index
    %13 = vector.load %arg17[%c0_13, %c0_14] : memref<128x256xf32, #tpu.memory_space<vmem>>, vector<128x256xf32>
    tpu.vector_store %arg17[%c0_13, %c0_14], %12 {strides = array<i32>} : memref<128x256xf32, #tpu.memory_space<vmem>>, vector<128x256xf32>,
    %c3_i32 = arith.constant 3 : i32
    %14 = arith.cmpi eq, %arg0, %c3_i32 : i32
    %15 = arith.extui %14 : i1 to i32
    %c0_i32_15 = arith.constant 0 : i32
    %16 = arith.cmpi ne, %15, %c0_i32_15 : i32
    scf.if %16 {
      %c0_16 = arith.constant 0 : index
      %c0_17 = arith.constant 0 : index
      %17 = vector.load %arg16[%c0_16, %c0_17] : memref<128x256xf32, #tpu.memory_space<vmem>>, vector<128x256xf32>
      %c0_18 = arith.constant 0 : index
      %c0_19 = arith.constant 0 : index
      %18 = vector.load %arg4[%c0_18, %c0_19] : memref<1x256xf32, #tpu.memory_space<vmem>>, vector<1x256xf32>
      %19 = vector.broadcast %18 : vector<1x256xf32> to vector<128x256xf32>
      %20 = arith.addf %17, %19 : vector<128x256xf32>
      %cst_20 = arith.constant 0.000000e+00 : f32
      %21 = vector.broadcast %cst_20 : f32 to vector<128x256xf32>
      %22 = arith.maximumf %20, %21 : vector<128x256xf32>
      %23 = arith.truncf %22 : vector<128x256xf32> to vector<128x256xbf16>
      %c0_21 = arith.constant 0 : index
      %c0_22 = arith.constant 0 : index
      %24 = vector.load %arg5[%c0_21, %c0_22] : memref<256x256xbf16, #tpu.memory_space<vmem>>, vector<256x256xbf16>
      %cst_23 = arith.constant dense<0.000000e+00> : vector<128x256xf32>
      %25 = tpu.matmul %23, %24, %cst_23 {dimension_numbers = #tpu.dot_dimension_numbers<[1], [0], [0], [1], [0, 0, 1, 1], [], []>} : vector<128x256xbf16>, vector<256x256xbf16>, vector<128x256xf32> -> vector<128x256xf32>
      %c0_24 = arith.constant 0 : index
      %c0_25 = arith.constant 0 : index
      %26 = vector.load %arg6[%c0_24, %c0_25] : memref<1x256xf32, #tpu.memory_space<vmem>>, vector<1x256xf32>
      %27 = vector.broadcast %26 : vector<1x256xf32> to vector<128x256xf32>
      %28 = arith.addf %25, %27 : vector<128x256xf32>
      %cst_26 = arith.constant 0.000000e+00 : f32
      %29 = vector.broadcast %cst_26 : f32 to vector<128x256xf32>
      %30 = arith.maximumf %28, %29 : vector<128x256xf32>
      %c0_27 = arith.constant 0 : index
      %c0_28 = arith.constant 0 : index
      %31 = vector.load %arg17[%c0_27, %c0_28] : memref<128x256xf32, #tpu.memory_space<vmem>>, vector<128x256xf32>
      %c0_29 = arith.constant 0 : index
      %c0_30 = arith.constant 0 : index
      %32 = vector.load %arg7[%c0_29, %c0_30] : memref<1x256xf32, #tpu.memory_space<vmem>>, vector<1x256xf32>
      %33 = vector.broadcast %32 : vector<1x256xf32> to vector<128x256xf32>
      %34 = arith.addf %31, %33 : vector<128x256xf32>
      %cst_31 = arith.constant 0.000000e+00 : f32
      %35 = vector.broadcast %cst_31 : f32 to vector<128x256xf32>
      %36 = arith.maximumf %34, %35 : vector<128x256xf32>
      %37 = arith.truncf %36 : vector<128x256xf32> to vector<128x256xbf16>
      %c0_32 = arith.constant 0 : index
      %c0_33 = arith.constant 0 : index
      %38 = vector.load %arg8[%c0_32, %c0_33] : memref<256x256xbf16, #tpu.memory_space<vmem>>, vector<256x256xbf16>
      %cst_34 = arith.constant dense<0.000000e+00> : vector<128x256xf32>
      %39 = tpu.matmul %37, %38, %cst_34 {dimension_numbers = #tpu.dot_dimension_numbers<[1], [0], [0], [1], [0, 0, 1, 1], [], []>} : vector<128x256xbf16>, vector<256x256xbf16>, vector<128x256xf32> -> vector<128x256xf32>
      %c0_35 = arith.constant 0 : index
      %c0_36 = arith.constant 0 : index
      %40 = vector.load %arg9[%c0_35, %c0_36] : memref<1x256xf32, #tpu.memory_space<vmem>>, vector<1x256xf32>
      %41 = vector.broadcast %40 : vector<1x256xf32> to vector<128x256xf32>
      %42 = arith.addf %39, %41 : vector<128x256xf32>
      %cst_37 = arith.constant 0.000000e+00 : f32
      %43 = vector.broadcast %cst_37 : f32 to vector<128x256xf32>
      %44 = arith.maximumf %42, %43 : vector<128x256xf32>
      %45 = arith.truncf %30 : vector<128x256xf32> to vector<128x256xbf16>
      %c0_38 = arith.constant 0 : index
      %c0_39 = arith.constant 0 : index
      %46 = vector.load %arg10[%c0_38, %c0_39] : memref<256x128xbf16, #tpu.memory_space<vmem>>, vector<256x128xbf16>
      %cst_40 = arith.constant dense<0.000000e+00> : vector<128x128xf32>
      %47 = tpu.matmul %45, %46, %cst_40 {dimension_numbers = #tpu.dot_dimension_numbers<[1], [0], [0], [1], [0, 0, 1, 1], [], []>} : vector<128x256xbf16>, vector<256x128xbf16>, vector<128x128xf32> -> vector<128x128xf32>
      %c0_41 = arith.constant 0 : index
      %c0_42 = arith.constant 0 : index
      %48 = vector.load %arg11[%c0_41, %c0_42] : memref<1x128xf32, #tpu.memory_space<vmem>>, vector<1x128xf32>
      %49 = vector.broadcast %48 : vector<1x128xf32> to vector<128x128xf32>
      %50 = arith.addf %47, %49 : vector<128x128xf32>
      %51 = arith.truncf %44 : vector<128x256xf32> to vector<128x256xbf16>
      %c0_43 = arith.constant 0 : index
      %c0_44 = arith.constant 0 : index
      %52 = vector.load %arg12[%c0_43, %c0_44] : memref<256x32xbf16, #tpu.memory_space<vmem>>, vector<256x32xbf16>
      %cst_45 = arith.constant dense<0.000000e+00> : vector<128x32xf32>
      %53 = tpu.matmul %51, %52, %cst_45 {dimension_numbers = #tpu.dot_dimension_numbers<[1], [0], [0], [1], [0, 0, 1, 1], [], []>} : vector<128x256xbf16>, vector<256x32xbf16>, vector<128x32xf32> -> vector<128x32xf32>
      %c0_46 = arith.constant 0 : index
      %c0_47 = arith.constant 0 : index
      %54 = vector.load %arg13[%c0_46, %c0_47] : memref<1x32xf32, #tpu.memory_space<vmem>>, vector<1x32xf32>
      %55 = vector.broadcast %54 : vector<1x32xf32> to vector<128x32xf32>
      %56 = arith.addf %53, %55 : vector<128x32xf32>
      %57 = vector.extract_strided_slice %50 {offsets = [0, 0], sizes = [128, 3], strides = [1, 1]} : vector<128x128xf32> to vector<128x3xf32>
      %58 = vector.extract_strided_slice %50 {offsets = [0, 3], sizes = [128, 12], strides = [1, 1]} : vector<128x128xf32> to vector<128x12xf32>
      %59 = vector.extract_strided_slice %50 {offsets = [0, 15], sizes = [128, 6], strides = [1, 1]} : vector<128x128xf32> to vector<128x6xf32>
      %cst_48 = arith.constant dense<0xFF800000> : vector<128xf32>
      %60 = vector.multi_reduction <maximumf>, %57, %cst_48 [1] : vector<128x3xf32> to vector<128xf32>
      %61 = vector.shape_cast %60 : vector<128xf32> to vector<128x1xf32>
      %62 = vector.broadcast %61 : vector<128x1xf32> to vector<128x3xf32>
      %63 = arith.subf %57, %62 : vector<128x3xf32>
      %64 = math.exp %63 : vector<128x3xf32>
      %cst_49 = arith.constant dense<0.000000e+00> : vector<128xf32>
      %65 = vector.multi_reduction <add>, %64, %cst_49 [1] : vector<128x3xf32> to vector<128xf32>
      %66 = vector.shape_cast %65 : vector<128xf32> to vector<128x1xf32>
      %67 = tpu.reciprocal %66 {approx = true} : vector<128x1xf32> -> vector<128x1xf32>
      %68 = vector.broadcast %67 : vector<128x1xf32> to vector<128x3xf32>
      %69 = arith.mulf %64, %68 : vector<128x3xf32>
      %c0_50 = arith.constant 0 : index
      %c0_51 = arith.constant 0 : index
      %70 = vector.load %arg14[%c0_50, %c0_51] : memref<128x5xf32, #tpu.memory_space<vmem>>, vector<128x5xf32>
      %71 = vector.extract_strided_slice %70 {offsets = [0, 1], sizes = [128, 1], strides = [1, 1]} : vector<128x5xf32> to vector<128x1xf32>
      %72 = vector.extract_strided_slice %70 {offsets = [0, 2], sizes = [128, 1], strides = [1, 1]} : vector<128x5xf32> to vector<128x1xf32>
      %73 = vector.extract_strided_slice %70 {offsets = [0, 3], sizes = [128, 1], strides = [1, 1]} : vector<128x5xf32> to vector<128x1xf32>
      %74 = vector.extract_strided_slice %70 {offsets = [0, 4], sizes = [128, 1], strides = [1, 1]} : vector<128x5xf32> to vector<128x1xf32>
      %75 = arith.subf %73, %71 : vector<128x1xf32>
      %cst_52 = arith.constant 1.000000e+00 : f32
      %76 = vector.broadcast %cst_52 : f32 to vector<128x1xf32>
      %77 = arith.addf %75, %76 : vector<128x1xf32>
      %78 = arith.subf %74, %72 : vector<128x1xf32>
      %cst_53 = arith.constant 1.000000e+00 : f32
      %79 = vector.broadcast %cst_53 : f32 to vector<128x1xf32>
      %80 = arith.addf %78, %79 : vector<128x1xf32>
      %cst_54 = arith.constant 5.000000e-01 : f32
      %81 = vector.broadcast %cst_54 : f32 to vector<128x1xf32>
      %82 = arith.mulf %81, %77 : vector<128x1xf32>
      %83 = arith.addf %71, %82 : vector<128x1xf32>
      %cst_55 = arith.constant 5.000000e-01 : f32
      %84 = vector.broadcast %cst_55 : f32 to vector<128x1xf32>
      %85 = arith.mulf %84, %80 : vector<128x1xf32>
      %86 = arith.addf %72, %85 : vector<128x1xf32>
      %87 = vector.extract_strided_slice %58 {offsets = [0, 4], sizes = [128, 4], strides = [1, 1]} : vector<128x12xf32> to vector<128x4xf32>
      %88 = vector.extract_strided_slice %59 {offsets = [0, 2], sizes = [128, 2], strides = [1, 1]} : vector<128x6xf32> to vector<128x2xf32>
      %89 = vector.extract_strided_slice %87 {offsets = [0, 0], sizes = [128, 1], strides = [1, 1]} : vector<128x4xf32> to vector<128x1xf32>
      %cst_56 = arith.constant 1.000000e-01 : f32
      %90 = vector.broadcast %cst_56 : f32 to vector<128x1xf32>
      %91 = arith.mulf %89, %90 : vector<128x1xf32>
      %cst_57 = arith.constant 0.000000e+00 : f32
      %92 = vector.broadcast %cst_57 : f32 to vector<128x1xf32>
      %93 = arith.addf %91, %92 : vector<128x1xf32>
      %94 = vector.extract_strided_slice %87 {offsets = [0, 1], sizes = [128, 1], strides = [1, 1]} : vector<128x4xf32> to vector<128x1xf32>
      %cst_58 = arith.constant 1.000000e-01 : f32
      %95 = vector.broadcast %cst_58 : f32 to vector<128x1xf32>
      %96 = arith.mulf %94, %95 : vector<128x1xf32>
      %cst_59 = arith.constant 0.000000e+00 : f32
      %97 = vector.broadcast %cst_59 : f32 to vector<128x1xf32>
      %98 = arith.addf %96, %97 : vector<128x1xf32>
      %99 = vector.extract_strided_slice %87 {offsets = [0, 2], sizes = [128, 1], strides = [1, 1]} : vector<128x4xf32> to vector<128x1xf32>
      %cst_60 = arith.constant 2.000000e-01 : f32
      %100 = vector.broadcast %cst_60 : f32 to vector<128x1xf32>
      %101 = arith.mulf %99, %100 : vector<128x1xf32>
      %cst_61 = arith.constant 0.000000e+00 : f32
      %102 = vector.broadcast %cst_61 : f32 to vector<128x1xf32>
      %103 = arith.addf %101, %102 : vector<128x1xf32>
      %104 = vector.extract_strided_slice %87 {offsets = [0, 3], sizes = [128, 1], strides = [1, 1]} : vector<128x4xf32> to vector<128x1xf32>
      %cst_62 = arith.constant 2.000000e-01 : f32
      %105 = vector.broadcast %cst_62 : f32 to vector<128x1xf32>
      %106 = arith.mulf %104, %105 : vector<128x1xf32>
      %cst_63 = arith.constant 0.000000e+00 : f32
      %107 = vector.broadcast %cst_63 : f32 to vector<128x1xf32>
      %108 = arith.addf %106, %107 : vector<128x1xf32>
      %109 = vector.extract_strided_slice %88 {offsets = [0, 0], sizes = [128, 1], strides = [1, 1]} : vector<128x2xf32> to vector<128x1xf32>
      %cst_64 = arith.constant 1.000000e-01 : f32
      %110 = vector.broadcast %cst_64 : f32 to vector<128x1xf32>
      %111 = arith.mulf %109, %110 : vector<128x1xf32>
      %cst_65 = arith.constant 0.000000e+00 : f32
      %112 = vector.broadcast %cst_65 : f32 to vector<128x1xf32>
      %113 = arith.addf %111, %112 : vector<128x1xf32>
      %114 = vector.extract_strided_slice %88 {offsets = [0, 1], sizes = [128, 1], strides = [1, 1]} : vector<128x2xf32> to vector<128x1xf32>
      %cst_66 = arith.constant 1.000000e-01 : f32
      %115 = vector.broadcast %cst_66 : f32 to vector<128x1xf32>
      %116 = arith.mulf %114, %115 : vector<128x1xf32>
      %cst_67 = arith.constant 0.000000e+00 : f32
      %117 = vector.broadcast %cst_67 : f32 to vector<128x1xf32>
      %118 = arith.addf %116, %117 : vector<128x1xf32>
      %119 = arith.mulf %93, %77 : vector<128x1xf32>
      %120 = arith.addf %83, %119 : vector<128x1xf32>
      %121 = arith.mulf %98, %80 : vector<128x1xf32>
      %122 = arith.addf %86, %121 : vector<128x1xf32>
      %123 = math.exp %103 : vector<128x1xf32>
      %124 = arith.mulf %77, %123 : vector<128x1xf32>
      %125 = math.exp %108 : vector<128x1xf32>
      %126 = arith.mulf %80, %125 : vector<128x1xf32>
      %127 = arith.mulf %113, %77 : vector<128x1xf32>
      %128 = arith.addf %83, %127 : vector<128x1xf32>
      %129 = arith.mulf %118, %80 : vector<128x1xf32>
      %130 = arith.addf %86, %129 : vector<128x1xf32>
      %131 = vector.extract_strided_slice %69 {offsets = [0, 1], sizes = [128, 1], strides = [1, 1]} : vector<128x3xf32> to vector<128x1xf32>
      %cst_68 = arith.constant 1.000000e+00 : f32
      %132 = vector.broadcast %cst_68 : f32 to vector<128x1xf32>
      %cst_69 = arith.constant 5.000000e-01 : f32
      %133 = vector.broadcast %cst_69 : f32 to vector<128x1xf32>
      %134 = arith.mulf %133, %124 : vector<128x1xf32>
      %135 = arith.subf %120, %134 : vector<128x1xf32>
      %cst_70 = arith.constant 5.000000e-01 : f32
      %136 = vector.broadcast %cst_70 : f32 to vector<128x1xf32>
      %137 = arith.mulf %136, %126 : vector<128x1xf32>
      %138 = arith.subf %122, %137 : vector<128x1xf32>
      %cst_71 = arith.constant 5.000000e-01 : f32
      %139 = vector.broadcast %cst_71 : f32 to vector<128x1xf32>
      %140 = arith.mulf %139, %124 : vector<128x1xf32>
      %141 = arith.addf %120, %140 : vector<128x1xf32>
      %cst_72 = arith.constant 5.000000e-01 : f32
      %142 = vector.broadcast %cst_72 : f32 to vector<128x1xf32>
      %143 = arith.mulf %142, %126 : vector<128x1xf32>
      %144 = arith.addf %122, %143 : vector<128x1xf32>
      %145 = tpu.concatenate %135, %138, %141, %144, %128, %130, %131, %132 in 1 : vector<128x1xf32>, vector<128x1xf32>, vector<128x1xf32>, vector<128x1xf32>, vector<128x1xf32>, vector<128x1xf32>, vector<128x1xf32>, vector<128x1xf32> -> vector<128x8xf32>
      %146 = vector.extract_strided_slice %58 {offsets = [0, 8], sizes = [128, 4], strides = [1, 1]} : vector<128x12xf32> to vector<128x4xf32>
      %147 = vector.extract_strided_slice %59 {offsets = [0, 4], sizes = [128, 2], strides = [1, 1]} : vector<128x6xf32> to vector<128x2xf32>
      %148 = vector.extract_strided_slice %146 {offsets = [0, 0], sizes = [128, 1], strides = [1, 1]} : vector<128x4xf32> to vector<128x1xf32>
      %cst_73 = arith.constant 1.000000e-01 : f32
      %149 = vector.broadcast %cst_73 : f32 to vector<128x1xf32>
      %150 = arith.mulf %148, %149 : vector<128x1xf32>
      %cst_74 = arith.constant 0.000000e+00 : f32
      %151 = vector.broadcast %cst_74 : f32 to vector<128x1xf32>
      %152 = arith.addf %150, %151 : vector<128x1xf32>
      %153 = vector.extract_strided_slice %146 {offsets = [0, 1], sizes = [128, 1], strides = [1, 1]} : vector<128x4xf32> to vector<128x1xf32>
      %cst_75 = arith.constant 1.000000e-01 : f32
      %154 = vector.broadcast %cst_75 : f32 to vector<128x1xf32>
      %155 = arith.mulf %153, %154 : vector<128x1xf32>
      %cst_76 = arith.constant 0.000000e+00 : f32
      %156 = vector.broadcast %cst_76 : f32 to vector<128x1xf32>
      %157 = arith.addf %155, %156 : vector<128x1xf32>
      %158 = vector.extract_strided_slice %146 {offsets = [0, 2], sizes = [128, 1], strides = [1, 1]} : vector<128x4xf32> to vector<128x1xf32>
      %cst_77 = arith.constant 2.000000e-01 : f32
      %159 = vector.broadcast %cst_77 : f32 to vector<128x1xf32>
      %160 = arith.mulf %158, %159 : vector<128x1xf32>
      %cst_78 = arith.constant 0.000000e+00 : f32
      %161 = vector.broadcast %cst_78 : f32 to vector<128x1xf32>
      %162 = arith.addf %160, %161 : vector<128x1xf32>
      %163 = vector.extract_strided_slice %146 {offsets = [0, 3], sizes = [128, 1], strides = [1, 1]} : vector<128x4xf32> to vector<128x1xf32>
      %cst_79 = arith.constant 2.000000e-01 : f32
      %164 = vector.broadcast %cst_79 : f32 to vector<128x1xf32>
      %165 = arith.mulf %163, %164 : vector<128x1xf32>
      %cst_80 = arith.constant 0.000000e+00 : f32
      %166 = vector.broadcast %cst_80 : f32 to vector<128x1xf32>
      %167 = arith.addf %165, %166 : vector<128x1xf32>
      %168 = vector.extract_strided_slice %147 {offsets = [0, 0], sizes = [128, 1], strides = [1, 1]} : vector<128x2xf32> to vector<128x1xf32>
      %cst_81 = arith.constant 1.000000e-01 : f32
      %169 = vector.broadcast %cst_81 : f32 to vector<128x1xf32>
      %170 = arith.mulf %168, %169 : vector<128x1xf32>
      %cst_82 = arith.constant 0.000000e+00 : f32
      %171 = vector.broadcast %cst_82 : f32 to vector<128x1xf32>
      %172 = arith.addf %170, %171 : vector<128x1xf32>
      %173 = vector.extract_strided_slice %147 {offsets = [0, 1], sizes = [128, 1], strides = [1, 1]} : vector<128x2xf32> to vector<128x1xf32>
      %cst_83 = arith.constant 1.000000e-01 : f32
      %174 = vector.broadcast %cst_83 : f32 to vector<128x1xf32>
      %175 = arith.mulf %173, %174 : vector<128x1xf32>
      %cst_84 = arith.constant 0.000000e+00 : f32
      %176 = vector.broadcast %cst_84 : f32 to vector<128x1xf32>
      %177 = arith.addf %175, %176 : vector<128x1xf32>
      %178 = arith.mulf %152, %77 : vector<128x1xf32>
      %179 = arith.addf %83, %178 : vector<128x1xf32>
      %180 = arith.mulf %157, %80 : vector<128x1xf32>
      %181 = arith.addf %86, %180 : vector<128x1xf32>
      %182 = math.exp %162 : vector<128x1xf32>
      %183 = arith.mulf %77, %182 : vector<128x1xf32>
      %184 = math.exp %167 : vector<128x1xf32>
      %185 = arith.mulf %80, %184 : vector<128x1xf32>
      %186 = arith.mulf %172, %77 : vector<128x1xf32>
      %187 = arith.addf %83, %186 : vector<128x1xf32>
      %188 = arith.mulf %177, %80 : vector<128x1xf32>
      %189 = arith.addf %86, %188 : vector<128x1xf32>
      %190 = vector.extract_strided_slice %69 {offsets = [0, 2], sizes = [128, 1], strides = [1, 1]} : vector<128x3xf32> to vector<128x1xf32>
      %cst_85 = arith.constant 2.000000e+00 : f32
      %191 = vector.broadcast %cst_85 : f32 to vector<128x1xf32>
      %cst_86 = arith.constant 5.000000e-01 : f32
      %192 = vector.broadcast %cst_86 : f32 to vector<128x1xf32>
      %193 = arith.mulf %192, %183 : vector<128x1xf32>
      %194 = arith.subf %179, %193 : vector<128x1xf32>
      %cst_87 = arith.constant 5.000000e-01 : f32
      %195 = vector.broadcast %cst_87 : f32 to vector<128x1xf32>
      %196 = arith.mulf %195, %185 : vector<128x1xf32>
      %197 = arith.subf %181, %196 : vector<128x1xf32>
      %cst_88 = arith.constant 5.000000e-01 : f32
      %198 = vector.broadcast %cst_88 : f32 to vector<128x1xf32>
      %199 = arith.mulf %198, %183 : vector<128x1xf32>
      %200 = arith.addf %179, %199 : vector<128x1xf32>
      %cst_89 = arith.constant 5.000000e-01 : f32
      %201 = vector.broadcast %cst_89 : f32 to vector<128x1xf32>
      %202 = arith.mulf %201, %185 : vector<128x1xf32>
      %203 = arith.addf %181, %202 : vector<128x1xf32>
      %204 = tpu.concatenate %194, %197, %200, %203, %187, %189, %190, %191 in 1 : vector<128x1xf32>, vector<128x1xf32>, vector<128x1xf32>, vector<128x1xf32>, vector<128x1xf32>, vector<128x1xf32>, vector<128x1xf32>, vector<128x1xf32> -> vector<128x8xf32>
      %cst_90 = arith.constant 0.000000e+00 : f32
      %205 = vector.broadcast %cst_90 : f32 to vector<128x80xf32>
      %206 = tpu.concatenate %145, %204, %56, %205 in 1 : vector<128x8xf32>, vector<128x8xf32>, vector<128x32xf32>, vector<128x80xf32> -> vector<128x128xf32>
      %c0_91 = arith.constant 0 : index
      %c0_92 = arith.constant 0 : index
      %207 = vector.load %arg15[%c0_91, %c0_92] : memref<128x128xf32, #tpu.memory_space<vmem>>, vector<128x128xf32>
      tpu.vector_store %arg15[%c0_91, %c0_92], %206 {strides = array<i32>} : memref<128x128xf32, #tpu.memory_space<vmem>>, vector<128x128xf32>,
    } else {
    }
    return
  }
  func.func @transform_0(%arg0: i32) -> (i32, i32) {
    %c0_i32 = arith.constant 0 : i32
    %c0_i32_0 = arith.constant 0 : i32
    return %c0_i32, %arg0 : i32, i32
  }
  func.func @transform_1(%arg0: i32) -> (i32, i32) {
    %c0_i32 = arith.constant 0 : i32
    %c0_i32_0 = arith.constant 0 : i32
    return %arg0, %c0_i32 : i32, i32
  }
  func.func @transform_2(%arg0: i32) -> (i32, i32) {
    %c0_i32 = arith.constant 0 : i32
    %c0_i32_0 = arith.constant 0 : i32
    return %arg0, %c0_i32 : i32, i32
  }
  func.func @transform_3(%arg0: i32) -> (i32, i32) {
    %c0_i32 = arith.constant 0 : i32
    %c0_i32_0 = arith.constant 0 : i32
    %c0_i32_1 = arith.constant 0 : i32
    return %c0_i32, %c0_i32_0 : i32, i32
  }
  func.func @transform_4(%arg0: i32) -> (i32, i32) {
    %c0_i32 = arith.constant 0 : i32
    %c0_i32_0 = arith.constant 0 : i32
    %c0_i32_1 = arith.constant 0 : i32
    return %c0_i32, %c0_i32_0 : i32, i32
  }
  func.func @transform_5(%arg0: i32) -> (i32, i32) {
    %c0_i32 = arith.constant 0 : i32
    %c0_i32_0 = arith.constant 0 : i32
    %c0_i32_1 = arith.constant 0 : i32
    return %c0_i32, %c0_i32_0 : i32, i32
  }
  func.func @transform_6(%arg0: i32) -> (i32, i32) {
    %c0_i32 = arith.constant 0 : i32
    %c0_i32_0 = arith.constant 0 : i32
    %c0_i32_1 = arith.constant 0 : i32
    return %c0_i32, %c0_i32_0 : i32, i32
  }
  func.func @transform_7(%arg0: i32) -> (i32, i32) {
    %c0_i32 = arith.constant 0 : i32
    %c0_i32_0 = arith.constant 0 : i32
    %c0_i32_1 = arith.constant 0 : i32
    return %c0_i32, %c0_i32_0 : i32, i32
  }
  func.func @transform_8(%arg0: i32) -> (i32, i32) {
    %c0_i32 = arith.constant 0 : i32
    %c0_i32_0 = arith.constant 0 : i32
    %c0_i32_1 = arith.constant 0 : i32
    return %c0_i32, %c0_i32_0 : i32, i32
  }
  func.func @transform_9(%arg0: i32) -> (i32, i32) {
    %c0_i32 = arith.constant 0 : i32
    %c0_i32_0 = arith.constant 0 : i32
    %c0_i32_1 = arith.constant 0 : i32
    return %c0_i32, %c0_i32_0 : i32, i32
  }
  func.func @transform_10(%arg0: i32) -> (i32, i32) {
    %c0_i32 = arith.constant 0 : i32
    %c0_i32_0 = arith.constant 0 : i32
    %c0_i32_1 = arith.constant 0 : i32
    return %c0_i32, %c0_i32_0 : i32, i32
  }
  func.func @transform_11(%arg0: i32) -> (i32, i32) {
    %c0_i32 = arith.constant 0 : i32
    %c0_i32_0 = arith.constant 0 : i32
    %c0_i32_1 = arith.constant 0 : i32
    return %c0_i32, %c0_i32_0 : i32, i32
  }
  func.func @transform_12(%arg0: i32) -> (i32, i32) {
    %c0_i32 = arith.constant 0 : i32
    %c0_i32_0 = arith.constant 0 : i32
    %c0_i32_1 = arith.constant 0 : i32
    return %c0_i32, %c0_i32_0 : i32, i32
  }
  func.func @transform_13(%arg0: i32) -> (i32, i32) {
    %c0_i32 = arith.constant 0 : i32
    %c0_i32_0 = arith.constant 0 : i32
    %c0_i32_1 = arith.constant 0 : i32
    return %c0_i32, %c0_i32_0 : i32, i32
  }
  func.func @transform_14(%arg0: i32) -> (i32, i32) {
    %c0_i32 = arith.constant 0 : i32
    %c0_i32_0 = arith.constant 0 : i32
    %c0_i32_1 = arith.constant 0 : i32
    return %c0_i32, %c0_i32_0 : i32, i32
  }
}

module attributes {stable_mosaic.version = 11 : i64} {
  func.func @_normalize_pad_kernel(%arg0: i32, %arg1: i32, %arg2: memref<3xf32, #tpu.memory_space<smem>>, %arg3: memref<3xf32, #tpu.memory_space<smem>>, %arg4: memref<1x1x32x48xf32, #tpu.memory_space<vmem>>, %arg5: memref<1x1x64x64xf32, #tpu.memory_space<vmem>>) attributes {dimension_semantics = [#tpu.dimension_semantics<parallel>, #tpu.dimension_semantics<parallel>], iteration_bounds = array<i64: 2, 3>, scalar_prefetch = 0 : i64, scratch_operands = 0 : i64, tpu.core_type = #tpu.core_type<tc>, window_params = [{transform_indices = @transform_0, window_bounds = array<i64: 3>}, {transform_indices = @transform_1, window_bounds = array<i64: 3>}, {transform_indices = @transform_2, window_bounds = array<i64: 1, 1, 32, 48>}, {transform_indices = @transform_3, window_bounds = array<i64: 1, 1, 64, 64>}]} {
    %0 = arith.index_cast %arg1 : i32 to index
    %1 = memref.load %arg2[%0] : memref<3xf32, #tpu.memory_space<smem>>
    %2 = arith.index_cast %arg1 : i32 to index
    %3 = memref.load %arg3[%2] : memref<3xf32, #tpu.memory_space<smem>>
    %cst = arith.constant 0.000000e+00 : f32
    %4 = vector.broadcast %cst : f32 to vector<1x1x64x64xf32>
    %c0 = arith.constant 0 : index
    %c0_0 = arith.constant 0 : index
    %c0_1 = arith.constant 0 : index
    %c0_2 = arith.constant 0 : index
    %5 = vector.load %arg5[%c0, %c0_0, %c0_1, %c0_2] : memref<1x1x64x64xf32, #tpu.memory_space<vmem>>, vector<1x1x64x64xf32>
    tpu.vector_store %arg5[%c0, %c0_0, %c0_1, %c0_2], %4 {strides = array<i32>} : memref<1x1x64x64xf32, #tpu.memory_space<vmem>>, vector<1x1x64x64xf32>,
    %c0_3 = arith.constant 0 : index
    %c0_4 = arith.constant 0 : index
    %c0_5 = arith.constant 0 : index
    %c0_6 = arith.constant 0 : index
    %6 = vector.load %arg4[%c0_3, %c0_4, %c0_5, %c0_6] : memref<1x1x32x48xf32, #tpu.memory_space<vmem>>, vector<1x1x32x48xf32>
    %7 = vector.broadcast %1 : f32 to vector<1x1x32x48xf32>
    %8 = arith.subf %6, %7 : vector<1x1x32x48xf32>
    %9 = vector.broadcast %3 : f32 to vector<1x1x32x48xf32>
    %10 = arith.mulf %8, %9 : vector<1x1x32x48xf32>
    %c0_7 = arith.constant 0 : index
    %c0_8 = arith.constant 0 : index
    %c0_9 = arith.constant 0 : index
    %c0_10 = arith.constant 0 : index
    %11 = vector.load %arg5[%c0_7, %c0_8, %c0_9, %c0_10] : memref<1x1x64x64xf32, #tpu.memory_space<vmem>>, vector<1x1x32x48xf32>
    tpu.vector_store %arg5[%c0_7, %c0_8, %c0_9, %c0_10], %10 {strides = array<i32>} : memref<1x1x64x64xf32, #tpu.memory_space<vmem>>, vector<1x1x32x48xf32>,
    return
  }
  func.func @transform_0(%arg0: i32, %arg1: i32) -> i32 {
    %c0_i32 = arith.constant 0 : i32
    %c0_i32_0 = arith.constant 0 : i32
    return %c0_i32 : i32
  }
  func.func @transform_1(%arg0: i32, %arg1: i32) -> i32 {
    %c0_i32 = arith.constant 0 : i32
    %c0_i32_0 = arith.constant 0 : i32
    return %c0_i32 : i32
  }
  func.func @transform_2(%arg0: i32, %arg1: i32) -> (i32, i32, i32, i32) {
    %c0_i32 = arith.constant 0 : i32
    %c0_i32_0 = arith.constant 0 : i32
    %c0_i32_1 = arith.constant 0 : i32
    return %arg0, %arg1, %c0_i32, %c0_i32_0 : i32, i32, i32, i32
  }
  func.func @transform_3(%arg0: i32, %arg1: i32) -> (i32, i32, i32, i32) {
    %c0_i32 = arith.constant 0 : i32
    %c0_i32_0 = arith.constant 0 : i32
    %c0_i32_1 = arith.constant 0 : i32
    return %arg0, %arg1, %c0_i32, %c0_i32_0 : i32, i32, i32, i32
  }
}

</mosaic_0001>

<llo_original>
// kernel: network_forward_test.2
$region0: #{network_forward_test.2}
  #allocation0 [shape = 'u32[]', space=smem, size = 0x4, offset = 0x4, fixed_abs, tag = 'smem constant byte address 0x4 - core index']
  #allocation1 [shape = 'u32[144,128]{1,0:T(1,128)}', space=vmem, size = 0x12000, scoped, tag = 'internal scratch']
  %s0 = inlined_call_operand.vmem [shape: f32[3], index: 0, kind: input, shape index: {}]
  %s1 = inlined_call_operand.vmem [shape: f32[3], index: 1, kind: input, shape index: {}]
  %s2 = inlined_call_operand.vmem [shape: f32[2,3,32,48], index: 2, kind: input, shape index: {}]
  %s3 = inlined_call_operand.hbm [shape: f32[2,3,64,64], index: 3, kind: output, shape index: {}]
  %s4 = sld [smem:[#allocation0]]
  $region53: #{network_forward_test.2} parent=0
    _
  %s6 = ssub.s32 1, %s4
  %s7 = scalar_select 0, %s6, %s4
  $region1: #{network_forward_test.2} parent=0
    #allocation2 [shape = 'u8[512]{0}', space=smem, size = 0x200, scoped, tag = 'input window, operand 0, single buffered']
    #allocation3 [shape = 's32[2]{0}', space=sflag, size = 0x8, scoped, tag = 'scoped memory for network_forward_test.2']
    #allocation4 [shape = 's32[2]{0}', space=sflag, size = 0x8, scoped, tag = 'scoped memory for network_forward_test.2']
    #allocation5 [shape = 'u8[512]{0}', space=smem, size = 0x200, scoped, tag = 'input window, operand 1, single buffered']
    #allocation6 [shape = 's32[1]{0}', space=sflag, size = 0x4, scoped, tag = 'scoped memory for network_forward_test.2']
    #allocation7 [shape = 'u8[65536]{0}', space=vmem, size = 0x10000, scoped, tag = 'output window, operand 0']
    %8 = vsyncpa [#allocation4], 0
    %9 = vsyncpa [#allocation6], 0
    %10 = vsyncpa [#allocation3], 0
    %s11 = scalar_lea.sflag [#allocation3], 1
    %12 = vsyncpa %s11, 0
    loop: start=0, step=1, limit=8
    $region2: #{network_forward_test.2} parent=1 // loop_pre_header
      _
    $region3: #{network_forward_test.2} parent=1 // loop_header
      %s14 = sphi 0, %s18
      %p15 = scmp.ge.s32.totalorder %s14, 8
      %s21 = sphi 0, %s33
      %s22 = sphi 0, %s29
      %s23 = sphi 0, %s21
      %s24 = sphi 0, %s22
      %s25 = sphi 0, %s23
      %s26 = sphi 0, %s24
      %s34 = sphi 0, %s34
      %s36 = sphi 0, %s34
      %s37 = sphi 0, %s36
      %s51 = sphi 0, %s37
      %s55 = sphi 0, %s55
      %s57 = sphi 0, %s55
      %s58 = sphi 0, %s57
      %s72 = sphi 0, %s58
      %s80 = sphi 0, %s82
      %s83 = sphi 0, %s80
      %s84 = sphi 0, %s83
      %s100 = sphi 0, %s84
      %s108 = sphi 0, %s110
      %s111 = sphi 0, %s108
      %s112 = sphi 0, %s111
      %s128 = sphi 0, %s112
    $region4: #{network_forward_test.2} parent=1 // loop_header_branch
      %17 = sbr.rel (%p15) target = $region8
    $region5: #{network_forward_test.2} parent=1 // loop_body
      %s19 = ssub.s32 %s14, 1
      %s20 = ssub.s32 %s14, 2
      %s27 = sadd.s32 1, %s22
      %p28 = scmp.ge.s32.totalorder %s27, 3
      %s29 = scalar_select %p28, 0, %s27
      %s30 = sadd.s32 1, %s21
      %s31 = scalar_select %p28, %s30, %s21
      %p32 = scmp.ge.s32.totalorder %s31, 2
      %s33 = scalar_select %p32, 0, %s31
      %s35 = sadd.s32 %s34, 1
      %p38 = scmp.eq.s32.totalorder %s14, 5
      %p39 = scmp.ne.s32.totalorder %s34, %s36
      %p40 = scmp.eq.s32.totalorder %s14, 0
      %p41 = por %p39, %p40
      %p42 = scmp.ne.s32.totalorder %s34, %s36
      %p43 = scmp.eq.s32.totalorder %s19, 5
      %p44 = por %p42, %p43
      %p45 = scmp.ne.s32.totalorder %s36, %s37
      %p46 = scmp.eq.s32.totalorder %s19, 0
      %p47 = por %p45, %p46
      %p48 = scmp.ne.s32.totalorder %s36, %s37
      %p49 = scmp.eq.s32.totalorder %s20, 5
      %p50 = por %p48, %p49
      %p52 = scmp.ne.s32.totalorder %s37, %s51
      %p53 = scmp.eq.s32.totalorder %s20, 0
      %p54 = por %p52, %p53
      %s56 = sadd.s32 %s55, 1
      %p59 = scmp.eq.s32.totalorder %s14, 5
      %p60 = scmp.ne.s32.totalorder %s55, %s57
      %p61 = scmp.eq.s32.totalorder %s14, 0
      %p62 = por %p60, %p61
      %p63 = scmp.ne.s32.totalorder %s55, %s57
      %p64 = scmp.eq.s32.totalorder %s19, 5
      %p65 = por %p63, %p64
      %p66 = scmp.ne.s32.totalorder %s57, %s58
      %p67 = scmp.eq.s32.totalorder %s19, 0
      %p68 = por %p66, %p67
      %p69 = scmp.ne.s32.totalorder %s57, %s58
      %p70 = scmp.eq.s32.totalorder %s20, 5
      %p71 = por %p69, %p70
      %p73 = scmp.ne.s32.totalorder %s58, %s72
      %p74 = scmp.eq.s32.totalorder %s20, 0
      %p75 = por %p73, %p74
      %s76 = ssub.s32 %s21, %s33
      %s77 = ssub.s32 %s22, %s29
      %s78 = sor.u32 %s76, %s77
      %p79 = scmp.eq.s32.totalorder %s78, 0
      %s81 = sadd.s32 %s80, 1
      %s82 = scalar_select %p79, %s80, %s81
      %p85 = pneg %p79
      %p86 = scmp.eq.s32.totalorder %s14, 5
      %p87 = por %p85, %p86
      %p88 = scmp.ne.s32.totalorder %s80, %s83
      %p89 = scmp.eq.s32.totalorder %s14, 0
      %p90 = por %p88, %p89
      %p91 = scmp.ne.s32.totalorder %s80, %s83
      %p92 = scmp.eq.s32.totalorder %s19, 5
      %p93 = por %p91, %p92
      %p94 = scmp.ne.s32.totalorder %s83, %s84
      %p95 = scmp.eq.s32.totalorder %s19, 0
      %p96 = por %p94, %p95
      %p97 = scmp.ne.s32.totalorder %s83, %s84
      %p98 = scmp.eq.s32.totalorder %s20, 5
      %p99 = por %p97, %p98
      %p101 = scmp.ne.s32.totalorder %s84, %s100
      %p102 = scmp.eq.s32.totalorder %s20, 0
      %p103 = por %p101, %p102
      %s104 = ssub.s32 %s21, %s33
      %s105 = ssub.s32 %s22, %s29
      %s106 = sor.u32 %s104, %s105
      %p107 = scmp.eq.s32.totalorder %s106, 0
      %s109 = sadd.s32 %s108, 1
      %s110 = scalar_select %p107, %s108, %s109
      %p113 = pneg %p107
      %p114 = scmp.eq.s32.totalorder %s14, 5
      %p115 = por %p113, %p114
      %p116 = scmp.ne.s32.totalorder %s108, %s111
      %p117 = scmp.eq.s32.totalorder %s14, 0
      %p118 = por %p116, %p117
      %p119 = scmp.ne.s32.totalorder %s108, %s111
      %p120 = scmp.eq.s32.totalorder %s19, 5
      %p121 = por %p119, %p120
      %p122 = scmp.ne.s32.totalorder %s111, %s112
      %p123 = scmp.eq.s32.totalorder %s19, 0
      %p124 = por %p122, %p123
      %p125 = scmp.ne.s32.totalorder %s111, %s112
      %p126 = scmp.eq.s32.totalorder %s20, 5
      %p127 = por %p125, %p126
      %p129 = scmp.ne.s32.totalorder %s112, %s128
      %p130 = scmp.eq.s32.totalorder %s20, 0
      %p131 = por %p129, %p130
      %p132 = scmp.le.s32.totalorder 1, %s14
      %p133 = scmp.lt.s32.totalorder %s14, 7
      %p134 = pnand %p132, %p133
      %p135 = pneg %p134
      // Predicated region
      $region9: #{network_forward_test.2} parent=5 // pred_check
        _
      $region10: #{network_forward_test.2} parent=5 // pred_check_branch
        %137 = sbr.rel (%p134) target = $region12
      $region11: #{network_forward_test.2} parent=5 // pred_region
        %s138 = ssub.s32 %s14, 1
        // Predicated region
        $region13: #{network_forward_test.2} parent=11 // pred_check
          %p139 = pneg %p47
        $region14: #{network_forward_test.2} parent=11 // pred_check_branch
          %141 = sbr.rel (%p139) target = $region16
        $region15: #{network_forward_test.2} parent=11 // pred_region
          %s143 = ssub.s32 16, 16
          %144 = vsyncadd [#allocation4], %s143
          %s146 = sshll.u32 %s0, 4
          %s147 = int_to_ptr.vmem [resolvable:$true] %s146
          %149 = dma.vmem_to_smem %s147, 16, [#allocation2], [#allocation4]
        $region16: #{network_forward_test.2} parent=11 // pred_fallthru
          _
        // Predicated region
        $region17: #{network_forward_test.2} parent=11 // pred_check
          %p150 = pneg %p68
        $region18: #{network_forward_test.2} parent=11 // pred_check_branch
          %152 = sbr.rel (%p150) target = $region20
        $region19: #{network_forward_test.2} parent=11 // pred_region
          %s154 = ssub.s32 16, 16
          %155 = vsyncadd [#allocation6], %s154
          %s157 = sshll.u32 %s1, 4
          %s158 = int_to_ptr.vmem [resolvable:$true] %s157
          %160 = dma.vmem_to_smem %s158, 16, [#allocation5], [#allocation6]
        $region20: #{network_forward_test.2} parent=11 // pred_fallthru
          _
      $region12: #{network_forward_test.2} parent=5 // pred_fallthru
        _
      %p161 = scmp.lt.s32.totalorder %s14, 6
      // Predicated region
      $region21: #{network_forward_test.2} parent=5 // pred_check
        %p162 = pneg %p161
      $region22: #{network_forward_test.2} parent=5 // pred_check_branch
        %164 = sbr.rel (%p162) target = $region24
      $region23: #{network_forward_test.2} parent=5 // pred_region
        // Predicated region
        $region25: #{network_forward_test.2} parent=23 // pred_check
          %p165 = pneg %p90
        $region26: #{network_forward_test.2} parent=23 // pred_check_branch
          %167 = sbr.rel (%p165) target = $region28
        $region27: #{network_forward_test.2} parent=23 // pred_region
          %p168 = scmp.lt.s32.totalorder %s21, 1
          %s169 = scalar_select %p168, %s21, 1
          %p170 = scmp.lt.s32.totalorder %s22, 2
          %s171 = scalar_select %p170, %s22, 2
          %s172 = smul.addr %s171, 4
          %s173 = smul.addr %s169, 12
          %s174 = sadd.s32 %s172, %s173
          %s175 = smul.addr %s174, 8
          %s176 = scalar_lea.vmem %s2, %s175
        $region28: #{network_forward_test.2} parent=23 // pred_fallthru
          _
      $region24: #{network_forward_test.2} parent=5 // pred_fallthru
        _
      %p177 = scmp.le.s32.totalorder 1, %s14
      %p178 = scmp.lt.s32.totalorder %s14, 7
      %p179 = pnand %p177, %p178
      %p180 = pneg %p179
      // Predicated region
      $region29: #{network_forward_test.2} parent=5 // pred_check
        _
      $region30: #{network_forward_test.2} parent=5 // pred_check_branch
        %182 = sbr.rel (%p179) target = $region32
      $region31: #{network_forward_test.2} parent=5 // pred_region
        %s183 = ssub.s32 %s14, 1
        // Predicated region
        $region33: #{network_forward_test.2} parent=31 // pred_check
          %p184 = pneg %p47
        $region34: #{network_forward_test.2} parent=31 // pred_check_branch
          %186 = sbr.rel (%p184) target = $region36
        $region35: #{network_forward_test.2} parent=31 // pred_region
          %187 = dma.done [#allocation4], 16
        $region36: #{network_forward_test.2} parent=31 // pred_fallthru
          _
        // Predicated region
        $region37: #{network_forward_test.2} parent=31 // pred_check
          %p188 = pneg %p68
        $region38: #{network_forward_test.2} parent=31 // pred_check_branch
          %190 = sbr.rel (%p188) target = $region40
        $region39: #{network_forward_test.2} parent=31 // pred_region
          %191 = dma.done [#allocation6], 16
        $region40: #{network_forward_test.2} parent=31 // pred_fallthru
          _
        %192 = sfence
        %p193 = pneg %p47
        %p194 = pneg %p44
        %p195 = pneg %p68
        %p196 = pneg %p65
        %p197 = scmp.lt.s32.totalorder %s23, 1
        %s198 = scalar_select %p197, %s23, 1
        %p199 = scmp.lt.s32.totalorder %s24, 2
        %s200 = scalar_select %p199, %s24, 2
        %s201 = smul.addr %s200, 4
        %s202 = smul.addr %s198, 12
        %s203 = sadd.s32 %s201, %s202
        %s204 = smul.addr %s203, 8
        %s205 = scalar_lea.vmem %s2, %s204
        %p206 = pneg %p96
        %p207 = pneg %p93
        %p208 = pneg %p124
        %p209 = pneg %p121
        %s210 = sand.u32 %s111, 1
        %s211 = scalar_lea.sflag [#allocation3], %s210
        %s212 = sand.u32 %s111, 1
        %s213 = smul.addr %s212, 64
        %s214 = scalar_lea.vmem [#allocation7], %s213
        %p215 = scmp.lt.s32.totalorder %s23, 1
        %s216 = scalar_select %p215, %s23, 1
        %p217 = scmp.lt.s32.totalorder %s24, 2
        %s218 = scalar_select %p217, %s24, 2
        %s219 = smul.addr %s218, 4
        %s220 = smul.addr %s216, 12
        %s221 = sadd.s32 %s219, %s220
        %s222 = smul.addr %s221, 8
        %s223 = scalar_lea.vmem %s2, %s222
        %s224 = sld [smem:[#allocation2 + %s24]]
        %s225 = sld [smem:[#allocation5 + %s24]]
        %vm226 = vcmask 523264
        %227 = vst.msk [vmem:[%s214] sm:$0xff] %vm226, 0.0
        %228 = vst.msk [vmem:[%s214 + $0x8] sm:$0xff] %vm226, 0.0
        %229 = vst.msk [vmem:[%s214 + $0x10] sm:$0xff] %vm226, 0.0
        %230 = vst.msk [vmem:[%s214 + $0x18] sm:$0xff] %vm226, 0.0
        %231 = vst.msk [vmem:[%s214 + $0x20] sm:$0xff] %vm226, 0.0
        %232 = vst.msk [vmem:[%s214 + $0x28] sm:$0xff] %vm226, 0.0
        %233 = vst.msk [vmem:[%s214 + $0x30] sm:$0xff] %vm226, 0.0
        %234 = vst.msk [vmem:[%s214 + $0x38] sm:$0xff] %vm226, 0.0
        %v235 = vld [vmem:[%s223] sm:$0xff]
        %v236 = vld [vmem:[%s223 + $0x8] sm:$0xff]
        %v237 = vld [vmem:[%s223 + $0x10] sm:$0xff]
        %v238 = vld [vmem:[%s223 + $0x18] sm:$0xff]
        %v239 = vstv %s224
        %v240 = vsub.f32 %v235, %v239
        %v241 = vsub.f32 %v236, %v239
        %v242 = vsub.f32 %v237, %v239
        %v243 = vsub.f32 %v238, %v239
        %v244 = vstv %s225
        %v245 = vmul.f32 %v240, %v244
        %v246 = vmul.f32 %v241, %v244
        %v247 = vmul.f32 %v242, %v244
        %v248 = vmul.f32 %v243, %v244
        %vm249 = vcmask 392192
        %250 = vst.msk [vmem:[%s214] sm:$0xff] %vm249, %v245
        %251 = vst.msk [vmem:[%s214 + $0x8] sm:$0xff] %vm249, %v246
        %252 = vst.msk [vmem:[%s214 + $0x10] sm:$0xff] %vm249, %v247
        %253 = vst.msk [vmem:[%s214 + $0x18] sm:$0xff] %vm249, %v248
        %s254 = sand.u32 %s111, 1
        %s255 = scalar_lea.sflag [#allocation3], %s254
        %s256 = sand.u32 %s111, 1
        %s257 = smul.addr %s256, 64
        %s258 = scalar_lea.vmem [#allocation7], %s257
        // Predicated region
        $region41: #{network_forward_test.2} parent=31 // pred_check
          %p259 = pneg %p121
        $region42: #{network_forward_test.2} parent=31 // pred_check_branch
          %261 = sbr.rel (%p259) target = $region44
        $region43: #{network_forward_test.2} parent=31 // pred_region
          %s263 = ssub.s32 1024, 1024
          %264 = vsyncadd %s255, %s263
          %s265 = smul.addr %s24, 8
          %s266 = smul.addr %s23, 24
          %s267 = sadd.s32 %s265, %s266
          %s268 = smul.addr %s267, 128
          %s269 = scalar_lea.hbm %s3, %s268
          %s270 = sshll.u32 %s258, 4
          %s271 = int_to_ptr.vmem [resolvable:$true] %s270
          %276 = dma.vmem_to_hbm [thread:$0]  %s271, 1024, %s269, %s255, 128, 128, 8
        $region44: #{network_forward_test.2} parent=31 // pred_fallthru
          _
      $region32: #{network_forward_test.2} parent=5 // pred_fallthru
        _
      %p277 = scmp.le.s32.totalorder 2, %s14
      // Predicated region
      $region45: #{network_forward_test.2} parent=5 // pred_check
        %p278 = pneg %p277
      $region46: #{network_forward_test.2} parent=5 // pred_check_branch
        %280 = sbr.rel (%p278) target = $region48
      $region47: #{network_forward_test.2} parent=5 // pred_region
        %s281 = ssub.s32 %s14, 2
        // Predicated region
        $region49: #{network_forward_test.2} parent=47 // pred_check
          %p282 = pneg %p127
        $region50: #{network_forward_test.2} parent=47 // pred_check_branch
          %284 = sbr.rel (%p282) target = $region52
        $region51: #{network_forward_test.2} parent=47 // pred_region
          %s285 = sand.u32 %s112, 1
          %s286 = scalar_lea.sflag [#allocation3], %s285
          %s287 = sand.u32 %s112, 1
          %s288 = smul.addr %s287, 64
          %s289 = scalar_lea.vmem [#allocation7], %s288
          %290 = dma.done %s286, 1024
        $region52: #{network_forward_test.2} parent=47 // pred_fallthru
          _
      $region48: #{network_forward_test.2} parent=5 // pred_fallthru
        _
    $region6: #{network_forward_test.2} parent=1 // loop_footer
      %s18 = sadd.s32 1, %s14
    $region7: #{network_forward_test.2} parent=1 // loop_footer_branch
      %13 = sbr.rel target = $region3
    $region8: #{network_forward_test.2} parent=1 // loop_exit
      _
    %291 = vsyncpa [#allocation3], 1
    %s292 = scalar_lea.sflag [#allocation3], 1
    %293 = vsyncpa %s292, 1
    %294 = vsyncpa [#allocation4], 1
    %s295 = scalar_lea.sflag [#allocation4], 1
    %296 = vsyncpa %s295, 1
    %297 = vsyncpa [#allocation6], 1

// kernel: network_forward_test.3
$region0: #{network_forward_test.3}
  #allocation0 [shape = 'u32[]', space=smem, size = 0x4, offset = 0x4, fixed_abs, tag = 'smem constant byte address 0x4 - core index']
  #allocation1 [shape = 'u32[144,128]{1,0:T(1,128)}', space=vmem, size = 0x12000, scoped, tag = 'internal scratch']
  #allocation2 [shape = 'f32[128,256]{1,0:T(8,128)}', space=vmem, size = 0x20000, scoped, tag = 'scratch operand']
  #allocation3 [shape = 'f32[128,256]{1,0:T(8,128)}', space=vmem, size = 0x20000, scoped, tag = 'scratch operand']
  %s0 = inlined_call_operand.vmem [shape: bf16[128,3584], index: 0, kind: input, shape index: {}]
  %s1 = inlined_call_operand.vmem [shape: bf16[3584,256], index: 1, kind: input, shape index: {}]
  %s2 = inlined_call_operand.vmem [shape: bf16[3584,256], index: 2, kind: input, shape index: {}]
  %s3 = inlined_call_operand.vmem [shape: f32[1,256], index: 3, kind: input, shape index: {}]
  %s4 = inlined_call_operand.vmem [shape: bf16[256,256], index: 4, kind: input, shape index: {}]
  %s5 = inlined_call_operand.vmem [shape: f32[1,256], index: 5, kind: input, shape index: {}]
  %s6 = inlined_call_operand.vmem [shape: f32[1,256], index: 6, kind: input, shape index: {}]
  %s7 = inlined_call_operand.vmem [shape: bf16[256,256], index: 7, kind: input, shape index: {}]
  %s8 = inlined_call_operand.vmem [shape: f32[1,256], index: 8, kind: input, shape index: {}]
  %s9 = inlined_call_operand.vmem [shape: bf16[256,128], index: 9, kind: input, shape index: {}]
  %s10 = inlined_call_operand.vmem [shape: f32[1,128], index: 10, kind: input, shape index: {}]
  %s11 = inlined_call_operand.vmem [shape: bf16[256,32], index: 11, kind: input, shape index: {}]
  %s12 = inlined_call_operand.vmem [shape: f32[1,32], index: 12, kind: input, shape index: {}]
  %s13 = inlined_call_operand.vmem [shape: f32[128,5], index: 13, kind: input, shape index: {}]
  %s14 = inlined_call_operand.vmem [shape: f32[128,128], index: 14, kind: output, shape index: {}]
  %s15 = sld [smem:[#allocation0]]
  $region123: #{network_forward_test.3} parent=0
    _
  %s17 = ssub.s32 1, %s15
  %s18 = scalar_select 0, %s17, %s15
  $region1: #{network_forward_test.3} parent=0
    #allocation4 [shape = 'u8[458752]{0}', space=vmem, size = 0x70000, scoped, tag = 'input window, operand 0']
    loop: start=0, step=1, limit=6
    $region2: #{network_forward_test.3} parent=1 // loop_pre_header
      _
    $region3: #{network_forward_test.3} parent=1 // loop_header
      %s20 = sphi 0, %s24
      %p21 = scmp.ge.s32.totalorder %s20, 6
      %s30 = sphi 0, %s32
      %s33 = sphi 0, %s30
      %s34 = sphi 0, %s33
      %s50 = sphi 0, %s34
      %s56 = sphi 0, %s58
      %s59 = sphi 0, %s56
      %s60 = sphi 0, %s59
      %s76 = sphi 0, %s60
      %s82 = sphi 0, %s84
      %s85 = sphi 0, %s82
      %s86 = sphi 0, %s85
      %s102 = sphi 0, %s86
      %s106 = sphi 0, %s106
      %s108 = sphi 0, %s106
      %s109 = sphi 0, %s108
      %s123 = sphi 0, %s109
      %s127 = sphi 0, %s127
      %s129 = sphi 0, %s127
      %s130 = sphi 0, %s129
      %s144 = sphi 0, %s130
      %s148 = sphi 0, %s148
      %s150 = sphi 0, %s148
      %s151 = sphi 0, %s150
      %s165 = sphi 0, %s151
      %s169 = sphi 0, %s169
      %s171 = sphi 0, %s169
      %s172 = sphi 0, %s171
      %s186 = sphi 0, %s172
      %s190 = sphi 0, %s190
      %s192 = sphi 0, %s190
      %s193 = sphi 0, %s192
      %s207 = sphi 0, %s193
      %s211 = sphi 0, %s211
      %s213 = sphi 0, %s211
      %s214 = sphi 0, %s213
      %s228 = sphi 0, %s214
      %s232 = sphi 0, %s232
      %s234 = sphi 0, %s232
      %s235 = sphi 0, %s234
      %s249 = sphi 0, %s235
      %s253 = sphi 0, %s253
      %s255 = sphi 0, %s253
      %s256 = sphi 0, %s255
      %s270 = sphi 0, %s256
      %s274 = sphi 0, %s274
      %s276 = sphi 0, %s274
      %s277 = sphi 0, %s276
      %s291 = sphi 0, %s277
      %s295 = sphi 0, %s295
      %s297 = sphi 0, %s295
      %s298 = sphi 0, %s297
      %s312 = sphi 0, %s298
      %s316 = sphi 0, %s316
      %s318 = sphi 0, %s316
      %s319 = sphi 0, %s318
      %s333 = sphi 0, %s319
      %s337 = sphi 0, %s337
      %s339 = sphi 0, %s337
      %s340 = sphi 0, %s339
      %s354 = sphi 0, %s340
    $region4: #{network_forward_test.3} parent=1 // loop_header_branch
      %23 = sbr.rel (%p21) target = $region8
    $region5: #{network_forward_test.3} parent=1 // loop_body
      %s25 = ssub.s32 %s20, 1
      %s26 = ssub.s32 %s20, 2
      %s27 = sadd.s32 %s20, 1
      %s28 = ssub.s32 %s20, %s27
      %p29 = scmp.eq.s32.totalorder %s28, 0
      %s31 = sadd.s32 %s30, 1
      %s32 = scalar_select %p29, %s30, %s31
      %p35 = pneg %p29
      %p36 = scmp.eq.s32.totalorder %s20, 3
      %p37 = por %p35, %p36
      %p38 = scmp.ne.s32.totalorder %s30, %s33
      %p39 = scmp.eq.s32.totalorder %s20, 0
      %p40 = por %p38, %p39
      %p41 = scmp.ne.s32.totalorder %s30, %s33
      %p42 = scmp.eq.s32.totalorder %s25, 3
      %p43 = por %p41, %p42
      %p44 = scmp.ne.s32.totalorder %s33, %s34
      %p45 = scmp.eq.s32.totalorder %s25, 0
      %p46 = por %p44, %p45
      %p47 = scmp.ne.s32.totalorder %s33, %s34
      %p48 = scmp.eq.s32.totalorder %s26, 3
      %p49 = por %p47, %p48
      %p51 = scmp.ne.s32.totalorder %s34, %s50
      %p52 = scmp.eq.s32.totalorder %s26, 0
      %p53 = por %p51, %p52
      %s54 = ssub.s32 %s20, %s27
      %p55 = scmp.eq.s32.totalorder %s54, 0
      %s57 = sadd.s32 %s56, 1
      %s58 = scalar_select %p55, %s56, %s57
      %p61 = pneg %p55
      %p62 = scmp.eq.s32.totalorder %s20, 3
      %p63 = por %p61, %p62
      %p64 = scmp.ne.s32.totalorder %s56, %s59
      %p65 = scmp.eq.s32.totalorder %s20, 0
      %p66 = por %p64, %p65
      %p67 = scmp.ne.s32.totalorder %s56, %s59
      %p68 = scmp.eq.s32.totalorder %s25, 3
      %p69 = por %p67, %p68
      %p70 = scmp.ne.s32.totalorder %s59, %s60
      %p71 = scmp.eq.s32.totalorder %s25, 0
      %p72 = por %p70, %p71
      %p73 = scmp.ne.s32.totalorder %s59, %s60
      %p74 = scmp.eq.s32.totalorder %s26, 3
      %p75 = por %p73, %p74
      %p77 = scmp.ne.s32.totalorder %s60, %s76
      %p78 = scmp.eq.s32.totalorder %s26, 0
      %p79 = por %p77, %p78
      %s80 = ssub.s32 %s20, %s27
      %p81 = scmp.eq.s32.totalorder %s80, 0
      %s83 = sadd.s32 %s82, 1
      %s84 = scalar_select %p81, %s82, %s83
      %p87 = pneg %p81
      %p88 = scmp.eq.s32.totalorder %s20, 3
      %p89 = por %p87, %p88
      %p90 = scmp.ne.s32.totalorder %s82, %s85
      %p91 = scmp.eq.s32.totalorder %s20, 0
      %p92 = por %p90, %p91
      %p93 = scmp.ne.s32.totalorder %s82, %s85
      %p94 = scmp.eq.s32.totalorder %s25, 3
      %p95 = por %p93, %p94
      %p96 = scmp.ne.s32.totalorder %s85, %s86
      %p97 = scmp.eq.s32.totalorder %s25, 0
      %p98 = por %p96, %p97
      %p99 = scmp.ne.s32.totalorder %s85, %s86
      %p100 = scmp.eq.s32.totalorder %s26, 3
      %p101 = por %p99, %p100
      %p103 = scmp.ne.s32.totalorder %s86, %s102
      %p104 = scmp.eq.s32.totalorder %s26, 0
      %p105 = por %p103, %p104
      %s107 = sadd.s32 %s106, 1
      %p110 = scmp.eq.s32.totalorder %s20, 3
      %p111 = scmp.ne.s32.totalorder %s106, %s108
      %p112 = scmp.eq.s32.totalorder %s20, 0
      %p113 = por %p111, %p112
      %p114 = scmp.ne.s32.totalorder %s106, %s108
      %p115 = scmp.eq.s32.totalorder %s25, 3
      %p116 = por %p114, %p115
      %p117 = scmp.ne.s32.totalorder %s108, %s109
      %p118 = scmp.eq.s32.totalorder %s25, 0
      %p119 = por %p117, %p118
      %p120 = scmp.ne.s32.totalorder %s108, %s109
      %p121 = scmp.eq.s32.totalorder %s26, 3
      %p122 = por %p120, %p121
      %p124 = scmp.ne.s32.totalorder %s109, %s123
      %p125 = scmp.eq.s32.totalorder %s26, 0
      %p126 = por %p124, %p125
      %s128 = sadd.s32 %s127, 1
      %p131 = scmp.eq.s32.totalorder %s20, 3
      %p132 = scmp.ne.s32.totalorder %s127, %s129
      %p133 = scmp.eq.s32.totalorder %s20, 0
      %p134 = por %p132, %p133
      %p135 = scmp.ne.s32.totalorder %s127, %s129
      %p136 = scmp.eq.s32.totalorder %s25, 3
      %p137 = por %p135, %p136
      %p138 = scmp.ne.s32.totalorder %s129, %s130
      %p139 = scmp.eq.s32.totalorder %s25, 0
      %p140 = por %p138, %p139
      %p141 = scmp.ne.s32.totalorder %s129, %s130
      %p142 = scmp.eq.s32.totalorder %s26, 3
      %p143 = por %p141, %p142
      %p145 = scmp.ne.s32.totalorder %s130, %s144
      %p146 = scmp.eq.s32.totalorder %s26, 0
      %p147 = por %p145, %p146
      %s149 = sadd.s32 %s148, 1
      %p152 = scmp.eq.s32.totalorder %s20, 3
      %p153 = scmp.ne.s32.totalorder %s148, %s150
      %p154 = scmp.eq.s32.totalorder %s20, 0
      %p155 = por %p153, %p154
      %p156 = scmp.ne.s32.totalorder %s148, %s150
      %p157 = scmp.eq.s32.totalorder %s25, 3
      %p158 = por %p156, %p157
      %p159 = scmp.ne.s32.totalorder %s150, %s151
      %p160 = scmp.eq.s32.totalorder %s25, 0
      %p161 = por %p159, %p160
      %p162 = scmp.ne.s32.totalorder %s150, %s151
      %p163 = scmp.eq.s32.totalorder %s26, 3
      %p164 = por %p162, %p163
      %p166 = scmp.ne.s32.totalorder %s151, %s165
      %p167 = scmp.eq.s32.totalorder %s26, 0
      %p168 = por %p166, %p167
      %s170 = sadd.s32 %s169, 1
      %p173 = scmp.eq.s32.totalorder %s20, 3
      %p174 = scmp.ne.s32.totalorder %s169, %s171
      %p175 = scmp.eq.s32.totalorder %s20, 0
      %p176 = por %p174, %p175
      %p177 = scmp.ne.s32.totalorder %s169, %s171
      %p178 = scmp.eq.s32.totalorder %s25, 3
      %p179 = por %p177, %p178
      %p180 = scmp.ne.s32.totalorder %s171, %s172
      %p181 = scmp.eq.s32.totalorder %s25, 0
      %p182 = por %p180, %p181
      %p183 = scmp.ne.s32.totalorder %s171, %s172
      %p184 = scmp.eq.s32.totalorder %s26, 3
      %p185 = por %p183, %p184
      %p187 = scmp.ne.s32.totalorder %s172, %s186
      %p188 = scmp.eq.s32.totalorder %s26, 0
      %p189 = por %p187, %p188
      %s191 = sadd.s32 %s190, 1
      %p194 = scmp.eq.s32.totalorder %s20, 3
      %p195 = scmp.ne.s32.totalorder %s190, %s192
      %p196 = scmp.eq.s32.totalorder %s20, 0
      %p197 = por %p195, %p196
      %p198 = scmp.ne.s32.totalorder %s190, %s192
      %p199 = scmp.eq.s32.totalorder %s25, 3
      %p200 = por %p198, %p199
      %p201 = scmp.ne.s32.totalorder %s192, %s193
      %p202 = scmp.eq.s32.totalorder %s25, 0
      %p203 = por %p201, %p202
      %p204 = scmp.ne.s32.totalorder %s192, %s193
      %p205 = scmp.eq.s32.totalorder %s26, 3
      %p206 = por %p204, %p205
      %p208 = scmp.ne.s32.totalorder %s193, %s207
      %p209 = scmp.eq.s32.totalorder %s26, 0
      %p210 = por %p208, %p209
      %s212 = sadd.s32 %s211, 1
      %p215 = scmp.eq.s32.totalorder %s20, 3
      %p216 = scmp.ne.s32.totalorder %s211, %s213
      %p217 = scmp.eq.s32.totalorder %s20, 0
      %p218 = por %p216, %p217
      %p219 = scmp.ne.s32.totalorder %s211, %s213
      %p220 = scmp.eq.s32.totalorder %s25, 3
      %p221 = por %p219, %p220
      %p222 = scmp.ne.s32.totalorder %s213, %s214
      %p223 = scmp.eq.s32.totalorder %s25, 0
      %p224 = por %p222, %p223
      %p225 = scmp.ne.s32.totalorder %s213, %s214
      %p226 = scmp.eq.s32.totalorder %s26, 3
      %p227 = por %p225, %p226
      %p229 = scmp.ne.s32.totalorder %s214, %s228
      %p230 = scmp.eq.s32.totalorder %s26, 0
      %p231 = por %p229, %p230
      %s233 = sadd.s32 %s232, 1
      %p236 = scmp.eq.s32.totalorder %s20, 3
      %p237 = scmp.ne.s32.totalorder %s232, %s234
      %p238 = scmp.eq.s32.totalorder %s20, 0
      %p239 = por %p237, %p238
      %p240 = scmp.ne.s32.totalorder %s232, %s234
      %p241 = scmp.eq.s32.totalorder %s25, 3
      %p242 = por %p240, %p241
      %p243 = scmp.ne.s32.totalorder %s234, %s235
      %p244 = scmp.eq.s32.totalorder %s25, 0
      %p245 = por %p243, %p244
      %p246 = scmp.ne.s32.totalorder %s234, %s235
      %p247 = scmp.eq.s32.totalorder %s26, 3
      %p248 = por %p246, %p247
      %p250 = scmp.ne.s32.totalorder %s235, %s249
      %p251 = scmp.eq.s32.totalorder %s26, 0
      %p252 = por %p250, %p251
      %s254 = sadd.s32 %s253, 1
      %p257 = scmp.eq.s32.totalorder %s20, 3
      %p258 = scmp.ne.s32.totalorder %s253, %s255
      %p259 = scmp.eq.s32.totalorder %s20, 0
      %p260 = por %p258, %p259
      %p261 = scmp.ne.s32.totalorder %s253, %s255
      %p262 = scmp.eq.s32.totalorder %s25, 3
      %p263 = por %p261, %p262
      %p264 = scmp.ne.s32.totalorder %s255, %s256
      %p265 = scmp.eq.s32.totalorder %s25, 0
      %p266 = por %p264, %p265
      %p267 = scmp.ne.s32.totalorder %s255, %s256
      %p268 = scmp.eq.s32.totalorder %s26, 3
      %p269 = por %p267, %p268
      %p271 = scmp.ne.s32.totalorder %s256, %s270
      %p272 = scmp.eq.s32.totalorder %s26, 0
      %p273 = por %p271, %p272
      %s275 = sadd.s32 %s274, 1
      %p278 = scmp.eq.s32.totalorder %s20, 3
      %p279 = scmp.ne.s32.totalorder %s274, %s276
      %p280 = scmp.eq.s32.totalorder %s20, 0
      %p281 = por %p279, %p280
      %p282 = scmp.ne.s32.totalorder %s274, %s276
      %p283 = scmp.eq.s32.totalorder %s25, 3
      %p284 = por %p282, %p283
      %p285 = scmp.ne.s32.totalorder %s276, %s277
      %p286 = scmp.eq.s32.totalorder %s25, 0
      %p287 = por %p285, %p286
      %p288 = scmp.ne.s32.totalorder %s276, %s277
      %p289 = scmp.eq.s32.totalorder %s26, 3
      %p290 = por %p288, %p289
      %p292 = scmp.ne.s32.totalorder %s277, %s291
      %p293 = scmp.eq.s32.totalorder %s26, 0
      %p294 = por %p292, %p293
      %s296 = sadd.s32 %s295, 1
      %p299 = scmp.eq.s32.totalorder %s20, 3
      %p300 = scmp.ne.s32.totalorder %s295, %s297
      %p301 = scmp.eq.s32.totalorder %s20, 0
      %p302 = por %p300, %p301
      %p303 = scmp.ne.s32.totalorder %s295, %s297
      %p304 = scmp.eq.s32.totalorder %s25, 3
      %p305 = por %p303, %p304
      %p306 = scmp.ne.s32.totalorder %s297, %s298
      %p307 = scmp.eq.s32.totalorder %s25, 0
      %p308 = por %p306, %p307
      %p309 = scmp.ne.s32.totalorder %s297, %s298
      %p310 = scmp.eq.s32.totalorder %s26, 3
      %p311 = por %p309, %p310
      %p313 = scmp.ne.s32.totalorder %s298, %s312
      %p314 = scmp.eq.s32.totalorder %s26, 0
      %p315 = por %p313, %p314
      %s317 = sadd.s32 %s316, 1
      %p320 = scmp.eq.s32.totalorder %s20, 3
      %p321 = scmp.ne.s32.totalorder %s316, %s318
      %p322 = scmp.eq.s32.totalorder %s20, 0
      %p323 = por %p321, %p322
      %p324 = scmp.ne.s32.totalorder %s316, %s318
      %p325 = scmp.eq.s32.totalorder %s25, 3
      %p326 = por %p324, %p325
      %p327 = scmp.ne.s32.totalorder %s318, %s319
      %p328 = scmp.eq.s32.totalorder %s25, 0
      %p329 = por %p327, %p328
      %p330 = scmp.ne.s32.totalorder %s318, %s319
      %p331 = scmp.eq.s32.totalorder %s26, 3
      %p332 = por %p330, %p331
      %p334 = scmp.ne.s32.totalorder %s319, %s333
      %p335 = scmp.eq.s32.totalorder %s26, 0
      %p336 = por %p334, %p335
      %s338 = sadd.s32 %s337, 1
      %p341 = scmp.eq.s32.totalorder %s20, 3
      %p342 = scmp.ne.s32.totalorder %s337, %s339
      %p343 = scmp.eq.s32.totalorder %s20, 0
      %p344 = por %p342, %p343
      %p345 = scmp.ne.s32.totalorder %s337, %s339
      %p346 = scmp.eq.s32.totalorder %s25, 3
      %p347 = por %p345, %p346
      %p348 = scmp.ne.s32.totalorder %s339, %s340
      %p349 = scmp.eq.s32.totalorder %s25, 0
      %p350 = por %p348, %p349
      %p351 = scmp.ne.s32.totalorder %s339, %s340
      %p352 = scmp.eq.s32.totalorder %s26, 3
      %p353 = por %p351, %p352
      %p355 = scmp.ne.s32.totalorder %s340, %s354
      %p356 = scmp.eq.s32.totalorder %s26, 0
      %p357 = por %p355, %p356
      %p358 = scmp.le.s32.totalorder 1, %s20
      %p359 = scmp.lt.s32.totalorder %s20, 5
      %p360 = pnand %p358, %p359
      %p361 = pneg %p360
      // Predicated region
      $region9: #{network_forward_test.3} parent=5 // pred_check
        _
      $region10: #{network_forward_test.3} parent=5 // pred_check_branch
        %363 = sbr.rel (%p360) target = $region12
      $region11: #{network_forward_test.3} parent=5 // pred_region
        %s364 = ssub.s32 %s20, 1
        // Predicated region
        $region13: #{network_forward_test.3} parent=11 // pred_check
          %p365 = pneg %p119
        $region14: #{network_forward_test.3} parent=11 // pred_check_branch
          %367 = sbr.rel (%p365) target = $region16
        $region15: #{network_forward_test.3} parent=11 // pred_region
          _
        $region16: #{network_forward_test.3} parent=11 // pred_fallthru
          _
        // Predicated region
        $region17: #{network_forward_test.3} parent=11 // pred_check
          %p368 = pneg %p140
        $region18: #{network_forward_test.3} parent=11 // pred_check_branch
          %370 = sbr.rel (%p368) target = $region20
        $region19: #{network_forward_test.3} parent=11 // pred_region
          _
        $region20: #{network_forward_test.3} parent=11 // pred_fallthru
          _
        // Predicated region
        $region21: #{network_forward_test.3} parent=11 // pred_check
          %p371 = pneg %p161
        $region22: #{network_forward_test.3} parent=11 // pred_check_branch
          %373 = sbr.rel (%p371) target = $region24
        $region23: #{network_forward_test.3} parent=11 // pred_region
          _
        $region24: #{network_forward_test.3} parent=11 // pred_fallthru
          _
        // Predicated region
        $region25: #{network_forward_test.3} parent=11 // pred_check
          %p374 = pneg %p182
        $region26: #{network_forward_test.3} parent=11 // pred_check_branch
          %376 = sbr.rel (%p374) target = $region28
        $region27: #{network_forward_test.3} parent=11 // pred_region
          _
        $region28: #{network_forward_test.3} parent=11 // pred_fallthru
          _
        // Predicated region
        $region29: #{network_forward_test.3} parent=11 // pred_check
          %p377 = pneg %p203
        $region30: #{network_forward_test.3} parent=11 // pred_check_branch
          %379 = sbr.rel (%p377) target = $region32
        $region31: #{network_forward_test.3} parent=11 // pred_region
          _
        $region32: #{network_forward_test.3} parent=11 // pred_fallthru
          _
        // Predicated region
        $region33: #{network_forward_test.3} parent=11 // pred_check
          %p380 = pneg %p224
        $region34: #{network_forward_test.3} parent=11 // pred_check_branch
          %382 = sbr.rel (%p380) target = $region36
        $region35: #{network_forward_test.3} parent=11 // pred_region
          _
        $region36: #{network_forward_test.3} parent=11 // pred_fallthru
          _
        // Predicated region
        $region37: #{network_forward_test.3} parent=11 // pred_check
          %p383 = pneg %p245
        $region38: #{network_forward_test.3} parent=11 // pred_check_branch
          %385 = sbr.rel (%p383) target = $region40
        $region39: #{network_forward_test.3} parent=11 // pred_region
          _
        $region40: #{network_forward_test.3} parent=11 // pred_fallthru
          _
        // Predicated region
        $region41: #{network_forward_test.3} parent=11 // pred_check
          %p386 = pneg %p266
        $region42: #{network_forward_test.3} parent=11 // pred_check_branch
          %388 = sbr.rel (%p386) target = $region44
        $region43: #{network_forward_test.3} parent=11 // pred_region
          _
        $region44: #{network_forward_test.3} parent=11 // pred_fallthru
          _
        // Predicated region
        $region45: #{network_forward_test.3} parent=11 // pred_check
          %p389 = pneg %p287
        $region46: #{network_forward_test.3} parent=11 // pred_check_branch
          %391 = sbr.rel (%p389) target = $region48
        $region47: #{network_forward_test.3} parent=11 // pred_region
          _
        $region48: #{network_forward_test.3} parent=11 // pred_fallthru
          _
        // Predicated region
        $region49: #{network_forward_test.3} parent=11 // pred_check
          %p392 = pneg %p308
        $region50: #{network_forward_test.3} parent=11 // pred_check_branch
          %394 = sbr.rel (%p392) target = $region52
        $region51: #{network_forward_test.3} parent=11 // pred_region
          _
        $region52: #{network_forward_test.3} parent=11 // pred_fallthru
          _
        // Predicated region
        $region53: #{network_forward_test.3} parent=11 // pred_check
          %p395 = pneg %p329
        $region54: #{network_forward_test.3} parent=11 // pred_check_branch
          %397 = sbr.rel (%p395) target = $region56
        $region55: #{network_forward_test.3} parent=11 // pred_region
          _
        $region56: #{network_forward_test.3} parent=11 // pred_fallthru
          _
      $region12: #{network_forward_test.3} parent=5 // pred_fallthru
        _
      %p398 = scmp.lt.s32.totalorder %s20, 4
      // Predicated region
      $region57: #{network_forward_test.3} parent=5 // pred_check
        %p399 = pneg %p398
      $region58: #{network_forward_test.3} parent=5 // pred_check_branch
        %401 = sbr.rel (%p399) target = $region60
      $region59: #{network_forward_test.3} parent=5 // pred_region
        // Predicated region
        $region61: #{network_forward_test.3} parent=59 // pred_check
          %p402 = pneg %p40
        $region62: #{network_forward_test.3} parent=59 // pred_check_branch
          %404 = sbr.rel (%p402) target = $region64
        $region63: #{network_forward_test.3} parent=59 // pred_region
          %s405 = sand.u32 %s30, 1
          %s406 = sand.u32 %s30, 1
          %s407 = smul.addr %s406, 448
          %s408 = scalar_lea.vmem [#allocation4], %s407
          %s409 = smul.u32 7, %s20
          %s410 = smul.addr %s409, 4
          %s411 = scalar_lea.vmem %s0, %s410
          // Predicated region
          $region65: #{network_forward_test.3} parent=63 // pred_check
            _
          $region66: #{network_forward_test.3} parent=63 // pred_check_branch
            %413 = sbr.rel (0) target = $region68
          $region67: #{network_forward_test.3} parent=63 // pred_region
            // Predicated region
            $region69: #{network_forward_test.3} parent=67 // pred_check
              _
            $region70: #{network_forward_test.3} parent=67 // pred_check_branch
              %415 = sbr.rel (0) target = $region72
            $region71: #{network_forward_test.3} parent=67 // pred_region
              %s416 = scalar_lea.vmem %s411, 24
              %s417 = scalar_lea.vmem %s408, 24 [#allocation4]
              loop: start=0, step=1, limit=1
              $region73: #{network_forward_test.3} parent=71 // loop_pre_header
                _
              $region74: #{network_forward_test.3} parent=71 // loop_header
                %s419 = sphi 0, %s423
                %p420 = scmp.ge.s32.totalorder %s419, 1
                %s424 = sphi %s411, %s411
                %s425 = sphi %s408, %s408
              $region75: #{network_forward_test.3} parent=71 // loop_header_branch
                %422 = sbr.rel (%p420) target = $region79
              $region76: #{network_forward_test.3} parent=71 // loop_body
                %v426 = vld [vmem:[%s424] sm:$0xff]
                %427 = vst [vmem:[%s425] sm:$0xff] %v426
                %v428 = vld [vmem:[%s424 + $0x8] sm:$0xff]
                %429 = vst [vmem:[%s425 + $0x8] sm:$0xff] %v428
                %v430 = vld [vmem:[%s424 + $0x10] sm:$0xff]
                %431 = vst [vmem:[%s425 + $0x10] sm:$0xff] %v430
                %v432 = vld [vmem:[%s424 + $0x70] sm:$0xff]
                %433 = vst [vmem:[%s425 + $0x1c] sm:$0xff] %v432
                %v434 = vld [vmem:[%s424 + $0x78] sm:$0xff]
                %435 = vst [vmem:[%s425 + $0x24] sm:$0xff] %v434
                %v436 = vld [vmem:[%s424 + $0x80] sm:$0xff]
                %437 = vst [vmem:[%s425 + $0x2c] sm:$0xff] %v436
                %v438 = vld [vmem:[%s424 + $0xe0] sm:$0xff]
                %439 = vst [vmem:[%s425 + $0x38] sm:$0xff] %v438
                %v440 = vld [vmem:[%s424 + $0xe8] sm:$0xff]
                %441 = vst [vmem:[%s425 + $0x40] sm:$0xff] %v440
                %v442 = vld [vmem:[%s424 + $0xf0] sm:$0xff]
                %443 = vst [vmem:[%s425 + $0x48] sm:$0xff] %v442
                %v444 = vld [vmem:[%s424 + $0x150] sm:$0xff]
                %445 = vst [vmem:[%s425 + $0x54] sm:$0xff] %v444
                %v446 = vld [vmem:[%s424 + $0x158] sm:$0xff]
                %447 = vst [vmem:[%s425 + $0x5c] sm:$0xff] %v446
                %v448 = vld [vmem:[%s424 + $0x160] sm:$0xff]
                %449 = vst [vmem:[%s425 + $0x64] sm:$0xff] %v448
                %v450 = vld [vmem:[%s424 + $0x1c0] sm:$0xff]
                %451 = vst [vmem:[%s425 + $0x70] sm:$0xff] %v450
                %v452 = vld [vmem:[%s424 + $0x1c8] sm:$0xff]
                %453 = vst [vmem:[%s425 + $0x78] sm:$0xff] %v452
                %v454 = vld [vmem:[%s424 + $0x1d0] sm:$0xff]
                %455 = vst [vmem:[%s425 + $0x80] sm:$0xff] %v454
                %v456 = vld [vmem:[%s424 + $0x230] sm:$0xff]
                %457 = vst [vmem:[%s425 + $0x8c] sm:$0xff] %v456
                %v458 = vld [vmem:[%s424 + $0x238] sm:$0xff]
                %459 = vst [vmem:[%s425 + $0x94] sm:$0xff] %v458
                %v460 = vld [vmem:[%s424 + $0x240] sm:$0xff]
                %461 = vst [vmem:[%s425 + $0x9c] sm:$0xff] %v460
                %v462 = vld [vmem:[%s424 + $0x2a0] sm:$0xff]
                %463 = vst [vmem:[%s425 + $0xa8] sm:$0xff] %v462
                %v464 = vld [vmem:[%s424 + $0x2a8] sm:$0xff]
                %465 = vst [vmem:[%s425 + $0xb0] sm:$0xff] %v464
                %v466 = vld [vmem:[%s424 + $0x2b0] sm:$0xff]
                %467 = vst [vmem:[%s425 + $0xb8] sm:$0xff] %v466
                %v468 = vld [vmem:[%s424 + $0x310] sm:$0xff]
                %469 = vst [vmem:[%s425 + $0xc4] sm:$0xff] %v468
                %v470 = vld [vmem:[%s424 + $0x318] sm:$0xff]
                %471 = vst [vmem:[%s425 + $0xcc] sm:$0xff] %v470
                %v472 = vld [vmem:[%s424 + $0x320] sm:$0xff]
                %473 = vst [vmem:[%s425 + $0xd4] sm:$0xff] %v472
                %v474 = vld [vmem:[%s424 + $0x380] sm:$0xff]
                %475 = vst [vmem:[%s425 + $0xe0] sm:$0xff] %v474
                %v476 = vld [vmem:[%s424 + $0x388] sm:$0xff]
                %477 = vst [vmem:[%s425 + $0xe8] sm:$0xff] %v476
                %v478 = vld [vmem:[%s424 + $0x390] sm:$0xff]
                %479 = vst [vmem:[%s425 + $0xf0] sm:$0xff] %v478
                %v480 = vld [vmem:[%s424 + $0x3f0] sm:$0xff]
                %481 = vst [vmem:[%s425 + $0xfc] sm:$0xff] %v480
                %v482 = vld [vmem:[%s424 + $0x3f8] sm:$0xff]
                %483 = vst [vmem:[%s425 + $0x104] sm:$0xff] %v482
                %v484 = vld [vmem:[%s424 + $0x400] sm:$0xff]
                %485 = vst [vmem:[%s425 + $0x10c] sm:$0xff] %v484
                %v486 = vld [vmem:[%s424 + $0x460] sm:$0xff]
                %487 = vst [vmem:[%s425 + $0x118] sm:$0xff] %v486
                %v488 = vld [vmem:[%s424 + $0x468] sm:$0xff]
                %489 = vst [vmem:[%s425 + $0x120] sm:$0xff] %v488
                %v490 = vld [vmem:[%s424 + $0x470] sm:$0xff]
                %491 = vst [vmem:[%s425 + $0x128] sm:$0xff] %v490
                %v492 = vld [vmem:[%s424 + $0x4d0] sm:$0xff]
                %493 = vst [vmem:[%s425 + $0x134] sm:$0xff] %v492
                %v494 = vld [vmem:[%s424 + $0x4d8] sm:$0xff]
                %495 = vst [vmem:[%s425 + $0x13c] sm:$0xff] %v494
                %v496 = vld [vmem:[%s424 + $0x4e0] sm:$0xff]
                %497 = vst [vmem:[%s425 + $0x144] sm:$0xff] %v496
                %v498 = vld [vmem:[%s424 + $0x540] sm:$0xff]
                %499 = vst [vmem:[%s425 + $0x150] sm:$0xff] %v498
                %v500 = vld [vmem:[%s424 + $0x548] sm:$0xff]
                %501 = vst [vmem:[%s425 + $0x158] sm:$0xff] %v500
                %v502 = vld [vmem:[%s424 + $0x550] sm:$0xff]
                %503 = vst [vmem:[%s425 + $0x160] sm:$0xff] %v502
                %v504 = vld [vmem:[%s424 + $0x5b0] sm:$0xff]
                %505 = vst [vmem:[%s425 + $0x16c] sm:$0xff] %v504
                %v506 = vld [vmem:[%s424 + $0x5b8] sm:$0xff]
                %507 = vst [vmem:[%s425 + $0x174] sm:$0xff] %v506
                %v508 = vld [vmem:[%s424 + $0x5c0] sm:$0xff]
                %509 = vst [vmem:[%s425 + $0x17c] sm:$0xff] %v508
                %v510 = vld [vmem:[%s424 + $0x620] sm:$0xff]
                %511 = vst [vmem:[%s425 + $0x188] sm:$0xff] %v510
                %v512 = vld [vmem:[%s424 + $0x628] sm:$0xff]
                %513 = vst [vmem:[%s425 + $0x190] sm:$0xff] %v512
                %v514 = vld [vmem:[%s424 + $0x630] sm:$0xff]
                %515 = vst [vmem:[%s425 + $0x198] sm:$0xff] %v514
                %v516 = vld [vmem:[%s424 + $0x690] sm:$0xff]
                %517 = vst [vmem:[%s425 + $0x1a4] sm:$0xff] %v516
                %v518 = vld [vmem:[%s424 + $0x698] sm:$0xff]
                %519 = vst [vmem:[%s425 + $0x1ac] sm:$0xff] %v518
                %v520 = vld [vmem:[%s424 + $0x6a0] sm:$0xff]
                %521 = vst [vmem:[%s425 + $0x1b4] sm:$0xff] %v520
              $region77: #{network_forward_test.3} parent=71 // loop_footer
                %s423 = sadd.s32 1, %s419
              $region78: #{network_forward_test.3} parent=71 // loop_footer_branch
                %418 = sbr.rel target = $region74
              $region79: #{network_forward_test.3} parent=71 // loop_exit
                _
              %s523 = ssub.s32 16, 1
              loop: start=0, step=1, limit=1
              $region80: #{network_forward_test.3} parent=71 // loop_pre_header
                _
              $region81: #{network_forward_test.3} parent=71 // loop_header
                %s525 = sphi 0, %s529
                %p526 = scmp.ge.s32.totalorder %s525, 1
                %s530 = sphi %s416, %s416
                %s531 = sphi %s417, %s417
              $region82: #{network_forward_test.3} parent=71 // loop_header_branch
                %528 = sbr.rel (%p526) target = $region86
              $region83: #{network_forward_test.3} parent=71 // loop_body
                %v532 = vld [vmem:[%s530] sm:%s523]
                %533 = vst [vmem:[%s531] sm:%s523] %v532
                %v534 = vld [vmem:[%s530 + $0x70] sm:%s523]
                %535 = vst [vmem:[%s531 + $0x1c] sm:%s523] %v534
                %v536 = vld [vmem:[%s530 + $0xe0] sm:%s523]
                %537 = vst [vmem:[%s531 + $0x38] sm:%s523] %v536
                %v538 = vld [vmem:[%s530 + $0x150] sm:%s523]
                %539 = vst [vmem:[%s531 + $0x54] sm:%s523] %v538
                %v540 = vld [vmem:[%s530 + $0x1c0] sm:%s523]
                %541 = vst [vmem:[%s531 + $0x70] sm:%s523] %v540
                %v542 = vld [vmem:[%s530 + $0x230] sm:%s523]
                %543 = vst [vmem:[%s531 + $0x8c] sm:%s523] %v542
                %v544 = vld [vmem:[%s530 + $0x2a0] sm:%s523]
                %545 = vst [vmem:[%s531 + $0xa8] sm:%s523] %v544
                %v546 = vld [vmem:[%s530 + $0x310] sm:%s523]
                %547 = vst [vmem:[%s531 + $0xc4] sm:%s523] %v546
                %v548 = vld [vmem:[%s530 + $0x380] sm:%s523]
                %549 = vst [vmem:[%s531 + $0xe0] sm:%s523] %v548
                %v550 = vld [vmem:[%s530 + $0x3f0] sm:%s523]
                %551 = vst [vmem:[%s531 + $0xfc] sm:%s523] %v550
                %v552 = vld [vmem:[%s530 + $0x460] sm:%s523]
                %553 = vst [vmem:[%s531 + $0x118] sm:%s523] %v552
                %v554 = vld [vmem:[%s530 + $0x4d0] sm:%s523]
                %555 = vst [vmem:[%s531 + $0x134] sm:%s523] %v554
                %v556 = vld [vmem:[%s530 + $0x540] sm:%s523]
                %557 = vst [vmem:[%s531 + $0x150] sm:%s523] %v556
                %v558 = vld [vmem:[%s530 + $0x5b0] sm:%s523]
                %559 = vst [vmem:[%s531 + $0x16c] sm:%s523] %v558
                %v560 = vld [vmem:[%s530 + $0x620] sm:%s523]
                %561 = vst [vmem:[%s531 + $0x188] sm:%s523] %v560
                %v562 = vld [vmem:[%s530 + $0x690] sm:%s523]
                %563 = vst [vmem:[%s531 + $0x1a4] sm:%s523] %v562
              $region84: #{network_forward_test.3} parent=71 // loop_footer
                %s529 = sadd.s32 1, %s525
              $region85: #{network_forward_test.3} parent=71 // loop_footer_branch
                %524 = sbr.rel target = $region81
              $region86: #{network_forward_test.3} parent=71 // loop_exit
                _
            $region72: #{network_forward_test.3} parent=67 // pred_fallthru
              _
          $region68: #{network_forward_test.3} parent=63 // pred_fallthru
            _
          %564 = vnop
        $region64: #{network_forward_test.3} parent=59 // pred_fallthru
          _
        // Predicated region
        $region87: #{network_forward_test.3} parent=59 // pred_check
          %p565 = pneg %p66
        $region88: #{network_forward_test.3} parent=59 // pred_check_branch
          %567 = sbr.rel (%p565) target = $region90
        $region89: #{network_forward_test.3} parent=59 // pred_region
          %s568 = smul.u32 112, %s20
          %p569 = scmp.lt.s32.totalorder %s568, 447
          %s570 = scalar_select %p569, %s568, 447
          %s571 = smul.addr %s570, 2
          %s572 = smul.addr %s571, 4
          %s573 = scalar_lea.vmem %s1, %s572
          %s574 = smul.u32 112, %s20
        $region90: #{network_forward_test.3} parent=59 // pred_fallthru
          _
        // Predicated region
        $region91: #{network_forward_test.3} parent=59 // pred_check
          %p575 = pneg %p92
        $region92: #{network_forward_test.3} parent=59 // pred_check_branch
          %577 = sbr.rel (%p575) target = $region94
        $region93: #{network_forward_test.3} parent=59 // pred_region
          %s578 = smul.u32 112, %s20
          %p579 = scmp.lt.s32.totalorder %s578, 447
          %s580 = scalar_select %p579, %s578, 447
          %s581 = smul.addr %s580, 2
          %s582 = smul.addr %s581, 4
          %s583 = scalar_lea.vmem %s2, %s582
          %s584 = smul.u32 112, %s20
        $region94: #{network_forward_test.3} parent=59 // pred_fallthru
          _
      $region60: #{network_forward_test.3} parent=5 // pred_fallthru
        _
      %p585 = scmp.le.s32.totalorder 1, %s20
      %p586 = scmp.lt.s32.totalorder %s20, 5
      %p587 = pnand %p585, %p586
      %p588 = pneg %p587
      // Predicated region
      $region95: #{network_forward_test.3} parent=5 // pred_check
        _
      $region96: #{network_forward_test.3} parent=5 // pred_check_branch
        %590 = sbr.rel (%p587) target = $region98
      $region97: #{network_forward_test.3} parent=5 // pred_region
        %s591 = ssub.s32 %s20, 1
        %s592 = sand.u32 %s33, 1
        %s593 = sand.u32 %s33, 1
        %s594 = smul.addr %s593, 448
        %s595 = scalar_lea.vmem [#allocation4], %s594
        // Predicated region
        $region99: #{network_forward_test.3} parent=97 // pred_check
          %p596 = pneg %p46
        $region100: #{network_forward_test.3} parent=97 // pred_check_branch
          %598 = sbr.rel (%p596) target = $region102
        $region101: #{network_forward_test.3} parent=97 // pred_region
          _
        $region102: #{network_forward_test.3} parent=97 // pred_fallthru
          _
        %s599 = sand.u32 %s33, 1
        %s600 = sand.u32 %s33, 1
        %s601 = smul.addr %s600, 448
        %s602 = scalar_lea.vmem [#allocation4], %s601
        %p603 = pneg %p46
        %p604 = pneg %p43
        %s605 = smul.u32 112, %s25
        %p606 = scmp.lt.s32.totalorder %s605, 447
        %s607 = scalar_select %p606, %s605, 447
        %s608 = smul.addr %s607, 2
        %s609 = smul.addr %s608, 4
        %s610 = scalar_lea.vmem %s1, %s609
        %p611 = pneg %p72
        %p612 = pneg %p69
        %s613 = smul.u32 112, %s25
        %p614 = scmp.lt.s32.totalorder %s613, 447
        %s615 = scalar_select %p614, %s613, 447
        %s616 = smul.addr %s615, 2
        %s617 = smul.addr %s616, 4
        %s618 = scalar_lea.vmem %s2, %s617
        %p619 = pneg %p98
        %p620 = pneg %p95
        %p621 = pneg %p119
        %p622 = pneg %p116
        %p623 = pneg %p140
        %p624 = pneg %p137
        %p625 = pneg %p161
        %p626 = pneg %p158
        %p627 = pneg %p182
        %p628 = pneg %p179
        %p629 = pneg %p203
        %p630 = pneg %p200
        %p631 = pneg %p224
        %p632 = pneg %p221
        %p633 = pneg %p245
        %p634 = pneg %p242
        %p635 = pneg %p266
        %p636 = pneg %p263
        %p637 = pneg %p287
        %p638 = pneg %p284
        %p639 = pneg %p308
        %p640 = pneg %p305
        %p641 = pneg %p329
        %p642 = pneg %p326
        %p643 = pneg %p350
        %p644 = pneg %p347
        %s645 = smul.u32 7, %s25
        %s646 = smul.u32 112, %s25
        %p647 = scmp.lt.s32.totalorder %s646, 447
        %s648 = scalar_select %p647, %s646, 447
        %s649 = smul.addr %s648, 2
        %s650 = smul.addr %s649, 4
        %s651 = scalar_lea.vmem %s1, %s650
        %s652 = smul.u32 112, %s25
        %s653 = smul.u32 112, %s25
        %p654 = scmp.lt.s32.totalorder %s653, 447
        %s655 = scalar_select %p654, %s653, 447
        %s656 = smul.addr %s655, 2
        %s657 = smul.addr %s656, 4
        %s658 = scalar_lea.vmem %s2, %s657
        %s659 = smul.u32 112, %s25
        %p661 = scmp.eq.s32.totalorder %s25, 0
        // Predicated region
        $region103: #{network_forward_test.3} parent=97 // pred_check
          %p662 = pneg %p661
        $region104: #{network_forward_test.3} parent=97 // pred_check_branch
          %664 = sbr.rel (%p662) target = $region106
        $region105: #{network_forward_test.3} parent=97 // pred_region
          %665 = vst [vmem:[#allocation2] sm:$0xff] 0.0
          %666 = vst [vmem:[#allocation2 + $0x8] sm:$0xff] 0.0
          %667 = vst [vmem:[#allocation2 + $0x10] sm:$0xff] 0.0
          %668 = vst [vmem:[#allocation2 + $0x18] sm:$0xff] 0.0
          %669 = vst [vmem:[#allocation2 + $0x20] sm:$0xff] 0.0
          %670 = vst [vmem:[#allocation2 + $0x28] sm:$0xff] 0.0
          %671 = vst [vmem:[#allocation2 + $0x30] sm:$0xff] 0.0
          %672 = vst [vmem:[#allocation2 + $0x38] sm:$0xff] 0.0
          %673 = vst [vmem:[#allocation2 + $0x40] sm:$0xff] 0.0
          %674 = vst [vmem:[#allocation2 + $0x48] sm:$0xff] 0.0
          %675 = vst [vmem:[#allocation2 + $0x50] sm:$0xff] 0.0
          %676 = vst [vmem:[#allocation2 + $0x58] sm:$0xff] 0.0
          %677 = vst [vmem:[#allocation2 + $0x60] sm:$0xff] 0.0
          %678 = vst [vmem:[#allocation2 + $0x68] sm:$0xff] 0.0
          %679 = vst [vmem:[#allocation2 + $0x70] sm:$0xff] 0.0
          %680 = vst [vmem:[#allocation2 + $0x78] sm:$0xff] 0.0
          %681 = vst [vmem:[#allocation2 + $0x80] sm:$0xff] 0.0
          %682 = vst [vmem:[#allocation2 + $0x88] sm:$0xff] 0.0
          %683 = vst [vmem:[#allocation2 + $0x90] sm:$0xff] 0.0
          %684 = vst [vmem:[#allocation2 + $0x98] sm:$0xff] 0.0
          %685 = vst [vmem:[#allocation2 + $0xa0] sm:$0xff] 0.0
          %686 = vst [vmem:[#allocation2 + $0xa8] sm:$0xff] 0.0
          %687 = vst [vmem:[#allocation2 + $0xb0] sm:$0xff] 0.0
          %688 = vst [vmem:[#allocation2 + $0xb8] sm:$0xff] 0.0
          %689 = vst [vmem:[#allocation2 + $0xc0] sm:$0xff] 0.0
          %690 = vst [vmem:[#allocation2 + $0xc8] sm:$0xff] 0.0
          %691 = vst [vmem:[#allocation2 + $0xd0] sm:$0xff] 0.0
          %692 = vst [vmem:[#allocation2 + $0xd8] sm:$0xff] 0.0
          %693 = vst [vmem:[#allocation2 + $0xe0] sm:$0xff] 0.0
          %694 = vst [vmem:[#allocation2 + $0xe8] sm:$0xff] 0.0
          %695 = vst [vmem:[#allocation2 + $0xf0] sm:$0xff] 0.0
          %696 = vst [vmem:[#allocation2 + $0xf8] sm:$0xff] 0.0
          %697 = vst [vmem:[#allocation3] sm:$0xff] 0.0
          %698 = vst [vmem:[#allocation3 + $0x8] sm:$0xff] 0.0
          %699 = vst [vmem:[#allocation3 + $0x10] sm:$0xff] 0.0
          %700 = vst [vmem:[#allocation3 + $0x18] sm:$0xff] 0.0
          %701 = vst [vmem:[#allocation3 + $0x20] sm:$0xff] 0.0
          %702 = vst [vmem:[#allocation3 + $0x28] sm:$0xff] 0.0
          %703 = vst [vmem:[#allocation3 + $0x30] sm:$0xff] 0.0
          %704 = vst [vmem:[#allocation3 + $0x38] sm:$0xff] 0.0
          %705 = vst [vmem:[#allocation3 + $0x40] sm:$0xff] 0.0
          %706 = vst [vmem:[#allocation3 + $0x48] sm:$0xff] 0.0
          %707 = vst [vmem:[#allocation3 + $0x50] sm:$0xff] 0.0
          %708 = vst [vmem:[#allocation3 + $0x58] sm:$0xff] 0.0
          %709 = vst [vmem:[#allocation3 + $0x60] sm:$0xff] 0.0
          %710 = vst [vmem:[#allocation3 + $0x68] sm:$0xff] 0.0
          %711 = vst [vmem:[#allocation3 + $0x70] sm:$0xff] 0.0
          %712 = vst [vmem:[#allocation3 + $0x78] sm:$0xff] 0.0
          %713 = vst [vmem:[#allocation3 + $0x80] sm:$0xff] 0.0
          %714 = vst [vmem:[#allocation3 + $0x88] sm:$0xff] 0.0
          %715 = vst [vmem:[#allocation3 + $0x90] sm:$0xff] 0.0
          %716 = vst [vmem:[#allocation3 + $0x98] sm:$0xff] 0.0
          %717 = vst [vmem:[#allocation3 + $0xa0] sm:$0xff] 0.0
          %718 = vst [vmem:[#allocation3 + $0xa8] sm:$0xff] 0.0
          %719 = vst [vmem:[#allocation3 + $0xb0] sm:$0xff] 0.0
          %720 = vst [vmem:[#allocation3 + $0xb8] sm:$0xff] 0.0
          %721 = vst [vmem:[#allocation3 + $0xc0] sm:$0xff] 0.0
          %722 = vst [vmem:[#allocation3 + $0xc8] sm:$0xff] 0.0
          %723 = vst [vmem:[#allocation3 + $0xd0] sm:$0xff] 0.0
          %724 = vst [vmem:[#allocation3 + $0xd8] sm:$0xff] 0.0
          %725 = vst [vmem:[#allocation3 + $0xe0] sm:$0xff] 0.0
          %726 = vst [vmem:[#allocation3 + $0xe8] sm:$0xff] 0.0
          %727 = vst [vmem:[#allocation3 + $0xf0] sm:$0xff] 0.0
          %728 = vst [vmem:[#allocation3 + $0xf8] sm:$0xff] 0.0
        $region106: #{network_forward_test.3} parent=97 // pred_fallthru
          _
        %v729 = vld [vmem:[%s595] sm:$0xff]
        %v730 = vld [vmem:[%s595 + $0x8] sm:$0xff]
        %v731 = vld [vmem:[%s595 + $0x10] sm:$0xff]
        %v732 = vld [vmem:[%s595 + $0x18] sm:$0xf]
        %v733 = vld [vmem:[%s595 + $0x1c] sm:$0xff]
        %v734 = vld [vmem:[%s595 + $0x24] sm:$0xff]
        %v735 = vld [vmem:[%s595 + $0x2c] sm:$0xff]
        %v736 = vld [vmem:[%s595 + $0x34] sm:$0xf]
        %v737 = vld [vmem:[%s595 + $0x38] sm:$0xff]
        %v738 = vld [vmem:[%s595 + $0x40] sm:$0xff]
        %v739 = vld [vmem:[%s595 + $0x48] sm:$0xff]
        %v740 = vld [vmem:[%s595 + $0x50] sm:$0xf]
        %v741 = vld [vmem:[%s595 + $0x54] sm:$0xff]
        %v742 = vld [vmem:[%s595 + $0x5c] sm:$0xff]
        %v743 = vld [vmem:[%s595 + $0x64] sm:$0xff]
        %v744 = vld [vmem:[%s595 + $0x6c] sm:$0xf]
        %v745 = vld [vmem:[%s595 + $0x70] sm:$0xff]
        %v746 = vld [vmem:[%s595 + $0x78] sm:$0xff]
        %v747 = vld [vmem:[%s595 + $0x80] sm:$0xff]
        %v748 = vld [vmem:[%s595 + $0x88] sm:$0xf]
        %v749 = vld [vmem:[%s595 + $0x8c] sm:$0xff]
        %v750 = vld [vmem:[%s595 + $0x94] sm:$0xff]
        %v751 = vld [vmem:[%s595 + $0x9c] sm:$0xff]
        %v752 = vld [vmem:[%s595 + $0xa4] sm:$0xf]
        %v753 = vld [vmem:[%s595 + $0xa8] sm:$0xff]
        %v754 = vld [vmem:[%s595 + $0xb0] sm:$0xff]
        %v755 = vld [vmem:[%s595 + $0xb8] sm:$0xff]
        %v756 = vld [vmem:[%s595 + $0xc0] sm:$0xf]
        %v757 = vld [vmem:[%s595 + $0xc4] sm:$0xff]
        %v758 = vld [vmem:[%s595 + $0xcc] sm:$0xff]
        %v759 = vld [vmem:[%s595 + $0xd4] sm:$0xff]
        %v760 = vld [vmem:[%s595 + $0xdc] sm:$0xf]
        %v761 = vld [vmem:[%s595 + $0xe0] sm:$0xff]
        %v762 = vld [vmem:[%s595 + $0xe8] sm:$0xff]
        %v763 = vld [vmem:[%s595 + $0xf0] sm:$0xff]
        %v764 = vld [vmem:[%s595 + $0xf8] sm:$0xf]
        %v765 = vld [vmem:[%s595 + $0xfc] sm:$0xff]
        %v766 = vld [vmem:[%s595 + $0x104] sm:$0xff]
        %v767 = vld [vmem:[%s595 + $0x10c] sm:$0xff]
        %v768 = vld [vmem:[%s595 + $0x114] sm:$0xf]
        %v769 = vld [vmem:[%s595 + $0x118] sm:$0xff]
        %v770 = vld [vmem:[%s595 + $0x120] sm:$0xff]
        %v771 = vld [vmem:[%s595 + $0x128] sm:$0xff]
        %v772 = vld [vmem:[%s595 + $0x130] sm:$0xf]
        %v773 = vld [vmem:[%s595 + $0x134] sm:$0xff]
        %v774 = vld [vmem:[%s595 + $0x13c] sm:$0xff]
        %v775 = vld [vmem:[%s595 + $0x144] sm:$0xff]
        %v776 = vld [vmem:[%s595 + $0x14c] sm:$0xf]
        %v777 = vld [vmem:[%s595 + $0x150] sm:$0xff]
        %v778 = vld [vmem:[%s595 + $0x158] sm:$0xff]
        %v779 = vld [vmem:[%s595 + $0x160] sm:$0xff]
        %v780 = vld [vmem:[%s595 + $0x168] sm:$0xf]
        %v781 = vld [vmem:[%s595 + $0x16c] sm:$0xff]
        %v782 = vld [vmem:[%s595 + $0x174] sm:$0xff]
        %v783 = vld [vmem:[%s595 + $0x17c] sm:$0xff]
        %v784 = vld [vmem:[%s595 + $0x184] sm:$0xf]
        %v785 = vld [vmem:[%s595 + $0x188] sm:$0xff]
        %v786 = vld [vmem:[%s595 + $0x190] sm:$0xff]
        %v787 = vld [vmem:[%s595 + $0x198] sm:$0xff]
        %v788 = vld [vmem:[%s595 + $0x1a0] sm:$0xf]
        %v789 = vld [vmem:[%s595 + $0x1a4] sm:$0xff]
        %v790 = vld [vmem:[%s595 + $0x1ac] sm:$0xff]
        %v791 = vld [vmem:[%s595 + $0x1b4] sm:$0xff]
        %v792 = vld [vmem:[%s595 + $0x1bc] sm:$0xf]
        %v793 = vld [vmem:[#allocation2] sm:$0xff]
        %v794 = vld [vmem:[#allocation2 + $0x8] sm:$0xff]
        %v795 = vld [vmem:[#allocation2 + $0x10] sm:$0xff]
        %v796 = vld [vmem:[#allocation2 + $0x18] sm:$0xff]
        %v797 = vld [vmem:[#allocation2 + $0x20] sm:$0xff]
        %v798 = vld [vmem:[#allocation2 + $0x28] sm:$0xff]
        %v799 = vld [vmem:[#allocation2 + $0x30] sm:$0xff]
        %v800 = vld [vmem:[#allocation2 + $0x38] sm:$0xff]
        %v801 = vld [vmem:[#allocation2 + $0x40] sm:$0xff]
        %v802 = vld [vmem:[#allocation2 + $0x48] sm:$0xff]
        %v803 = vld [vmem:[#allocation2 + $0x50] sm:$0xff]
        %v804 = vld [vmem:[#allocation2 + $0x58] sm:$0xff]
        %v805 = vld [vmem:[#allocation2 + $0x60] sm:$0xff]
        %v806 = vld [vmem:[#allocation2 + $0x68] sm:$0xff]
        %v807 = vld [vmem:[#allocation2 + $0x70] sm:$0xff]
        %v808 = vld [vmem:[#allocation2 + $0x78] sm:$0xff]
        %v809 = vld [vmem:[#allocation2 + $0x80] sm:$0xff]
        %v810 = vld [vmem:[#allocation2 + $0x88] sm:$0xff]
        %v811 = vld [vmem:[#allocation2 + $0x90] sm:$0xff]
        %v812 = vld [vmem:[#allocation2 + $0x98] sm:$0xff]
        %v813 = vld [vmem:[#allocation2 + $0xa0] sm:$0xff]
        %v814 = vld [vmem:[#allocation2 + $0xa8] sm:$0xff]
        %v815 = vld [vmem:[#allocation2 + $0xb0] sm:$0xff]
        %v816 = vld [vmem:[#allocation2 + $0xb8] sm:$0xff]
        %v817 = vld [vmem:[#allocation2 + $0xc0] sm:$0xff]
        %v818 = vld [vmem:[#allocation2 + $0xc8] sm:$0xff]
        %v819 = vld [vmem:[#allocation2 + $0xd0] sm:$0xff]
        %v820 = vld [vmem:[#allocation2 + $0xd8] sm:$0xff]
        %v821 = vld [vmem:[#allocation2 + $0xe0] sm:$0xff]
        %v822 = vld [vmem:[#allocation2 + $0xe8] sm:$0xff]
        %v823 = vld [vmem:[#allocation2 + $0xf0] sm:$0xff]
        %v824 = vld [vmem:[#allocation2 + $0xf8] sm:$0xff]
        %v825 = vld [vmem:[%s651] sm:$0xff]
        %v826 = vld [vmem:[%s651 + $0x8] sm:$0xff]
        %v827 = vld [vmem:[%s651 + $0x10] sm:$0xff]
        %v828 = vld [vmem:[%s651 + $0x18] sm:$0xff]
        %v829 = vld [vmem:[%s651 + $0x20] sm:$0xff]
        %v830 = vld [vmem:[%s651 + $0x28] sm:$0xff]
        %v831 = vld [vmem:[%s651 + $0x30] sm:$0xff]
        %v832 = vld [vmem:[%s651 + $0x38] sm:$0xff]
        %v833 = vld [vmem:[%s651 + $0x40] sm:$0xff]
        %v834 = vld [vmem:[%s651 + $0x48] sm:$0xff]
        %v835 = vld [vmem:[%s651 + $0x50] sm:$0xff]
        %v836 = vld [vmem:[%s651 + $0x58] sm:$0xff]
        %v837 = vld [vmem:[%s651 + $0x60] sm:$0xff]
        %v838 = vld [vmem:[%s651 + $0x68] sm:$0xff]
        %v839 = vld [vmem:[%s651 + $0x70] sm:$0xff]
        %v840 = vld [vmem:[%s651 + $0x78] sm:$0xff]
        %v841 = vld [vmem:[%s651 + $0x80] sm:$0xff]
        %v842 = vld [vmem:[%s651 + $0x88] sm:$0xff]
        %v843 = vld [vmem:[%s651 + $0x90] sm:$0xff]
        %v844 = vld [vmem:[%s651 + $0x98] sm:$0xff]
        %v845 = vld [vmem:[%s651 + $0xa0] sm:$0xff]
        %v846 = vld [vmem:[%s651 + $0xa8] sm:$0xff]
        %v847 = vld [vmem:[%s651 + $0xb0] sm:$0xff]
        %v848 = vld [vmem:[%s651 + $0xb8] sm:$0xff]
        %v849 = vld [vmem:[%s651 + $0xc0] sm:$0xff]
        %v850 = vld [vmem:[%s651 + $0xc8] sm:$0xff]
        %v851 = vld [vmem:[%s651 + $0xd0] sm:$0xff]
        %v852 = vld [vmem:[%s651 + $0xd8] sm:$0xff]
        %v853 = vld [vmem:[%s651 + $0xe0] sm:$0xff]
        %v854 = vld [vmem:[%s651 + $0xe8] sm:$0xff]
        %v855 = vld [vmem:[%s651 + $0xf0] sm:$0xff]
        %v856 = vld [vmem:[%s651 + $0xf8] sm:$0xff]
        %v857 = vld [vmem:[%s651 + $0x100] sm:$0xff]
        %v858 = vld [vmem:[%s651 + $0x108] sm:$0xff]
        %v859 = vld [vmem:[%s651 + $0x110] sm:$0xff]
        %v860 = vld [vmem:[%s651 + $0x118] sm:$0xff]
        %v861 = vld [vmem:[%s651 + $0x120] sm:$0xff]
        %v862 = vld [vmem:[%s651 + $0x128] sm:$0xff]
        %v863 = vld [vmem:[%s651 + $0x130] sm:$0xff]
        %v864 = vld [vmem:[%s651 + $0x138] sm:$0xff]
        %v865 = vld [vmem:[%s651 + $0x140] sm:$0xff]
        %v866 = vld [vmem:[%s651 + $0x148] sm:$0xff]
        %v867 = vld [vmem:[%s651 + $0x150] sm:$0xff]
        %v868 = vld [vmem:[%s651 + $0x158] sm:$0xff]
        %v869 = vld [vmem:[%s651 + $0x160] sm:$0xff]
        %v870 = vld [vmem:[%s651 + $0x168] sm:$0xff]
        %v871 = vld [vmem:[%s651 + $0x170] sm:$0xff]
        %v872 = vld [vmem:[%s651 + $0x178] sm:$0xff]
        %v873 = vld [vmem:[%s651 + $0x180] sm:$0xff]
        %v874 = vld [vmem:[%s651 + $0x188] sm:$0xff]
        %v875 = vld [vmem:[%s651 + $0x190] sm:$0xff]
        %v876 = vld [vmem:[%s651 + $0x198] sm:$0xff]
        %v877 = vld [vmem:[%s651 + $0x1a0] sm:$0xff]
        %v878 = vld [vmem:[%s651 + $0x1a8] sm:$0xff]
        %v879 = vld [vmem:[%s651 + $0x1b0] sm:$0xff]
        %v880 = vld [vmem:[%s651 + $0x1b8] sm:$0xff]
        %v881 = vld [vmem:[%s651 + $0x1c0] sm:$0xff]
        %v882 = vld [vmem:[%s651 + $0x1c8] sm:$0xff]
        %v883 = vld [vmem:[%s651 + $0x1d0] sm:$0xff]
        %v884 = vld [vmem:[%s651 + $0x1d8] sm:$0xff]
        %v885 = vld [vmem:[%s651 + $0x1e0] sm:$0xff]
        %v886 = vld [vmem:[%s651 + $0x1e8] sm:$0xff]
        %v887 = vld [vmem:[%s651 + $0x1f0] sm:$0xff]
        %v888 = vld [vmem:[%s651 + $0x1f8] sm:$0xff]
        %v889 = vld [vmem:[%s651 + $0x200] sm:$0xff]
        %v890 = vld [vmem:[%s651 + $0x208] sm:$0xff]
        %v891 = vld [vmem:[%s651 + $0x210] sm:$0xff]
        %v892 = vld [vmem:[%s651 + $0x218] sm:$0xff]
        %v893 = vld [vmem:[%s651 + $0x220] sm:$0xff]
        %v894 = vld [vmem:[%s651 + $0x228] sm:$0xff]
        %v895 = vld [vmem:[%s651 + $0x230] sm:$0xff]
        %v896 = vld [vmem:[%s651 + $0x238] sm:$0xff]
        %v897 = vld [vmem:[%s651 + $0x240] sm:$0xff]
        %v898 = vld [vmem:[%s651 + $0x248] sm:$0xff]
        %v899 = vld [vmem:[%s651 + $0x250] sm:$0xff]
        %v900 = vld [vmem:[%s651 + $0x258] sm:$0xff]
        %v901 = vld [vmem:[%s651 + $0x260] sm:$0xff]
        %v902 = vld [vmem:[%s651 + $0x268] sm:$0xff]
        %v903 = vld [vmem:[%s651 + $0x270] sm:$0xff]
        %v904 = vld [vmem:[%s651 + $0x278] sm:$0xff]
        %v905 = vld [vmem:[%s651 + $0x280] sm:$0xff]
        %v906 = vld [vmem:[%s651 + $0x288] sm:$0xff]
        %v907 = vld [vmem:[%s651 + $0x290] sm:$0xff]
        %v908 = vld [vmem:[%s651 + $0x298] sm:$0xff]
        %v909 = vld [vmem:[%s651 + $0x2a0] sm:$0xff]
        %v910 = vld [vmem:[%s651 + $0x2a8] sm:$0xff]
        %v911 = vld [vmem:[%s651 + $0x2b0] sm:$0xff]
        %v912 = vld [vmem:[%s651 + $0x2b8] sm:$0xff]
        %v913 = vld [vmem:[%s651 + $0x2c0] sm:$0xff]
        %v914 = vld [vmem:[%s651 + $0x2c8] sm:$0xff]
        %v915 = vld [vmem:[%s651 + $0x2d0] sm:$0xff]
        %v916 = vld [vmem:[%s651 + $0x2d8] sm:$0xff]
        %v917 = vld [vmem:[%s651 + $0x2e0] sm:$0xff]
        %v918 = vld [vmem:[%s651 + $0x2e8] sm:$0xff]
        %v919 = vld [vmem:[%s651 + $0x2f0] sm:$0xff]
        %v920 = vld [vmem:[%s651 + $0x2f8] sm:$0xff]
        %v921 = vld [vmem:[%s651 + $0x300] sm:$0xff]
        %v922 = vld [vmem:[%s651 + $0x308] sm:$0xff]
        %v923 = vld [vmem:[%s651 + $0x310] sm:$0xff]
        %v924 = vld [vmem:[%s651 + $0x318] sm:$0xff]
        %v925 = vld [vmem:[%s651 + $0x320] sm:$0xff]
        %v926 = vld [vmem:[%s651 + $0x328] sm:$0xff]
        %v927 = vld [vmem:[%s651 + $0x330] sm:$0xff]
        %v928 = vld [vmem:[%s651 + $0x338] sm:$0xff]
        %v929 = vld [vmem:[%s651 + $0x340] sm:$0xff]
        %v930 = vld [vmem:[%s651 + $0x348] sm:$0xff]
        %v931 = vld [vmem:[%s651 + $0x350] sm:$0xff]
        %v932 = vld [vmem:[%s651 + $0x358] sm:$0xff]
        %v933 = vld [vmem:[%s651 + $0x360] sm:$0xff]
        %v934 = vld [vmem:[%s651 + $0x368] sm:$0xff]
        %v935 = vld [vmem:[%s651 + $0x370] sm:$0xff]
        %v936 = vld [vmem:[%s651 + $0x378] sm:$0xff]
        %v1001 = vunpack.c.l.b16 %v729
        %v1002 = vunpack.c.h.b16 %v729
        %v1003 = vunpack.c.l.b16 %v730
        %v1004 = vunpack.c.h.b16 %v730
        %v1005 = vunpack.c.l.b16 %v731
        %v1006 = vunpack.c.h.b16 %v731
        %v1007 = vunpack.c.l.b16 %v732
        %v1008 = vunpack.c.l.b16 %v733
        %v1009 = vunpack.c.h.b16 %v733
        %v1010 = vunpack.c.l.b16 %v734
        %v1011 = vunpack.c.h.b16 %v734
        %v1012 = vunpack.c.l.b16 %v735
        %v1013 = vunpack.c.h.b16 %v735
        %v1014 = vunpack.c.l.b16 %v736
        %v1015 = vunpack.c.l.b16 %v737
        %v1016 = vunpack.c.h.b16 %v737
        %v1017 = vunpack.c.l.b16 %v738
        %v1018 = vunpack.c.h.b16 %v738
        %v1019 = vunpack.c.l.b16 %v739
        %v1020 = vunpack.c.h.b16 %v739
        %v1021 = vunpack.c.l.b16 %v740
        %v1022 = vunpack.c.l.b16 %v741
        %v1023 = vunpack.c.h.b16 %v741
        %v1024 = vunpack.c.l.b16 %v742
        %v1025 = vunpack.c.h.b16 %v742
        %v1026 = vunpack.c.l.b16 %v743
        %v1027 = vunpack.c.h.b16 %v743
        %v1028 = vunpack.c.l.b16 %v744
        %v1029 = vunpack.c.l.b16 %v745
        %v1030 = vunpack.c.h.b16 %v745
        %v1031 = vunpack.c.l.b16 %v746
        %v1032 = vunpack.c.h.b16 %v746
        %v1033 = vunpack.c.l.b16 %v747
        %v1034 = vunpack.c.h.b16 %v747
        %v1035 = vunpack.c.l.b16 %v748
        %v1036 = vunpack.c.l.b16 %v749
        %v1037 = vunpack.c.h.b16 %v749
        %v1038 = vunpack.c.l.b16 %v750
        %v1039 = vunpack.c.h.b16 %v750
        %v1040 = vunpack.c.l.b16 %v751
        %v1041 = vunpack.c.h.b16 %v751
        %v1042 = vunpack.c.l.b16 %v752
        %v1043 = vunpack.c.l.b16 %v753
        %v1044 = vunpack.c.h.b16 %v753
        %v1045 = vunpack.c.l.b16 %v754
        %v1046 = vunpack.c.h.b16 %v754
        %v1047 = vunpack.c.l.b16 %v755
        %v1048 = vunpack.c.h.b16 %v755
        %v1049 = vunpack.c.l.b16 %v756
        %v1050 = vunpack.c.l.b16 %v757
        %v1051 = vunpack.c.h.b16 %v757
        %v1052 = vunpack.c.l.b16 %v758
        %v1053 = vunpack.c.h.b16 %v758
        %v1054 = vunpack.c.l.b16 %v759
        %v1055 = vunpack.c.h.b16 %v759
        %v1056 = vunpack.c.l.b16 %v760
        %v1057 = vunpack.c.l.b16 %v761
        %v1058 = vunpack.c.h.b16 %v761
        %v1059 = vunpack.c.l.b16 %v762
        %v1060 = vunpack.c.h.b16 %v762
        %v1061 = vunpack.c.l.b16 %v763
        %v1062 = vunpack.c.h.b16 %v763
        %v1063 = vunpack.c.l.b16 %v764
        %v1064 = vunpack.c.l.b16 %v765
        %v1065 = vunpack.c.h.b16 %v765
        %v1066 = vunpack.c.l.b16 %v766
        %v1067 = vunpack.c.h.b16 %v766
        %v1068 = vunpack.c.l.b16 %v767
        %v1069 = vunpack.c.h.b16 %v767
        %v1070 = vunpack.c.l.b16 %v768
        %v1071 = vunpack.c.l.b16 %v769
        %v1072 = vunpack.c.h.b16 %v769
        %v1073 = vunpack.c.l.b16 %v770
        %v1074 = vunpack.c.h.b16 %v770
        %v1075 = vunpack.c.l.b16 %v771
        %v1076 = vunpack.c.h.b16 %v771
        %v1077 = vunpack.c.l.b16 %v772
        %v1078 = vunpack.c.l.b16 %v773
        %v1079 = vunpack.c.h.b16 %v773
        %v1080 = vunpack.c.l.b16 %v774
        %v1081 = vunpack.c.h.b16 %v774
        %v1082 = vunpack.c.l.b16 %v775
        %v1083 = vunpack.c.h.b16 %v775
        %v1084 = vunpack.c.l.b16 %v776
        %v1085 = vunpack.c.l.b16 %v777
        %v1086 = vunpack.c.h.b16 %v777
        %v1087 = vunpack.c.l.b16 %v778
        %v1088 = vunpack.c.h.b16 %v778
        %v1089 = vunpack.c.l.b16 %v779
        %v1090 = vunpack.c.h.b16 %v779
        %v1091 = vunpack.c.l.b16 %v780
        %v1092 = vunpack.c.l.b16 %v781
        %v1093 = vunpack.c.h.b16 %v781
        %v1094 = vunpack.c.l.b16 %v782
        %v1095 = vunpack.c.h.b16 %v782
        %v1096 = vunpack.c.l.b16 %v783
        %v1097 = vunpack.c.h.b16 %v783
        %v1098 = vunpack.c.l.b16 %v784
        %v1099 = vunpack.c.l.b16 %v785
        %v1100 = vunpack.c.h.b16 %v785
        %v1101 = vunpack.c.l.b16 %v786
        %v1102 = vunpack.c.h.b16 %v786
        %v1103 = vunpack.c.l.b16 %v787
        %v1104 = vunpack.c.h.b16 %v787
        %v1105 = vunpack.c.l.b16 %v788
        %v1106 = vunpack.c.l.b16 %v789
        %v1107 = vunpack.c.h.b16 %v789
        %v1108 = vunpack.c.l.b16 %v790
        %v1109 = vunpack.c.h.b16 %v790
        %v1110 = vunpack.c.l.b16 %v791
        %v1111 = vunpack.c.h.b16 %v791
        %v1112 = vunpack.c.l.b16 %v792
        %v1113 = vpack.c.b16 %v1008, %v1001
        %v1114 = vpack.c.b16 %v1009, %v1002
        %v1115 = vpack.c.b16 %v1010, %v1003
        %v1116 = vpack.c.b16 %v1011, %v1004
        %v1117 = vpack.c.b16 %v1012, %v1005
        %v1118 = vpack.c.b16 %v1013, %v1006
        %v1119 = vpack.c.b16 %v1014, %v1007
        %v1120 = vpack.c.b16 %v1022, %v1015
        %v1121 = vpack.c.b16 %v1023, %v1016
        %v1122 = vpack.c.b16 %v1024, %v1017
        %v1123 = vpack.c.b16 %v1025, %v1018
        %v1124 = vpack.c.b16 %v1026, %v1019
        %v1125 = vpack.c.b16 %v1027, %v1020
        %v1126 = vpack.c.b16 %v1028, %v1021
        %v1127 = vpack.c.b16 %v1036, %v1029
        %v1128 = vpack.c.b16 %v1037, %v1030
        %v1129 = vpack.c.b16 %v1038, %v1031
        %v1130 = vpack.c.b16 %v1039, %v1032
        %v1131 = vpack.c.b16 %v1040, %v1033
        %v1132 = vpack.c.b16 %v1041, %v1034
        %v1133 = vpack.c.b16 %v1042, %v1035
        %v1134 = vpack.c.b16 %v1050, %v1043
        %v1135 = vpack.c.b16 %v1051, %v1044
        %v1136 = vpack.c.b16 %v1052, %v1045
        %v1137 = vpack.c.b16 %v1053, %v1046
        %v1138 = vpack.c.b16 %v1054, %v1047
        %v1139 = vpack.c.b16 %v1055, %v1048
        %v1140 = vpack.c.b16 %v1056, %v1049
        %v1141 = vpack.c.b16 %v1064, %v1057
        %v1142 = vpack.c.b16 %v1065, %v1058
        %v1143 = vpack.c.b16 %v1066, %v1059
        %v1144 = vpack.c.b16 %v1067, %v1060
        %v1145 = vpack.c.b16 %v1068, %v1061
        %v1146 = vpack.c.b16 %v1069, %v1062
        %v1147 = vpack.c.b16 %v1070, %v1063
        %v1148 = vpack.c.b16 %v1078, %v1071
        %v1149 = vpack.c.b16 %v1079, %v1072
        %v1150 = vpack.c.b16 %v1080, %v1073
        %v1151 = vpack.c.b16 %v1081, %v1074
        %v1152 = vpack.c.b16 %v1082, %v1075
        %v1153 = vpack.c.b16 %v1083, %v1076
        %v1154 = vpack.c.b16 %v1084, %v1077
        %v1155 = vpack.c.b16 %v1092, %v1085
        %v1156 = vpack.c.b16 %v1093, %v1086
        %v1157 = vpack.c.b16 %v1094, %v1087
        %v1158 = vpack.c.b16 %v1095, %v1088
        %v1159 = vpack.c.b16 %v1096, %v1089
        %v1160 = vpack.c.b16 %v1097, %v1090
        %v1161 = vpack.c.b16 %v1098, %v1091
        %v1162 = vpack.c.b16 %v1106, %v1099
        %v1163 = vpack.c.b16 %v1107, %v1100
        %v1164 = vpack.c.b16 %v1108, %v1101
        %v1165 = vpack.c.b16 %v1109, %v1102
        %v1166 = vpack.c.b16 %v1110, %v1103
        %v1167 = vpack.c.b16 %v1111, %v1104
        %v1168 = vpack.c.b16 %v1112, %v1105
        %v1337 = vunpack.c.l.b16 %v825
        %v1338 = vunpack.c.h.b16 %v825
        %v1339 = vunpack.c.l.b16 %v826
        %v1340 = vunpack.c.h.b16 %v826
        %v1341 = vunpack.c.l.b16 %v827
        %v1342 = vunpack.c.h.b16 %v827
        %v1343 = vunpack.c.l.b16 %v828
        %v1344 = vunpack.c.h.b16 %v828
        %v1345 = vunpack.c.l.b16 %v829
        %v1346 = vunpack.c.h.b16 %v829
        %v1347 = vunpack.c.l.b16 %v830
        %v1348 = vunpack.c.h.b16 %v830
        %v1349 = vunpack.c.l.b16 %v831
        %v1350 = vunpack.c.h.b16 %v831
        %v1351 = vunpack.c.l.b16 %v832
        %v1352 = vunpack.c.h.b16 %v832
        %v1353 = vunpack.c.l.b16 %v833
        %v1354 = vunpack.c.h.b16 %v833
        %v1355 = vunpack.c.l.b16 %v834
        %v1356 = vunpack.c.h.b16 %v834
        %v1357 = vunpack.c.l.b16 %v835
        %v1358 = vunpack.c.h.b16 %v835
        %v1359 = vunpack.c.l.b16 %v836
        %v1360 = vunpack.c.h.b16 %v836
        %v1361 = vunpack.c.l.b16 %v837
        %v1362 = vunpack.c.h.b16 %v837
        %v1363 = vunpack.c.l.b16 %v838
        %v1364 = vunpack.c.h.b16 %v838
        %v1365 = vunpack.c.l.b16 %v839
        %v1366 = vunpack.c.h.b16 %v839
        %v1367 = vunpack.c.l.b16 %v840
        %v1368 = vunpack.c.h.b16 %v840
        %v1369 = vunpack.c.l.b16 %v841
        %v1370 = vunpack.c.h.b16 %v841
        %v1371 = vunpack.c.l.b16 %v842
        %v1372 = vunpack.c.h.b16 %v842
        %v1373 = vunpack.c.l.b16 %v843
        %v1374 = vunpack.c.h.b16 %v843
        %v1375 = vunpack.c.l.b16 %v844
        %v1376 = vunpack.c.h.b16 %v844
        %v1377 = vunpack.c.l.b16 %v845
        %v1378 = vunpack.c.h.b16 %v845
        %v1379 = vunpack.c.l.b16 %v846
        %v1380 = vunpack.c.h.b16 %v846
        %v1381 = vunpack.c.l.b16 %v847
        %v1382 = vunpack.c.h.b16 %v847
        %v1383 = vunpack.c.l.b16 %v848
        %v1384 = vunpack.c.h.b16 %v848
        %v1385 = vunpack.c.l.b16 %v849
        %v1386 = vunpack.c.h.b16 %v849
        %v1387 = vunpack.c.l.b16 %v850
        %v1388 = vunpack.c.h.b16 %v850
        %v1389 = vunpack.c.l.b16 %v851
        %v1390 = vunpack.c.h.b16 %v851
        %v1391 = vunpack.c.l.b16 %v852
        %v1392 = vunpack.c.h.b16 %v852
        %v1393 = vunpack.c.l.b16 %v853
        %v1394 = vunpack.c.h.b16 %v853
        %v1395 = vunpack.c.l.b16 %v854
        %v1396 = vunpack.c.h.b16 %v854
        %v1397 = vunpack.c.l.b16 %v855
        %v1398 = vunpack.c.h.b16 %v855
        %v1399 = vunpack.c.l.b16 %v856
        %v1400 = vunpack.c.h.b16 %v856
        %v1401 = vunpack.c.l.b16 %v857
        %v1402 = vunpack.c.h.b16 %v857
        %v1403 = vunpack.c.l.b16 %v858
        %v1404 = vunpack.c.h.b16 %v858
        %v1405 = vunpack.c.l.b16 %v859
        %v1406 = vunpack.c.h.b16 %v859
        %v1407 = vunpack.c.l.b16 %v860
        %v1408 = vunpack.c.h.b16 %v860
        %v1409 = vunpack.c.l.b16 %v861
        %v1410 = vunpack.c.h.b16 %v861
        %v1411 = vunpack.c.l.b16 %v862
        %v1412 = vunpack.c.h.b16 %v862
        %v1413 = vunpack.c.l.b16 %v863
        %v1414 = vunpack.c.h.b16 %v863
        %v1415 = vunpack.c.l.b16 %v864
        %v1416 = vunpack.c.h.b16 %v864
        %v1417 = vunpack.c.l.b16 %v865
        %v1418 = vunpack.c.h.b16 %v865
        %v1419 = vunpack.c.l.b16 %v866
        %v1420 = vunpack.c.h.b16 %v866
        %v1421 = vunpack.c.l.b16 %v867
        %v1422 = vunpack.c.h.b16 %v867
        %v1423 = vunpack.c.l.b16 %v868
        %v1424 = vunpack.c.h.b16 %v868
        %v1425 = vunpack.c.l.b16 %v869
        %v1426 = vunpack.c.h.b16 %v869
        %v1427 = vunpack.c.l.b16 %v870
        %v1428 = vunpack.c.h.b16 %v870
        %v1429 = vunpack.c.l.b16 %v871
        %v1430 = vunpack.c.h.b16 %v871
        %v1431 = vunpack.c.l.b16 %v872
        %v1432 = vunpack.c.h.b16 %v872
        %v1433 = vunpack.c.l.b16 %v873
        %v1434 = vunpack.c.h.b16 %v873
        %v1435 = vunpack.c.l.b16 %v874
        %v1436 = vunpack.c.h.b16 %v874
        %v1437 = vunpack.c.l.b16 %v875
        %v1438 = vunpack.c.h.b16 %v875
        %v1439 = vunpack.c.l.b16 %v876
        %v1440 = vunpack.c.h.b16 %v876
        %v1441 = vunpack.c.l.b16 %v877
        %v1442 = vunpack.c.h.b16 %v877
        %v1443 = vunpack.c.l.b16 %v878
        %v1444 = vunpack.c.h.b16 %v878
        %v1445 = vunpack.c.l.b16 %v879
        %v1446 = vunpack.c.h.b16 %v879
        %v1447 = vunpack.c.l.b16 %v880
        %v1448 = vunpack.c.h.b16 %v880
        %v1449 = vunpack.c.l.b16 %v881
        %v1450 = vunpack.c.h.b16 %v881
        %v1451 = vunpack.c.l.b16 %v882
        %v1452 = vunpack.c.h.b16 %v882
        %v1453 = vunpack.c.l.b16 %v883
        %v1454 = vunpack.c.h.b16 %v883
        %v1455 = vunpack.c.l.b16 %v884
        %v1456 = vunpack.c.h.b16 %v884
        %v1457 = vunpack.c.l.b16 %v885
        %v1458 = vunpack.c.h.b16 %v885
        %v1459 = vunpack.c.l.b16 %v886
        %v1460 = vunpack.c.h.b16 %v886
        %v1461 = vunpack.c.l.b16 %v887
        %v1462 = vunpack.c.h.b16 %v887
        %v1463 = vunpack.c.l.b16 %v888
        %v1464 = vunpack.c.h.b16 %v888
        %v1465 = vunpack.c.l.b16 %v889
        %v1466 = vunpack.c.h.b16 %v889
        %v1467 = vunpack.c.l.b16 %v890
        %v1468 = vunpack.c.h.b16 %v890
        %v1469 = vunpack.c.l.b16 %v891
        %v1470 = vunpack.c.h.b16 %v891
        %v1471 = vunpack.c.l.b16 %v892
        %v1472 = vunpack.c.h.b16 %v892
        %v1473 = vunpack.c.l.b16 %v893
        %v1474 = vunpack.c.h.b16 %v893
        %v1475 = vunpack.c.l.b16 %v894
        %v1476 = vunpack.c.h.b16 %v894
        %v1477 = vunpack.c.l.b16 %v895
        %v1478 = vunpack.c.h.b16 %v895
        %v1479 = vunpack.c.l.b16 %v896
        %v1480 = vunpack.c.h.b16 %v896
        %v1481 = vunpack.c.l.b16 %v897
        %v1482 = vunpack.c.h.b16 %v897
        %v1483 = vunpack.c.l.b16 %v898
        %v1484 = vunpack.c.h.b16 %v898
        %v1485 = vunpack.c.l.b16 %v899
        %v1486 = vunpack.c.h.b16 %v899
        %v1487 = vunpack.c.l.b16 %v900
        %v1488 = vunpack.c.h.b16 %v900
        %v1489 = vunpack.c.l.b16 %v901
        %v1490 = vunpack.c.h.b16 %v901
        %v1491 = vunpack.c.l.b16 %v902
        %v1492 = vunpack.c.h.b16 %v902
        %v1493 = vunpack.c.l.b16 %v903
        %v1494 = vunpack.c.h.b16 %v903
        %v1495 = vunpack.c.l.b16 %v904
        %v1496 = vunpack.c.h.b16 %v904
        %v1497 = vunpack.c.l.b16 %v905
        %v1498 = vunpack.c.h.b16 %v905
        %v1499 = vunpack.c.l.b16 %v906
        %v1500 = vunpack.c.h.b16 %v906
        %v1501 = vunpack.c.l.b16 %v907
        %v1502 = vunpack.c.h.b16 %v907
        %v1503 = vunpack.c.l.b16 %v908
        %v1504 = vunpack.c.h.b16 %v908
        %v1505 = vunpack.c.l.b16 %v909
        %v1506 = vunpack.c.h.b16 %v909
        %v1507 = vunpack.c.l.b16 %v910
        %v1508 = vunpack.c.h.b16 %v910
        %v1509 = vunpack.c.l.b16 %v911
        %v1510 = vunpack.c.h.b16 %v911
        %v1511 = vunpack.c.l.b16 %v912
        %v1512 = vunpack.c.h.b16 %v912
        %v1513 = vunpack.c.l.b16 %v913
        %v1514 = vunpack.c.h.b16 %v913
        %v1515 = vunpack.c.l.b16 %v914
        %v1516 = vunpack.c.h.b16 %v914
        %v1517 = vunpack.c.l.b16 %v915
        %v1518 = vunpack.c.h.b16 %v915
        %v1519 = vunpack.c.l.b16 %v916
        %v1520 = vunpack.c.h.b16 %v916
        %v1521 = vunpack.c.l.b16 %v917
        %v1522 = vunpack.c.h.b16 %v917
        %v1523 = vunpack.c.l.b16 %v918
        %v1524 = vunpack.c.h.b16 %v918
        %v1525 = vunpack.c.l.b16 %v919
        %v1526 = vunpack.c.h.b16 %v919
        %v1527 = vunpack.c.l.b16 %v920
        %v1528 = vunpack.c.h.b16 %v920
        %v1529 = vunpack.c.l.b16 %v921
        %v1530 = vunpack.c.h.b16 %v921
        %v1531 = vunpack.c.l.b16 %v922
        %v1532 = vunpack.c.h.b16 %v922
        %v1533 = vunpack.c.l.b16 %v923
        %v1534 = vunpack.c.h.b16 %v923
        %v1535 = vunpack.c.l.b16 %v924
        %v1536 = vunpack.c.h.b16 %v924
        %v1537 = vunpack.c.l.b16 %v925
        %v1538 = vunpack.c.h.b16 %v925
        %v1539 = vunpack.c.l.b16 %v926
        %v1540 = vunpack.c.h.b16 %v926
        %v1541 = vunpack.c.l.b16 %v927
        %v1542 = vunpack.c.h.b16 %v927
        %v1543 = vunpack.c.l.b16 %v928
        %v1544 = vunpack.c.h.b16 %v928
        %v1545 = vunpack.c.l.b16 %v929
        %v1546 = vunpack.c.h.b16 %v929
        %v1547 = vunpack.c.l.b16 %v930
        %v1548 = vunpack.c.h.b16 %v930
        %v1549 = vunpack.c.l.b16 %v931
        %v1550 = vunpack.c.h.b16 %v931
        %v1551 = vunpack.c.l.b16 %v932
        %v1552 = vunpack.c.h.b16 %v932
        %v1553 = vunpack.c.l.b16 %v933
        %v1554 = vunpack.c.h.b16 %v933
        %v1555 = vunpack.c.l.b16 %v934
        %v1556 = vunpack.c.h.b16 %v934
        %v1557 = vunpack.c.l.b16 %v935
        %v1558 = vunpack.c.h.b16 %v935
        %v1559 = vunpack.c.l.b16 %v936
        %v1560 = vunpack.c.h.b16 %v936
        %v1561 = vpack.c.b16 %v1339, %v1337
        %v1562 = vpack.c.b16 %v1340, %v1338
        %v1563 = vpack.c.b16 %v1343, %v1341
        %v1564 = vpack.c.b16 %v1344, %v1342
        %v1565 = vpack.c.b16 %v1347, %v1345
        %v1566 = vpack.c.b16 %v1348, %v1346
        %v1567 = vpack.c.b16 %v1351, %v1349
        %v1568 = vpack.c.b16 %v1352, %v1350
        %v1569 = vpack.c.b16 %v1355, %v1353
        %v1570 = vpack.c.b16 %v1356, %v1354
        %v1571 = vpack.c.b16 %v1359, %v1357
        %v1572 = vpack.c.b16 %v1360, %v1358
        %v1573 = vpack.c.b16 %v1363, %v1361
        %v1574 = vpack.c.b16 %v1364, %v1362
        %v1575 = vpack.c.b16 %v1367, %v1365
        %v1576 = vpack.c.b16 %v1368, %v1366
        %v1577 = vpack.c.b16 %v1371, %v1369
        %v1578 = vpack.c.b16 %v1372, %v1370
        %v1579 = vpack.c.b16 %v1375, %v1373
        %v1580 = vpack.c.b16 %v1376, %v1374
        %v1581 = vpack.c.b16 %v1379, %v1377
        %v1582 = vpack.c.b16 %v1380, %v1378
        %v1583 = vpack.c.b16 %v1383, %v1381
        %v1584 = vpack.c.b16 %v1384, %v1382
        %v1585 = vpack.c.b16 %v1387, %v1385
        %v1586 = vpack.c.b16 %v1388, %v1386
        %v1587 = vpack.c.b16 %v1391, %v1389
        %v1588 = vpack.c.b16 %v1392, %v1390
        %v1589 = vpack.c.b16 %v1395, %v1393
        %v1590 = vpack.c.b16 %v1396, %v1394
        %v1591 = vpack.c.b16 %v1399, %v1397
        %v1592 = vpack.c.b16 %v1400, %v1398
        %v1593 = vpack.c.b16 %v1403, %v1401
        %v1594 = vpack.c.b16 %v1404, %v1402
        %v1595 = vpack.c.b16 %v1407, %v1405
        %v1596 = vpack.c.b16 %v1408, %v1406
        %v1597 = vpack.c.b16 %v1411, %v1409
        %v1598 = vpack.c.b16 %v1412, %v1410
        %v1599 = vpack.c.b16 %v1415, %v1413
        %v1600 = vpack.c.b16 %v1416, %v1414
        %v1601 = vpack.c.b16 %v1419, %v1417
        %v1602 = vpack.c.b16 %v1420, %v1418
        %v1603 = vpack.c.b16 %v1423, %v1421
        %v1604 = vpack.c.b16 %v1424, %v1422
        %v1605 = vpack.c.b16 %v1427, %v1425
        %v1606 = vpack.c.b16 %v1428, %v1426
        %v1607 = vpack.c.b16 %v1431, %v1429
        %v1608 = vpack.c.b16 %v1432, %v1430
        %v1609 = vpack.c.b16 %v1435, %v1433
        %v1610 = vpack.c.b16 %v1436, %v1434
        %v1611 = vpack.c.b16 %v1439, %v1437
        %v1612 = vpack.c.b16 %v1440, %v1438
        %v1613 = vpack.c.b16 %v1443, %v1441
        %v1614 = vpack.c.b16 %v1444, %v1442
        %v1615 = vpack.c.b16 %v1447, %v1445
        %v1616 = vpack.c.b16 %v1448, %v1446
        %v1617 = vpack.c.b16 %v1451, %v1449
        %v1618 = vpack.c.b16 %v1452, %v1450
        %v1619 = vpack.c.b16 %v1455, %v1453
        %v1620 = vpack.c.b16 %v1456, %v1454
        %v1621 = vpack.c.b16 %v1459, %v1457
        %v1622 = vpack.c.b16 %v1460, %v1458
        %v1623 = vpack.c.b16 %v1463, %v1461
        %v1624 = vpack.c.b16 %v1464, %v1462
        %v1625 = vpack.c.b16 %v1467, %v1465
        %v1626 = vpack.c.b16 %v1468, %v1466
        %v1627 = vpack.c.b16 %v1471, %v1469
        %v1628 = vpack.c.b16 %v1472, %v1470
        %v1629 = vpack.c.b16 %v1475, %v1473
        %v1630 = vpack.c.b16 %v1476, %v1474
        %v1631 = vpack.c.b16 %v1479, %v1477
        %v1632 = vpack.c.b16 %v1480, %v1478
        %v1633 = vpack.c.b16 %v1483, %v1481
        %v1634 = vpack.c.b16 %v1484, %v1482
        %v1635 = vpack.c.b16 %v1487, %v1485
        %v1636 = vpack.c.b16 %v1488, %v1486
        %v1637 = vpack.c.b16 %v1491, %v1489
        %v1638 = vpack.c.b16 %v1492, %v1490
        %v1639 = vpack.c.b16 %v1495, %v1493
        %v1640 = vpack.c.b16 %v1496, %v1494
        %v1641 = vpack.c.b16 %v1499, %v1497
        %v1642 = vpack.c.b16 %v1500, %v1498
        %v1643 = vpack.c.b16 %v1503, %v1501
        %v1644 = vpack.c.b16 %v1504, %v1502
        %v1645 = vpack.c.b16 %v1507, %v1505
        %v1646 = vpack.c.b16 %v1508, %v1506
        %v1647 = vpack.c.b16 %v1511, %v1509
        %v1648 = vpack.c.b16 %v1512, %v1510
        %v1649 = vpack.c.b16 %v1515, %v1513
        %v1650 = vpack.c.b16 %v1516, %v1514
        %v1651 = vpack.c.b16 %v1519, %v1517
        %v1652 = vpack.c.b16 %v1520, %v1518
        %v1653 = vpack.c.b16 %v1523, %v1521
        %v1654 = vpack.c.b16 %v1524, %v1522
        %v1655 = vpack.c.b16 %v1527, %v1525
        %v1656 = vpack.c.b16 %v1528, %v1526
        %v1657 = vpack.c.b16 %v1531, %v1529
        %v1658 = vpack.c.b16 %v1532, %v1530
        %v1659 = vpack.c.b16 %v1535, %v1533
        %v1660 = vpack.c.b16 %v1536, %v1534
        %v1661 = vpack.c.b16 %v1539, %v1537
        %v1662 = vpack.c.b16 %v1540, %v1538
        %v1663 = vpack.c.b16 %v1543, %v1541
        %v1664 = vpack.c.b16 %v1544, %v1542
        %v1665 = vpack.c.b16 %v1547, %v1545
        %v1666 = vpack.c.b16 %v1548, %v1546
        %v1667 = vpack.c.b16 %v1551, %v1549
        %v1668 = vpack.c.b16 %v1552, %v1550
        %v1669 = vpack.c.b16 %v1555, %v1553
        %v1670 = vpack.c.b16 %v1556, %v1554
        %v1671 = vpack.c.b16 %v1559, %v1557
        %v1672 = vpack.c.b16 %v1560, %v1558
        %1785 = vmatprep.subr.bf16.mxu0 %v1576
        %1786 = vmatpush1.bf16.msra.mxu0 %v1575
        %1787 = vmatprep.subr.bf16.mxu0 %v1574
        %1788 = vmatpush1.bf16.msra.mxu0 %v1573
        %1789 = vmatprep.subr.bf16.mxu0 %v1572
        %1790 = vmatpush1.bf16.msra.mxu0 %v1571
        %1791 = vmatprep.subr.bf16.mxu0 %v1570
        %1792 = vmatpush1.bf16.msra.mxu0 %v1569
        %1793 = vmatprep.subr.bf16.mxu0 %v1568
        %1794 = vmatpush1.bf16.msra.mxu0 %v1567
        %1795 = vmatprep.subr.bf16.mxu0 %v1566
        %1796 = vmatpush1.bf16.msra.mxu0 %v1565
        %1797 = vmatprep.subr.bf16.mxu0 %v1564
        %1798 = vmatpush1.bf16.msra.mxu0 %v1563
        %1799 = vmatprep.subr.bf16.mxu0 %v1562
        %1800 = vmatpush1.bf16.msra.mxu0 %v1561
        %1801 = vmatprep.subr.bf16.mxu0 %v1592
        %1802 = vmatpush2.bf16.msra.mxu0 %v1591
        %1803 = vmatprep.subr.bf16.mxu0 %v1590
        %1804 = vmatpush2.bf16.msra.mxu0 %v1589
        %1805 = vmatprep.subr.bf16.mxu0 %v1588
        %1806 = vmatpush2.bf16.msra.mxu0 %v1587
        %1807 = vmatprep.subr.bf16.mxu0 %v1586
        %1808 = vmatpush2.bf16.msra.mxu0 %v1585
        %1809 = vmatprep.subr.bf16.mxu0 %v1584
        %1810 = vmatpush2.bf16.msra.mxu0 %v1583
        %1811 = vmatprep.subr.bf16.mxu0 %v1582
        %1812 = vmatpush2.bf16.msra.mxu0 %v1581
        %1813 = vmatprep.subr.bf16.mxu0 %v1580
        %1814 = vmatpush2.bf16.msra.mxu0 %v1579
        %1815 = vmatprep.subr.bf16.mxu0 %v1578
        %1816 = vmatpush2.bf16.msra.mxu0 %v1577
        %1817 = vmatprep.mubr.bf16.mxu0 %v1114
        %1818 = vmatmul.mubr.bf16.gmra.mxu0 %v1113
        %v1819 = vpop.f32.mrf.mxu0
        %v1820 = vadd.f32 0.0, %v1819
        %v1821 = vpop.f32.mrf.mxu0
        %v1822 = vadd.f32 0.0, %v1821
        %v1823 = vpop.f32.mrf.mxu0
        %v1824 = vadd.f32 0.0, %v1823
        %v1825 = vpop.f32.mrf.mxu0
        %v1826 = vadd.f32 0.0, %v1825
        %1827 = vmatprep.mubr.bf16.mxu0 %v1121
        %1828 = vmatmul.mubr.bf16.gmra.mxu0 %v1120
        %v1829 = vpop.f32.mrf.mxu0
        %v1830 = vadd.f32 0.0, %v1829
        %v1831 = vpop.f32.mrf.mxu0
        %v1832 = vadd.f32 0.0, %v1831
        %v1833 = vpop.f32.mrf.mxu0
        %v1834 = vadd.f32 0.0, %v1833
        %v1835 = vpop.f32.mrf.mxu0
        %v1836 = vadd.f32 0.0, %v1835
        %1837 = vmatprep.mubr.bf16.mxu0 %v1128
        %1838 = vmatmul.mubr.bf16.gmra.mxu0 %v1127
        %v1839 = vpop.f32.mrf.mxu0
        %v1840 = vadd.f32 0.0, %v1839
        %v1841 = vpop.f32.mrf.mxu0
        %v1842 = vadd.f32 0.0, %v1841
        %v1843 = vpop.f32.mrf.mxu0
        %v1844 = vadd.f32 0.0, %v1843
        %v1845 = vpop.f32.mrf.mxu0
        %v1846 = vadd.f32 0.0, %v1845
        %1847 = vmatprep.mubr.bf16.mxu0 %v1135
        %1848 = vmatmul.mubr.bf16.gmra.mxu0 %v1134
        %v1849 = vpop.f32.mrf.mxu0
        %v1850 = vadd.f32 0.0, %v1849
        %v1851 = vpop.f32.mrf.mxu0
        %v1852 = vadd.f32 0.0, %v1851
        %v1853 = vpop.f32.mrf.mxu0
        %v1854 = vadd.f32 0.0, %v1853
        %v1855 = vpop.f32.mrf.mxu0
        %v1856 = vadd.f32 0.0, %v1855
        %1857 = vmatprep.mubr.bf16.mxu0 %v1142
        %1858 = vmatmul.mubr.bf16.gmra.mxu0 %v1141
        %v1859 = vpop.f32.mrf.mxu0
        %v1860 = vadd.f32 0.0, %v1859
        %v1861 = vpop.f32.mrf.mxu0
        %v1862 = vadd.f32 0.0, %v1861
        %v1863 = vpop.f32.mrf.mxu0
        %v1864 = vadd.f32 0.0, %v1863
        %v1865 = vpop.f32.mrf.mxu0
        %v1866 = vadd.f32 0.0, %v1865
        %1867 = vmatprep.mubr.bf16.mxu0 %v1149
        %1868 = vmatmul.mubr.bf16.gmra.mxu0 %v1148
        %v1869 = vpop.f32.mrf.mxu0
        %v1870 = vadd.f32 0.0, %v1869
        %v1871 = vpop.f32.mrf.mxu0
        %v1872 = vadd.f32 0.0, %v1871
        %v1873 = vpop.f32.mrf.mxu0
        %v1874 = vadd.f32 0.0, %v1873
        %v1875 = vpop.f32.mrf.mxu0
        %v1876 = vadd.f32 0.0, %v1875
        %1877 = vmatprep.mubr.bf16.mxu0 %v1156
        %1878 = vmatmul.mubr.bf16.gmra.mxu0 %v1155
        %v1879 = vpop.f32.mrf.mxu0
        %v1880 = vadd.f32 0.0, %v1879
        %v1881 = vpop.f32.mrf.mxu0
        %v1882 = vadd.f32 0.0, %v1881
        %v1883 = vpop.f32.mrf.mxu0
        %v1884 = vadd.f32 0.0, %v1883
        %v1885 = vpop.f32.mrf.mxu0
        %v1886 = vadd.f32 0.0, %v1885
        %1887 = vmatprep.mubr.bf16.mxu0 %v1163
        %1888 = vmatmul.mubr.bf16.gmra.mxu0 %v1162
        %v1889 = vpop.f32.mrf.mxu0
        %v1890 = vadd.f32 0.0, %v1889
        %v1891 = vpop.f32.mrf.mxu0
        %v1892 = vadd.f32 0.0, %v1891
        %v1893 = vpop.f32.mrf.mxu0
        %v1894 = vadd.f32 0.0, %v1893
        %v1895 = vpop.f32.mrf.mxu0
        %v1896 = vadd.f32 0.0, %v1895
        %1897 = vdwg.mxu0
        %1898 = vmatprep.subr.bf16.mxu0 %v1608
        %1899 = vmatpush1.bf16.msra.mxu0 %v1607
        %1900 = vmatprep.subr.bf16.mxu0 %v1606
        %1901 = vmatpush1.bf16.msra.mxu0 %v1605
        %1902 = vmatprep.subr.bf16.mxu0 %v1604
        %1903 = vmatpush1.bf16.msra.mxu0 %v1603
        %1904 = vmatprep.subr.bf16.mxu0 %v1602
        %1905 = vmatpush1.bf16.msra.mxu0 %v1601
        %1906 = vmatprep.subr.bf16.mxu0 %v1600
        %1907 = vmatpush1.bf16.msra.mxu0 %v1599
        %1908 = vmatprep.subr.bf16.mxu0 %v1598
        %1909 = vmatpush1.bf16.msra.mxu0 %v1597
        %1910 = vmatprep.subr.bf16.mxu0 %v1596
        %1911 = vmatpush1.bf16.msra.mxu0 %v1595
        %1912 = vmatprep.subr.bf16.mxu0 %v1594
        %1913 = vmatpush1.bf16.msra.mxu0 %v1593
        %1914 = vmatprep.subr.bf16.mxu0 %v1624
        %1915 = vmatpush2.bf16.msra.mxu0 %v1623
        %1916 = vmatprep.subr.bf16.mxu0 %v1622
        %1917 = vmatpush2.bf16.msra.mxu0 %v1621
        %1918 = vmatprep.subr.bf16.mxu0 %v1620
        %1919 = vmatpush2.bf16.msra.mxu0 %v1619
        %1920 = vmatprep.subr.bf16.mxu0 %v1618
        %1921 = vmatpush2.bf16.msra.mxu0 %v1617
        %1922 = vmatprep.subr.bf16.mxu0 %v1616
        %1923 = vmatpush2.bf16.msra.mxu0 %v1615
        %1924 = vmatprep.subr.bf16.mxu0 %v1614
        %1925 = vmatpush2.bf16.msra.mxu0 %v1613
        %1926 = vmatprep.subr.bf16.mxu0 %v1612
        %1927 = vmatpush2.bf16.msra.mxu0 %v1611
        %1928 = vmatprep.subr.bf16.mxu0 %v1610
        %1929 = vmatpush2.bf16.msra.mxu0 %v1609
        %1930 = vmatprep.mubr.bf16.mxu0 %v1116
        %1931 = vmatmul.mubr.bf16.gmra.mxu0 %v1115
        %v1932 = vpop.f32.mrf.mxu0
        %v1933 = vadd.f32 %v1820, %v1932
        %v1934 = vpop.f32.mrf.mxu0
        %v1935 = vadd.f32 %v1822, %v1934
        %v1936 = vpop.f32.mrf.mxu0
        %v1937 = vadd.f32 %v1824, %v1936
        %v1938 = vpop.f32.mrf.mxu0
        %v1939 = vadd.f32 %v1826, %v1938
        %1940 = vmatprep.mubr.bf16.mxu0 %v1123
        %1941 = vmatmul.mubr.bf16.gmra.mxu0 %v1122
        %v1942 = vpop.f32.mrf.mxu0
        %v1943 = vadd.f32 %v1830, %v1942
        %v1944 = vpop.f32.mrf.mxu0
        %v1945 = vadd.f32 %v1832, %v1944
        %v1946 = vpop.f32.mrf.mxu0
        %v1947 = vadd.f32 %v1834, %v1946
        %v1948 = vpop.f32.mrf.mxu0
        %v1949 = vadd.f32 %v1836, %v1948
        %1950 = vmatprep.mubr.bf16.mxu0 %v1130
        %1951 = vmatmul.mubr.bf16.gmra.mxu0 %v1129
        %v1952 = vpop.f32.mrf.mxu0
        %v1953 = vadd.f32 %v1840, %v1952
        %v1954 = vpop.f32.mrf.mxu0
        %v1955 = vadd.f32 %v1842, %v1954
        %v1956 = vpop.f32.mrf.mxu0
        %v1957 = vadd.f32 %v1844, %v1956
        %v1958 = vpop.f32.mrf.mxu0
        %v1959 = vadd.f32 %v1846, %v1958
        %1960 = vmatprep.mubr.bf16.mxu0 %v1137
        %1961 = vmatmul.mubr.bf16.gmra.mxu0 %v1136
        %v1962 = vpop.f32.mrf.mxu0
        %v1963 = vadd.f32 %v1850, %v1962
        %v1964 = vpop.f32.mrf.mxu0
        %v1965 = vadd.f32 %v1852, %v1964
        %v1966 = vpop.f32.mrf.mxu0
        %v1967 = vadd.f32 %v1854, %v1966
        %v1968 = vpop.f32.mrf.mxu0
        %v1969 = vadd.f32 %v1856, %v1968
        %1970 = vmatprep.mubr.bf16.mxu0 %v1144
        %1971 = vmatmul.mubr.bf16.gmra.mxu0 %v1143
        %v1972 = vpop.f32.mrf.mxu0
        %v1973 = vadd.f32 %v1860, %v1972
        %v1974 = vpop.f32.mrf.mxu0
        %v1975 = vadd.f32 %v1862, %v1974
        %v1976 = vpop.f32.mrf.mxu0
        %v1977 = vadd.f32 %v1864, %v1976
        %v1978 = vpop.f32.mrf.mxu0
        %v1979 = vadd.f32 %v1866, %v1978
        %1980 = vmatprep.mubr.bf16.mxu0 %v1151
        %1981 = vmatmul.mubr.bf16.gmra.mxu0 %v1150
        %v1982 = vpop.f32.mrf.mxu0
        %v1983 = vadd.f32 %v1870, %v1982
        %v1984 = vpop.f32.mrf.mxu0
        %v1985 = vadd.f32 %v1872, %v1984
        %v1986 = vpop.f32.mrf.mxu0
        %v1987 = vadd.f32 %v1874, %v1986
        %v1988 = vpop.f32.mrf.mxu0
        %v1989 = vadd.f32 %v1876, %v1988
        %1990 = vmatprep.mubr.bf16.mxu0 %v1158
        %1991 = vmatmul.mubr.bf16.gmra.mxu0 %v1157
        %v1992 = vpop.f32.mrf.mxu0
        %v1993 = vadd.f32 %v1880, %v1992
        %v1994 = vpop.f32.mrf.mxu0
        %v1995 = vadd.f32 %v1882, %v1994
        %v1996 = vpop.f32.mrf.mxu0
        %v1997 = vadd.f32 %v1884, %v1996
        %v1998 = vpop.f32.mrf.mxu0
        %v1999 = vadd.f32 %v1886, %v1998
        %2000 = vmatprep.mubr.bf16.mxu0 %v1165
        %2001 = vmatmul.mubr.bf16.gmra.mxu0 %v1164
        %v2002 = vpop.f32.mrf.mxu0
        %v2003 = vadd.f32 %v1890, %v2002
        %v2004 = vpop.f32.mrf.mxu0
        %v2005 = vadd.f32 %v1892, %v2004
        %v2006 = vpop.f32.mrf.mxu0
        %v2007 = vadd.f32 %v1894, %v2006
        %v2008 = vpop.f32.mrf.mxu0
        %v2009 = vadd.f32 %v1896, %v2008
        %2010 = vdwg.mxu0
        %2011 = vmatprep.subr.bf16.mxu0 %v1640
        %2012 = vmatpush1.bf16.msra.mxu0 %v1639
        %2013 = vmatprep.subr.bf16.mxu0 %v1638
        %2014 = vmatpush1.bf16.msra.mxu0 %v1637
        %2015 = vmatprep.subr.bf16.mxu0 %v1636
        %2016 = vmatpush1.bf16.msra.mxu0 %v1635
        %2017 = vmatprep.subr.bf16.mxu0 %v1634
        %2018 = vmatpush1.bf16.msra.mxu0 %v1633
        %2019 = vmatprep.subr.bf16.mxu0 %v1632
        %2020 = vmatpush1.bf16.msra.mxu0 %v1631
        %2021 = vmatprep.subr.bf16.mxu0 %v1630
        %2022 = vmatpush1.bf16.msra.mxu0 %v1629
        %2023 = vmatprep.subr.bf16.mxu0 %v1628
        %2024 = vmatpush1.bf16.msra.mxu0 %v1627
        %2025 = vmatprep.subr.bf16.mxu0 %v1626
        %2026 = vmatpush1.bf16.msra.mxu0 %v1625
        %2027 = vmatprep.subr.bf16.mxu0 %v1656
        %2028 = vmatpush2.bf16.msra.mxu0 %v1655
        %2029 = vmatprep.subr.bf16.mxu0 %v1654
        %2030 = vmatpush2.bf16.msra.mxu0 %v1653
        %2031 = vmatprep.subr.bf16.mxu0 %v1652
        %2032 = vmatpush2.bf16.msra.mxu0 %v1651
        %2033 = vmatprep.subr.bf16.mxu0 %v1650
        %2034 = vmatpush2.bf16.msra.mxu0 %v1649
        %2035 = vmatprep.subr.bf16.mxu0 %v1648
        %2036 = vmatpush2.bf16.msra.mxu0 %v1647
        %2037 = vmatprep.subr.bf16.mxu0 %v1646
        %2038 = vmatpush2.bf16.msra.mxu0 %v1645
        %2039 = vmatprep.subr.bf16.mxu0 %v1644
        %2040 = vmatpush2.bf16.msra.mxu0 %v1643
        %2041 = vmatprep.subr.bf16.mxu0 %v1642
        %2042 = vmatpush2.bf16.msra.mxu0 %v1641
        %2043 = vmatprep.mubr.bf16.mxu0 %v1118
        %2044 = vmatmul.mubr.bf16.gmra.mxu0 %v1117
        %v2045 = vpop.f32.mrf.mxu0
        %v2046 = vadd.f32 %v1933, %v2045
        %v2047 = vpop.f32.mrf.mxu0
        %v2048 = vadd.f32 %v1935, %v2047
        %v2049 = vpop.f32.mrf.mxu0
        %v2050 = vadd.f32 %v1937, %v2049
        %v2051 = vpop.f32.mrf.mxu0
        %v2052 = vadd.f32 %v1939, %v2051
        %2053 = vmatprep.mubr.bf16.mxu0 %v1125
        %2054 = vmatmul.mubr.bf16.gmra.mxu0 %v1124
        %v2055 = vpop.f32.mrf.mxu0
        %v2056 = vadd.f32 %v1943, %v2055
        %v2057 = vpop.f32.mrf.mxu0
        %v2058 = vadd.f32 %v1945, %v2057
        %v2059 = vpop.f32.mrf.mxu0
        %v2060 = vadd.f32 %v1947, %v2059
        %v2061 = vpop.f32.mrf.mxu0
        %v2062 = vadd.f32 %v1949, %v2061
        %2063 = vmatprep.mubr.bf16.mxu0 %v1132
        %2064 = vmatmul.mubr.bf16.gmra.mxu0 %v1131
        %v2065 = vpop.f32.mrf.mxu0
        %v2066 = vadd.f32 %v1953, %v2065
        %v2067 = vpop.f32.mrf.mxu0
        %v2068 = vadd.f32 %v1955, %v2067
        %v2069 = vpop.f32.mrf.mxu0
        %v2070 = vadd.f32 %v1957, %v2069
        %v2071 = vpop.f32.mrf.mxu0
        %v2072 = vadd.f32 %v1959, %v2071
        %2073 = vmatprep.mubr.bf16.mxu0 %v1139
        %2074 = vmatmul.mubr.bf16.gmra.mxu0 %v1138
        %v2075 = vpop.f32.mrf.mxu0
        %v2076 = vadd.f32 %v1963, %v2075
        %v2077 = vpop.f32.mrf.mxu0
        %v2078 = vadd.f32 %v1965, %v2077
        %v2079 = vpop.f32.mrf.mxu0
        %v2080 = vadd.f32 %v1967, %v2079
        %v2081 = vpop.f32.mrf.mxu0
        %v2082 = vadd.f32 %v1969, %v2081
        %2083 = vmatprep.mubr.bf16.mxu0 %v1146
        %2084 = vmatmul.mubr.bf16.gmra.mxu0 %v1145
        %v2085 = vpop.f32.mrf.mxu0
        %v2086 = vadd.f32 %v1973, %v2085
        %v2087 = vpop.f32.mrf.mxu0
        %v2088 = vadd.f32 %v1975, %v2087
        %v2089 = vpop.f32.mrf.mxu0
        %v2090 = vadd.f32 %v1977, %v2089
        %v2091 = vpop.f32.mrf.mxu0
        %v2092 = vadd.f32 %v1979, %v2091
        %2093 = vmatprep.mubr.bf16.mxu0 %v1153
        %2094 = vmatmul.mubr.bf16.gmra.mxu0 %v1152
        %v2095 = vpop.f32.mrf.mxu0
        %v2096 = vadd.f32 %v1983, %v2095
        %v2097 = vpop.f32.mrf.mxu0
        %v2098 = vadd.f32 %v1985, %v2097
        %v2099 = vpop.f32.mrf.mxu0
        %v2100 = vadd.f32 %v1987, %v2099
        %v2101 = vpop.f32.mrf.mxu0
        %v2102 = vadd.f32 %v1989, %v2101
        %2103 = vmatprep.mubr.bf16.mxu0 %v1160
        %2104 = vmatmul.mubr.bf16.gmra.mxu0 %v1159
        %v2105 = vpop.f32.mrf.mxu0
        %v2106 = vadd.f32 %v1993, %v2105
        %v2107 = vpop.f32.mrf.mxu0
        %v2108 = vadd.f32 %v1995, %v2107
        %v2109 = vpop.f32.mrf.mxu0
        %v2110 = vadd.f32 %v1997, %v2109
        %v2111 = vpop.f32.mrf.mxu0
        %v2112 = vadd.f32 %v1999, %v2111
        %2113 = vmatprep.mubr.bf16.mxu0 %v1167
        %2114 = vmatmul.mubr.bf16.gmra.mxu0 %v1166
        %v2115 = vpop.f32.mrf.mxu0
        %v2116 = vadd.f32 %v2003, %v2115
        %v2117 = vpop.f32.mrf.mxu0
        %v2118 = vadd.f32 %v2005, %v2117
        %v2119 = vpop.f32.mrf.mxu0
        %v2120 = vadd.f32 %v2007, %v2119
        %v2121 = vpop.f32.mrf.mxu0
        %v2122 = vadd.f32 %v2009, %v2121
        %2123 = vdwg.mxu0
        %2124 = vmatprep.subr.bf16.mxu0 %v1672
        %2125 = vmatpush1.bf16.msra.mxu0 %v1671
        %2126 = vmatprep.subr.bf16.mxu0 %v1670
        %2127 = vmatpush1.bf16.msra.mxu0 %v1669
        %2128 = vmatprep.subr.bf16.mxu0 %v1668
        %2129 = vmatpush1.bf16.msra.mxu0 %v1667
        %2130 = vmatprep.subr.bf16.mxu0 %v1666
        %2131 = vmatpush1.bf16.msra.mxu0 %v1665
        %2132 = vmatprep.subr.bf16.mxu0 %v1664
        %2133 = vmatpush1.bf16.msra.mxu0 %v1663
        %2134 = vmatprep.subr.bf16.mxu0 %v1662
        %2135 = vmatpush1.bf16.msra.mxu0 %v1661
        %2136 = vmatprep.subr.bf16.mxu0 %v1660
        %2137 = vmatpush1.bf16.msra.mxu0 %v1659
        %2138 = vmatprep.subr.bf16.mxu0 %v1658
        %2139 = vmatpush1.bf16.msra.mxu0 %v1657
        %2140 = vmatprep.subr.bf16.mxu0 0
        %2141 = vmatpush2.bf16.msra.mxu0 0
        %2142 = vmatprep.subr.bf16.mxu0 0
        %2143 = vmatpush2.bf16.msra.mxu0 0
        %2144 = vmatprep.subr.bf16.mxu0 0
        %2145 = vmatpush2.bf16.msra.mxu0 0
        %2146 = vmatprep.subr.bf16.mxu0 0
        %2147 = vmatpush2.bf16.msra.mxu0 0
        %2148 = vmatprep.subr.bf16.mxu0 0
        %2149 = vmatpush2.bf16.msra.mxu0 0
        %2150 = vmatprep.subr.bf16.mxu0 0
        %2151 = vmatpush2.bf16.msra.mxu0 0
        %2152 = vmatprep.subr.bf16.mxu0 0
        %2153 = vmatpush2.bf16.msra.mxu0 0
        %2154 = vmatprep.subr.bf16.mxu0 0
        %2155 = vmatpush2.bf16.msra.mxu0 0
        %2156 = vmatprep.mubr.bf16.mxu0 0
        %2157 = vmatmul.mubr.bf16.gmra.mxu0 %v1119
        %v2158 = vpop.f32.mrf.mxu0
        %v2159 = vadd.f32 %v2046, %v2158
        %v2160 = vpop.f32.mrf.mxu0
        %v2161 = vadd.f32 %v2048, %v2160
        %v2162 = vpop.f32.mrf.mxu0
        %v2163 = vadd.f32 %v2050, %v2162
        %v2164 = vpop.f32.mrf.mxu0
        %v2165 = vadd.f32 %v2052, %v2164
        %2166 = vmatprep.mubr.bf16.mxu0 0
        %2167 = vmatmul.mubr.bf16.gmra.mxu0 %v1126
        %v2168 = vpop.f32.mrf.mxu0
        %v2169 = vadd.f32 %v2056, %v2168
        %v2170 = vpop.f32.mrf.mxu0
        %v2171 = vadd.f32 %v2058, %v2170
        %v2172 = vpop.f32.mrf.mxu0
        %v2173 = vadd.f32 %v2060, %v2172
        %v2174 = vpop.f32.mrf.mxu0
        %v2175 = vadd.f32 %v2062, %v2174
        %2176 = vmatprep.mubr.bf16.mxu0 0
        %2177 = vmatmul.mubr.bf16.gmra.mxu0 %v1133
        %v2178 = vpop.f32.mrf.mxu0
        %v2179 = vadd.f32 %v2066, %v2178
        %v2180 = vpop.f32.mrf.mxu0
        %v2181 = vadd.f32 %v2068, %v2180
        %v2182 = vpop.f32.mrf.mxu0
        %v2183 = vadd.f32 %v2070, %v2182
        %v2184 = vpop.f32.mrf.mxu0
        %v2185 = vadd.f32 %v2072, %v2184
        %2186 = vmatprep.mubr.bf16.mxu0 0
        %2187 = vmatmul.mubr.bf16.gmra.mxu0 %v1140
        %v2188 = vpop.f32.mrf.mxu0
        %v2189 = vadd.f32 %v2076, %v2188
        %v2190 = vpop.f32.mrf.mxu0
        %v2191 = vadd.f32 %v2078, %v2190
        %v2192 = vpop.f32.mrf.mxu0
        %v2193 = vadd.f32 %v2080, %v2192
        %v2194 = vpop.f32.mrf.mxu0
        %v2195 = vadd.f32 %v2082, %v2194
        %2196 = vmatprep.mubr.bf16.mxu0 0
        %2197 = vmatmul.mubr.bf16.gmra.mxu0 %v1147
        %v2198 = vpop.f32.mrf.mxu0
        %v2199 = vadd.f32 %v2086, %v2198
        %v2200 = vpop.f32.mrf.mxu0
        %v2201 = vadd.f32 %v2088, %v2200
        %v2202 = vpop.f32.mrf.mxu0
        %v2203 = vadd.f32 %v2090, %v2202
        %v2204 = vpop.f32.mrf.mxu0
        %v2205 = vadd.f32 %v2092, %v2204
        %2206 = vmatprep.mubr.bf16.mxu0 0
        %2207 = vmatmul.mubr.bf16.gmra.mxu0 %v1154
        %v2208 = vpop.f32.mrf.mxu0
        %v2209 = vadd.f32 %v2096, %v2208
        %v2210 = vpop.f32.mrf.mxu0
        %v2211 = vadd.f32 %v2098, %v2210
        %v2212 = vpop.f32.mrf.mxu0
        %v2213 = vadd.f32 %v2100, %v2212
        %v2214 = vpop.f32.mrf.mxu0
        %v2215 = vadd.f32 %v2102, %v2214
        %2216 = vmatprep.mubr.bf16.mxu0 0
        %2217 = vmatmul.mubr.bf16.gmra.mxu0 %v1161
        %v2218 = vpop.f32.mrf.mxu0
        %v2219 = vadd.f32 %v2106, %v2218
        %v2220 = vpop.f32.mrf.mxu0
        %v2221 = vadd.f32 %v2108, %v2220
        %v2222 = vpop.f32.mrf.mxu0
        %v2223 = vadd.f32 %v2110, %v2222
        %v2224 = vpop.f32.mrf.mxu0
        %v2225 = vadd.f32 %v2112, %v2224
        %2226 = vmatprep.mubr.bf16.mxu0 0
        %2227 = vmatmul.mubr.bf16.gmra.mxu0 %v1168
        %v2228 = vpop.f32.mrf.mxu0
        %v2229 = vadd.f32 %v2116, %v2228
        %v2230 = vpop.f32.mrf.mxu0
        %v2231 = vadd.f32 %v2118, %v2230
        %v2232 = vpop.f32.mrf.mxu0
        %v2233 = vadd.f32 %v2120, %v2232
        %v2234 = vpop.f32.mrf.mxu0
        %v2235 = vadd.f32 %v2122, %v2234
        %2236 = vdwg.mxu0
        %v2237 = vadd.f32 %v793, %v2159
        %v2238 = vadd.f32 %v794, %v2161
        %v2239 = vadd.f32 %v795, %v2163
        %v2240 = vadd.f32 %v796, %v2165
        %v2241 = vadd.f32 %v797, %v2169
        %v2242 = vadd.f32 %v798, %v2171
        %v2243 = vadd.f32 %v799, %v2173
        %v2244 = vadd.f32 %v800, %v2175
        %v2245 = vadd.f32 %v801, %v2179
        %v2246 = vadd.f32 %v802, %v2181
        %v2247 = vadd.f32 %v803, %v2183
        %v2248 = vadd.f32 %v804, %v2185
        %v2249 = vadd.f32 %v805, %v2189
        %v2250 = vadd.f32 %v806, %v2191
        %v2251 = vadd.f32 %v807, %v2193
        %v2252 = vadd.f32 %v808, %v2195
        %v2253 = vadd.f32 %v809, %v2199
        %v2254 = vadd.f32 %v810, %v2201
        %v2255 = vadd.f32 %v811, %v2203
        %v2256 = vadd.f32 %v812, %v2205
        %v2257 = vadd.f32 %v813, %v2209
        %v2258 = vadd.f32 %v814, %v2211
        %v2259 = vadd.f32 %v815, %v2213
        %v2260 = vadd.f32 %v816, %v2215
        %v2261 = vadd.f32 %v817, %v2219
        %v2262 = vadd.f32 %v818, %v2221
        %v2263 = vadd.f32 %v819, %v2223
        %v2264 = vadd.f32 %v820, %v2225
        %v2265 = vadd.f32 %v821, %v2229
        %v2266 = vadd.f32 %v822, %v2231
        %v2267 = vadd.f32 %v823, %v2233
        %v2268 = vadd.f32 %v824, %v2235
        %2269 = vst [vmem:[#allocation2] sm:$0xff] %v2237
        %2270 = vst [vmem:[#allocation2 + $0x8] sm:$0xff] %v2238
        %2271 = vst [vmem:[#allocation2 + $0x10] sm:$0xff] %v2239
        %2272 = vst [vmem:[#allocation2 + $0x18] sm:$0xff] %v2240
        %2273 = vst [vmem:[#allocation2 + $0x20] sm:$0xff] %v2241
        %2274 = vst [vmem:[#allocation2 + $0x28] sm:$0xff] %v2242
        %2275 = vst [vmem:[#allocation2 + $0x30] sm:$0xff] %v2243
        %2276 = vst [vmem:[#allocation2 + $0x38] sm:$0xff] %v2244
        %2277 = vst [vmem:[#allocation2 + $0x40] sm:$0xff] %v2245
        %2278 = vst [vmem:[#allocation2 + $0x48] sm:$0xff] %v2246
        %2279 = vst [vmem:[#allocation2 + $0x50] sm:$0xff] %v2247
        %2280 = vst [vmem:[#allocation2 + $0x58] sm:$0xff] %v2248
        %2281 = vst [vmem:[#allocation2 + $0x60] sm:$0xff] %v2249
        %2282 = vst [vmem:[#allocation2 + $0x68] sm:$0xff] %v2250
        %2283 = vst [vmem:[#allocation2 + $0x70] sm:$0xff] %v2251
        %2284 = vst [vmem:[#allocation2 + $0x78] sm:$0xff] %v2252
        %2285 = vst [vmem:[#allocation2 + $0x80] sm:$0xff] %v2253
        %2286 = vst [vmem:[#allocation2 + $0x88] sm:$0xff] %v2254
        %2287 = vst [vmem:[#allocation2 + $0x90] sm:$0xff] %v2255
        %2288 = vst [vmem:[#allocation2 + $0x98] sm:$0xff] %v2256
        %2289 = vst [vmem:[#allocation2 + $0xa0] sm:$0xff] %v2257
        %2290 = vst [vmem:[#allocation2 + $0xa8] sm:$0xff] %v2258
        %2291 = vst [vmem:[#allocation2 + $0xb0] sm:$0xff] %v2259
        %2292 = vst [vmem:[#allocation2 + $0xb8] sm:$0xff] %v2260
        %2293 = vst [vmem:[#allocation2 + $0xc0] sm:$0xff] %v2261
        %2294 = vst [vmem:[#allocation2 + $0xc8] sm:$0xff] %v2262
        %2295 = vst [vmem:[#allocation2 + $0xd0] sm:$0xff] %v2263
        %2296 = vst [vmem:[#allocation2 + $0xd8] sm:$0xff] %v2264
        %2297 = vst [vmem:[#allocation2 + $0xe0] sm:$0xff] %v2265
        %2298 = vst [vmem:[#allocation2 + $0xe8] sm:$0xff] %v2266
        %2299 = vst [vmem:[#allocation2 + $0xf0] sm:$0xff] %v2267
        %2300 = vst [vmem:[#allocation2 + $0xf8] sm:$0xff] %v2268
        %v2301 = vld [vmem:[#allocation3] sm:$0xff]
        %v2302 = vld [vmem:[#allocation3 + $0x8] sm:$0xff]
        %v2303 = vld [vmem:[#allocation3 + $0x10] sm:$0xff]
        %v2304 = vld [vmem:[#allocation3 + $0x18] sm:$0xff]
        %v2305 = vld [vmem:[#allocation3 + $0x20] sm:$0xff]
        %v2306 = vld [vmem:[#allocation3 + $0x28] sm:$0xff]
        %v2307 = vld [vmem:[#allocation3 + $0x30] sm:$0xff]
        %v2308 = vld [vmem:[#allocation3 + $0x38] sm:$0xff]
        %v2309 = vld [vmem:[#allocation3 + $0x40] sm:$0xff]
        %v2310 = vld [vmem:[#allocation3 + $0x48] sm:$0xff]
        %v2311 = vld [vmem:[#allocation3 + $0x50] sm:$0xff]
        %v2312 = vld [vmem:[#allocation3 + $0x58] sm:$0xff]
        %v2313 = vld [vmem:[#allocation3 + $0x60] sm:$0xff]
        %v2314 = vld [vmem:[#allocation3 + $0x68] sm:$0xff]
        %v2315 = vld [vmem:[#allocation3 + $0x70] sm:$0xff]
        %v2316 = vld [vmem:[#allocation3 + $0x78] sm:$0xff]
        %v2317 = vld [vmem:[#allocation3 + $0x80] sm:$0xff]
        %v2318 = vld [vmem:[#allocation3 + $0x88] sm:$0xff]
        %v2319 = vld [vmem:[#allocation3 + $0x90] sm:$0xff]
        %v2320 = vld [vmem:[#allocation3 + $0x98] sm:$0xff]
        %v2321 = vld [vmem:[#allocation3 + $0xa0] sm:$0xff]
        %v2322 = vld [vmem:[#allocation3 + $0xa8] sm:$0xff]
        %v2323 = vld [vmem:[#allocation3 + $0xb0] sm:$0xff]
        %v2324 = vld [vmem:[#allocation3 + $0xb8] sm:$0xff]
        %v2325 = vld [vmem:[#allocation3 + $0xc0] sm:$0xff]
        %v2326 = vld [vmem:[#allocation3 + $0xc8] sm:$0xff]
        %v2327 = vld [vmem:[#allocation3 + $0xd0] sm:$0xff]
        %v2328 = vld [vmem:[#allocation3 + $0xd8] sm:$0xff]
        %v2329 = vld [vmem:[#allocation3 + $0xe0] sm:$0xff]
        %v2330 = vld [vmem:[#allocation3 + $0xe8] sm:$0xff]
        %v2331 = vld [vmem:[#allocation3 + $0xf0] sm:$0xff]
        %v2332 = vld [vmem:[#allocation3 + $0xf8] sm:$0xff]
        %v2333 = vld [vmem:[%s658] sm:$0xff]
        %v2334 = vld [vmem:[%s658 + $0x8] sm:$0xff]
        %v2335 = vld [vmem:[%s658 + $0x10] sm:$0xff]
        %v2336 = vld [vmem:[%s658 + $0x18] sm:$0xff]
        %v2337 = vld [vmem:[%s658 + $0x20] sm:$0xff]
        %v2338 = vld [vmem:[%s658 + $0x28] sm:$0xff]
        %v2339 = vld [vmem:[%s658 + $0x30] sm:$0xff]
        %v2340 = vld [vmem:[%s658 + $0x38] sm:$0xff]
        %v2341 = vld [vmem:[%s658 + $0x40] sm:$0xff]
        %v2342 = vld [vmem:[%s658 + $0x48] sm:$0xff]
        %v2343 = vld [vmem:[%s658 + $0x50] sm:$0xff]
        %v2344 = vld [vmem:[%s658 + $0x58] sm:$0xff]
        %v2345 = vld [vmem:[%s658 + $0x60] sm:$0xff]
        %v2346 = vld [vmem:[%s658 + $0x68] sm:$0xff]
        %v2347 = vld [vmem:[%s658 + $0x70] sm:$0xff]
        %v2348 = vld [vmem:[%s658 + $0x78] sm:$0xff]
        %v2349 = vld [vmem:[%s658 + $0x80] sm:$0xff]
        %v2350 = vld [vmem:[%s658 + $0x88] sm:$0xff]
        %v2351 = vld [vmem:[%s658 + $0x90] sm:$0xff]
        %v2352 = vld [vmem:[%s658 + $0x98] sm:$0xff]
        %v2353 = vld [vmem:[%s658 + $0xa0] sm:$0xff]
        %v2354 = vld [vmem:[%s658 + $0xa8] sm:$0xff]
        %v2355 = vld [vmem:[%s658 + $0xb0] sm:$0xff]
        %v2356 = vld [vmem:[%s658 + $0xb8] sm:$0xff]
        %v2357 = vld [vmem:[%s658 + $0xc0] sm:$0xff]
        %v2358 = vld [vmem:[%s658 + $0xc8] sm:$0xff]
        %v2359 = vld [vmem:[%s658 + $0xd0] sm:$0xff]
        %v2360 = vld [vmem:[%s658 + $0xd8] sm:$0xff]
        %v2361 = vld [vmem:[%s658 + $0xe0] sm:$0xff]
        %v2362 = vld [vmem:[%s658 + $0xe8] sm:$0xff]
        %v2363 = vld [vmem:[%s658 + $0xf0] sm:$0xff]
        %v2364 = vld [vmem:[%s658 + $0xf8] sm:$0xff]
        %v2365 = vld [vmem:[%s658 + $0x100] sm:$0xff]
        %v2366 = vld [vmem:[%s658 + $0x108] sm:$0xff]
        %v2367 = vld [vmem:[%s658 + $0x110] sm:$0xff]
        %v2368 = vld [vmem:[%s658 + $0x118] sm:$0xff]
        %v2369 = vld [vmem:[%s658 + $0x120] sm:$0xff]
        %v2370 = vld [vmem:[%s658 + $0x128] sm:$0xff]
        %v2371 = vld [vmem:[%s658 + $0x130] sm:$0xff]
        %v2372 = vld [vmem:[%s658 + $0x138] sm:$0xff]
        %v2373 = vld [vmem:[%s658 + $0x140] sm:$0xff]
        %v2374 = vld [vmem:[%s658 + $0x148] sm:$0xff]
        %v2375 = vld [vmem:[%s658 + $0x150] sm:$0xff]
        %v2376 = vld [vmem:[%s658 + $0x158] sm:$0xff]
        %v2377 = vld [vmem:[%s658 + $0x160] sm:$0xff]
        %v2378 = vld [vmem:[%s658 + $0x168] sm:$0xff]
        %v2379 = vld [vmem:[%s658 + $0x170] sm:$0xff]
        %v2380 = vld [vmem:[%s658 + $0x178] sm:$0xff]
        %v2381 = vld [vmem:[%s658 + $0x180] sm:$0xff]
        %v2382 = vld [vmem:[%s658 + $0x188] sm:$0xff]
        %v2383 = vld [vmem:[%s658 + $0x190] sm:$0xff]
        %v2384 = vld [vmem:[%s658 + $0x198] sm:$0xff]
        %v2385 = vld [vmem:[%s658 + $0x1a0] sm:$0xff]
        %v2386 = vld [vmem:[%s658 + $0x1a8] sm:$0xff]
        %v2387 = vld [vmem:[%s658 + $0x1b0] sm:$0xff]
        %v2388 = vld [vmem:[%s658 + $0x1b8] sm:$0xff]
        %v2389 = vld [vmem:[%s658 + $0x1c0] sm:$0xff]
        %v2390 = vld [vmem:[%s658 + $0x1c8] sm:$0xff]
        %v2391 = vld [vmem:[%s658 + $0x1d0] sm:$0xff]
        %v2392 = vld [vmem:[%s658 + $0x1d8] sm:$0xff]
        %v2393 = vld [vmem:[%s658 + $0x1e0] sm:$0xff]
        %v2394 = vld [vmem:[%s658 + $0x1e8] sm:$0xff]
        %v2395 = vld [vmem:[%s658 + $0x1f0] sm:$0xff]
        %v2396 = vld [vmem:[%s658 + $0x1f8] sm:$0xff]
        %v2397 = vld [vmem:[%s658 + $0x200] sm:$0xff]
        %v2398 = vld [vmem:[%s658 + $0x208] sm:$0xff]
        %v2399 = vld [vmem:[%s658 + $0x210] sm:$0xff]
        %v2400 = vld [vmem:[%s658 + $0x218] sm:$0xff]
        %v2401 = vld [vmem:[%s658 + $0x220] sm:$0xff]
        %v2402 = vld [vmem:[%s658 + $0x228] sm:$0xff]
        %v2403 = vld [vmem:[%s658 + $0x230] sm:$0xff]
        %v2404 = vld [vmem:[%s658 + $0x238] sm:$0xff]
        %v2405 = vld [vmem:[%s658 + $0x240] sm:$0xff]
        %v2406 = vld [vmem:[%s658 + $0x248] sm:$0xff]
        %v2407 = vld [vmem:[%s658 + $0x250] sm:$0xff]
        %v2408 = vld [vmem:[%s658 + $0x258] sm:$0xff]
        %v2409 = vld [vmem:[%s658 + $0x260] sm:$0xff]
        %v2410 = vld [vmem:[%s658 + $0x268] sm:$0xff]
        %v2411 = vld [vmem:[%s658 + $0x270] sm:$0xff]
        %v2412 = vld [vmem:[%s658 + $0x278] sm:$0xff]
        %v2413 = vld [vmem:[%s658 + $0x280] sm:$0xff]
        %v2414 = vld [vmem:[%s658 + $0x288] sm:$0xff]
        %v2415 = vld [vmem:[%s658 + $0x290] sm:$0xff]
        %v2416 = vld [vmem:[%s658 + $0x298] sm:$0xff]
        %v2417 = vld [vmem:[%s658 + $0x2a0] sm:$0xff]
        %v2418 = vld [vmem:[%s658 + $0x2a8] sm:$0xff]
        %v2419 = vld [vmem:[%s658 + $0x2b0] sm:$0xff]
        %v2420 = vld [vmem:[%s658 + $0x2b8] sm:$0xff]
        %v2421 = vld [vmem:[%s658 + $0x2c0] sm:$0xff]
        %v2422 = vld [vmem:[%s658 + $0x2c8] sm:$0xff]
        %v2423 = vld [vmem:[%s658 + $0x2d0] sm:$0xff]
        %v2424 = vld [vmem:[%s658 + $0x2d8] sm:$0xff]
        %v2425 = vld [vmem:[%s658 + $0x2e0] sm:$0xff]
        %v2426 = vld [vmem:[%s658 + $0x2e8] sm:$0xff]
        %v2427 = vld [vmem:[%s658 + $0x2f0] sm:$0xff]
        %v2428 = vld [vmem:[%s658 + $0x2f8] sm:$0xff]
        %v2429 = vld [vmem:[%s658 + $0x300] sm:$0xff]
        %v2430 = vld [vmem:[%s658 + $0x308] sm:$0xff]
        %v2431 = vld [vmem:[%s658 + $0x310] sm:$0xff]
        %v2432 = vld [vmem:[%s658 + $0x318] sm:$0xff]
        %v2433 = vld [vmem:[%s658 + $0x320] sm:$0xff]
        %v2434 = vld [vmem:[%s658 + $0x328] sm:$0xff]
        %v2435 = vld [vmem:[%s658 + $0x330] sm:$0xff]
        %v2436 = vld [vmem:[%s658 + $0x338] sm:$0xff]
        %v2437 = vld [vmem:[%s658 + $0x340] sm:$0xff]
        %v2438 = vld [vmem:[%s658 + $0x348] sm:$0xff]
        %v2439 = vld [vmem:[%s658 + $0x350] sm:$0xff]
        %v2440 = vld [vmem:[%s658 + $0x358] sm:$0xff]
        %v2441 = vld [vmem:[%s658 + $0x360] sm:$0xff]
        %v2442 = vld [vmem:[%s658 + $0x368] sm:$0xff]
        %v2443 = vld [vmem:[%s658 + $0x370] sm:$0xff]
        %v2444 = vld [vmem:[%s658 + $0x378] sm:$0xff]
        %v2557 = vunpack.c.l.b16 %v2333
        %v2558 = vunpack.c.h.b16 %v2333
        %v2559 = vunpack.c.l.b16 %v2334
        %v2560 = vunpack.c.h.b16 %v2334
        %v2561 = vunpack.c.l.b16 %v2335
        %v2562 = vunpack.c.h.b16 %v2335
        %v2563 = vunpack.c.l.b16 %v2336
        %v2564 = vunpack.c.h.b16 %v2336
        %v2565 = vunpack.c.l.b16 %v2337
        %v2566 = vunpack.c.h.b16 %v2337
        %v2567 = vunpack.c.l.b16 %v2338
        %v2568 = vunpack.c.h.b16 %v2338
        %v2569 = vunpack.c.l.b16 %v2339
        %v2570 = vunpack.c.h.b16 %v2339
        %v2571 = vunpack.c.l.b16 %v2340
        %v2572 = vunpack.c.h.b16 %v2340
        %v2573 = vunpack.c.l.b16 %v2341
        %v2574 = vunpack.c.h.b16 %v2341
        %v2575 = vunpack.c.l.b16 %v2342
        %v2576 = vunpack.c.h.b16 %v2342
        %v2577 = vunpack.c.l.b16 %v2343
        %v2578 = vunpack.c.h.b16 %v2343
        %v2579 = vunpack.c.l.b16 %v2344
        %v2580 = vunpack.c.h.b16 %v2344
        %v2581 = vunpack.c.l.b16 %v2345
        %v2582 = vunpack.c.h.b16 %v2345
        %v2583 = vunpack.c.l.b16 %v2346
        %v2584 = vunpack.c.h.b16 %v2346
        %v2585 = vunpack.c.l.b16 %v2347
        %v2586 = vunpack.c.h.b16 %v2347
        %v2587 = vunpack.c.l.b16 %v2348
        %v2588 = vunpack.c.h.b16 %v2348
        %v2589 = vunpack.c.l.b16 %v2349
        %v2590 = vunpack.c.h.b16 %v2349
        %v2591 = vunpack.c.l.b16 %v2350
        %v2592 = vunpack.c.h.b16 %v2350
        %v2593 = vunpack.c.l.b16 %v2351
        %v2594 = vunpack.c.h.b16 %v2351
        %v2595 = vunpack.c.l.b16 %v2352
        %v2596 = vunpack.c.h.b16 %v2352
        %v2597 = vunpack.c.l.b16 %v2353
        %v2598 = vunpack.c.h.b16 %v2353
        %v2599 = vunpack.c.l.b16 %v2354
        %v2600 = vunpack.c.h.b16 %v2354
        %v2601 = vunpack.c.l.b16 %v2355
        %v2602 = vunpack.c.h.b16 %v2355
        %v2603 = vunpack.c.l.b16 %v2356
        %v2604 = vunpack.c.h.b16 %v2356
        %v2605 = vunpack.c.l.b16 %v2357
        %v2606 = vunpack.c.h.b16 %v2357
        %v2607 = vunpack.c.l.b16 %v2358
        %v2608 = vunpack.c.h.b16 %v2358
        %v2609 = vunpack.c.l.b16 %v2359
        %v2610 = vunpack.c.h.b16 %v2359
        %v2611 = vunpack.c.l.b16 %v2360
        %v2612 = vunpack.c.h.b16 %v2360
        %v2613 = vunpack.c.l.b16 %v2361
        %v2614 = vunpack.c.h.b16 %v2361
        %v2615 = vunpack.c.l.b16 %v2362
        %v2616 = vunpack.c.h.b16 %v2362
        %v2617 = vunpack.c.l.b16 %v2363
        %v2618 = vunpack.c.h.b16 %v2363
        %v2619 = vunpack.c.l.b16 %v2364
        %v2620 = vunpack.c.h.b16 %v2364
        %v2621 = vunpack.c.l.b16 %v2365
        %v2622 = vunpack.c.h.b16 %v2365
        %v2623 = vunpack.c.l.b16 %v2366
        %v2624 = vunpack.c.h.b16 %v2366
        %v2625 = vunpack.c.l.b16 %v2367
        %v2626 = vunpack.c.h.b16 %v2367
        %v2627 = vunpack.c.l.b16 %v2368
        %v2628 = vunpack.c.h.b16 %v2368
        %v2629 = vunpack.c.l.b16 %v2369
        %v2630 = vunpack.c.h.b16 %v2369
        %v2631 = vunpack.c.l.b16 %v2370
        %v2632 = vunpack.c.h.b16 %v2370
        %v2633 = vunpack.c.l.b16 %v2371
        %v2634 = vunpack.c.h.b16 %v2371
        %v2635 = vunpack.c.l.b16 %v2372
        %v2636 = vunpack.c.h.b16 %v2372
        %v2637 = vunpack.c.l.b16 %v2373
        %v2638 = vunpack.c.h.b16 %v2373
        %v2639 = vunpack.c.l.b16 %v2374
        %v2640 = vunpack.c.h.b16 %v2374
        %v2641 = vunpack.c.l.b16 %v2375
        %v2642 = vunpack.c.h.b16 %v2375
        %v2643 = vunpack.c.l.b16 %v2376
        %v2644 = vunpack.c.h.b16 %v2376
        %v2645 = vunpack.c.l.b16 %v2377
        %v2646 = vunpack.c.h.b16 %v2377
        %v2647 = vunpack.c.l.b16 %v2378
        %v2648 = vunpack.c.h.b16 %v2378
        %v2649 = vunpack.c.l.b16 %v2379
        %v2650 = vunpack.c.h.b16 %v2379
        %v2651 = vunpack.c.l.b16 %v2380
        %v2652 = vunpack.c.h.b16 %v2380
        %v2653 = vunpack.c.l.b16 %v2381
        %v2654 = vunpack.c.h.b16 %v2381
        %v2655 = vunpack.c.l.b16 %v2382
        %v2656 = vunpack.c.h.b16 %v2382
        %v2657 = vunpack.c.l.b16 %v2383
        %v2658 = vunpack.c.h.b16 %v2383
        %v2659 = vunpack.c.l.b16 %v2384
        %v2660 = vunpack.c.h.b16 %v2384
        %v2661 = vunpack.c.l.b16 %v2385
        %v2662 = vunpack.c.h.b16 %v2385
        %v2663 = vunpack.c.l.b16 %v2386
        %v2664 = vunpack.c.h.b16 %v2386
        %v2665 = vunpack.c.l.b16 %v2387
        %v2666 = vunpack.c.h.b16 %v2387
        %v2667 = vunpack.c.l.b16 %v2388
        %v2668 = vunpack.c.h.b16 %v2388
        %v2669 = vunpack.c.l.b16 %v2389
        %v2670 = vunpack.c.h.b16 %v2389
        %v2671 = vunpack.c.l.b16 %v2390
        %v2672 = vunpack.c.h.b16 %v2390
        %v2673 = vunpack.c.l.b16 %v2391
        %v2674 = vunpack.c.h.b16 %v2391
        %v2675 = vunpack.c.l.b16 %v2392
        %v2676 = vunpack.c.h.b16 %v2392
        %v2677 = vunpack.c.l.b16 %v2393
        %v2678 = vunpack.c.h.b16 %v2393
        %v2679 = vunpack.c.l.b16 %v2394
        %v2680 = vunpack.c.h.b16 %v2394
        %v2681 = vunpack.c.l.b16 %v2395
        %v2682 = vunpack.c.h.b16 %v2395
        %v2683 = vunpack.c.l.b16 %v2396
        %v2684 = vunpack.c.h.b16 %v2396
        %v2685 = vunpack.c.l.b16 %v2397
        %v2686 = vunpack.c.h.b16 %v2397
        %v2687 = vunpack.c.l.b16 %v2398
        %v2688 = vunpack.c.h.b16 %v2398
        %v2689 = vunpack.c.l.b16 %v2399
        %v2690 = vunpack.c.h.b16 %v2399
        %v2691 = vunpack.c.l.b16 %v2400
        %v2692 = vunpack.c.h.b16 %v2400
        %v2693 = vunpack.c.l.b16 %v2401
        %v2694 = vunpack.c.h.b16 %v2401
        %v2695 = vunpack.c.l.b16 %v2402
        %v2696 = vunpack.c.h.b16 %v2402
        %v2697 = vunpack.c.l.b16 %v2403
        %v2698 = vunpack.c.h.b16 %v2403
        %v2699 = vunpack.c.l.b16 %v2404
        %v2700 = vunpack.c.h.b16 %v2404
        %v2701 = vunpack.c.l.b16 %v2405
        %v2702 = vunpack.c.h.b16 %v2405
        %v2703 = vunpack.c.l.b16 %v2406
        %v2704 = vunpack.c.h.b16 %v2406
        %v2705 = vunpack.c.l.b16 %v2407
        %v2706 = vunpack.c.h.b16 %v2407
        %v2707 = vunpack.c.l.b16 %v2408
        %v2708 = vunpack.c.h.b16 %v2408
        %v2709 = vunpack.c.l.b16 %v2409
        %v2710 = vunpack.c.h.b16 %v2409
        %v2711 = vunpack.c.l.b16 %v2410
        %v2712 = vunpack.c.h.b16 %v2410
        %v2713 = vunpack.c.l.b16 %v2411
        %v2714 = vunpack.c.h.b16 %v2411
        %v2715 = vunpack.c.l.b16 %v2412
        %v2716 = vunpack.c.h.b16 %v2412
        %v2717 = vunpack.c.l.b16 %v2413
        %v2718 = vunpack.c.h.b16 %v2413
        %v2719 = vunpack.c.l.b16 %v2414
        %v2720 = vunpack.c.h.b16 %v2414
        %v2721 = vunpack.c.l.b16 %v2415
        %v2722 = vunpack.c.h.b16 %v2415
        %v2723 = vunpack.c.l.b16 %v2416
        %v2724 = vunpack.c.h.b16 %v2416
        %v2725 = vunpack.c.l.b16 %v2417
        %v2726 = vunpack.c.h.b16 %v2417
        %v2727 = vunpack.c.l.b16 %v2418
        %v2728 = vunpack.c.h.b16 %v2418
        %v2729 = vunpack.c.l.b16 %v2419
        %v2730 = vunpack.c.h.b16 %v2419
        %v2731 = vunpack.c.l.b16 %v2420
        %v2732 = vunpack.c.h.b16 %v2420
        %v2733 = vunpack.c.l.b16 %v2421
        %v2734 = vunpack.c.h.b16 %v2421
        %v2735 = vunpack.c.l.b16 %v2422
        %v2736 = vunpack.c.h.b16 %v2422
        %v2737 = vunpack.c.l.b16 %v2423
        %v2738 = vunpack.c.h.b16 %v2423
        %v2739 = vunpack.c.l.b16 %v2424
        %v2740 = vunpack.c.h.b16 %v2424
        %v2741 = vunpack.c.l.b16 %v2425
        %v2742 = vunpack.c.h.b16 %v2425
        %v2743 = vunpack.c.l.b16 %v2426
        %v2744 = vunpack.c.h.b16 %v2426
        %v2745 = vunpack.c.l.b16 %v2427
        %v2746 = vunpack.c.h.b16 %v2427
        %v2747 = vunpack.c.l.b16 %v2428
        %v2748 = vunpack.c.h.b16 %v2428
        %v2749 = vunpack.c.l.b16 %v2429
        %v2750 = vunpack.c.h.b16 %v2429
        %v2751 = vunpack.c.l.b16 %v2430
        %v2752 = vunpack.c.h.b16 %v2430
        %v2753 = vunpack.c.l.b16 %v2431
        %v2754 = vunpack.c.h.b16 %v2431
        %v2755 = vunpack.c.l.b16 %v2432
        %v2756 = vunpack.c.h.b16 %v2432
        %v2757 = vunpack.c.l.b16 %v2433
        %v2758 = vunpack.c.h.b16 %v2433
        %v2759 = vunpack.c.l.b16 %v2434
        %v2760 = vunpack.c.h.b16 %v2434
        %v2761 = vunpack.c.l.b16 %v2435
        %v2762 = vunpack.c.h.b16 %v2435
        %v2763 = vunpack.c.l.b16 %v2436
        %v2764 = vunpack.c.h.b16 %v2436
        %v2765 = vunpack.c.l.b16 %v2437
        %v2766 = vunpack.c.h.b16 %v2437
        %v2767 = vunpack.c.l.b16 %v2438
        %v2768 = vunpack.c.h.b16 %v2438
        %v2769 = vunpack.c.l.b16 %v2439
        %v2770 = vunpack.c.h.b16 %v2439
        %v2771 = vunpack.c.l.b16 %v2440
        %v2772 = vunpack.c.h.b16 %v2440
        %v2773 = vunpack.c.l.b16 %v2441
        %v2774 = vunpack.c.h.b16 %v2441
        %v2775 = vunpack.c.l.b16 %v2442
        %v2776 = vunpack.c.h.b16 %v2442
        %v2777 = vunpack.c.l.b16 %v2443
        %v2778 = vunpack.c.h.b16 %v2443
        %v2779 = vunpack.c.l.b16 %v2444
        %v2780 = vunpack.c.h.b16 %v2444
        %v2781 = vpack.c.b16 %v2559, %v2557
        %v2782 = vpack.c.b16 %v2560, %v2558
        %v2783 = vpack.c.b16 %v2563, %v2561
        %v2784 = vpack.c.b16 %v2564, %v2562
        %v2785 = vpack.c.b16 %v2567, %v2565
        %v2786 = vpack.c.b16 %v2568, %v2566
        %v2787 = vpack.c.b16 %v2571, %v2569
        %v2788 = vpack.c.b16 %v2572, %v2570
        %v2789 = vpack.c.b16 %v2575, %v2573
        %v2790 = vpack.c.b16 %v2576, %v2574
        %v2791 = vpack.c.b16 %v2579, %v2577
        %v2792 = vpack.c.b16 %v2580, %v2578
        %v2793 = vpack.c.b16 %v2583, %v2581
        %v2794 = vpack.c.b16 %v2584, %v2582
        %v2795 = vpack.c.b16 %v2587, %v2585
        %v2796 = vpack.c.b16 %v2588, %v2586
        %v2797 = vpack.c.b16 %v2591, %v2589
        %v2798 = vpack.c.b16 %v2592, %v2590
        %v2799 = vpack.c.b16 %v2595, %v2593
        %v2800 = vpack.c.b16 %v2596, %v2594
        %v2801 = vpack.c.b16 %v2599, %v2597
        %v2802 = vpack.c.b16 %v2600, %v2598
        %v2803 = vpack.c.b16 %v2603, %v2601
        %v2804 = vpack.c.b16 %v2604, %v2602
        %v2805 = vpack.c.b16 %v2607, %v2605
        %v2806 = vpack.c.b16 %v2608, %v2606
        %v2807 = vpack.c.b16 %v2611, %v2609
        %v2808 = vpack.c.b16 %v2612, %v2610
        %v2809 = vpack.c.b16 %v2615, %v2613
        %v2810 = vpack.c.b16 %v2616, %v2614
        %v2811 = vpack.c.b16 %v2619, %v2617
        %v2812 = vpack.c.b16 %v2620, %v2618
        %v2813 = vpack.c.b16 %v2623, %v2621
        %v2814 = vpack.c.b16 %v2624, %v2622
        %v2815 = vpack.c.b16 %v2627, %v2625
        %v2816 = vpack.c.b16 %v2628, %v2626
        %v2817 = vpack.c.b16 %v2631, %v2629
        %v2818 = vpack.c.b16 %v2632, %v2630
        %v2819 = vpack.c.b16 %v2635, %v2633
        %v2820 = vpack.c.b16 %v2636, %v2634
        %v2821 = vpack.c.b16 %v2639, %v2637
        %v2822 = vpack.c.b16 %v2640, %v2638
        %v2823 = vpack.c.b16 %v2643, %v2641
        %v2824 = vpack.c.b16 %v2644, %v2642
        %v2825 = vpack.c.b16 %v2647, %v2645
        %v2826 = vpack.c.b16 %v2648, %v2646
        %v2827 = vpack.c.b16 %v2651, %v2649
        %v2828 = vpack.c.b16 %v2652, %v2650
        %v2829 = vpack.c.b16 %v2655, %v2653
        %v2830 = vpack.c.b16 %v2656, %v2654
        %v2831 = vpack.c.b16 %v2659, %v2657
        %v2832 = vpack.c.b16 %v2660, %v2658
        %v2833 = vpack.c.b16 %v2663, %v2661
        %v2834 = vpack.c.b16 %v2664, %v2662
        %v2835 = vpack.c.b16 %v2667, %v2665
        %v2836 = vpack.c.b16 %v2668, %v2666
        %v2837 = vpack.c.b16 %v2671, %v2669
        %v2838 = vpack.c.b16 %v2672, %v2670
        %v2839 = vpack.c.b16 %v2675, %v2673
        %v2840 = vpack.c.b16 %v2676, %v2674
        %v2841 = vpack.c.b16 %v2679, %v2677
        %v2842 = vpack.c.b16 %v2680, %v2678
        %v2843 = vpack.c.b16 %v2683, %v2681
        %v2844 = vpack.c.b16 %v2684, %v2682
        %v2845 = vpack.c.b16 %v2687, %v2685
        %v2846 = vpack.c.b16 %v2688, %v2686
        %v2847 = vpack.c.b16 %v2691, %v2689
        %v2848 = vpack.c.b16 %v2692, %v2690
        %v2849 = vpack.c.b16 %v2695, %v2693
        %v2850 = vpack.c.b16 %v2696, %v2694
        %v2851 = vpack.c.b16 %v2699, %v2697
        %v2852 = vpack.c.b16 %v2700, %v2698
        %v2853 = vpack.c.b16 %v2703, %v2701
        %v2854 = vpack.c.b16 %v2704, %v2702
        %v2855 = vpack.c.b16 %v2707, %v2705
        %v2856 = vpack.c.b16 %v2708, %v2706
        %v2857 = vpack.c.b16 %v2711, %v2709
        %v2858 = vpack.c.b16 %v2712, %v2710
        %v2859 = vpack.c.b16 %v2715, %v2713
        %v2860 = vpack.c.b16 %v2716, %v2714
        %v2861 = vpack.c.b16 %v2719, %v2717
        %v2862 = vpack.c.b16 %v2720, %v2718
        %v2863 = vpack.c.b16 %v2723, %v2721
        %v2864 = vpack.c.b16 %v2724, %v2722
        %v2865 = vpack.c.b16 %v2727, %v2725
        %v2866 = vpack.c.b16 %v2728, %v2726
        %v2867 = vpack.c.b16 %v2731, %v2729
        %v2868 = vpack.c.b16 %v2732, %v2730
        %v2869 = vpack.c.b16 %v2735, %v2733
        %v2870 = vpack.c.b16 %v2736, %v2734
        %v2871 = vpack.c.b16 %v2739, %v2737
        %v2872 = vpack.c.b16 %v2740, %v2738
        %v2873 = vpack.c.b16 %v2743, %v2741
        %v2874 = vpack.c.b16 %v2744, %v2742
        %v2875 = vpack.c.b16 %v2747, %v2745
        %v2876 = vpack.c.b16 %v2748, %v2746
        %v2877 = vpack.c.b16 %v2751, %v2749
        %v2878 = vpack.c.b16 %v2752, %v2750
        %v2879 = vpack.c.b16 %v2755, %v2753
        %v2880 = vpack.c.b16 %v2756, %v2754
        %v2881 = vpack.c.b16 %v2759, %v2757
        %v2882 = vpack.c.b16 %v2760, %v2758
        %v2883 = vpack.c.b16 %v2763, %v2761
        %v2884 = vpack.c.b16 %v2764, %v2762
        %v2885 = vpack.c.b16 %v2767, %v2765
        %v2886 = vpack.c.b16 %v2768, %v2766
        %v2887 = vpack.c.b16 %v2771, %v2769
        %v2888 = vpack.c.b16 %v2772, %v2770
        %v2889 = vpack.c.b16 %v2775, %v2773
        %v2890 = vpack.c.b16 %v2776, %v2774
        %v2891 = vpack.c.b16 %v2779, %v2777
        %v2892 = vpack.c.b16 %v2780, %v2778
        %3005 = vmatprep.subr.bf16.mxu0 %v2796
        %3006 = vmatpush1.bf16.msra.mxu0 %v2795
        %3007 = vmatprep.subr.bf16.mxu0 %v2794
        %3008 = vmatpush1.bf16.msra.mxu0 %v2793
        %3009 = vmatprep.subr.bf16.mxu0 %v2792
        %3010 = vmatpush1.bf16.msra.mxu0 %v2791
        %3011 = vmatprep.subr.bf16.mxu0 %v2790
        %3012 = vmatpush1.bf16.msra.mxu0 %v2789
        %3013 = vmatprep.subr.bf16.mxu0 %v2788
        %3014 = vmatpush1.bf16.msra.mxu0 %v2787
        %3015 = vmatprep.subr.bf16.mxu0 %v2786
        %3016 = vmatpush1.bf16.msra.mxu0 %v2785
        %3017 = vmatprep.subr.bf16.mxu0 %v2784
        %3018 = vmatpush1.bf16.msra.mxu0 %v2783
        %3019 = vmatprep.subr.bf16.mxu0 %v2782
        %3020 = vmatpush1.bf16.msra.mxu0 %v2781
        %3021 = vmatprep.subr.bf16.mxu0 %v2812
        %3022 = vmatpush2.bf16.msra.mxu0 %v2811
        %3023 = vmatprep.subr.bf16.mxu0 %v2810
        %3024 = vmatpush2.bf16.msra.mxu0 %v2809
        %3025 = vmatprep.subr.bf16.mxu0 %v2808
        %3026 = vmatpush2.bf16.msra.mxu0 %v2807
        %3027 = vmatprep.subr.bf16.mxu0 %v2806
        %3028 = vmatpush2.bf16.msra.mxu0 %v2805
        %3029 = vmatprep.subr.bf16.mxu0 %v2804
        %3030 = vmatpush2.bf16.msra.mxu0 %v2803
        %3031 = vmatprep.subr.bf16.mxu0 %v2802
        %3032 = vmatpush2.bf16.msra.mxu0 %v2801
        %3033 = vmatprep.subr.bf16.mxu0 %v2800
        %3034 = vmatpush2.bf16.msra.mxu0 %v2799
        %3035 = vmatprep.subr.bf16.mxu0 %v2798
        %3036 = vmatpush2.bf16.msra.mxu0 %v2797
        %3037 = vmatprep.mubr.bf16.mxu0 %v1114
        %3038 = vmatmul.mubr.bf16.gmra.mxu0 %v1113
        %v3039 = vpop.f32.mrf.mxu0
        %v3040 = vadd.f32 0.0, %v3039
        %v3041 = vpop.f32.mrf.mxu0
        %v3042 = vadd.f32 0.0, %v3041
        %v3043 = vpop.f32.mrf.mxu0
        %v3044 = vadd.f32 0.0, %v3043
        %v3045 = vpop.f32.mrf.mxu0
        %v3046 = vadd.f32 0.0, %v3045
        %3047 = vmatprep.mubr.bf16.mxu0 %v1121
        %3048 = vmatmul.mubr.bf16.gmra.mxu0 %v1120
        %v3049 = vpop.f32.mrf.mxu0
        %v3050 = vadd.f32 0.0, %v3049
        %v3051 = vpop.f32.mrf.mxu0
        %v3052 = vadd.f32 0.0, %v3051
        %v3053 = vpop.f32.mrf.mxu0
        %v3054 = vadd.f32 0.0, %v3053
        %v3055 = vpop.f32.mrf.mxu0
        %v3056 = vadd.f32 0.0, %v3055
        %3057 = vmatprep.mubr.bf16.mxu0 %v1128
        %3058 = vmatmul.mubr.bf16.gmra.mxu0 %v1127
        %v3059 = vpop.f32.mrf.mxu0
        %v3060 = vadd.f32 0.0, %v3059
        %v3061 = vpop.f32.mrf.mxu0
        %v3062 = vadd.f32 0.0, %v3061
        %v3063 = vpop.f32.mrf.mxu0
        %v3064 = vadd.f32 0.0, %v3063
        %v3065 = vpop.f32.mrf.mxu0
        %v3066 = vadd.f32 0.0, %v3065
        %3067 = vmatprep.mubr.bf16.mxu0 %v1135
        %3068 = vmatmul.mubr.bf16.gmra.mxu0 %v1134
        %v3069 = vpop.f32.mrf.mxu0
        %v3070 = vadd.f32 0.0, %v3069
        %v3071 = vpop.f32.mrf.mxu0
        %v3072 = vadd.f32 0.0, %v3071
        %v3073 = vpop.f32.mrf.mxu0
        %v3074 = vadd.f32 0.0, %v3073
        %v3075 = vpop.f32.mrf.mxu0
        %v3076 = vadd.f32 0.0, %v3075
        %3077 = vmatprep.mubr.bf16.mxu0 %v1142
        %3078 = vmatmul.mubr.bf16.gmra.mxu0 %v1141
        %v3079 = vpop.f32.mrf.mxu0
        %v3080 = vadd.f32 0.0, %v3079
        %v3081 = vpop.f32.mrf.mxu0
        %v3082 = vadd.f32 0.0, %v3081
        %v3083 = vpop.f32.mrf.mxu0
        %v3084 = vadd.f32 0.0, %v3083
        %v3085 = vpop.f32.mrf.mxu0
        %v3086 = vadd.f32 0.0, %v3085
        %3087 = vmatprep.mubr.bf16.mxu0 %v1149
        %3088 = vmatmul.mubr.bf16.gmra.mxu0 %v1148
        %v3089 = vpop.f32.mrf.mxu0
        %v3090 = vadd.f32 0.0, %v3089
        %v3091 = vpop.f32.mrf.mxu0
        %v3092 = vadd.f32 0.0, %v3091
        %v3093 = vpop.f32.mrf.mxu0
        %v3094 = vadd.f32 0.0, %v3093
        %v3095 = vpop.f32.mrf.mxu0
        %v3096 = vadd.f32 0.0, %v3095
        %3097 = vmatprep.mubr.bf16.mxu0 %v1156
        %3098 = vmatmul.mubr.bf16.gmra.mxu0 %v1155
        %v3099 = vpop.f32.mrf.mxu0
        %v3100 = vadd.f32 0.0, %v3099
        %v3101 = vpop.f32.mrf.mxu0
        %v3102 = vadd.f32 0.0, %v3101
        %v3103 = vpop.f32.mrf.mxu0
        %v3104 = vadd.f32 0.0, %v3103
        %v3105 = vpop.f32.mrf.mxu0
        %v3106 = vadd.f32 0.0, %v3105
        %3107 = vmatprep.mubr.bf16.mxu0 %v1163
        %3108 = vmatmul.mubr.bf16.gmra.mxu0 %v1162
        %v3109 = vpop.f32.mrf.mxu0
        %v3110 = vadd.f32 0.0, %v3109
        %v3111 = vpop.f32.mrf.mxu0
        %v3112 = vadd.f32 0.0, %v3111
        %v3113 = vpop.f32.mrf.mxu0
        %v3114 = vadd.f32 0.0, %v3113
        %v3115 = vpop.f32.mrf.mxu0
        %v3116 = vadd.f32 0.0, %v3115
        %3117 = vdwg.mxu0
        %3118 = vmatprep.subr.bf16.mxu0 %v2828
        %3119 = vmatpush1.bf16.msra.mxu0 %v2827
        %3120 = vmatprep.subr.bf16.mxu0 %v2826
        %3121 = vmatpush1.bf16.msra.mxu0 %v2825
        %3122 = vmatprep.subr.bf16.mxu0 %v2824
        %3123 = vmatpush1.bf16.msra.mxu0 %v2823
        %3124 = vmatprep.subr.bf16.mxu0 %v2822
        %3125 = vmatpush1.bf16.msra.mxu0 %v2821
        %3126 = vmatprep.subr.bf16.mxu0 %v2820
        %3127 = vmatpush1.bf16.msra.mxu0 %v2819
        %3128 = vmatprep.subr.bf16.mxu0 %v2818
        %3129 = vmatpush1.bf16.msra.mxu0 %v2817
        %3130 = vmatprep.subr.bf16.mxu0 %v2816
        %3131 = vmatpush1.bf16.msra.mxu0 %v2815
        %3132 = vmatprep.subr.bf16.mxu0 %v2814
        %3133 = vmatpush1.bf16.msra.mxu0 %v2813
        %3134 = vmatprep.subr.bf16.mxu0 %v2844
        %3135 = vmatpush2.bf16.msra.mxu0 %v2843
        %3136 = vmatprep.subr.bf16.mxu0 %v2842
        %3137 = vmatpush2.bf16.msra.mxu0 %v2841
        %3138 = vmatprep.subr.bf16.mxu0 %v2840
        %3139 = vmatpush2.bf16.msra.mxu0 %v2839
        %3140 = vmatprep.subr.bf16.mxu0 %v2838
        %3141 = vmatpush2.bf16.msra.mxu0 %v2837
        %3142 = vmatprep.subr.bf16.mxu0 %v2836
        %3143 = vmatpush2.bf16.msra.mxu0 %v2835
        %3144 = vmatprep.subr.bf16.mxu0 %v2834
        %3145 = vmatpush2.bf16.msra.mxu0 %v2833
        %3146 = vmatprep.subr.bf16.mxu0 %v2832
        %3147 = vmatpush2.bf16.msra.mxu0 %v2831
        %3148 = vmatprep.subr.bf16.mxu0 %v2830
        %3149 = vmatpush2.bf16.msra.mxu0 %v2829
        %3150 = vmatprep.mubr.bf16.mxu0 %v1116
        %3151 = vmatmul.mubr.bf16.gmra.mxu0 %v1115
        %v3152 = vpop.f32.mrf.mxu0
        %v3153 = vadd.f32 %v3040, %v3152
        %v3154 = vpop.f32.mrf.mxu0
        %v3155 = vadd.f32 %v3042, %v3154
        %v3156 = vpop.f32.mrf.mxu0
        %v3157 = vadd.f32 %v3044, %v3156
        %v3158 = vpop.f32.mrf.mxu0
        %v3159 = vadd.f32 %v3046, %v3158
        %3160 = vmatprep.mubr.bf16.mxu0 %v1123
        %3161 = vmatmul.mubr.bf16.gmra.mxu0 %v1122
        %v3162 = vpop.f32.mrf.mxu0
        %v3163 = vadd.f32 %v3050, %v3162
        %v3164 = vpop.f32.mrf.mxu0
        %v3165 = vadd.f32 %v3052, %v3164
        %v3166 = vpop.f32.mrf.mxu0
        %v3167 = vadd.f32 %v3054, %v3166
        %v3168 = vpop.f32.mrf.mxu0
        %v3169 = vadd.f32 %v3056, %v3168
        %3170 = vmatprep.mubr.bf16.mxu0 %v1130
        %3171 = vmatmul.mubr.bf16.gmra.mxu0 %v1129
        %v3172 = vpop.f32.mrf.mxu0
        %v3173 = vadd.f32 %v3060, %v3172
        %v3174 = vpop.f32.mrf.mxu0
        %v3175 = vadd.f32 %v3062, %v3174
        %v3176 = vpop.f32.mrf.mxu0
        %v3177 = vadd.f32 %v3064, %v3176
        %v3178 = vpop.f32.mrf.mxu0
        %v3179 = vadd.f32 %v3066, %v3178
        %3180 = vmatprep.mubr.bf16.mxu0 %v1137
        %3181 = vmatmul.mubr.bf16.gmra.mxu0 %v1136
        %v3182 = vpop.f32.mrf.mxu0
        %v3183 = vadd.f32 %v3070, %v3182
        %v3184 = vpop.f32.mrf.mxu0
        %v3185 = vadd.f32 %v3072, %v3184
        %v3186 = vpop.f32.mrf.mxu0
        %v3187 = vadd.f32 %v3074, %v3186
        %v3188 = vpop.f32.mrf.mxu0
        %v3189 = vadd.f32 %v3076, %v3188
        %3190 = vmatprep.mubr.bf16.mxu0 %v1144
        %3191 = vmatmul.mubr.bf16.gmra.mxu0 %v1143
        %v3192 = vpop.f32.mrf.mxu0
        %v3193 = vadd.f32 %v3080, %v3192
        %v3194 = vpop.f32.mrf.mxu0
        %v3195 = vadd.f32 %v3082, %v3194
        %v3196 = vpop.f32.mrf.mxu0
        %v3197 = vadd.f32 %v3084, %v3196
        %v3198 = vpop.f32.mrf.mxu0
        %v3199 = vadd.f32 %v3086, %v3198
        %3200 = vmatprep.mubr.bf16.mxu0 %v1151
        %3201 = vmatmul.mubr.bf16.gmra.mxu0 %v1150
        %v3202 = vpop.f32.mrf.mxu0
        %v3203 = vadd.f32 %v3090, %v3202
        %v3204 = vpop.f32.mrf.mxu0
        %v3205 = vadd.f32 %v3092, %v3204
        %v3206 = vpop.f32.mrf.mxu0
        %v3207 = vadd.f32 %v3094, %v3206
        %v3208 = vpop.f32.mrf.mxu0
        %v3209 = vadd.f32 %v3096, %v3208
        %3210 = vmatprep.mubr.bf16.mxu0 %v1158
        %3211 = vmatmul.mubr.bf16.gmra.mxu0 %v1157
        %v3212 = vpop.f32.mrf.mxu0
        %v3213 = vadd.f32 %v3100, %v3212
        %v3214 = vpop.f32.mrf.mxu0
        %v3215 = vadd.f32 %v3102, %v3214
        %v3216 = vpop.f32.mrf.mxu0
        %v3217 = vadd.f32 %v3104, %v3216
        %v3218 = vpop.f32.mrf.mxu0
        %v3219 = vadd.f32 %v3106, %v3218
        %3220 = vmatprep.mubr.bf16.mxu0 %v1165
        %3221 = vmatmul.mubr.bf16.gmra.mxu0 %v1164
        %v3222 = vpop.f32.mrf.mxu0
        %v3223 = vadd.f32 %v3110, %v3222
        %v3224 = vpop.f32.mrf.mxu0
        %v3225 = vadd.f32 %v3112, %v3224
        %v3226 = vpop.f32.mrf.mxu0
        %v3227 = vadd.f32 %v3114, %v3226
        %v3228 = vpop.f32.mrf.mxu0
        %v3229 = vadd.f32 %v3116, %v3228
        %3230 = vdwg.mxu0
        %3231 = vmatprep.subr.bf16.mxu0 %v2860
        %3232 = vmatpush1.bf16.msra.mxu0 %v2859
        %3233 = vmatprep.subr.bf16.mxu0 %v2858
        %3234 = vmatpush1.bf16.msra.mxu0 %v2857
        %3235 = vmatprep.subr.bf16.mxu0 %v2856
        %3236 = vmatpush1.bf16.msra.mxu0 %v2855
        %3237 = vmatprep.subr.bf16.mxu0 %v2854
        %3238 = vmatpush1.bf16.msra.mxu0 %v2853
        %3239 = vmatprep.subr.bf16.mxu0 %v2852
        %3240 = vmatpush1.bf16.msra.mxu0 %v2851
        %3241 = vmatprep.subr.bf16.mxu0 %v2850
        %3242 = vmatpush1.bf16.msra.mxu0 %v2849
        %3243 = vmatprep.subr.bf16.mxu0 %v2848
        %3244 = vmatpush1.bf16.msra.mxu0 %v2847
        %3245 = vmatprep.subr.bf16.mxu0 %v2846
        %3246 = vmatpush1.bf16.msra.mxu0 %v2845
        %3247 = vmatprep.subr.bf16.mxu0 %v2876
        %3248 = vmatpush2.bf16.msra.mxu0 %v2875
        %3249 = vmatprep.subr.bf16.mxu0 %v2874
        %3250 = vmatpush2.bf16.msra.mxu0 %v2873
        %3251 = vmatprep.subr.bf16.mxu0 %v2872
        %3252 = vmatpush2.bf16.msra.mxu0 %v2871
        %3253 = vmatprep.subr.bf16.mxu0 %v2870
        %3254 = vmatpush2.bf16.msra.mxu0 %v2869
        %3255 = vmatprep.subr.bf16.mxu0 %v2868
        %3256 = vmatpush2.bf16.msra.mxu0 %v2867
        %3257 = vmatprep.subr.bf16.mxu0 %v2866
        %3258 = vmatpush2.bf16.msra.mxu0 %v2865
        %3259 = vmatprep.subr.bf16.mxu0 %v2864
        %3260 = vmatpush2.bf16.msra.mxu0 %v2863
        %3261 = vmatprep.subr.bf16.mxu0 %v2862
        %3262 = vmatpush2.bf16.msra.mxu0 %v2861
        %3263 = vmatprep.mubr.bf16.mxu0 %v1118
        %3264 = vmatmul.mubr.bf16.gmra.mxu0 %v1117
        %v3265 = vpop.f32.mrf.mxu0
        %v3266 = vadd.f32 %v3153, %v3265
        %v3267 = vpop.f32.mrf.mxu0
        %v3268 = vadd.f32 %v3155, %v3267
        %v3269 = vpop.f32.mrf.mxu0
        %v3270 = vadd.f32 %v3157, %v3269
        %v3271 = vpop.f32.mrf.mxu0
        %v3272 = vadd.f32 %v3159, %v3271
        %3273 = vmatprep.mubr.bf16.mxu0 %v1125
        %3274 = vmatmul.mubr.bf16.gmra.mxu0 %v1124
        %v3275 = vpop.f32.mrf.mxu0
        %v3276 = vadd.f32 %v3163, %v3275
        %v3277 = vpop.f32.mrf.mxu0
        %v3278 = vadd.f32 %v3165, %v3277
        %v3279 = vpop.f32.mrf.mxu0
        %v3280 = vadd.f32 %v3167, %v3279
        %v3281 = vpop.f32.mrf.mxu0
        %v3282 = vadd.f32 %v3169, %v3281
        %3283 = vmatprep.mubr.bf16.mxu0 %v1132
        %3284 = vmatmul.mubr.bf16.gmra.mxu0 %v1131
        %v3285 = vpop.f32.mrf.mxu0
        %v3286 = vadd.f32 %v3173, %v3285
        %v3287 = vpop.f32.mrf.mxu0
        %v3288 = vadd.f32 %v3175, %v3287
        %v3289 = vpop.f32.mrf.mxu0
        %v3290 = vadd.f32 %v3177, %v3289
        %v3291 = vpop.f32.mrf.mxu0
        %v3292 = vadd.f32 %v3179, %v3291
        %3293 = vmatprep.mubr.bf16.mxu0 %v1139
        %3294 = vmatmul.mubr.bf16.gmra.mxu0 %v1138
        %v3295 = vpop.f32.mrf.mxu0
        %v3296 = vadd.f32 %v3183, %v3295
        %v3297 = vpop.f32.mrf.mxu0
        %v3298 = vadd.f32 %v3185, %v3297
        %v3299 = vpop.f32.mrf.mxu0
        %v3300 = vadd.f32 %v3187, %v3299
        %v3301 = vpop.f32.mrf.mxu0
        %v3302 = vadd.f32 %v3189, %v3301
        %3303 = vmatprep.mubr.bf16.mxu0 %v1146
        %3304 = vmatmul.mubr.bf16.gmra.mxu0 %v1145
        %v3305 = vpop.f32.mrf.mxu0
        %v3306 = vadd.f32 %v3193, %v3305
        %v3307 = vpop.f32.mrf.mxu0
        %v3308 = vadd.f32 %v3195, %v3307
        %v3309 = vpop.f32.mrf.mxu0
        %v3310 = vadd.f32 %v3197, %v3309
        %v3311 = vpop.f32.mrf.mxu0
        %v3312 = vadd.f32 %v3199, %v3311
        %3313 = vmatprep.mubr.bf16.mxu0 %v1153
        %3314 = vmatmul.mubr.bf16.gmra.mxu0 %v1152
        %v3315 = vpop.f32.mrf.mxu0
        %v3316 = vadd.f32 %v3203, %v3315
        %v3317 = vpop.f32.mrf.mxu0
        %v3318 = vadd.f32 %v3205, %v3317
        %v3319 = vpop.f32.mrf.mxu0
        %v3320 = vadd.f32 %v3207, %v3319
        %v3321 = vpop.f32.mrf.mxu0
        %v3322 = vadd.f32 %v3209, %v3321
        %3323 = vmatprep.mubr.bf16.mxu0 %v1160
        %3324 = vmatmul.mubr.bf16.gmra.mxu0 %v1159
        %v3325 = vpop.f32.mrf.mxu0
        %v3326 = vadd.f32 %v3213, %v3325
        %v3327 = vpop.f32.mrf.mxu0
        %v3328 = vadd.f32 %v3215, %v3327
        %v3329 = vpop.f32.mrf.mxu0
        %v3330 = vadd.f32 %v3217, %v3329
        %v3331 = vpop.f32.mrf.mxu0
        %v3332 = vadd.f32 %v3219, %v3331
        %3333 = vmatprep.mubr.bf16.mxu0 %v1167
        %3334 = vmatmul.mubr.bf16.gmra.mxu0 %v1166
        %v3335 = vpop.f32.mrf.mxu0
        %v3336 = vadd.f32 %v3223, %v3335
        %v3337 = vpop.f32.mrf.mxu0
        %v3338 = vadd.f32 %v3225, %v3337
        %v3339 = vpop.f32.mrf.mxu0
        %v3340 = vadd.f32 %v3227, %v3339
        %v3341 = vpop.f32.mrf.mxu0
        %v3342 = vadd.f32 %v3229, %v3341
        %3343 = vdwg.mxu0
        %3344 = vmatprep.subr.bf16.mxu0 %v2892
        %3345 = vmatpush1.bf16.msra.mxu0 %v2891
        %3346 = vmatprep.subr.bf16.mxu0 %v2890
        %3347 = vmatpush1.bf16.msra.mxu0 %v2889
        %3348 = vmatprep.subr.bf16.mxu0 %v2888
        %3349 = vmatpush1.bf16.msra.mxu0 %v2887
        %3350 = vmatprep.subr.bf16.mxu0 %v2886
        %3351 = vmatpush1.bf16.msra.mxu0 %v2885
        %3352 = vmatprep.subr.bf16.mxu0 %v2884
        %3353 = vmatpush1.bf16.msra.mxu0 %v2883
        %3354 = vmatprep.subr.bf16.mxu0 %v2882
        %3355 = vmatpush1.bf16.msra.mxu0 %v2881
        %3356 = vmatprep.subr.bf16.mxu0 %v2880
        %3357 = vmatpush1.bf16.msra.mxu0 %v2879
        %3358 = vmatprep.subr.bf16.mxu0 %v2878
        %3359 = vmatpush1.bf16.msra.mxu0 %v2877
        %3360 = vmatprep.subr.bf16.mxu0 0
        %3361 = vmatpush2.bf16.msra.mxu0 0
        %3362 = vmatprep.subr.bf16.mxu0 0
        %3363 = vmatpush2.bf16.msra.mxu0 0
        %3364 = vmatprep.subr.bf16.mxu0 0
        %3365 = vmatpush2.bf16.msra.mxu0 0
        %3366 = vmatprep.subr.bf16.mxu0 0
        %3367 = vmatpush2.bf16.msra.mxu0 0
        %3368 = vmatprep.subr.bf16.mxu0 0
        %3369 = vmatpush2.bf16.msra.mxu0 0
        %3370 = vmatprep.subr.bf16.mxu0 0
        %3371 = vmatpush2.bf16.msra.mxu0 0
        %3372 = vmatprep.subr.bf16.mxu0 0
        %3373 = vmatpush2.bf16.msra.mxu0 0
        %3374 = vmatprep.subr.bf16.mxu0 0
        %3375 = vmatpush2.bf16.msra.mxu0 0
        %3376 = vmatprep.mubr.bf16.mxu0 0
        %3377 = vmatmul.mubr.bf16.gmra.mxu0 %v1119
        %v3378 = vpop.f32.mrf.mxu0
        %v3379 = vadd.f32 %v3266, %v3378
        %v3380 = vpop.f32.mrf.mxu0
        %v3381 = vadd.f32 %v3268, %v3380
        %v3382 = vpop.f32.mrf.mxu0
        %v3383 = vadd.f32 %v3270, %v3382
        %v3384 = vpop.f32.mrf.mxu0
        %v3385 = vadd.f32 %v3272, %v3384
        %3386 = vmatprep.mubr.bf16.mxu0 0
        %3387 = vmatmul.mubr.bf16.gmra.mxu0 %v1126
        %v3388 = vpop.f32.mrf.mxu0
        %v3389 = vadd.f32 %v3276, %v3388
        %v3390 = vpop.f32.mrf.mxu0
        %v3391 = vadd.f32 %v3278, %v3390
        %v3392 = vpop.f32.mrf.mxu0
        %v3393 = vadd.f32 %v3280, %v3392
        %v3394 = vpop.f32.mrf.mxu0
        %v3395 = vadd.f32 %v3282, %v3394
        %3396 = vmatprep.mubr.bf16.mxu0 0
        %3397 = vmatmul.mubr.bf16.gmra.mxu0 %v1133
        %v3398 = vpop.f32.mrf.mxu0
        %v3399 = vadd.f32 %v3286, %v3398
        %v3400 = vpop.f32.mrf.mxu0
        %v3401 = vadd.f32 %v3288, %v3400
        %v3402 = vpop.f32.mrf.mxu0
        %v3403 = vadd.f32 %v3290, %v3402
        %v3404 = vpop.f32.mrf.mxu0
        %v3405 = vadd.f32 %v3292, %v3404
        %3406 = vmatprep.mubr.bf16.mxu0 0
        %3407 = vmatmul.mubr.bf16.gmra.mxu0 %v1140
        %v3408 = vpop.f32.mrf.mxu0
        %v3409 = vadd.f32 %v3296, %v3408
        %v3410 = vpop.f32.mrf.mxu0
        %v3411 = vadd.f32 %v3298, %v3410
        %v3412 = vpop.f32.mrf.mxu0
        %v3413 = vadd.f32 %v3300, %v3412
        %v3414 = vpop.f32.mrf.mxu0
        %v3415 = vadd.f32 %v3302, %v3414
        %3416 = vmatprep.mubr.bf16.mxu0 0
        %3417 = vmatmul.mubr.bf16.gmra.mxu0 %v1147
        %v3418 = vpop.f32.mrf.mxu0
        %v3419 = vadd.f32 %v3306, %v3418
        %v3420 = vpop.f32.mrf.mxu0
        %v3421 = vadd.f32 %v3308, %v3420
        %v3422 = vpop.f32.mrf.mxu0
        %v3423 = vadd.f32 %v3310, %v3422
        %v3424 = vpop.f32.mrf.mxu0
        %v3425 = vadd.f32 %v3312, %v3424
        %3426 = vmatprep.mubr.bf16.mxu0 0
        %3427 = vmatmul.mubr.bf16.gmra.mxu0 %v1154
        %v3428 = vpop.f32.mrf.mxu0
        %v3429 = vadd.f32 %v3316, %v3428
        %v3430 = vpop.f32.mrf.mxu0
        %v3431 = vadd.f32 %v3318, %v3430
        %v3432 = vpop.f32.mrf.mxu0
        %v3433 = vadd.f32 %v3320, %v3432
        %v3434 = vpop.f32.mrf.mxu0
        %v3435 = vadd.f32 %v3322, %v3434
        %3436 = vmatprep.mubr.bf16.mxu0 0
        %3437 = vmatmul.mubr.bf16.gmra.mxu0 %v1161
        %v3438 = vpop.f32.mrf.mxu0
        %v3439 = vadd.f32 %v3326, %v3438
        %v3440 = vpop.f32.mrf.mxu0
        %v3441 = vadd.f32 %v3328, %v3440
        %v3442 = vpop.f32.mrf.mxu0
        %v3443 = vadd.f32 %v3330, %v3442
        %v3444 = vpop.f32.mrf.mxu0
        %v3445 = vadd.f32 %v3332, %v3444
        %3446 = vmatprep.mubr.bf16.mxu0 0
        %3447 = vmatmul.mubr.bf16.gmra.mxu0 %v1168
        %v3448 = vpop.f32.mrf.mxu0
        %v3449 = vadd.f32 %v3336, %v3448
        %v3450 = vpop.f32.mrf.mxu0
        %v3451 = vadd.f32 %v3338, %v3450
        %v3452 = vpop.f32.mrf.mxu0
        %v3453 = vadd.f32 %v3340, %v3452
        %v3454 = vpop.f32.mrf.mxu0
        %v3455 = vadd.f32 %v3342, %v3454
        %3456 = vdwg.mxu0
        %v3457 = vadd.f32 %v2301, %v3379
        %v3458 = vadd.f32 %v2302, %v3381
        %v3459 = vadd.f32 %v2303, %v3383
        %v3460 = vadd.f32 %v2304, %v3385
        %v3461 = vadd.f32 %v2305, %v3389
        %v3462 = vadd.f32 %v2306, %v3391
        %v3463 = vadd.f32 %v2307, %v3393
        %v3464 = vadd.f32 %v2308, %v3395
        %v3465 = vadd.f32 %v2309, %v3399
        %v3466 = vadd.f32 %v2310, %v3401
        %v3467 = vadd.f32 %v2311, %v3403
        %v3468 = vadd.f32 %v2312, %v3405
        %v3469 = vadd.f32 %v2313, %v3409
        %v3470 = vadd.f32 %v2314, %v3411
        %v3471 = vadd.f32 %v2315, %v3413
        %v3472 = vadd.f32 %v2316, %v3415
        %v3473 = vadd.f32 %v2317, %v3419
        %v3474 = vadd.f32 %v2318, %v3421
        %v3475 = vadd.f32 %v2319, %v3423
        %v3476 = vadd.f32 %v2320, %v3425
        %v3477 = vadd.f32 %v2321, %v3429
        %v3478 = vadd.f32 %v2322, %v3431
        %v3479 = vadd.f32 %v2323, %v3433
        %v3480 = vadd.f32 %v2324, %v3435
        %v3481 = vadd.f32 %v2325, %v3439
        %v3482 = vadd.f32 %v2326, %v3441
        %v3483 = vadd.f32 %v2327, %v3443
        %v3484 = vadd.f32 %v2328, %v3445
        %v3485 = vadd.f32 %v2329, %v3449
        %v3486 = vadd.f32 %v2330, %v3451
        %v3487 = vadd.f32 %v2331, %v3453
        %v3488 = vadd.f32 %v2332, %v3455
        %3489 = vst [vmem:[#allocation3] sm:$0xff] %v3457
        %3490 = vst [vmem:[#allocation3 + $0x8] sm:$0xff] %v3458
        %3491 = vst [vmem:[#allocation3 + $0x10] sm:$0xff] %v3459
        %3492 = vst [vmem:[#allocation3 + $0x18] sm:$0xff] %v3460
        %3493 = vst [vmem:[#allocation3 + $0x20] sm:$0xff] %v3461
        %3494 = vst [vmem:[#allocation3 + $0x28] sm:$0xff] %v3462
        %3495 = vst [vmem:[#allocation3 + $0x30] sm:$0xff] %v3463
        %3496 = vst [vmem:[#allocation3 + $0x38] sm:$0xff] %v3464
        %3497 = vst [vmem:[#allocation3 + $0x40] sm:$0xff] %v3465
        %3498 = vst [vmem:[#allocation3 + $0x48] sm:$0xff] %v3466
        %3499 = vst [vmem:[#allocation3 + $0x50] sm:$0xff] %v3467
        %3500 = vst [vmem:[#allocation3 + $0x58] sm:$0xff] %v3468
        %3501 = vst [vmem:[#allocation3 + $0x60] sm:$0xff] %v3469
        %3502 = vst [vmem:[#allocation3 + $0x68] sm:$0xff] %v3470
        %3503 = vst [vmem:[#allocation3 + $0x70] sm:$0xff] %v3471
        %3504 = vst [vmem:[#allocation3 + $0x78] sm:$0xff] %v3472
        %3505 = vst [vmem:[#allocation3 + $0x80] sm:$0xff] %v3473
        %3506 = vst [vmem:[#allocation3 + $0x88] sm:$0xff] %v3474
        %3507 = vst [vmem:[#allocation3 + $0x90] sm:$0xff] %v3475
        %3508 = vst [vmem:[#allocation3 + $0x98] sm:$0xff] %v3476
        %3509 = vst [vmem:[#allocation3 + $0xa0] sm:$0xff] %v3477
        %3510 = vst [vmem:[#allocation3 + $0xa8] sm:$0xff] %v3478
        %3511 = vst [vmem:[#allocation3 + $0xb0] sm:$0xff] %v3479
        %3512 = vst [vmem:[#allocation3 + $0xb8] sm:$0xff] %v3480
        %3513 = vst [vmem:[#allocation3 + $0xc0] sm:$0xff] %v3481
        %3514 = vst [vmem:[#allocation3 + $0xc8] sm:$0xff] %v3482
        %3515 = vst [vmem:[#allocation3 + $0xd0] sm:$0xff] %v3483
        %3516 = vst [vmem:[#allocation3 + $0xd8] sm:$0xff] %v3484
        %3517 = vst [vmem:[#allocation3 + $0xe0] sm:$0xff] %v3485
        %3518 = vst [vmem:[#allocation3 + $0xe8] sm:$0xff] %v3486
        %3519 = vst [vmem:[#allocation3 + $0xf0] sm:$0xff] %v3487
        %3520 = vst [vmem:[#allocation3 + $0xf8] sm:$0xff] %v3488
        %p3521 = scmp.eq.s32.totalorder %s25, 3
        // Predicated region
        $region107: #{network_forward_test.3} parent=97 // pred_check
          %p3522 = pneg %p3521
        $region108: #{network_forward_test.3} parent=97 // pred_check_branch
          %3524 = sbr.rel (%p3522) target = $region110
        $region109: #{network_forward_test.3} parent=97 // pred_region
          %v3525 = vld [vmem:[#allocation2] sm:$0xff]
          %v3526 = vld [vmem:[#allocation2 + $0x8] sm:$0xff]
          %v3527 = vld [vmem:[#allocation2 + $0x10] sm:$0xff]
          %v3528 = vld [vmem:[#allocation2 + $0x18] sm:$0xff]
          %v3529 = vld [vmem:[#allocation2 + $0x20] sm:$0xff]
          %v3530 = vld [vmem:[#allocation2 + $0x28] sm:$0xff]
          %v3531 = vld [vmem:[#allocation2 + $0x30] sm:$0xff]
          %v3532 = vld [vmem:[#allocation2 + $0x38] sm:$0xff]
          %v3533 = vld [vmem:[#allocation2 + $0x40] sm:$0xff]
          %v3534 = vld [vmem:[#allocation2 + $0x48] sm:$0xff]
          %v3535 = vld [vmem:[#allocation2 + $0x50] sm:$0xff]
          %v3536 = vld [vmem:[#allocation2 + $0x58] sm:$0xff]
          %v3537 = vld [vmem:[#allocation2 + $0x60] sm:$0xff]
          %v3538 = vld [vmem:[#allocation2 + $0x68] sm:$0xff]
          %v3539 = vld [vmem:[#allocation2 + $0x70] sm:$0xff]
          %v3540 = vld [vmem:[#allocation2 + $0x78] sm:$0xff]
          %v3541 = vld [vmem:[#allocation2 + $0x80] sm:$0xff]
          %v3542 = vld [vmem:[#allocation2 + $0x88] sm:$0xff]
          %v3543 = vld [vmem:[#allocation2 + $0x90] sm:$0xff]
          %v3544 = vld [vmem:[#allocation2 + $0x98] sm:$0xff]
          %v3545 = vld [vmem:[#allocation2 + $0xa0] sm:$0xff]
          %v3546 = vld [vmem:[#allocation2 + $0xa8] sm:$0xff]
          %v3547 = vld [vmem:[#allocation2 + $0xb0] sm:$0xff]
          %v3548 = vld [vmem:[#allocation2 + $0xb8] sm:$0xff]
          %v3549 = vld [vmem:[#allocation2 + $0xc0] sm:$0xff]
          %v3550 = vld [vmem:[#allocation2 + $0xc8] sm:$0xff]
          %v3551 = vld [vmem:[#allocation2 + $0xd0] sm:$0xff]
          %v3552 = vld [vmem:[#allocation2 + $0xd8] sm:$0xff]
          %v3553 = vld [vmem:[#allocation2 + $0xe0] sm:$0xff]
          %v3554 = vld [vmem:[#allocation2 + $0xe8] sm:$0xff]
          %v3555 = vld [vmem:[#allocation2 + $0xf0] sm:$0xff]
          %v3556 = vld [vmem:[#allocation2 + $0xf8] sm:$0xff]
          %v3557 = vld [vmem:[%s3] sm:$0x3]
          %v3559 = vlaneseq
          %v3560 = vshrl.u32 %v3559, 7
          %v3561 = vsub.s32 0, %v3560
          %v3562 = vrot.slane %v3557, %v3561
          %v3563 = vlaneseq
          %v3564 = vshrl.u32 %v3563, 7
          %v3565 = vsub.s32 1, %v3564
          %v3566 = vrot.slane %v3557, %v3565
          %v3569 = vadd.f32 %v3525, %v3562
          %v3570 = vadd.f32 %v3526, %v3566
          %v3571 = vadd.f32 %v3527, %v3562
          %v3572 = vadd.f32 %v3528, %v3566
          %v3573 = vadd.f32 %v3529, %v3562
          %v3574 = vadd.f32 %v3530, %v3566
          %v3575 = vadd.f32 %v3531, %v3562
          %v3576 = vadd.f32 %v3532, %v3566
          %v3577 = vadd.f32 %v3533, %v3562
          %v3578 = vadd.f32 %v3534, %v3566
          %v3579 = vadd.f32 %v3535, %v3562
          %v3580 = vadd.f32 %v3536, %v3566
          %v3581 = vadd.f32 %v3537, %v3562
          %v3582 = vadd.f32 %v3538, %v3566
          %v3583 = vadd.f32 %v3539, %v3562
          %v3584 = vadd.f32 %v3540, %v3566
          %v3585 = vadd.f32 %v3541, %v3562
          %v3586 = vadd.f32 %v3542, %v3566
          %v3587 = vadd.f32 %v3543, %v3562
          %v3588 = vadd.f32 %v3544, %v3566
          %v3589 = vadd.f32 %v3545, %v3562
          %v3590 = vadd.f32 %v3546, %v3566
          %v3591 = vadd.f32 %v3547, %v3562
          %v3592 = vadd.f32 %v3548, %v3566
          %v3593 = vadd.f32 %v3549, %v3562
          %v3594 = vadd.f32 %v3550, %v3566
          %v3595 = vadd.f32 %v3551, %v3562
          %v3596 = vadd.f32 %v3552, %v3566
          %v3597 = vadd.f32 %v3553, %v3562
          %v3598 = vadd.f32 %v3554, %v3566
          %v3599 = vadd.f32 %v3555, %v3562
          %v3600 = vadd.f32 %v3556, %v3566
          %v3601 = vmax.f32 %v3569, 0.0
          %v3602 = vmax.f32 %v3570, 0.0
          %v3603 = vmax.f32 %v3571, 0.0
          %v3604 = vmax.f32 %v3572, 0.0
          %v3605 = vmax.f32 %v3573, 0.0
          %v3606 = vmax.f32 %v3574, 0.0
          %v3607 = vmax.f32 %v3575, 0.0
          %v3608 = vmax.f32 %v3576, 0.0
          %v3609 = vmax.f32 %v3577, 0.0
          %v3610 = vmax.f32 %v3578, 0.0
          %v3611 = vmax.f32 %v3579, 0.0
          %v3612 = vmax.f32 %v3580, 0.0
          %v3613 = vmax.f32 %v3581, 0.0
          %v3614 = vmax.f32 %v3582, 0.0
          %v3615 = vmax.f32 %v3583, 0.0
          %v3616 = vmax.f32 %v3584, 0.0
          %v3617 = vmax.f32 %v3585, 0.0
          %v3618 = vmax.f32 %v3586, 0.0
          %v3619 = vmax.f32 %v3587, 0.0
          %v3620 = vmax.f32 %v3588, 0.0
          %v3621 = vmax.f32 %v3589, 0.0
          %v3622 = vmax.f32 %v3590, 0.0
          %v3623 = vmax.f32 %v3591, 0.0
          %v3624 = vmax.f32 %v3592, 0.0
          %v3625 = vmax.f32 %v3593, 0.0
          %v3626 = vmax.f32 %v3594, 0.0
          %v3627 = vmax.f32 %v3595, 0.0
          %v3628 = vmax.f32 %v3596, 0.0
          %v3629 = vmax.f32 %v3597, 0.0
          %v3630 = vmax.f32 %v3598, 0.0
          %v3631 = vmax.f32 %v3599, 0.0
          %v3632 = vmax.f32 %v3600, 0.0
          %v3633 = vpack.c.bf16 %v3603, %v3601
          %v3634 = vpack.c.bf16 %v3604, %v3602
          %v3635 = vpack.c.bf16 %v3607, %v3605
          %v3636 = vpack.c.bf16 %v3608, %v3606
          %v3637 = vpack.c.bf16 %v3611, %v3609
          %v3638 = vpack.c.bf16 %v3612, %v3610
          %v3639 = vpack.c.bf16 %v3615, %v3613
          %v3640 = vpack.c.bf16 %v3616, %v3614
          %v3641 = vpack.c.bf16 %v3619, %v3617
          %v3642 = vpack.c.bf16 %v3620, %v3618
          %v3643 = vpack.c.bf16 %v3623, %v3621
          %v3644 = vpack.c.bf16 %v3624, %v3622
          %v3645 = vpack.c.bf16 %v3627, %v3625
          %v3646 = vpack.c.bf16 %v3628, %v3626
          %v3647 = vpack.c.bf16 %v3631, %v3629
          %v3648 = vpack.c.bf16 %v3632, %v3630
          %v3649 = vld [vmem:[%s4] sm:$0xff]
          %v3650 = vld [vmem:[%s4 + $0x8] sm:$0xff]
          %v3651 = vld [vmem:[%s4 + $0x10] sm:$0xff]
          %v3652 = vld [vmem:[%s4 + $0x18] sm:$0xff]
          %v3653 = vld [vmem:[%s4 + $0x20] sm:$0xff]
          %v3654 = vld [vmem:[%s4 + $0x28] sm:$0xff]
          %v3655 = vld [vmem:[%s4 + $0x30] sm:$0xff]
          %v3656 = vld [vmem:[%s4 + $0x38] sm:$0xff]
          %v3657 = vld [vmem:[%s4 + $0x40] sm:$0xff]
          %v3658 = vld [vmem:[%s4 + $0x48] sm:$0xff]
          %v3659 = vld [vmem:[%s4 + $0x50] sm:$0xff]
          %v3660 = vld [vmem:[%s4 + $0x58] sm:$0xff]
          %v3661 = vld [vmem:[%s4 + $0x60] sm:$0xff]
          %v3662 = vld [vmem:[%s4 + $0x68] sm:$0xff]
          %v3663 = vld [vmem:[%s4 + $0x70] sm:$0xff]
          %v3664 = vld [vmem:[%s4 + $0x78] sm:$0xff]
          %v3665 = vld [vmem:[%s4 + $0x80] sm:$0xff]
          %v3666 = vld [vmem:[%s4 + $0x88] sm:$0xff]
          %v3667 = vld [vmem:[%s4 + $0x90] sm:$0xff]
          %v3668 = vld [vmem:[%s4 + $0x98] sm:$0xff]
          %v3669 = vld [vmem:[%s4 + $0xa0] sm:$0xff]
          %v3670 = vld [vmem:[%s4 + $0xa8] sm:$0xff]
          %v3671 = vld [vmem:[%s4 + $0xb0] sm:$0xff]
          %v3672 = vld [vmem:[%s4 + $0xb8] sm:$0xff]
          %v3673 = vld [vmem:[%s4 + $0xc0] sm:$0xff]
          %v3674 = vld [vmem:[%s4 + $0xc8] sm:$0xff]
          %v3675 = vld [vmem:[%s4 + $0xd0] sm:$0xff]
          %v3676 = vld [vmem:[%s4 + $0xd8] sm:$0xff]
          %v3677 = vld [vmem:[%s4 + $0xe0] sm:$0xff]
          %v3678 = vld [vmem:[%s4 + $0xe8] sm:$0xff]
          %v3679 = vld [vmem:[%s4 + $0xf0] sm:$0xff]
          %v3680 = vld [vmem:[%s4 + $0xf8] sm:$0xff]
          %v3681 = vld [vmem:[%s5] sm:$0x3]
          %v3683 = vlaneseq
          %v3684 = vshrl.u32 %v3683, 7
          %v3685 = vsub.s32 0, %v3684
          %v3686 = vrot.slane %v3681, %v3685
          %v3687 = vlaneseq
          %v3688 = vshrl.u32 %v3687, 7
          %v3689 = vsub.s32 1, %v3688
          %v3690 = vrot.slane %v3681, %v3689
          %v3725 = vunpack.c.l.b16 %v3649
          %v3726 = vunpack.c.h.b16 %v3649
          %v3727 = vunpack.c.l.b16 %v3650
          %v3728 = vunpack.c.h.b16 %v3650
          %v3729 = vunpack.c.l.b16 %v3651
          %v3730 = vunpack.c.h.b16 %v3651
          %v3731 = vunpack.c.l.b16 %v3652
          %v3732 = vunpack.c.h.b16 %v3652
          %v3733 = vunpack.c.l.b16 %v3653
          %v3734 = vunpack.c.h.b16 %v3653
          %v3735 = vunpack.c.l.b16 %v3654
          %v3736 = vunpack.c.h.b16 %v3654
          %v3737 = vunpack.c.l.b16 %v3655
          %v3738 = vunpack.c.h.b16 %v3655
          %v3739 = vunpack.c.l.b16 %v3656
          %v3740 = vunpack.c.h.b16 %v3656
          %v3741 = vunpack.c.l.b16 %v3657
          %v3742 = vunpack.c.h.b16 %v3657
          %v3743 = vunpack.c.l.b16 %v3658
          %v3744 = vunpack.c.h.b16 %v3658
          %v3745 = vunpack.c.l.b16 %v3659
          %v3746 = vunpack.c.h.b16 %v3659
          %v3747 = vunpack.c.l.b16 %v3660
          %v3748 = vunpack.c.h.b16 %v3660
          %v3749 = vunpack.c.l.b16 %v3661
          %v3750 = vunpack.c.h.b16 %v3661
          %v3751 = vunpack.c.l.b16 %v3662
          %v3752 = vunpack.c.h.b16 %v3662
          %v3753 = vunpack.c.l.b16 %v3663
          %v3754 = vunpack.c.h.b16 %v3663
          %v3755 = vunpack.c.l.b16 %v3664
          %v3756 = vunpack.c.h.b16 %v3664
          %v3757 = vunpack.c.l.b16 %v3665
          %v3758 = vunpack.c.h.b16 %v3665
          %v3759 = vunpack.c.l.b16 %v3666
          %v3760 = vunpack.c.h.b16 %v3666
          %v3761 = vunpack.c.l.b16 %v3667
          %v3762 = vunpack.c.h.b16 %v3667
          %v3763 = vunpack.c.l.b16 %v3668
          %v3764 = vunpack.c.h.b16 %v3668
          %v3765 = vunpack.c.l.b16 %v3669
          %v3766 = vunpack.c.h.b16 %v3669
          %v3767 = vunpack.c.l.b16 %v3670
          %v3768 = vunpack.c.h.b16 %v3670
          %v3769 = vunpack.c.l.b16 %v3671
          %v3770 = vunpack.c.h.b16 %v3671
          %v3771 = vunpack.c.l.b16 %v3672
          %v3772 = vunpack.c.h.b16 %v3672
          %v3773 = vunpack.c.l.b16 %v3673
          %v3774 = vunpack.c.h.b16 %v3673
          %v3775 = vunpack.c.l.b16 %v3674
          %v3776 = vunpack.c.h.b16 %v3674
          %v3777 = vunpack.c.l.b16 %v3675
          %v3778 = vunpack.c.h.b16 %v3675
          %v3779 = vunpack.c.l.b16 %v3676
          %v3780 = vunpack.c.h.b16 %v3676
          %v3781 = vunpack.c.l.b16 %v3677
          %v3782 = vunpack.c.h.b16 %v3677
          %v3783 = vunpack.c.l.b16 %v3678
          %v3784 = vunpack.c.h.b16 %v3678
          %v3785 = vunpack.c.l.b16 %v3679
          %v3786 = vunpack.c.h.b16 %v3679
          %v3787 = vunpack.c.l.b16 %v3680
          %v3788 = vunpack.c.h.b16 %v3680
          %v3789 = vpack.c.b16 %v3727, %v3725
          %v3790 = vpack.c.b16 %v3728, %v3726
          %v3791 = vpack.c.b16 %v3731, %v3729
          %v3792 = vpack.c.b16 %v3732, %v3730
          %v3793 = vpack.c.b16 %v3735, %v3733
          %v3794 = vpack.c.b16 %v3736, %v3734
          %v3795 = vpack.c.b16 %v3739, %v3737
          %v3796 = vpack.c.b16 %v3740, %v3738
          %v3797 = vpack.c.b16 %v3743, %v3741
          %v3798 = vpack.c.b16 %v3744, %v3742
          %v3799 = vpack.c.b16 %v3747, %v3745
          %v3800 = vpack.c.b16 %v3748, %v3746
          %v3801 = vpack.c.b16 %v3751, %v3749
          %v3802 = vpack.c.b16 %v3752, %v3750
          %v3803 = vpack.c.b16 %v3755, %v3753
          %v3804 = vpack.c.b16 %v3756, %v3754
          %v3805 = vpack.c.b16 %v3759, %v3757
          %v3806 = vpack.c.b16 %v3760, %v3758
          %v3807 = vpack.c.b16 %v3763, %v3761
          %v3808 = vpack.c.b16 %v3764, %v3762
          %v3809 = vpack.c.b16 %v3767, %v3765
          %v3810 = vpack.c.b16 %v3768, %v3766
          %v3811 = vpack.c.b16 %v3771, %v3769
          %v3812 = vpack.c.b16 %v3772, %v3770
          %v3813 = vpack.c.b16 %v3775, %v3773
          %v3814 = vpack.c.b16 %v3776, %v3774
          %v3815 = vpack.c.b16 %v3779, %v3777
          %v3816 = vpack.c.b16 %v3780, %v3778
          %v3817 = vpack.c.b16 %v3783, %v3781
          %v3818 = vpack.c.b16 %v3784, %v3782
          %v3819 = vpack.c.b16 %v3787, %v3785
          %v3820 = vpack.c.b16 %v3788, %v3786
          %3853 = vmatprep.subr.bf16.mxu0 %v3804
          %3854 = vmatpush1.bf16.msra.mxu0 %v3803
          %3855 = vmatprep.subr.bf16.mxu0 %v3802
          %3856 = vmatpush1.bf16.msra.mxu0 %v3801
          %3857 = vmatprep.subr.bf16.mxu0 %v3800
          %3858 = vmatpush1.bf16.msra.mxu0 %v3799
          %3859 = vmatprep.subr.bf16.mxu0 %v3798
          %3860 = vmatpush1.bf16.msra.mxu0 %v3797
          %3861 = vmatprep.subr.bf16.mxu0 %v3796
          %3862 = vmatpush1.bf16.msra.mxu0 %v3795
          %3863 = vmatprep.subr.bf16.mxu0 %v3794
          %3864 = vmatpush1.bf16.msra.mxu0 %v3793
          %3865 = vmatprep.subr.bf16.mxu0 %v3792
          %3866 = vmatpush1.bf16.msra.mxu0 %v3791
          %3867 = vmatprep.subr.bf16.mxu0 %v3790
          %3868 = vmatpush1.bf16.msra.mxu0 %v3789
          %3869 = vmatprep.subr.bf16.mxu0 %v3820
          %3870 = vmatpush2.bf16.msra.mxu0 %v3819
          %3871 = vmatprep.subr.bf16.mxu0 %v3818
          %3872 = vmatpush2.bf16.msra.mxu0 %v3817
          %3873 = vmatprep.subr.bf16.mxu0 %v3816
          %3874 = vmatpush2.bf16.msra.mxu0 %v3815
          %3875 = vmatprep.subr.bf16.mxu0 %v3814
          %3876 = vmatpush2.bf16.msra.mxu0 %v3813
          %3877 = vmatprep.subr.bf16.mxu0 %v3812
          %3878 = vmatpush2.bf16.msra.mxu0 %v3811
          %3879 = vmatprep.subr.bf16.mxu0 %v3810
          %3880 = vmatpush2.bf16.msra.mxu0 %v3809
          %3881 = vmatprep.subr.bf16.mxu0 %v3808
          %3882 = vmatpush2.bf16.msra.mxu0 %v3807
          %3883 = vmatprep.subr.bf16.mxu0 %v3806
          %3884 = vmatpush2.bf16.msra.mxu0 %v3805
          %3885 = vmatprep.mubr.bf16.mxu0 %v3634
          %3886 = vmatmul.mubr.bf16.gmra.mxu0 %v3633
          %v3887 = vpop.f32.mrf.mxu0
          %v3888 = vadd.f32 %v3686, %v3887
          %v3889 = vpop.f32.mrf.mxu0
          %v3890 = vadd.f32 %v3690, %v3889
          %v3891 = vpop.f32.mrf.mxu0
          %v3892 = vadd.f32 %v3686, %v3891
          %v3893 = vpop.f32.mrf.mxu0
          %v3894 = vadd.f32 %v3690, %v3893
          %3895 = vmatprep.mubr.bf16.mxu0 %v3636
          %3896 = vmatmul.mubr.bf16.gmra.mxu0 %v3635
          %v3897 = vpop.f32.mrf.mxu0
          %v3898 = vadd.f32 %v3686, %v3897
          %v3899 = vpop.f32.mrf.mxu0
          %v3900 = vadd.f32 %v3690, %v3899
          %v3901 = vpop.f32.mrf.mxu0
          %v3902 = vadd.f32 %v3686, %v3901
          %v3903 = vpop.f32.mrf.mxu0
          %v3904 = vadd.f32 %v3690, %v3903
          %3905 = vmatprep.mubr.bf16.mxu0 %v3638
          %3906 = vmatmul.mubr.bf16.gmra.mxu0 %v3637
          %v3907 = vpop.f32.mrf.mxu0
          %v3908 = vadd.f32 %v3686, %v3907
          %v3909 = vpop.f32.mrf.mxu0
          %v3910 = vadd.f32 %v3690, %v3909
          %v3911 = vpop.f32.mrf.mxu0
          %v3912 = vadd.f32 %v3686, %v3911
          %v3913 = vpop.f32.mrf.mxu0
          %v3914 = vadd.f32 %v3690, %v3913
          %3915 = vmatprep.mubr.bf16.mxu0 %v3640
          %3916 = vmatmul.mubr.bf16.gmra.mxu0 %v3639
          %v3917 = vpop.f32.mrf.mxu0
          %v3918 = vadd.f32 %v3686, %v3917
          %v3919 = vpop.f32.mrf.mxu0
          %v3920 = vadd.f32 %v3690, %v3919
          %v3921 = vpop.f32.mrf.mxu0
          %v3922 = vadd.f32 %v3686, %v3921
          %v3923 = vpop.f32.mrf.mxu0
          %v3924 = vadd.f32 %v3690, %v3923
          %3925 = vmatprep.mubr.bf16.mxu0 %v3642
          %3926 = vmatmul.mubr.bf16.gmra.mxu0 %v3641
          %v3927 = vpop.f32.mrf.mxu0
          %v3928 = vadd.f32 %v3686, %v3927
          %v3929 = vpop.f32.mrf.mxu0
          %v3930 = vadd.f32 %v3690, %v3929
          %v3931 = vpop.f32.mrf.mxu0
          %v3932 = vadd.f32 %v3686, %v3931
          %v3933 = vpop.f32.mrf.mxu0
          %v3934 = vadd.f32 %v3690, %v3933
          %3935 = vmatprep.mubr.bf16.mxu0 %v3644
          %3936 = vmatmul.mubr.bf16.gmra.mxu0 %v3643
          %v3937 = vpop.f32.mrf.mxu0
          %v3938 = vadd.f32 %v3686, %v3937
          %v3939 = vpop.f32.mrf.mxu0
          %v3940 = vadd.f32 %v3690, %v3939
          %v3941 = vpop.f32.mrf.mxu0
          %v3942 = vadd.f32 %v3686, %v3941
          %v3943 = vpop.f32.mrf.mxu0
          %v3944 = vadd.f32 %v3690, %v3943
          %3945 = vmatprep.mubr.bf16.mxu0 %v3646
          %3946 = vmatmul.mubr.bf16.gmra.mxu0 %v3645
          %v3947 = vpop.f32.mrf.mxu0
          %v3948 = vadd.f32 %v3686, %v3947
          %v3949 = vpop.f32.mrf.mxu0
          %v3950 = vadd.f32 %v3690, %v3949
          %v3951 = vpop.f32.mrf.mxu0
          %v3952 = vadd.f32 %v3686, %v3951
          %v3953 = vpop.f32.mrf.mxu0
          %v3954 = vadd.f32 %v3690, %v3953
          %3955 = vmatprep.mubr.bf16.mxu0 %v3648
          %3956 = vmatmul.mubr.bf16.gmra.mxu0 %v3647
          %v3957 = vpop.f32.mrf.mxu0
          %v3958 = vadd.f32 %v3686, %v3957
          %v3959 = vpop.f32.mrf.mxu0
          %v3960 = vadd.f32 %v3690, %v3959
          %v3961 = vpop.f32.mrf.mxu0
          %v3962 = vadd.f32 %v3686, %v3961
          %v3963 = vpop.f32.mrf.mxu0
          %v3964 = vadd.f32 %v3690, %v3963
          %3965 = vdwg.mxu0
          %v3966 = vmax.f32 %v3888, 0.0
          %v3967 = vmax.f32 %v3890, 0.0
          %v3968 = vmax.f32 %v3892, 0.0
          %v3969 = vmax.f32 %v3894, 0.0
          %v3970 = vmax.f32 %v3898, 0.0
          %v3971 = vmax.f32 %v3900, 0.0
          %v3972 = vmax.f32 %v3902, 0.0
          %v3973 = vmax.f32 %v3904, 0.0
          %v3974 = vmax.f32 %v3908, 0.0
          %v3975 = vmax.f32 %v3910, 0.0
          %v3976 = vmax.f32 %v3912, 0.0
          %v3977 = vmax.f32 %v3914, 0.0
          %v3978 = vmax.f32 %v3918, 0.0
          %v3979 = vmax.f32 %v3920, 0.0
          %v3980 = vmax.f32 %v3922, 0.0
          %v3981 = vmax.f32 %v3924, 0.0
          %v3982 = vmax.f32 %v3928, 0.0
          %v3983 = vmax.f32 %v3930, 0.0
          %v3984 = vmax.f32 %v3932, 0.0
          %v3985 = vmax.f32 %v3934, 0.0
          %v3986 = vmax.f32 %v3938, 0.0
          %v3987 = vmax.f32 %v3940, 0.0
          %v3988 = vmax.f32 %v3942, 0.0
          %v3989 = vmax.f32 %v3944, 0.0
          %v3990 = vmax.f32 %v3948, 0.0
          %v3991 = vmax.f32 %v3950, 0.0
          %v3992 = vmax.f32 %v3952, 0.0
          %v3993 = vmax.f32 %v3954, 0.0
          %v3994 = vmax.f32 %v3958, 0.0
          %v3995 = vmax.f32 %v3960, 0.0
          %v3996 = vmax.f32 %v3962, 0.0
          %v3997 = vmax.f32 %v3964, 0.0
          %v3998 = vld [vmem:[#allocation3] sm:$0xff]
          %v3999 = vld [vmem:[#allocation3 + $0x8] sm:$0xff]
          %v4000 = vld [vmem:[#allocation3 + $0x10] sm:$0xff]
          %v4001 = vld [vmem:[#allocation3 + $0x18] sm:$0xff]
          %v4002 = vld [vmem:[#allocation3 + $0x20] sm:$0xff]
          %v4003 = vld [vmem:[#allocation3 + $0x28] sm:$0xff]
          %v4004 = vld [vmem:[#allocation3 + $0x30] sm:$0xff]
          %v4005 = vld [vmem:[#allocation3 + $0x38] sm:$0xff]
          %v4006 = vld [vmem:[#allocation3 + $0x40] sm:$0xff]
          %v4007 = vld [vmem:[#allocation3 + $0x48] sm:$0xff]
          %v4008 = vld [vmem:[#allocation3 + $0x50] sm:$0xff]
          %v4009 = vld [vmem:[#allocation3 + $0x58] sm:$0xff]
          %v4010 = vld [vmem:[#allocation3 + $0x60] sm:$0xff]
          %v4011 = vld [vmem:[#allocation3 + $0x68] sm:$0xff]
          %v4012 = vld [vmem:[#allocation3 + $0x70] sm:$0xff]
          %v4013 = vld [vmem:[#allocation3 + $0x78] sm:$0xff]
          %v4014 = vld [vmem:[#allocation3 + $0x80] sm:$0xff]
          %v4015 = vld [vmem:[#allocation3 + $0x88] sm:$0xff]
          %v4016 = vld [vmem:[#allocation3 + $0x90] sm:$0xff]
          %v4017 = vld [vmem:[#allocation3 + $0x98] sm:$0xff]
          %v4018 = vld [vmem:[#allocation3 + $0xa0] sm:$0xff]
          %v4019 = vld [vmem:[#allocation3 + $0xa8] sm:$0xff]
          %v4020 = vld [vmem:[#allocation3 + $0xb0] sm:$0xff]
          %v4021 = vld [vmem:[#allocation3 + $0xb8] sm:$0xff]
          %v4022 = vld [vmem:[#allocation3 + $0xc0] sm:$0xff]
          %v4023 = vld [vmem:[#allocation3 + $0xc8] sm:$0xff]
          %v4024 = vld [vmem:[#allocation3 + $0xd0] sm:$0xff]
          %v4025 = vld [vmem:[#allocation3 + $0xd8] sm:$0xff]
          %v4026 = vld [vmem:[#allocation3 + $0xe0] sm:$0xff]
          %v4027 = vld [vmem:[#allocation3 + $0xe8] sm:$0xff]
          %v4028 = vld [vmem:[#allocation3 + $0xf0] sm:$0xff]
          %v4029 = vld [vmem:[#allocation3 + $0xf8] sm:$0xff]
          %v4030 = vld [vmem:[%s6] sm:$0x3]
          %v4032 = vlaneseq
          %v4033 = vshrl.u32 %v4032, 7
          %v4034 = vsub.s32 0, %v4033
          %v4035 = vrot.slane %v4030, %v4034
          %v4036 = vlaneseq
          %v4037 = vshrl.u32 %v4036, 7
          %v4038 = vsub.s32 1, %v4037
          %v4039 = vrot.slane %v4030, %v4038
          %v4042 = vadd.f32 %v3998, %v4035
          %v4043 = vadd.f32 %v3999, %v4039
          %v4044 = vadd.f32 %v4000, %v4035
          %v4045 = vadd.f32 %v4001, %v4039
          %v4046 = vadd.f32 %v4002, %v4035
          %v4047 = vadd.f32 %v4003, %v4039
          %v4048 = vadd.f32 %v4004, %v4035
          %v4049 = vadd.f32 %v4005, %v4039
          %v4050 = vadd.f32 %v4006, %v4035
          %v4051 = vadd.f32 %v4007, %v4039
          %v4052 = vadd.f32 %v4008, %v4035
          %v4053 = vadd.f32 %v4009, %v4039
          %v4054 = vadd.f32 %v4010, %v4035
          %v4055 = vadd.f32 %v4011, %v4039
          %v4056 = vadd.f32 %v4012, %v4035
          %v4057 = vadd.f32 %v4013, %v4039
          %v4058 = vadd.f32 %v4014, %v4035
          %v4059 = vadd.f32 %v4015, %v4039
          %v4060 = vadd.f32 %v4016, %v4035
          %v4061 = vadd.f32 %v4017, %v4039
          %v4062 = vadd.f32 %v4018, %v4035
          %v4063 = vadd.f32 %v4019, %v4039
          %v4064 = vadd.f32 %v4020, %v4035
          %v4065 = vadd.f32 %v4021, %v4039
          %v4066 = vadd.f32 %v4022, %v4035
          %v4067 = vadd.f32 %v4023, %v4039
          %v4068 = vadd.f32 %v4024, %v4035
          %v4069 = vadd.f32 %v4025, %v4039
          %v4070 = vadd.f32 %v4026, %v4035
          %v4071 = vadd.f32 %v4027, %v4039
          %v4072 = vadd.f32 %v4028, %v4035
          %v4073 = vadd.f32 %v4029, %v4039
          %v4074 = vmax.f32 %v4042, 0.0
          %v4075 = vmax.f32 %v4043, 0.0
          %v4076 = vmax.f32 %v4044, 0.0
          %v4077 = vmax.f32 %v4045, 0.0
          %v4078 = vmax.f32 %v4046, 0.0
          %v4079 = vmax.f32 %v4047, 0.0
          %v4080 = vmax.f32 %v4048, 0.0
          %v4081 = vmax.f32 %v4049, 0.0
          %v4082 = vmax.f32 %v4050, 0.0
          %v4083 = vmax.f32 %v4051, 0.0
          %v4084 = vmax.f32 %v4052, 0.0
          %v4085 = vmax.f32 %v4053, 0.0
          %v4086 = vmax.f32 %v4054, 0.0
          %v4087 = vmax.f32 %v4055, 0.0
          %v4088 = vmax.f32 %v4056, 0.0
          %v4089 = vmax.f32 %v4057, 0.0
          %v4090 = vmax.f32 %v4058, 0.0
          %v4091 = vmax.f32 %v4059, 0.0
          %v4092 = vmax.f32 %v4060, 0.0
          %v4093 = vmax.f32 %v4061, 0.0
          %v4094 = vmax.f32 %v4062, 0.0
          %v4095 = vmax.f32 %v4063, 0.0
          %v4096 = vmax.f32 %v4064, 0.0
          %v4097 = vmax.f32 %v4065, 0.0
          %v4098 = vmax.f32 %v4066, 0.0
          %v4099 = vmax.f32 %v4067, 0.0
          %v4100 = vmax.f32 %v4068, 0.0
          %v4101 = vmax.f32 %v4069, 0.0
          %v4102 = vmax.f32 %v4070, 0.0
          %v4103 = vmax.f32 %v4071, 0.0
          %v4104 = vmax.f32 %v4072, 0.0
          %v4105 = vmax.f32 %v4073, 0.0
          %v4106 = vpack.c.bf16 %v4076, %v4074
          %v4107 = vpack.c.bf16 %v4077, %v4075
          %v4108 = vpack.c.bf16 %v4080, %v4078
          %v4109 = vpack.c.bf16 %v4081, %v4079
          %v4110 = vpack.c.bf16 %v4084, %v4082
          %v4111 = vpack.c.bf16 %v4085, %v4083
          %v4112 = vpack.c.bf16 %v4088, %v4086
          %v4113 = vpack.c.bf16 %v4089, %v4087
          %v4114 = vpack.c.bf16 %v4092, %v4090
          %v4115 = vpack.c.bf16 %v4093, %v4091
          %v4116 = vpack.c.bf16 %v4096, %v4094
          %v4117 = vpack.c.bf16 %v4097, %v4095
          %v4118 = vpack.c.bf16 %v4100, %v4098
          %v4119 = vpack.c.bf16 %v4101, %v4099
          %v4120 = vpack.c.bf16 %v4104, %v4102
          %v4121 = vpack.c.bf16 %v4105, %v4103
          %v4122 = vld [vmem:[%s7] sm:$0xff]
          %v4123 = vld [vmem:[%s7 + $0x8] sm:$0xff]
          %v4124 = vld [vmem:[%s7 + $0x10] sm:$0xff]
          %v4125 = vld [vmem:[%s7 + $0x18] sm:$0xff]
          %v4126 = vld [vmem:[%s7 + $0x20] sm:$0xff]
          %v4127 = vld [vmem:[%s7 + $0x28] sm:$0xff]
          %v4128 = vld [vmem:[%s7 + $0x30] sm:$0xff]
          %v4129 = vld [vmem:[%s7 + $0x38] sm:$0xff]
          %v4130 = vld [vmem:[%s7 + $0x40] sm:$0xff]
          %v4131 = vld [vmem:[%s7 + $0x48] sm:$0xff]
          %v4132 = vld [vmem:[%s7 + $0x50] sm:$0xff]
          %v4133 = vld [vmem:[%s7 + $0x58] sm:$0xff]
          %v4134 = vld [vmem:[%s7 + $0x60] sm:$0xff]
          %v4135 = vld [vmem:[%s7 + $0x68] sm:$0xff]
          %v4136 = vld [vmem:[%s7 + $0x70] sm:$0xff]
          %v4137 = vld [vmem:[%s7 + $0x78] sm:$0xff]
          %v4138 = vld [vmem:[%s7 + $0x80] sm:$0xff]
          %v4139 = vld [vmem:[%s7 + $0x88] sm:$0xff]
          %v4140 = vld [vmem:[%s7 + $0x90] sm:$0xff]
          %v4141 = vld [vmem:[%s7 + $0x98] sm:$0xff]
          %v4142 = vld [vmem:[%s7 + $0xa0] sm:$0xff]
          %v4143 = vld [vmem:[%s7 + $0xa8] sm:$0xff]
          %v4144 = vld [vmem:[%s7 + $0xb0] sm:$0xff]
          %v4145 = vld [vmem:[%s7 + $0xb8] sm:$0xff]
          %v4146 = vld [vmem:[%s7 + $0xc0] sm:$0xff]
          %v4147 = vld [vmem:[%s7 + $0xc8] sm:$0xff]
          %v4148 = vld [vmem:[%s7 + $0xd0] sm:$0xff]
          %v4149 = vld [vmem:[%s7 + $0xd8] sm:$0xff]
          %v4150 = vld [vmem:[%s7 + $0xe0] sm:$0xff]
          %v4151 = vld [vmem:[%s7 + $0xe8] sm:$0xff]
          %v4152 = vld [vmem:[%s7 + $0xf0] sm:$0xff]
          %v4153 = vld [vmem:[%s7 + $0xf8] sm:$0xff]
          %v4154 = vld [vmem:[%s8] sm:$0x3]
          %v4156 = vlaneseq
          %v4157 = vshrl.u32 %v4156, 7
          %v4158 = vsub.s32 0, %v4157
          %v4159 = vrot.slane %v4154, %v4158
          %v4160 = vlaneseq
          %v4161 = vshrl.u32 %v4160, 7
          %v4162 = vsub.s32 1, %v4161
          %v4163 = vrot.slane %v4154, %v4162
          %v4198 = vunpack.c.l.b16 %v4122
          %v4199 = vunpack.c.h.b16 %v4122
          %v4200 = vunpack.c.l.b16 %v4123
          %v4201 = vunpack.c.h.b16 %v4123
          %v4202 = vunpack.c.l.b16 %v4124
          %v4203 = vunpack.c.h.b16 %v4124
          %v4204 = vunpack.c.l.b16 %v4125
          %v4205 = vunpack.c.h.b16 %v4125
          %v4206 = vunpack.c.l.b16 %v4126
          %v4207 = vunpack.c.h.b16 %v4126
          %v4208 = vunpack.c.l.b16 %v4127
          %v4209 = vunpack.c.h.b16 %v4127
          %v4210 = vunpack.c.l.b16 %v4128
          %v4211 = vunpack.c.h.b16 %v4128
          %v4212 = vunpack.c.l.b16 %v4129
          %v4213 = vunpack.c.h.b16 %v4129
          %v4214 = vunpack.c.l.b16 %v4130
          %v4215 = vunpack.c.h.b16 %v4130
          %v4216 = vunpack.c.l.b16 %v4131
          %v4217 = vunpack.c.h.b16 %v4131
          %v4218 = vunpack.c.l.b16 %v4132
          %v4219 = vunpack.c.h.b16 %v4132
          %v4220 = vunpack.c.l.b16 %v4133
          %v4221 = vunpack.c.h.b16 %v4133
          %v4222 = vunpack.c.l.b16 %v4134
          %v4223 = vunpack.c.h.b16 %v4134
          %v4224 = vunpack.c.l.b16 %v4135
          %v4225 = vunpack.c.h.b16 %v4135
          %v4226 = vunpack.c.l.b16 %v4136
          %v4227 = vunpack.c.h.b16 %v4136
          %v4228 = vunpack.c.l.b16 %v4137
          %v4229 = vunpack.c.h.b16 %v4137
          %v4230 = vunpack.c.l.b16 %v4138
          %v4231 = vunpack.c.h.b16 %v4138
          %v4232 = vunpack.c.l.b16 %v4139
          %v4233 = vunpack.c.h.b16 %v4139
          %v4234 = vunpack.c.l.b16 %v4140
          %v4235 = vunpack.c.h.b16 %v4140
          %v4236 = vunpack.c.l.b16 %v4141
          %v4237 = vunpack.c.h.b16 %v4141
          %v4238 = vunpack.c.l.b16 %v4142
          %v4239 = vunpack.c.h.b16 %v4142
          %v4240 = vunpack.c.l.b16 %v4143
          %v4241 = vunpack.c.h.b16 %v4143
          %v4242 = vunpack.c.l.b16 %v4144
          %v4243 = vunpack.c.h.b16 %v4144
          %v4244 = vunpack.c.l.b16 %v4145
          %v4245 = vunpack.c.h.b16 %v4145
          %v4246 = vunpack.c.l.b16 %v4146
          %v4247 = vunpack.c.h.b16 %v4146
          %v4248 = vunpack.c.l.b16 %v4147
          %v4249 = vunpack.c.h.b16 %v4147
          %v4250 = vunpack.c.l.b16 %v4148
          %v4251 = vunpack.c.h.b16 %v4148
          %v4252 = vunpack.c.l.b16 %v4149
          %v4253 = vunpack.c.h.b16 %v4149
          %v4254 = vunpack.c.l.b16 %v4150
          %v4255 = vunpack.c.h.b16 %v4150
          %v4256 = vunpack.c.l.b16 %v4151
          %v4257 = vunpack.c.h.b16 %v4151
          %v4258 = vunpack.c.l.b16 %v4152
          %v4259 = vunpack.c.h.b16 %v4152
          %v4260 = vunpack.c.l.b16 %v4153
          %v4261 = vunpack.c.h.b16 %v4153
          %v4262 = vpack.c.b16 %v4200, %v4198
          %v4263 = vpack.c.b16 %v4201, %v4199
          %v4264 = vpack.c.b16 %v4204, %v4202
          %v4265 = vpack.c.b16 %v4205, %v4203
          %v4266 = vpack.c.b16 %v4208, %v4206
          %v4267 = vpack.c.b16 %v4209, %v4207
          %v4268 = vpack.c.b16 %v4212, %v4210
          %v4269 = vpack.c.b16 %v4213, %v4211
          %v4270 = vpack.c.b16 %v4216, %v4214
          %v4271 = vpack.c.b16 %v4217, %v4215
          %v4272 = vpack.c.b16 %v4220, %v4218
          %v4273 = vpack.c.b16 %v4221, %v4219
          %v4274 = vpack.c.b16 %v4224, %v4222
          %v4275 = vpack.c.b16 %v4225, %v4223
          %v4276 = vpack.c.b16 %v4228, %v4226
          %v4277 = vpack.c.b16 %v4229, %v4227
          %v4278 = vpack.c.b16 %v4232, %v4230
          %v4279 = vpack.c.b16 %v4233, %v4231
          %v4280 = vpack.c.b16 %v4236, %v4234
          %v4281 = vpack.c.b16 %v4237, %v4235
          %v4282 = vpack.c.b16 %v4240, %v4238
          %v4283 = vpack.c.b16 %v4241, %v4239
          %v4284 = vpack.c.b16 %v4244, %v4242
          %v4285 = vpack.c.b16 %v4245, %v4243
          %v4286 = vpack.c.b16 %v4248, %v4246
          %v4287 = vpack.c.b16 %v4249, %v4247
          %v4288 = vpack.c.b16 %v4252, %v4250
          %v4289 = vpack.c.b16 %v4253, %v4251
          %v4290 = vpack.c.b16 %v4256, %v4254
          %v4291 = vpack.c.b16 %v4257, %v4255
          %v4292 = vpack.c.b16 %v4260, %v4258
          %v4293 = vpack.c.b16 %v4261, %v4259
          %4326 = vmatprep.subr.bf16.mxu0 %v4277
          %4327 = vmatpush1.bf16.msra.mxu0 %v4276
          %4328 = vmatprep.subr.bf16.mxu0 %v4275
          %4329 = vmatpush1.bf16.msra.mxu0 %v4274
          %4330 = vmatprep.subr.bf16.mxu0 %v4273
          %4331 = vmatpush1.bf16.msra.mxu0 %v4272
          %4332 = vmatprep.subr.bf16.mxu0 %v4271
          %4333 = vmatpush1.bf16.msra.mxu0 %v4270
          %4334 = vmatprep.subr.bf16.mxu0 %v4269
          %4335 = vmatpush1.bf16.msra.mxu0 %v4268
          %4336 = vmatprep.subr.bf16.mxu0 %v4267
          %4337 = vmatpush1.bf16.msra.mxu0 %v4266
          %4338 = vmatprep.subr.bf16.mxu0 %v4265
          %4339 = vmatpush1.bf16.msra.mxu0 %v4264
          %4340 = vmatprep.subr.bf16.mxu0 %v4263
          %4341 = vmatpush1.bf16.msra.mxu0 %v4262
          %4342 = vmatprep.subr.bf16.mxu0 %v4293
          %4343 = vmatpush2.bf16.msra.mxu0 %v4292
          %4344 = vmatprep.subr.bf16.mxu0 %v4291
          %4345 = vmatpush2.bf16.msra.mxu0 %v4290
          %4346 = vmatprep.subr.bf16.mxu0 %v4289
          %4347 = vmatpush2.bf16.msra.mxu0 %v4288
          %4348 = vmatprep.subr.bf16.mxu0 %v4287
          %4349 = vmatpush2.bf16.msra.mxu0 %v4286
          %4350 = vmatprep.subr.bf16.mxu0 %v4285
          %4351 = vmatpush2.bf16.msra.mxu0 %v4284
          %4352 = vmatprep.subr.bf16.mxu0 %v4283
          %4353 = vmatpush2.bf16.msra.mxu0 %v4282
          %4354 = vmatprep.subr.bf16.mxu0 %v4281
          %4355 = vmatpush2.bf16.msra.mxu0 %v4280
          %4356 = vmatprep.subr.bf16.mxu0 %v4279
          %4357 = vmatpush2.bf16.msra.mxu0 %v4278
          %4358 = vmatprep.mubr.bf16.mxu0 %v4107
          %4359 = vmatmul.mubr.bf16.gmra.mxu0 %v4106
          %v4360 = vpop.f32.mrf.mxu0
          %v4361 = vadd.f32 %v4159, %v4360
          %v4362 = vpop.f32.mrf.mxu0
          %v4363 = vadd.f32 %v4163, %v4362
          %v4364 = vpop.f32.mrf.mxu0
          %v4365 = vadd.f32 %v4159, %v4364
          %v4366 = vpop.f32.mrf.mxu0
          %v4367 = vadd.f32 %v4163, %v4366
          %4368 = vmatprep.mubr.bf16.mxu0 %v4109
          %4369 = vmatmul.mubr.bf16.gmra.mxu0 %v4108
          %v4370 = vpop.f32.mrf.mxu0
          %v4371 = vadd.f32 %v4159, %v4370
          %v4372 = vpop.f32.mrf.mxu0
          %v4373 = vadd.f32 %v4163, %v4372
          %v4374 = vpop.f32.mrf.mxu0
          %v4375 = vadd.f32 %v4159, %v4374
          %v4376 = vpop.f32.mrf.mxu0
          %v4377 = vadd.f32 %v4163, %v4376
          %4378 = vmatprep.mubr.bf16.mxu0 %v4111
          %4379 = vmatmul.mubr.bf16.gmra.mxu0 %v4110
          %v4380 = vpop.f32.mrf.mxu0
          %v4381 = vadd.f32 %v4159, %v4380
          %v4382 = vpop.f32.mrf.mxu0
          %v4383 = vadd.f32 %v4163, %v4382
          %v4384 = vpop.f32.mrf.mxu0
          %v4385 = vadd.f32 %v4159, %v4384
          %v4386 = vpop.f32.mrf.mxu0
          %v4387 = vadd.f32 %v4163, %v4386
          %4388 = vmatprep.mubr.bf16.mxu0 %v4113
          %4389 = vmatmul.mubr.bf16.gmra.mxu0 %v4112
          %v4390 = vpop.f32.mrf.mxu0
          %v4391 = vadd.f32 %v4159, %v4390
          %v4392 = vpop.f32.mrf.mxu0
          %v4393 = vadd.f32 %v4163, %v4392
          %v4394 = vpop.f32.mrf.mxu0
          %v4395 = vadd.f32 %v4159, %v4394
          %v4396 = vpop.f32.mrf.mxu0
          %v4397 = vadd.f32 %v4163, %v4396
          %4398 = vmatprep.mubr.bf16.mxu0 %v4115
          %4399 = vmatmul.mubr.bf16.gmra.mxu0 %v4114
          %v4400 = vpop.f32.mrf.mxu0
          %v4401 = vadd.f32 %v4159, %v4400
          %v4402 = vpop.f32.mrf.mxu0
          %v4403 = vadd.f32 %v4163, %v4402
          %v4404 = vpop.f32.mrf.mxu0
          %v4405 = vadd.f32 %v4159, %v4404
          %v4406 = vpop.f32.mrf.mxu0
          %v4407 = vadd.f32 %v4163, %v4406
          %4408 = vmatprep.mubr.bf16.mxu0 %v4117
          %4409 = vmatmul.mubr.bf16.gmra.mxu0 %v4116
          %v4410 = vpop.f32.mrf.mxu0
          %v4411 = vadd.f32 %v4159, %v4410
          %v4412 = vpop.f32.mrf.mxu0
          %v4413 = vadd.f32 %v4163, %v4412
          %v4414 = vpop.f32.mrf.mxu0
          %v4415 = vadd.f32 %v4159, %v4414
          %v4416 = vpop.f32.mrf.mxu0
          %v4417 = vadd.f32 %v4163, %v4416
          %4418 = vmatprep.mubr.bf16.mxu0 %v4119
          %4419 = vmatmul.mubr.bf16.gmra.mxu0 %v4118
          %v4420 = vpop.f32.mrf.mxu0
          %v4421 = vadd.f32 %v4159, %v4420
          %v4422 = vpop.f32.mrf.mxu0
          %v4423 = vadd.f32 %v4163, %v4422
          %v4424 = vpop.f32.mrf.mxu0
          %v4425 = vadd.f32 %v4159, %v4424
          %v4426 = vpop.f32.mrf.mxu0
          %v4427 = vadd.f32 %v4163, %v4426
          %4428 = vmatprep.mubr.bf16.mxu0 %v4121
          %4429 = vmatmul.mubr.bf16.gmra.mxu0 %v4120
          %v4430 = vpop.f32.mrf.mxu0
          %v4431 = vadd.f32 %v4159, %v4430
          %v4432 = vpop.f32.mrf.mxu0
          %v4433 = vadd.f32 %v4163, %v4432
          %v4434 = vpop.f32.mrf.mxu0
          %v4435 = vadd.f32 %v4159, %v4434
          %v4436 = vpop.f32.mrf.mxu0
          %v4437 = vadd.f32 %v4163, %v4436
          %4438 = vdwg.mxu0
          %v4439 = vmax.f32 %v4361, 0.0
          %v4440 = vmax.f32 %v4363, 0.0
          %v4441 = vmax.f32 %v4365, 0.0
          %v4442 = vmax.f32 %v4367, 0.0
          %v4443 = vmax.f32 %v4371, 0.0
          %v4444 = vmax.f32 %v4373, 0.0
          %v4445 = vmax.f32 %v4375, 0.0
          %v4446 = vmax.f32 %v4377, 0.0
          %v4447 = vmax.f32 %v4381, 0.0
          %v4448 = vmax.f32 %v4383, 0.0
          %v4449 = vmax.f32 %v4385, 0.0
          %v4450 = vmax.f32 %v4387, 0.0
          %v4451 = vmax.f32 %v4391, 0.0
          %v4452 = vmax.f32 %v4393, 0.0
          %v4453 = vmax.f32 %v4395, 0.0
          %v4454 = vmax.f32 %v4397, 0.0
          %v4455 = vmax.f32 %v4401, 0.0
          %v4456 = vmax.f32 %v4403, 0.0
          %v4457 = vmax.f32 %v4405, 0.0
          %v4458 = vmax.f32 %v4407, 0.0
          %v4459 = vmax.f32 %v4411, 0.0
          %v4460 = vmax.f32 %v4413, 0.0
          %v4461 = vmax.f32 %v4415, 0.0
          %v4462 = vmax.f32 %v4417, 0.0
          %v4463 = vmax.f32 %v4421, 0.0
          %v4464 = vmax.f32 %v4423, 0.0
          %v4465 = vmax.f32 %v4425, 0.0
          %v4466 = vmax.f32 %v4427, 0.0
          %v4467 = vmax.f32 %v4431, 0.0
          %v4468 = vmax.f32 %v4433, 0.0
          %v4469 = vmax.f32 %v4435, 0.0
          %v4470 = vmax.f32 %v4437, 0.0
          %v4471 = vpack.c.bf16 %v3968, %v3966
          %v4472 = vpack.c.bf16 %v3969, %v3967
          %v4473 = vpack.c.bf16 %v3972, %v3970
          %v4474 = vpack.c.bf16 %v3973, %v3971
          %v4475 = vpack.c.bf16 %v3976, %v3974
          %v4476 = vpack.c.bf16 %v3977, %v3975
          %v4477 = vpack.c.bf16 %v3980, %v3978
          %v4478 = vpack.c.bf16 %v3981, %v3979
          %v4479 = vpack.c.bf16 %v3984, %v3982
          %v4480 = vpack.c.bf16 %v3985, %v3983
          %v4481 = vpack.c.bf16 %v3988, %v3986
          %v4482 = vpack.c.bf16 %v3989, %v3987
          %v4483 = vpack.c.bf16 %v3992, %v3990
          %v4484 = vpack.c.bf16 %v3993, %v3991
          %v4485 = vpack.c.bf16 %v3996, %v3994
          %v4486 = vpack.c.bf16 %v3997, %v3995
          %v4487 = vld [vmem:[%s9] sm:$0xf]
          %v4488 = vld [vmem:[%s9 + $0x4] sm:$0xf]
          %v4489 = vld [vmem:[%s9 + $0x8] sm:$0xf]
          %v4490 = vld [vmem:[%s9 + $0xc] sm:$0xf]
          %v4491 = vld [vmem:[%s9 + $0x10] sm:$0xf]
          %v4492 = vld [vmem:[%s9 + $0x14] sm:$0xf]
          %v4493 = vld [vmem:[%s9 + $0x18] sm:$0xf]
          %v4494 = vld [vmem:[%s9 + $0x1c] sm:$0xf]
          %v4495 = vld [vmem:[%s9 + $0x20] sm:$0xf]
          %v4496 = vld [vmem:[%s9 + $0x24] sm:$0xf]
          %v4497 = vld [vmem:[%s9 + $0x28] sm:$0xf]
          %v4498 = vld [vmem:[%s9 + $0x2c] sm:$0xf]
          %v4499 = vld [vmem:[%s9 + $0x30] sm:$0xf]
          %v4500 = vld [vmem:[%s9 + $0x34] sm:$0xf]
          %v4501 = vld [vmem:[%s9 + $0x38] sm:$0xf]
          %v4502 = vld [vmem:[%s9 + $0x3c] sm:$0xf]
          %v4503 = vld [vmem:[%s9 + $0x40] sm:$0xf]
          %v4504 = vld [vmem:[%s9 + $0x44] sm:$0xf]
          %v4505 = vld [vmem:[%s9 + $0x48] sm:$0xf]
          %v4506 = vld [vmem:[%s9 + $0x4c] sm:$0xf]
          %v4507 = vld [vmem:[%s9 + $0x50] sm:$0xf]
          %v4508 = vld [vmem:[%s9 + $0x54] sm:$0xf]
          %v4509 = vld [vmem:[%s9 + $0x58] sm:$0xf]
          %v4510 = vld [vmem:[%s9 + $0x5c] sm:$0xf]
          %v4511 = vld [vmem:[%s9 + $0x60] sm:$0xf]
          %v4512 = vld [vmem:[%s9 + $0x64] sm:$0xf]
          %v4513 = vld [vmem:[%s9 + $0x68] sm:$0xf]
          %v4514 = vld [vmem:[%s9 + $0x6c] sm:$0xf]
          %v4515 = vld [vmem:[%s9 + $0x70] sm:$0xf]
          %v4516 = vld [vmem:[%s9 + $0x74] sm:$0xf]
          %v4517 = vld [vmem:[%s9 + $0x78] sm:$0xf]
          %v4518 = vld [vmem:[%s9 + $0x7c] sm:$0xf]
          %v4519 = vld [vmem:[%s10] sm:$0x1]
          %v4521 = vlaneseq
          %v4522 = vshrl.u32 %v4521, 7
          %v4523 = vsub.s32 0, %v4522
          %v4524 = vrot.slane %v4519, %v4523
          %v4558 = vunpack.c.l.b16 %v4487
          %v4559 = vunpack.c.l.b16 %v4488
          %v4560 = vunpack.c.l.b16 %v4489
          %v4561 = vunpack.c.l.b16 %v4490
          %v4562 = vunpack.c.l.b16 %v4491
          %v4563 = vunpack.c.l.b16 %v4492
          %v4564 = vunpack.c.l.b16 %v4493
          %v4565 = vunpack.c.l.b16 %v4494
          %v4566 = vunpack.c.l.b16 %v4495
          %v4567 = vunpack.c.l.b16 %v4496
          %v4568 = vunpack.c.l.b16 %v4497
          %v4569 = vunpack.c.l.b16 %v4498
          %v4570 = vunpack.c.l.b16 %v4499
          %v4571 = vunpack.c.l.b16 %v4500
          %v4572 = vunpack.c.l.b16 %v4501
          %v4573 = vunpack.c.l.b16 %v4502
          %v4574 = vunpack.c.l.b16 %v4503
          %v4575 = vunpack.c.l.b16 %v4504
          %v4576 = vunpack.c.l.b16 %v4505
          %v4577 = vunpack.c.l.b16 %v4506
          %v4578 = vunpack.c.l.b16 %v4507
          %v4579 = vunpack.c.l.b16 %v4508
          %v4580 = vunpack.c.l.b16 %v4509
          %v4581 = vunpack.c.l.b16 %v4510
          %v4582 = vunpack.c.l.b16 %v4511
          %v4583 = vunpack.c.l.b16 %v4512
          %v4584 = vunpack.c.l.b16 %v4513
          %v4585 = vunpack.c.l.b16 %v4514
          %v4586 = vunpack.c.l.b16 %v4515
          %v4587 = vunpack.c.l.b16 %v4516
          %v4588 = vunpack.c.l.b16 %v4517
          %v4589 = vunpack.c.l.b16 %v4518
          %v4590 = vpack.c.b16 %v4559, %v4558
          %v4591 = vpack.c.b16 %v4561, %v4560
          %v4592 = vpack.c.b16 %v4563, %v4562
          %v4593 = vpack.c.b16 %v4565, %v4564
          %v4594 = vpack.c.b16 %v4567, %v4566
          %v4595 = vpack.c.b16 %v4569, %v4568
          %v4596 = vpack.c.b16 %v4571, %v4570
          %v4597 = vpack.c.b16 %v4573, %v4572
          %v4598 = vpack.c.b16 %v4575, %v4574
          %v4599 = vpack.c.b16 %v4577, %v4576
          %v4600 = vpack.c.b16 %v4579, %v4578
          %v4601 = vpack.c.b16 %v4581, %v4580
          %v4602 = vpack.c.b16 %v4583, %v4582
          %v4603 = vpack.c.b16 %v4585, %v4584
          %v4604 = vpack.c.b16 %v4587, %v4586
          %v4605 = vpack.c.b16 %v4589, %v4588
          %4622 = vmatprep.subr.bf16.mxu0 0
          %4623 = vmatpush1.bf16.msra.mxu0 %v4597
          %4624 = vmatprep.subr.bf16.mxu0 0
          %4625 = vmatpush1.bf16.msra.mxu0 %v4596
          %4626 = vmatprep.subr.bf16.mxu0 0
          %4627 = vmatpush1.bf16.msra.mxu0 %v4595
          %4628 = vmatprep.subr.bf16.mxu0 0
          %4629 = vmatpush1.bf16.msra.mxu0 %v4594
          %4630 = vmatprep.subr.bf16.mxu0 0
          %4631 = vmatpush1.bf16.msra.mxu0 %v4593
          %4632 = vmatprep.subr.bf16.mxu0 0
          %4633 = vmatpush1.bf16.msra.mxu0 %v4592
          %4634 = vmatprep.subr.bf16.mxu0 0
          %4635 = vmatpush1.bf16.msra.mxu0 %v4591
          %4636 = vmatprep.subr.bf16.mxu0 0
          %4637 = vmatpush1.bf16.msra.mxu0 %v4590
          %4638 = vmatprep.subr.bf16.mxu0 0
          %4639 = vmatpush2.bf16.msra.mxu0 %v4605
          %4640 = vmatprep.subr.bf16.mxu0 0
          %4641 = vmatpush2.bf16.msra.mxu0 %v4604
          %4642 = vmatprep.subr.bf16.mxu0 0
          %4643 = vmatpush2.bf16.msra.mxu0 %v4603
          %4644 = vmatprep.subr.bf16.mxu0 0
          %4645 = vmatpush2.bf16.msra.mxu0 %v4602
          %4646 = vmatprep.subr.bf16.mxu0 0
          %4647 = vmatpush2.bf16.msra.mxu0 %v4601
          %4648 = vmatprep.subr.bf16.mxu0 0
          %4649 = vmatpush2.bf16.msra.mxu0 %v4600
          %4650 = vmatprep.subr.bf16.mxu0 0
          %4651 = vmatpush2.bf16.msra.mxu0 %v4599
          %4652 = vmatprep.subr.bf16.mxu0 0
          %4653 = vmatpush2.bf16.msra.mxu0 %v4598
          %4654 = vmatprep.mubr.bf16.mxu0 %v4472
          %4655 = vmatmul.mubr.bf16.gmra.mxu0 %v4471
          %v4656 = vpop.f32.mrf.mxu0
          %v4657 = vadd.f32 %v4524, %v4656
          %v4658 = vpop.f32.mrf.mxu0
          %v4659 = vpop.f32.mrf.mxu0
          %v4660 = vadd.f32 %v4524, %v4659
          %v4661 = vpop.f32.mrf.mxu0
          %4662 = vmatprep.mubr.bf16.mxu0 %v4474
          %4663 = vmatmul.mubr.bf16.gmra.mxu0 %v4473
          %v4664 = vpop.f32.mrf.mxu0
          %v4665 = vadd.f32 %v4524, %v4664
          %v4666 = vpop.f32.mrf.mxu0
          %v4667 = vpop.f32.mrf.mxu0
          %v4668 = vadd.f32 %v4524, %v4667
          %v4669 = vpop.f32.mrf.mxu0
          %4670 = vmatprep.mubr.bf16.mxu0 %v4476
          %4671 = vmatmul.mubr.bf16.gmra.mxu0 %v4475
          %v4672 = vpop.f32.mrf.mxu0
          %v4673 = vadd.f32 %v4524, %v4672
          %v4674 = vpop.f32.mrf.mxu0
          %v4675 = vpop.f32.mrf.mxu0
          %v4676 = vadd.f32 %v4524, %v4675
          %v4677 = vpop.f32.mrf.mxu0
          %4678 = vmatprep.mubr.bf16.mxu0 %v4478
          %4679 = vmatmul.mubr.bf16.gmra.mxu0 %v4477
          %v4680 = vpop.f32.mrf.mxu0
          %v4681 = vadd.f32 %v4524, %v4680
          %v4682 = vpop.f32.mrf.mxu0
          %v4683 = vpop.f32.mrf.mxu0
          %v4684 = vadd.f32 %v4524, %v4683
          %v4685 = vpop.f32.mrf.mxu0
          %4686 = vmatprep.mubr.bf16.mxu0 %v4480
          %4687 = vmatmul.mubr.bf16.gmra.mxu0 %v4479
          %v4688 = vpop.f32.mrf.mxu0
          %v4689 = vadd.f32 %v4524, %v4688
          %v4690 = vpop.f32.mrf.mxu0
          %v4691 = vpop.f32.mrf.mxu0
          %v4692 = vadd.f32 %v4524, %v4691
          %v4693 = vpop.f32.mrf.mxu0
          %4694 = vmatprep.mubr.bf16.mxu0 %v4482
          %4695 = vmatmul.mubr.bf16.gmra.mxu0 %v4481
          %v4696 = vpop.f32.mrf.mxu0
          %v4697 = vadd.f32 %v4524, %v4696
          %v4698 = vpop.f32.mrf.mxu0
          %v4699 = vpop.f32.mrf.mxu0
          %v4700 = vadd.f32 %v4524, %v4699
          %v4701 = vpop.f32.mrf.mxu0
          %4702 = vmatprep.mubr.bf16.mxu0 %v4484
          %4703 = vmatmul.mubr.bf16.gmra.mxu0 %v4483
          %v4704 = vpop.f32.mrf.mxu0
          %v4705 = vadd.f32 %v4524, %v4704
          %v4706 = vpop.f32.mrf.mxu0
          %v4707 = vpop.f32.mrf.mxu0
          %v4708 = vadd.f32 %v4524, %v4707
          %v4709 = vpop.f32.mrf.mxu0
          %4710 = vmatprep.mubr.bf16.mxu0 %v4486
          %4711 = vmatmul.mubr.bf16.gmra.mxu0 %v4485
          %v4712 = vpop.f32.mrf.mxu0
          %v4713 = vadd.f32 %v4524, %v4712
          %v4714 = vpop.f32.mrf.mxu0
          %v4715 = vpop.f32.mrf.mxu0
          %v4716 = vadd.f32 %v4524, %v4715
          %v4717 = vpop.f32.mrf.mxu0
          %4718 = vdwg.mxu0
          %v4719 = vpack.c.bf16 %v4441, %v4439
          %v4720 = vpack.c.bf16 %v4442, %v4440
          %v4721 = vpack.c.bf16 %v4445, %v4443
          %v4722 = vpack.c.bf16 %v4446, %v4444
          %v4723 = vpack.c.bf16 %v4449, %v4447
          %v4724 = vpack.c.bf16 %v4450, %v4448
          %v4725 = vpack.c.bf16 %v4453, %v4451
          %v4726 = vpack.c.bf16 %v4454, %v4452
          %v4727 = vpack.c.bf16 %v4457, %v4455
          %v4728 = vpack.c.bf16 %v4458, %v4456
          %v4729 = vpack.c.bf16 %v4461, %v4459
          %v4730 = vpack.c.bf16 %v4462, %v4460
          %v4731 = vpack.c.bf16 %v4465, %v4463
          %v4732 = vpack.c.bf16 %v4466, %v4464
          %v4733 = vpack.c.bf16 %v4469, %v4467
          %v4734 = vpack.c.bf16 %v4470, %v4468
          %v4735 = vld [vmem:[%s11] sm:$0xf]
          %v4736 = vld [vmem:[%s11 + $0x4] sm:$0xf]
          %v4737 = vld [vmem:[%s11 + $0x8] sm:$0xf]
          %v4738 = vld [vmem:[%s11 + $0xc] sm:$0xf]
          %v4739 = vld [vmem:[%s11 + $0x10] sm:$0xf]
          %v4740 = vld [vmem:[%s11 + $0x14] sm:$0xf]
          %v4741 = vld [vmem:[%s11 + $0x18] sm:$0xf]
          %v4742 = vld [vmem:[%s11 + $0x1c] sm:$0xf]
          %v4743 = vld [vmem:[%s11 + $0x20] sm:$0xf]
          %v4744 = vld [vmem:[%s11 + $0x24] sm:$0xf]
          %v4745 = vld [vmem:[%s11 + $0x28] sm:$0xf]
          %v4746 = vld [vmem:[%s11 + $0x2c] sm:$0xf]
          %v4747 = vld [vmem:[%s11 + $0x30] sm:$0xf]
          %v4748 = vld [vmem:[%s11 + $0x34] sm:$0xf]
          %v4749 = vld [vmem:[%s11 + $0x38] sm:$0xf]
          %v4750 = vld [vmem:[%s11 + $0x3c] sm:$0xf]
          %v4751 = vld [vmem:[%s11 + $0x40] sm:$0xf]
          %v4752 = vld [vmem:[%s11 + $0x44] sm:$0xf]
          %v4753 = vld [vmem:[%s11 + $0x48] sm:$0xf]
          %v4754 = vld [vmem:[%s11 + $0x4c] sm:$0xf]
          %v4755 = vld [vmem:[%s11 + $0x50] sm:$0xf]
          %v4756 = vld [vmem:[%s11 + $0x54] sm:$0xf]
          %v4757 = vld [vmem:[%s11 + $0x58] sm:$0xf]
          %v4758 = vld [vmem:[%s11 + $0x5c] sm:$0xf]
          %v4759 = vld [vmem:[%s11 + $0x60] sm:$0xf]
          %v4760 = vld [vmem:[%s11 + $0x64] sm:$0xf]
          %v4761 = vld [vmem:[%s11 + $0x68] sm:$0xf]
          %v4762 = vld [vmem:[%s11 + $0x6c] sm:$0xf]
          %v4763 = vld [vmem:[%s11 + $0x70] sm:$0xf]
          %v4764 = vld [vmem:[%s11 + $0x74] sm:$0xf]
          %v4765 = vld [vmem:[%s11 + $0x78] sm:$0xf]
          %v4766 = vld [vmem:[%s11 + $0x7c] sm:$0xf]
          %v4767 = vld [vmem:[%s12] sm:$0x1]
          %v4769 = vlaneseq
          %v4770 = vshrl.u32 %v4769, 7
          %v4771 = vsub.s32 0, %v4770
          %v4772 = vrot.slane %v4767, %v4771
          %v4806 = vunpack.c.l.b16 %v4735
          %v4807 = vunpack.c.l.b16 %v4736
          %v4808 = vunpack.c.l.b16 %v4737
          %v4809 = vunpack.c.l.b16 %v4738
          %v4810 = vunpack.c.l.b16 %v4739
          %v4811 = vunpack.c.l.b16 %v4740
          %v4812 = vunpack.c.l.b16 %v4741
          %v4813 = vunpack.c.l.b16 %v4742
          %v4814 = vunpack.c.l.b16 %v4743
          %v4815 = vunpack.c.l.b16 %v4744
          %v4816 = vunpack.c.l.b16 %v4745
          %v4817 = vunpack.c.l.b16 %v4746
          %v4818 = vunpack.c.l.b16 %v4747
          %v4819 = vunpack.c.l.b16 %v4748
          %v4820 = vunpack.c.l.b16 %v4749
          %v4821 = vunpack.c.l.b16 %v4750
          %v4822 = vunpack.c.l.b16 %v4751
          %v4823 = vunpack.c.l.b16 %v4752
          %v4824 = vunpack.c.l.b16 %v4753
          %v4825 = vunpack.c.l.b16 %v4754
          %v4826 = vunpack.c.l.b16 %v4755
          %v4827 = vunpack.c.l.b16 %v4756
          %v4828 = vunpack.c.l.b16 %v4757
          %v4829 = vunpack.c.l.b16 %v4758
          %v4830 = vunpack.c.l.b16 %v4759
          %v4831 = vunpack.c.l.b16 %v4760
          %v4832 = vunpack.c.l.b16 %v4761
          %v4833 = vunpack.c.l.b16 %v4762
          %v4834 = vunpack.c.l.b16 %v4763
          %v4835 = vunpack.c.l.b16 %v4764
          %v4836 = vunpack.c.l.b16 %v4765
          %v4837 = vunpack.c.l.b16 %v4766
          %v4838 = vpack.c.b16 %v4807, %v4806
          %v4839 = vpack.c.b16 %v4809, %v4808
          %v4840 = vpack.c.b16 %v4811, %v4810
          %v4841 = vpack.c.b16 %v4813, %v4812
          %v4842 = vpack.c.b16 %v4815, %v4814
          %v4843 = vpack.c.b16 %v4817, %v4816
          %v4844 = vpack.c.b16 %v4819, %v4818
          %v4845 = vpack.c.b16 %v4821, %v4820
          %v4846 = vpack.c.b16 %v4823, %v4822
          %v4847 = vpack.c.b16 %v4825, %v4824
          %v4848 = vpack.c.b16 %v4827, %v4826
          %v4849 = vpack.c.b16 %v4829, %v4828
          %v4850 = vpack.c.b16 %v4831, %v4830
          %v4851 = vpack.c.b16 %v4833, %v4832
          %v4852 = vpack.c.b16 %v4835, %v4834
          %v4853 = vpack.c.b16 %v4837, %v4836
          %4870 = vmatprep.subr.bf16.mxu0 0
          %4871 = vmatpush1.bf16.msra.mxu0 %v4845
          %4872 = vmatprep.subr.bf16.mxu0 0
          %4873 = vmatpush1.bf16.msra.mxu0 %v4844
          %4874 = vmatprep.subr.bf16.mxu0 0
          %4875 = vmatpush1.bf16.msra.mxu0 %v4843
          %4876 = vmatprep.subr.bf16.mxu0 0
          %4877 = vmatpush1.bf16.msra.mxu0 %v4842
          %4878 = vmatprep.subr.bf16.mxu0 0
          %4879 = vmatpush1.bf16.msra.mxu0 %v4841
          %4880 = vmatprep.subr.bf16.mxu0 0
          %4881 = vmatpush1.bf16.msra.mxu0 %v4840
          %4882 = vmatprep.subr.bf16.mxu0 0
          %4883 = vmatpush1.bf16.msra.mxu0 %v4839
          %4884 = vmatprep.subr.bf16.mxu0 0
          %4885 = vmatpush1.bf16.msra.mxu0 %v4838
          %4886 = vmatprep.subr.bf16.mxu0 0
          %4887 = vmatpush2.bf16.msra.mxu0 %v4853
          %4888 = vmatprep.subr.bf16.mxu0 0
          %4889 = vmatpush2.bf16.msra.mxu0 %v4852
          %4890 = vmatprep.subr.bf16.mxu0 0
          %4891 = vmatpush2.bf16.msra.mxu0 %v4851
          %4892 = vmatprep.subr.bf16.mxu0 0
          %4893 = vmatpush2.bf16.msra.mxu0 %v4850
          %4894 = vmatprep.subr.bf16.mxu0 0
          %4895 = vmatpush2.bf16.msra.mxu0 %v4849
          %4896 = vmatprep.subr.bf16.mxu0 0
          %4897 = vmatpush2.bf16.msra.mxu0 %v4848
          %4898 = vmatprep.subr.bf16.mxu0 0
          %4899 = vmatpush2.bf16.msra.mxu0 %v4847
          %4900 = vmatprep.subr.bf16.mxu0 0
          %4901 = vmatpush2.bf16.msra.mxu0 %v4846
          %4902 = vmatprep.mubr.bf16.mxu0 %v4720
          %4903 = vmatmul.mubr.bf16.gmra.mxu0 %v4719
          %v4904 = vpop.f32.mrf.mxu0
          %v4905 = vadd.f32 %v4772, %v4904
          %v4906 = vpop.f32.mrf.mxu0
          %v4907 = vpop.f32.mrf.mxu0
          %v4908 = vadd.f32 %v4772, %v4907
          %v4909 = vpop.f32.mrf.mxu0
          %4910 = vmatprep.mubr.bf16.mxu0 %v4722
          %4911 = vmatmul.mubr.bf16.gmra.mxu0 %v4721
          %v4912 = vpop.f32.mrf.mxu0
          %v4913 = vadd.f32 %v4772, %v4912
          %v4914 = vpop.f32.mrf.mxu0
          %v4915 = vpop.f32.mrf.mxu0
          %v4916 = vadd.f32 %v4772, %v4915
          %v4917 = vpop.f32.mrf.mxu0
          %4918 = vmatprep.mubr.bf16.mxu0 %v4724
          %4919 = vmatmul.mubr.bf16.gmra.mxu0 %v4723
          %v4920 = vpop.f32.mrf.mxu0
          %v4921 = vadd.f32 %v4772, %v4920
          %v4922 = vpop.f32.mrf.mxu0
          %v4923 = vpop.f32.mrf.mxu0
          %v4924 = vadd.f32 %v4772, %v4923
          %v4925 = vpop.f32.mrf.mxu0
          %4926 = vmatprep.mubr.bf16.mxu0 %v4726
          %4927 = vmatmul.mubr.bf16.gmra.mxu0 %v4725
          %v4928 = vpop.f32.mrf.mxu0
          %v4929 = vadd.f32 %v4772, %v4928
          %v4930 = vpop.f32.mrf.mxu0
          %v4931 = vpop.f32.mrf.mxu0
          %v4932 = vadd.f32 %v4772, %v4931
          %v4933 = vpop.f32.mrf.mxu0
          %4934 = vmatprep.mubr.bf16.mxu0 %v4728
          %4935 = vmatmul.mubr.bf16.gmra.mxu0 %v4727
          %v4936 = vpop.f32.mrf.mxu0
          %v4937 = vadd.f32 %v4772, %v4936
          %v4938 = vpop.f32.mrf.mxu0
          %v4939 = vpop.f32.mrf.mxu0
          %v4940 = vadd.f32 %v4772, %v4939
          %v4941 = vpop.f32.mrf.mxu0
          %4942 = vmatprep.mubr.bf16.mxu0 %v4730
          %4943 = vmatmul.mubr.bf16.gmra.mxu0 %v4729
          %v4944 = vpop.f32.mrf.mxu0
          %v4945 = vadd.f32 %v4772, %v4944
          %v4946 = vpop.f32.mrf.mxu0
          %v4947 = vpop.f32.mrf.mxu0
          %v4948 = vadd.f32 %v4772, %v4947
          %v4949 = vpop.f32.mrf.mxu0
          %4950 = vmatprep.mubr.bf16.mxu0 %v4732
          %4951 = vmatmul.mubr.bf16.gmra.mxu0 %v4731
          %v4952 = vpop.f32.mrf.mxu0
          %v4953 = vadd.f32 %v4772, %v4952
          %v4954 = vpop.f32.mrf.mxu0
          %v4955 = vpop.f32.mrf.mxu0
          %v4956 = vadd.f32 %v4772, %v4955
          %v4957 = vpop.f32.mrf.mxu0
          %4958 = vmatprep.mubr.bf16.mxu0 %v4734
          %4959 = vmatmul.mubr.bf16.gmra.mxu0 %v4733
          %v4960 = vpop.f32.mrf.mxu0
          %v4961 = vadd.f32 %v4772, %v4960
          %v4962 = vpop.f32.mrf.mxu0
          %v4963 = vpop.f32.mrf.mxu0
          %v4964 = vadd.f32 %v4772, %v4963
          %v4965 = vpop.f32.mrf.mxu0
          %4966 = vdwg.mxu0
          %vm4967 = vcmask 23552
          %v4968 = vsel %vm4967, %v4657, -inf
          %4969 = vmax.xlane.f32.xlu0 %v4968
          %v4970 = vpop.xlane.xlu0 %4969
          %v4971 = vsel %vm4967, %v4660, -inf
          %4972 = vmax.xlane.f32.xlu0 %v4971
          %v4973 = vpop.xlane.xlu0 %4972
          %v4974 = vsel %vm4967, %v4665, -inf
          %4975 = vmax.xlane.f32.xlu0 %v4974
          %v4976 = vpop.xlane.xlu0 %4975
          %v4977 = vsel %vm4967, %v4668, -inf
          %4978 = vmax.xlane.f32.xlu0 %v4977
          %v4979 = vpop.xlane.xlu0 %4978
          %v4980 = vsel %vm4967, %v4673, -inf
          %4981 = vmax.xlane.f32.xlu0 %v4980
          %v4982 = vpop.xlane.xlu0 %4981
          %v4983 = vsel %vm4967, %v4676, -inf
          %4984 = vmax.xlane.f32.xlu0 %v4983
          %v4985 = vpop.xlane.xlu0 %4984
          %v4986 = vsel %vm4967, %v4681, -inf
          %4987 = vmax.xlane.f32.xlu0 %v4986
          %v4988 = vpop.xlane.xlu0 %4987
          %v4989 = vsel %vm4967, %v4684, -inf
          %4990 = vmax.xlane.f32.xlu0 %v4989
          %v4991 = vpop.xlane.xlu0 %4990
          %v4992 = vsel %vm4967, %v4689, -inf
          %4993 = vmax.xlane.f32.xlu0 %v4992
          %v4994 = vpop.xlane.xlu0 %4993
          %v4995 = vsel %vm4967, %v4692, -inf
          %4996 = vmax.xlane.f32.xlu0 %v4995
          %v4997 = vpop.xlane.xlu0 %4996
          %v4998 = vsel %vm4967, %v4697, -inf
          %4999 = vmax.xlane.f32.xlu0 %v4998
          %v5000 = vpop.xlane.xlu0 %4999
          %v5001 = vsel %vm4967, %v4700, -inf
          %5002 = vmax.xlane.f32.xlu0 %v5001
          %v5003 = vpop.xlane.xlu0 %5002
          %v5004 = vsel %vm4967, %v4705, -inf
          %5005 = vmax.xlane.f32.xlu0 %v5004
          %v5006 = vpop.xlane.xlu0 %5005
          %v5007 = vsel %vm4967, %v4708, -inf
          %5008 = vmax.xlane.f32.xlu0 %v5007
          %v5009 = vpop.xlane.xlu0 %5008
          %v5010 = vsel %vm4967, %v4713, -inf
          %5011 = vmax.xlane.f32.xlu0 %v5010
          %v5012 = vpop.xlane.xlu0 %5011
          %v5013 = vsel %vm4967, %v4716, -inf
          %5014 = vmax.xlane.f32.xlu0 %v5013
          %v5015 = vpop.xlane.xlu0 %5014
          %v5016 = vsub.f32 %v4657, %v4970
          %v5017 = vsub.f32 %v4660, %v4973
          %v5018 = vsub.f32 %v4665, %v4976
          %v5019 = vsub.f32 %v4668, %v4979
          %v5020 = vsub.f32 %v4673, %v4982
          %v5021 = vsub.f32 %v4676, %v4985
          %v5022 = vsub.f32 %v4681, %v4988
          %v5023 = vsub.f32 %v4684, %v4991
          %v5024 = vsub.f32 %v4689, %v4994
          %v5025 = vsub.f32 %v4692, %v4997
          %v5026 = vsub.f32 %v4697, %v5000
          %v5027 = vsub.f32 %v4700, %v5003
          %v5028 = vsub.f32 %v4705, %v5006
          %v5029 = vsub.f32 %v4708, %v5009
          %v5030 = vsub.f32 %v4713, %v5012
          %v5031 = vsub.f32 %v4716, %v5015
          %v5032 = vmul.f32 %v5016, 1.442695
          %v5033 = vpow.pop %v5032
          %v5034 = vmul.f32 %v5017, 1.442695
          %v5035 = vpow.pop %v5034
          %v5036 = vmul.f32 %v5018, 1.442695
          %v5037 = vpow.pop %v5036
          %v5038 = vmul.f32 %v5019, 1.442695
          %v5039 = vpow.pop %v5038
          %v5040 = vmul.f32 %v5020, 1.442695
          %v5041 = vpow.pop %v5040
          %v5042 = vmul.f32 %v5021, 1.442695
          %v5043 = vpow.pop %v5042
          %v5044 = vmul.f32 %v5022, 1.442695
          %v5045 = vpow.pop %v5044
          %v5046 = vmul.f32 %v5023, 1.442695
          %v5047 = vpow.pop %v5046
          %v5048 = vmul.f32 %v5024, 1.442695
          %v5049 = vpow.pop %v5048
          %v5050 = vmul.f32 %v5025, 1.442695
          %v5051 = vpow.pop %v5050
          %v5052 = vmul.f32 %v5026, 1.442695
          %v5053 = vpow.pop %v5052
          %v5054 = vmul.f32 %v5027, 1.442695
          %v5055 = vpow.pop %v5054
          %v5056 = vmul.f32 %v5028, 1.442695
          %v5057 = vpow.pop %v5056
          %v5058 = vmul.f32 %v5029, 1.442695
          %v5059 = vpow.pop %v5058
          %v5060 = vmul.f32 %v5030, 1.442695
          %v5061 = vpow.pop %v5060
          %v5062 = vmul.f32 %v5031, 1.442695
          %v5063 = vpow.pop %v5062
          %v5064 = vsel %vm4967, %v5033, 0.0
          %5065 = vadd.xlane.f32.xlu0 %v5064
          %v5066 = vpop.xlane.xlu0 %5065
          %v5067 = vsel %vm4967, %v5035, 0.0
          %5068 = vadd.xlane.f32.xlu0 %v5067
          %v5069 = vpop.xlane.xlu0 %5068
          %v5070 = vsel %vm4967, %v5037, 0.0
          %5071 = vadd.xlane.f32.xlu0 %v5070
          %v5072 = vpop.xlane.xlu0 %5071
          %v5073 = vsel %vm4967, %v5039, 0.0
          %5074 = vadd.xlane.f32.xlu0 %v5073
          %v5075 = vpop.xlane.xlu0 %5074
          %v5076 = vsel %vm4967, %v5041, 0.0
          %5077 = vadd.xlane.f32.xlu0 %v5076
          %v5078 = vpop.xlane.xlu0 %5077
          %v5079 = vsel %vm4967, %v5043, 0.0
          %5080 = vadd.xlane.f32.xlu0 %v5079
          %v5081 = vpop.xlane.xlu0 %5080
          %v5082 = vsel %vm4967, %v5045, 0.0
          %5083 = vadd.xlane.f32.xlu0 %v5082
          %v5084 = vpop.xlane.xlu0 %5083
          %v5085 = vsel %vm4967, %v5047, 0.0
          %5086 = vadd.xlane.f32.xlu0 %v5085
          %v5087 = vpop.xlane.xlu0 %5086
          %v5088 = vsel %vm4967, %v5049, 0.0
          %5089 = vadd.xlane.f32.xlu0 %v5088
          %v5090 = vpop.xlane.xlu0 %5089
          %v5091 = vsel %vm4967, %v5051, 0.0
          %5092 = vadd.xlane.f32.xlu0 %v5091
          %v5093 = vpop.xlane.xlu0 %5092
          %v5094 = vsel %vm4967, %v5053, 0.0
          %5095 = vadd.xlane.f32.xlu0 %v5094
          %v5096 = vpop.xlane.xlu0 %5095
          %v5097 = vsel %vm4967, %v5055, 0.0
          %5098 = vadd.xlane.f32.xlu0 %v5097
          %v5099 = vpop.xlane.xlu0 %5098
          %v5100 = vsel %vm4967, %v5057, 0.0
          %5101 = vadd.xlane.f32.xlu0 %v5100
          %v5102 = vpop.xlane.xlu0 %5101
          %v5103 = vsel %vm4967, %v5059, 0.0
          %5104 = vadd.xlane.f32.xlu0 %v5103
          %v5105 = vpop.xlane.xlu0 %5104
          %v5106 = vsel %vm4967, %v5061, 0.0
          %5107 = vadd.xlane.f32.xlu0 %v5106
          %v5108 = vpop.xlane.xlu0 %5107
          %v5109 = vsel %vm4967, %v5063, 0.0
          %5110 = vadd.xlane.f32.xlu0 %v5109
          %v5111 = vpop.xlane.xlu0 %5110
          %v5112 = vrcp.pop %v5066
          %v5113 = vrcp.pop %v5069
          %v5114 = vrcp.pop %v5072
          %v5115 = vrcp.pop %v5075
          %v5116 = vrcp.pop %v5078
          %v5117 = vrcp.pop %v5081
          %v5118 = vrcp.pop %v5084
          %v5119 = vrcp.pop %v5087
          %v5120 = vrcp.pop %v5090
          %v5121 = vrcp.pop %v5093
          %v5122 = vrcp.pop %v5096
          %v5123 = vrcp.pop %v5099
          %v5124 = vrcp.pop %v5102
          %v5125 = vrcp.pop %v5105
          %v5126 = vrcp.pop %v5108
          %v5127 = vrcp.pop %v5111
          %v5128 = vmul.f32 %v5033, %v5112
          %v5129 = vmul.f32 %v5035, %v5113
          %v5130 = vmul.f32 %v5037, %v5114
          %v5131 = vmul.f32 %v5039, %v5115
          %v5132 = vmul.f32 %v5041, %v5116
          %v5133 = vmul.f32 %v5043, %v5117
          %v5134 = vmul.f32 %v5045, %v5118
          %v5135 = vmul.f32 %v5047, %v5119
          %v5136 = vmul.f32 %v5049, %v5120
          %v5137 = vmul.f32 %v5051, %v5121
          %v5138 = vmul.f32 %v5053, %v5122
          %v5139 = vmul.f32 %v5055, %v5123
          %v5140 = vmul.f32 %v5057, %v5124
          %v5141 = vmul.f32 %v5059, %v5125
          %v5142 = vmul.f32 %v5061, %v5126
          %v5143 = vmul.f32 %v5063, %v5127
          %v5144 = vld [vmem:[%s13] sm:$0xff]
          %v5145 = vld [vmem:[%s13 + $0x8] sm:$0xff]
          %v5146 = vld [vmem:[%s13 + $0x10] sm:$0xff]
          %v5147 = vld [vmem:[%s13 + $0x18] sm:$0xff]
          %v5148 = vld [vmem:[%s13 + $0x20] sm:$0xff]
          %v5149 = vld [vmem:[%s13 + $0x28] sm:$0xff]
          %v5150 = vld [vmem:[%s13 + $0x30] sm:$0xff]
          %v5151 = vld [vmem:[%s13 + $0x38] sm:$0xff]
          %v5152 = vld [vmem:[%s13 + $0x40] sm:$0xff]
          %v5153 = vld [vmem:[%s13 + $0x48] sm:$0xff]
          %v5154 = vld [vmem:[%s13 + $0x50] sm:$0xff]
          %v5155 = vld [vmem:[%s13 + $0x58] sm:$0xff]
          %v5156 = vld [vmem:[%s13 + $0x60] sm:$0xff]
          %v5157 = vld [vmem:[%s13 + $0x68] sm:$0xff]
          %v5158 = vld [vmem:[%s13 + $0x70] sm:$0xff]
          %v5159 = vld [vmem:[%s13 + $0x78] sm:$0xff]
          %5176 = vrot.lane.b32.xlu0 %v5144, 2
          %v5177 = vpop.permute.xlu0 %5176
          %5178 = vrot.lane.b32.xlu0 %v5145, 2
          %v5179 = vpop.permute.xlu0 %5178
          %5180 = vrot.lane.b32.xlu0 %v5146, 2
          %v5181 = vpop.permute.xlu0 %5180
          %5182 = vrot.lane.b32.xlu0 %v5147, 2
          %v5183 = vpop.permute.xlu0 %5182
          %5184 = vrot.lane.b32.xlu0 %v5148, 2
          %v5185 = vpop.permute.xlu0 %5184
          %5186 = vrot.lane.b32.xlu0 %v5149, 2
          %v5187 = vpop.permute.xlu0 %5186
          %5188 = vrot.lane.b32.xlu0 %v5150, 2
          %v5189 = vpop.permute.xlu0 %5188
          %5190 = vrot.lane.b32.xlu0 %v5151, 2
          %v5191 = vpop.permute.xlu0 %5190
          %5192 = vrot.lane.b32.xlu0 %v5152, 2
          %v5193 = vpop.permute.xlu0 %5192
          %5194 = vrot.lane.b32.xlu0 %v5153, 2
          %v5195 = vpop.permute.xlu0 %5194
          %5196 = vrot.lane.b32.xlu0 %v5154, 2
          %v5197 = vpop.permute.xlu0 %5196
          %5198 = vrot.lane.b32.xlu0 %v5155, 2
          %v5199 = vpop.permute.xlu0 %5198
          %5200 = vrot.lane.b32.xlu0 %v5156, 2
          %v5201 = vpop.permute.xlu0 %5200
          %5202 = vrot.lane.b32.xlu0 %v5157, 2
          %v5203 = vpop.permute.xlu0 %5202
          %5204 = vrot.lane.b32.xlu0 %v5158, 2
          %v5205 = vpop.permute.xlu0 %5204
          %5206 = vrot.lane.b32.xlu0 %v5159, 2
          %v5207 = vpop.permute.xlu0 %5206
          %v5224 = vsub.f32 %v5144, %v5177
          %v5225 = vsub.f32 %v5145, %v5179
          %v5226 = vsub.f32 %v5146, %v5181
          %v5227 = vsub.f32 %v5147, %v5183
          %v5228 = vsub.f32 %v5148, %v5185
          %v5229 = vsub.f32 %v5149, %v5187
          %v5230 = vsub.f32 %v5150, %v5189
          %v5231 = vsub.f32 %v5151, %v5191
          %v5232 = vsub.f32 %v5152, %v5193
          %v5233 = vsub.f32 %v5153, %v5195
          %v5234 = vsub.f32 %v5154, %v5197
          %v5235 = vsub.f32 %v5155, %v5199
          %v5236 = vsub.f32 %v5156, %v5201
          %v5237 = vsub.f32 %v5157, %v5203
          %v5238 = vsub.f32 %v5158, %v5205
          %v5239 = vsub.f32 %v5159, %v5207
          %v5240 = vadd.f32 %v5224, 1.0
          %v5241 = vadd.f32 %v5225, 1.0
          %v5242 = vadd.f32 %v5226, 1.0
          %v5243 = vadd.f32 %v5227, 1.0
          %v5244 = vadd.f32 %v5228, 1.0
          %v5245 = vadd.f32 %v5229, 1.0
          %v5246 = vadd.f32 %v5230, 1.0
          %v5247 = vadd.f32 %v5231, 1.0
          %v5248 = vadd.f32 %v5232, 1.0
          %v5249 = vadd.f32 %v5233, 1.0
          %v5250 = vadd.f32 %v5234, 1.0
          %v5251 = vadd.f32 %v5235, 1.0
          %v5252 = vadd.f32 %v5236, 1.0
          %v5253 = vadd.f32 %v5237, 1.0
          %v5254 = vadd.f32 %v5238, 1.0
          %v5255 = vadd.f32 %v5239, 1.0
          %v5256 = vmul.f32 %v5240, 0.5
          %v5257 = vmul.f32 %v5241, 0.5
          %v5258 = vmul.f32 %v5242, 0.5
          %v5259 = vmul.f32 %v5243, 0.5
          %v5260 = vmul.f32 %v5244, 0.5
          %v5261 = vmul.f32 %v5245, 0.5
          %v5262 = vmul.f32 %v5246, 0.5
          %v5263 = vmul.f32 %v5247, 0.5
          %v5264 = vmul.f32 %v5248, 0.5
          %v5265 = vmul.f32 %v5249, 0.5
          %v5266 = vmul.f32 %v5250, 0.5
          %v5267 = vmul.f32 %v5251, 0.5
          %v5268 = vmul.f32 %v5252, 0.5
          %v5269 = vmul.f32 %v5253, 0.5
          %v5270 = vmul.f32 %v5254, 0.5
          %v5271 = vmul.f32 %v5255, 0.5
          %5288 = vrot.lane.b32.xlu0 %v5256, 126
          %v5289 = vpop.permute.xlu0 %5288
          %5290 = vrot.lane.b32.xlu0 %v5257, 126
          %v5291 = vpop.permute.xlu0 %5290
          %5292 = vrot.lane.b32.xlu0 %v5258, 126
          %v5293 = vpop.permute.xlu0 %5292
          %5294 = vrot.lane.b32.xlu0 %v5259, 126
          %v5295 = vpop.permute.xlu0 %5294
          %5296 = vrot.lane.b32.xlu0 %v5260, 126
          %v5297 = vpop.permute.xlu0 %5296
          %5298 = vrot.lane.b32.xlu0 %v5261, 126
          %v5299 = vpop.permute.xlu0 %5298
          %5300 = vrot.lane.b32.xlu0 %v5262, 126
          %v5301 = vpop.permute.xlu0 %5300
          %5302 = vrot.lane.b32.xlu0 %v5263, 126
          %v5303 = vpop.permute.xlu0 %5302
          %5304 = vrot.lane.b32.xlu0 %v5264, 126
          %v5305 = vpop.permute.xlu0 %5304
          %5306 = vrot.lane.b32.xlu0 %v5265, 126
          %v5307 = vpop.permute.xlu0 %5306
          %5308 = vrot.lane.b32.xlu0 %v5266, 126
          %v5309 = vpop.permute.xlu0 %5308
          %5310 = vrot.lane.b32.xlu0 %v5267, 126
          %v5311 = vpop.permute.xlu0 %5310
          %5312 = vrot.lane.b32.xlu0 %v5268, 126
          %v5313 = vpop.permute.xlu0 %5312
          %5314 = vrot.lane.b32.xlu0 %v5269, 126
          %v5315 = vpop.permute.xlu0 %5314
          %5316 = vrot.lane.b32.xlu0 %v5270, 126
          %v5317 = vpop.permute.xlu0 %5316
          %5318 = vrot.lane.b32.xlu0 %v5271, 126
          %v5319 = vpop.permute.xlu0 %5318
          %v5336 = vadd.f32 %v5144, %v5289
          %v5337 = vadd.f32 %v5145, %v5291
          %v5338 = vadd.f32 %v5146, %v5293
          %v5339 = vadd.f32 %v5147, %v5295
          %v5340 = vadd.f32 %v5148, %v5297
          %v5341 = vadd.f32 %v5149, %v5299
          %v5342 = vadd.f32 %v5150, %v5301
          %v5343 = vadd.f32 %v5151, %v5303
          %v5344 = vadd.f32 %v5152, %v5305
          %v5345 = vadd.f32 %v5153, %v5307
          %v5346 = vadd.f32 %v5154, %v5309
          %v5347 = vadd.f32 %v5155, %v5311
          %v5348 = vadd.f32 %v5156, %v5313
          %v5349 = vadd.f32 %v5157, %v5315
          %v5350 = vadd.f32 %v5158, %v5317
          %v5351 = vadd.f32 %v5159, %v5319
          %v5352 = vmul.f32 %v4657, 0.1
          %v5353 = vmul.f32 %v4660, 0.1
          %v5354 = vmul.f32 %v4665, 0.1
          %v5355 = vmul.f32 %v4668, 0.1
          %v5356 = vmul.f32 %v4673, 0.1
          %v5357 = vmul.f32 %v4676, 0.1
          %v5358 = vmul.f32 %v4681, 0.1
          %v5359 = vmul.f32 %v4684, 0.1
          %v5360 = vmul.f32 %v4689, 0.1
          %v5361 = vmul.f32 %v4692, 0.1
          %v5362 = vmul.f32 %v4697, 0.1
          %v5363 = vmul.f32 %v4700, 0.1
          %v5364 = vmul.f32 %v4705, 0.1
          %v5365 = vmul.f32 %v4708, 0.1
          %v5366 = vmul.f32 %v4713, 0.1
          %v5367 = vmul.f32 %v4716, 0.1
          %v5368 = vadd.f32 %v5352, 0.0
          %v5369 = vadd.f32 %v5353, 0.0
          %v5370 = vadd.f32 %v5354, 0.0
          %v5371 = vadd.f32 %v5355, 0.0
          %v5372 = vadd.f32 %v5356, 0.0
          %v5373 = vadd.f32 %v5357, 0.0
          %v5374 = vadd.f32 %v5358, 0.0
          %v5375 = vadd.f32 %v5359, 0.0
          %v5376 = vadd.f32 %v5360, 0.0
          %v5377 = vadd.f32 %v5361, 0.0
          %v5378 = vadd.f32 %v5362, 0.0
          %v5379 = vadd.f32 %v5363, 0.0
          %v5380 = vadd.f32 %v5364, 0.0
          %v5381 = vadd.f32 %v5365, 0.0
          %v5382 = vadd.f32 %v5366, 0.0
          %v5383 = vadd.f32 %v5367, 0.0
          %v5384 = vmul.f32 %v4657, 0.2
          %v5385 = vmul.f32 %v4660, 0.2
          %v5386 = vmul.f32 %v4665, 0.2
          %v5387 = vmul.f32 %v4668, 0.2
          %v5388 = vmul.f32 %v4673, 0.2
          %v5389 = vmul.f32 %v4676, 0.2
          %v5390 = vmul.f32 %v4681, 0.2
          %v5391 = vmul.f32 %v4684, 0.2
          %v5392 = vmul.f32 %v4689, 0.2
          %v5393 = vmul.f32 %v4692, 0.2
          %v5394 = vmul.f32 %v4697, 0.2
          %v5395 = vmul.f32 %v4700, 0.2
          %v5396 = vmul.f32 %v4705, 0.2
          %v5397 = vmul.f32 %v4708, 0.2
          %v5398 = vmul.f32 %v4713, 0.2
          %v5399 = vmul.f32 %v4716, 0.2
          %v5400 = vadd.f32 %v5384, 0.0
          %v5401 = vadd.f32 %v5385, 0.0
          %v5402 = vadd.f32 %v5386, 0.0
          %v5403 = vadd.f32 %v5387, 0.0
          %v5404 = vadd.f32 %v5388, 0.0
          %v5405 = vadd.f32 %v5389, 0.0
          %v5406 = vadd.f32 %v5390, 0.0
          %v5407 = vadd.f32 %v5391, 0.0
          %v5408 = vadd.f32 %v5392, 0.0
          %v5409 = vadd.f32 %v5393, 0.0
          %v5410 = vadd.f32 %v5394, 0.0
          %v5411 = vadd.f32 %v5395, 0.0
          %v5412 = vadd.f32 %v5396, 0.0
          %v5413 = vadd.f32 %v5397, 0.0
          %v5414 = vadd.f32 %v5398, 0.0
          %v5415 = vadd.f32 %v5399, 0.0
          %5432 = vrot.lane.b32.xlu0 %v5240, 4
          %v5433 = vpop.permute.xlu0 %5432
          %5434 = vrot.lane.b32.xlu0 %v5241, 4
          %v5435 = vpop.permute.xlu0 %5434
          %5436 = vrot.lane.b32.xlu0 %v5242, 4
          %v5437 = vpop.permute.xlu0 %5436
          %5438 = vrot.lane.b32.xlu0 %v5243, 4
          %v5439 = vpop.permute.xlu0 %5438
          %5440 = vrot.lane.b32.xlu0 %v5244, 4
          %v5441 = vpop.permute.xlu0 %5440
          %5442 = vrot.lane.b32.xlu0 %v5245, 4
          %v5443 = vpop.permute.xlu0 %5442
          %5444 = vrot.lane.b32.xlu0 %v5246, 4
          %v5445 = vpop.permute.xlu0 %5444
          %5446 = vrot.lane.b32.xlu0 %v5247, 4
          %v5447 = vpop.permute.xlu0 %5446
          %5448 = vrot.lane.b32.xlu0 %v5248, 4
          %v5449 = vpop.permute.xlu0 %5448
          %5450 = vrot.lane.b32.xlu0 %v5249, 4
          %v5451 = vpop.permute.xlu0 %5450
          %5452 = vrot.lane.b32.xlu0 %v5250, 4
          %v5453 = vpop.permute.xlu0 %5452
          %5454 = vrot.lane.b32.xlu0 %v5251, 4
          %v5455 = vpop.permute.xlu0 %5454
          %5456 = vrot.lane.b32.xlu0 %v5252, 4
          %v5457 = vpop.permute.xlu0 %5456
          %5458 = vrot.lane.b32.xlu0 %v5253, 4
          %v5459 = vpop.permute.xlu0 %5458
          %5460 = vrot.lane.b32.xlu0 %v5254, 4
          %v5461 = vpop.permute.xlu0 %5460
          %5462 = vrot.lane.b32.xlu0 %v5255, 4
          %v5463 = vpop.permute.xlu0 %5462
          %v5480 = vmul.f32 %v5368, %v5433
          %v5481 = vmul.f32 %v5369, %v5435
          %v5482 = vmul.f32 %v5370, %v5437
          %v5483 = vmul.f32 %v5371, %v5439
          %v5484 = vmul.f32 %v5372, %v5441
          %v5485 = vmul.f32 %v5373, %v5443
          %v5486 = vmul.f32 %v5374, %v5445
          %v5487 = vmul.f32 %v5375, %v5447
          %v5488 = vmul.f32 %v5376, %v5449
          %v5489 = vmul.f32 %v5377, %v5451
          %v5490 = vmul.f32 %v5378, %v5453
          %v5491 = vmul.f32 %v5379, %v5455
          %v5492 = vmul.f32 %v5380, %v5457
          %v5493 = vmul.f32 %v5381, %v5459
          %v5494 = vmul.f32 %v5382, %v5461
          %v5495 = vmul.f32 %v5383, %v5463
          %5512 = vrot.lane.b32.xlu0 %v5480, 122
          %v5513 = vpop.permute.xlu0 %5512
          %5514 = vrot.lane.b32.xlu0 %v5481, 122
          %v5515 = vpop.permute.xlu0 %5514
          %5516 = vrot.lane.b32.xlu0 %v5482, 122
          %v5517 = vpop.permute.xlu0 %5516
          %5518 = vrot.lane.b32.xlu0 %v5483, 122
          %v5519 = vpop.permute.xlu0 %5518
          %5520 = vrot.lane.b32.xlu0 %v5484, 122
          %v5521 = vpop.permute.xlu0 %5520
          %5522 = vrot.lane.b32.xlu0 %v5485, 122
          %v5523 = vpop.permute.xlu0 %5522
          %5524 = vrot.lane.b32.xlu0 %v5486, 122
          %v5525 = vpop.permute.xlu0 %5524
          %5526 = vrot.lane.b32.xlu0 %v5487, 122
          %v5527 = vpop.permute.xlu0 %5526
          %5528 = vrot.lane.b32.xlu0 %v5488, 122
          %v5529 = vpop.permute.xlu0 %5528
          %5530 = vrot.lane.b32.xlu0 %v5489, 122
          %v5531 = vpop.permute.xlu0 %5530
          %5532 = vrot.lane.b32.xlu0 %v5490, 122
          %v5533 = vpop.permute.xlu0 %5532
          %5534 = vrot.lane.b32.xlu0 %v5491, 122
          %v5535 = vpop.permute.xlu0 %5534
          %5536 = vrot.lane.b32.xlu0 %v5492, 122
          %v5537 = vpop.permute.xlu0 %5536
          %5538 = vrot.lane.b32.xlu0 %v5493, 122
          %v5539 = vpop.permute.xlu0 %5538
          %5540 = vrot.lane.b32.xlu0 %v5494, 122
          %v5541 = vpop.permute.xlu0 %5540
          %5542 = vrot.lane.b32.xlu0 %v5495, 122
          %v5543 = vpop.permute.xlu0 %5542
          %v5560 = vadd.f32 %v5336, %v5513
          %v5561 = vadd.f32 %v5337, %v5515
          %v5562 = vadd.f32 %v5338, %v5517
          %v5563 = vadd.f32 %v5339, %v5519
          %v5564 = vadd.f32 %v5340, %v5521
          %v5565 = vadd.f32 %v5341, %v5523
          %v5566 = vadd.f32 %v5342, %v5525
          %v5567 = vadd.f32 %v5343, %v5527
          %v5568 = vadd.f32 %v5344, %v5529
          %v5569 = vadd.f32 %v5345, %v5531
          %v5570 = vadd.f32 %v5346, %v5533
          %v5571 = vadd.f32 %v5347, %v5535
          %v5572 = vadd.f32 %v5348, %v5537
          %v5573 = vadd.f32 %v5349, %v5539
          %v5574 = vadd.f32 %v5350, %v5541
          %v5575 = vadd.f32 %v5351, %v5543
          %v5576 = vmul.f32 %v5400, 1.442695
          %v5577 = vpow.pop %v5576
          %v5578 = vmul.f32 %v5401, 1.442695
          %v5579 = vpow.pop %v5578
          %v5580 = vmul.f32 %v5402, 1.442695
          %v5581 = vpow.pop %v5580
          %v5582 = vmul.f32 %v5403, 1.442695
          %v5583 = vpow.pop %v5582
          %v5584 = vmul.f32 %v5404, 1.442695
          %v5585 = vpow.pop %v5584
          %v5586 = vmul.f32 %v5405, 1.442695
          %v5587 = vpow.pop %v5586
          %v5588 = vmul.f32 %v5406, 1.442695
          %v5589 = vpow.pop %v5588
          %v5590 = vmul.f32 %v5407, 1.442695
          %v5591 = vpow.pop %v5590
          %v5592 = vmul.f32 %v5408, 1.442695
          %v5593 = vpow.pop %v5592
          %v5594 = vmul.f32 %v5409, 1.442695
          %v5595 = vpow.pop %v5594
          %v5596 = vmul.f32 %v5410, 1.442695
          %v5597 = vpow.pop %v5596
          %v5598 = vmul.f32 %v5411, 1.442695
          %v5599 = vpow.pop %v5598
          %v5600 = vmul.f32 %v5412, 1.442695
          %v5601 = vpow.pop %v5600
          %v5602 = vmul.f32 %v5413, 1.442695
          %v5603 = vpow.pop %v5602
          %v5604 = vmul.f32 %v5414, 1.442695
          %v5605 = vpow.pop %v5604
          %v5606 = vmul.f32 %v5415, 1.442695
          %v5607 = vpow.pop %v5606
          %5624 = vrot.lane.b32.xlu0 %v5577, 122
          %v5625 = vpop.permute.xlu0 %5624
          %5626 = vrot.lane.b32.xlu0 %v5579, 122
          %v5627 = vpop.permute.xlu0 %5626
          %5628 = vrot.lane.b32.xlu0 %v5581, 122
          %v5629 = vpop.permute.xlu0 %5628
          %5630 = vrot.lane.b32.xlu0 %v5583, 122
          %v5631 = vpop.permute.xlu0 %5630
          %5632 = vrot.lane.b32.xlu0 %v5585, 122
          %v5633 = vpop.permute.xlu0 %5632
          %5634 = vrot.lane.b32.xlu0 %v5587, 122
          %v5635 = vpop.permute.xlu0 %5634
          %5636 = vrot.lane.b32.xlu0 %v5589, 122
          %v5637 = vpop.permute.xlu0 %5636
          %5638 = vrot.lane.b32.xlu0 %v5591, 122
          %v5639 = vpop.permute.xlu0 %5638
          %5640 = vrot.lane.b32.xlu0 %v5593, 122
          %v5641 = vpop.permute.xlu0 %5640
          %5642 = vrot.lane.b32.xlu0 %v5595, 122
          %v5643 = vpop.permute.xlu0 %5642
          %5644 = vrot.lane.b32.xlu0 %v5597, 122
          %v5645 = vpop.permute.xlu0 %5644
          %5646 = vrot.lane.b32.xlu0 %v5599, 122
          %v5647 = vpop.permute.xlu0 %5646
          %5648 = vrot.lane.b32.xlu0 %v5601, 122
          %v5649 = vpop.permute.xlu0 %5648
          %5650 = vrot.lane.b32.xlu0 %v5603, 122
          %v5651 = vpop.permute.xlu0 %5650
          %5652 = vrot.lane.b32.xlu0 %v5605, 122
          %v5653 = vpop.permute.xlu0 %5652
          %5654 = vrot.lane.b32.xlu0 %v5607, 122
          %v5655 = vpop.permute.xlu0 %5654
          %v5672 = vmul.f32 %v5240, %v5625
          %v5673 = vmul.f32 %v5241, %v5627
          %v5674 = vmul.f32 %v5242, %v5629
          %v5675 = vmul.f32 %v5243, %v5631
          %v5676 = vmul.f32 %v5244, %v5633
          %v5677 = vmul.f32 %v5245, %v5635
          %v5678 = vmul.f32 %v5246, %v5637
          %v5679 = vmul.f32 %v5247, %v5639
          %v5680 = vmul.f32 %v5248, %v5641
          %v5681 = vmul.f32 %v5249, %v5643
          %v5682 = vmul.f32 %v5250, %v5645
          %v5683 = vmul.f32 %v5251, %v5647
          %v5684 = vmul.f32 %v5252, %v5649
          %v5685 = vmul.f32 %v5253, %v5651
          %v5686 = vmul.f32 %v5254, %v5653
          %v5687 = vmul.f32 %v5255, %v5655
          %5688 = vrot.lane.b32.xlu0 %v5240, 14
          %v5689 = vpop.permute.xlu0 %5688
          %5690 = vrot.lane.b32.xlu0 %v5241, 14
          %v5691 = vpop.permute.xlu0 %5690
          %5692 = vrot.lane.b32.xlu0 %v5242, 14
          %v5693 = vpop.permute.xlu0 %5692
          %5694 = vrot.lane.b32.xlu0 %v5243, 14
          %v5695 = vpop.permute.xlu0 %5694
          %5696 = vrot.lane.b32.xlu0 %v5244, 14
          %v5697 = vpop.permute.xlu0 %5696
          %5698 = vrot.lane.b32.xlu0 %v5245, 14
          %v5699 = vpop.permute.xlu0 %5698
          %5700 = vrot.lane.b32.xlu0 %v5246, 14
          %v5701 = vpop.permute.xlu0 %5700
          %5702 = vrot.lane.b32.xlu0 %v5247, 14
          %v5703 = vpop.permute.xlu0 %5702
          %5704 = vrot.lane.b32.xlu0 %v5248, 14
          %v5705 = vpop.permute.xlu0 %5704
          %5706 = vrot.lane.b32.xlu0 %v5249, 14
          %v5707 = vpop.permute.xlu0 %5706
          %5708 = vrot.lane.b32.xlu0 %v5250, 14
          %v5709 = vpop.permute.xlu0 %5708
          %5710 = vrot.lane.b32.xlu0 %v5251, 14
          %v5711 = vpop.permute.xlu0 %5710
          %5712 = vrot.lane.b32.xlu0 %v5252, 14
          %v5713 = vpop.permute.xlu0 %5712
          %5714 = vrot.lane.b32.xlu0 %v5253, 14
          %v5715 = vpop.permute.xlu0 %5714
          %5716 = vrot.lane.b32.xlu0 %v5254, 14
          %v5717 = vpop.permute.xlu0 %5716
          %5718 = vrot.lane.b32.xlu0 %v5255, 14
          %v5719 = vpop.permute.xlu0 %5718
          %v5736 = vmul.f32 %v5368, %v5689
          %v5737 = vmul.f32 %v5369, %v5691
          %v5738 = vmul.f32 %v5370, %v5693
          %v5739 = vmul.f32 %v5371, %v5695
          %v5740 = vmul.f32 %v5372, %v5697
          %v5741 = vmul.f32 %v5373, %v5699
          %v5742 = vmul.f32 %v5374, %v5701
          %v5743 = vmul.f32 %v5375, %v5703
          %v5744 = vmul.f32 %v5376, %v5705
          %v5745 = vmul.f32 %v5377, %v5707
          %v5746 = vmul.f32 %v5378, %v5709
          %v5747 = vmul.f32 %v5379, %v5711
          %v5748 = vmul.f32 %v5380, %v5713
          %v5749 = vmul.f32 %v5381, %v5715
          %v5750 = vmul.f32 %v5382, %v5717
          %v5751 = vmul.f32 %v5383, %v5719
          %5768 = vrot.lane.b32.xlu0 %v5736, 112
          %v5769 = vpop.permute.xlu0 %5768
          %5770 = vrot.lane.b32.xlu0 %v5737, 112
          %v5771 = vpop.permute.xlu0 %5770
          %5772 = vrot.lane.b32.xlu0 %v5738, 112
          %v5773 = vpop.permute.xlu0 %5772
          %5774 = vrot.lane.b32.xlu0 %v5739, 112
          %v5775 = vpop.permute.xlu0 %5774
          %5776 = vrot.lane.b32.xlu0 %v5740, 112
          %v5777 = vpop.permute.xlu0 %5776
          %5778 = vrot.lane.b32.xlu0 %v5741, 112
          %v5779 = vpop.permute.xlu0 %5778
          %5780 = vrot.lane.b32.xlu0 %v5742, 112
          %v5781 = vpop.permute.xlu0 %5780
          %5782 = vrot.lane.b32.xlu0 %v5743, 112
          %v5783 = vpop.permute.xlu0 %5782
          %5784 = vrot.lane.b32.xlu0 %v5744, 112
          %v5785 = vpop.permute.xlu0 %5784
          %5786 = vrot.lane.b32.xlu0 %v5745, 112
          %v5787 = vpop.permute.xlu0 %5786
          %5788 = vrot.lane.b32.xlu0 %v5746, 112
          %v5789 = vpop.permute.xlu0 %5788
          %5790 = vrot.lane.b32.xlu0 %v5747, 112
          %v5791 = vpop.permute.xlu0 %5790
          %5792 = vrot.lane.b32.xlu0 %v5748, 112
          %v5793 = vpop.permute.xlu0 %5792
          %5794 = vrot.lane.b32.xlu0 %v5749, 112
          %v5795 = vpop.permute.xlu0 %5794
          %5796 = vrot.lane.b32.xlu0 %v5750, 112
          %v5797 = vpop.permute.xlu0 %5796
          %5798 = vrot.lane.b32.xlu0 %v5751, 112
          %v5799 = vpop.permute.xlu0 %5798
          %v5816 = vadd.f32 %v5336, %v5769
          %v5817 = vadd.f32 %v5337, %v5771
          %v5818 = vadd.f32 %v5338, %v5773
          %v5819 = vadd.f32 %v5339, %v5775
          %v5820 = vadd.f32 %v5340, %v5777
          %v5821 = vadd.f32 %v5341, %v5779
          %v5822 = vadd.f32 %v5342, %v5781
          %v5823 = vadd.f32 %v5343, %v5783
          %v5824 = vadd.f32 %v5344, %v5785
          %v5825 = vadd.f32 %v5345, %v5787
          %v5826 = vadd.f32 %v5346, %v5789
          %v5827 = vadd.f32 %v5347, %v5791
          %v5828 = vadd.f32 %v5348, %v5793
          %v5829 = vadd.f32 %v5349, %v5795
          %v5830 = vadd.f32 %v5350, %v5797
          %v5831 = vadd.f32 %v5351, %v5799
          %v5832 = vmul.f32 %v5672, 0.5
          %v5833 = vmul.f32 %v5673, 0.5
          %v5834 = vmul.f32 %v5674, 0.5
          %v5835 = vmul.f32 %v5675, 0.5
          %v5836 = vmul.f32 %v5676, 0.5
          %v5837 = vmul.f32 %v5677, 0.5
          %v5838 = vmul.f32 %v5678, 0.5
          %v5839 = vmul.f32 %v5679, 0.5
          %v5840 = vmul.f32 %v5680, 0.5
          %v5841 = vmul.f32 %v5681, 0.5
          %v5842 = vmul.f32 %v5682, 0.5
          %v5843 = vmul.f32 %v5683, 0.5
          %v5844 = vmul.f32 %v5684, 0.5
          %v5845 = vmul.f32 %v5685, 0.5
          %v5846 = vmul.f32 %v5686, 0.5
          %v5847 = vmul.f32 %v5687, 0.5
          %5864 = vrot.lane.b32.xlu0 %v5832, 126
          %v5865 = vpop.permute.xlu0 %5864
          %5866 = vrot.lane.b32.xlu0 %v5833, 126
          %v5867 = vpop.permute.xlu0 %5866
          %5868 = vrot.lane.b32.xlu0 %v5834, 126
          %v5869 = vpop.permute.xlu0 %5868
          %5870 = vrot.lane.b32.xlu0 %v5835, 126
          %v5871 = vpop.permute.xlu0 %5870
          %5872 = vrot.lane.b32.xlu0 %v5836, 126
          %v5873 = vpop.permute.xlu0 %5872
          %5874 = vrot.lane.b32.xlu0 %v5837, 126
          %v5875 = vpop.permute.xlu0 %5874
          %5876 = vrot.lane.b32.xlu0 %v5838, 126
          %v5877 = vpop.permute.xlu0 %5876
          %5878 = vrot.lane.b32.xlu0 %v5839, 126
          %v5879 = vpop.permute.xlu0 %5878
          %5880 = vrot.lane.b32.xlu0 %v5840, 126
          %v5881 = vpop.permute.xlu0 %5880
          %5882 = vrot.lane.b32.xlu0 %v5841, 126
          %v5883 = vpop.permute.xlu0 %5882
          %5884 = vrot.lane.b32.xlu0 %v5842, 126
          %v5885 = vpop.permute.xlu0 %5884
          %5886 = vrot.lane.b32.xlu0 %v5843, 126
          %v5887 = vpop.permute.xlu0 %5886
          %5888 = vrot.lane.b32.xlu0 %v5844, 126
          %v5889 = vpop.permute.xlu0 %5888
          %5890 = vrot.lane.b32.xlu0 %v5845, 126
          %v5891 = vpop.permute.xlu0 %5890
          %5892 = vrot.lane.b32.xlu0 %v5846, 126
          %v5893 = vpop.permute.xlu0 %5892
          %5894 = vrot.lane.b32.xlu0 %v5847, 126
          %v5895 = vpop.permute.xlu0 %5894
          %v5912 = vsub.f32 %v5560, %v5865
          %v5913 = vsub.f32 %v5561, %v5867
          %v5914 = vsub.f32 %v5562, %v5869
          %v5915 = vsub.f32 %v5563, %v5871
          %v5916 = vsub.f32 %v5564, %v5873
          %v5917 = vsub.f32 %v5565, %v5875
          %v5918 = vsub.f32 %v5566, %v5877
          %v5919 = vsub.f32 %v5567, %v5879
          %v5920 = vsub.f32 %v5568, %v5881
          %v5921 = vsub.f32 %v5569, %v5883
          %v5922 = vsub.f32 %v5570, %v5885
          %v5923 = vsub.f32 %v5571, %v5887
          %v5924 = vsub.f32 %v5572, %v5889
          %v5925 = vsub.f32 %v5573, %v5891
          %v5926 = vsub.f32 %v5574, %v5893
          %v5927 = vsub.f32 %v5575, %v5895
          %v5928 = vadd.f32 %v5560, %v5865
          %v5929 = vadd.f32 %v5561, %v5867
          %v5930 = vadd.f32 %v5562, %v5869
          %v5931 = vadd.f32 %v5563, %v5871
          %v5932 = vadd.f32 %v5564, %v5873
          %v5933 = vadd.f32 %v5565, %v5875
          %v5934 = vadd.f32 %v5566, %v5877
          %v5935 = vadd.f32 %v5567, %v5879
          %v5936 = vadd.f32 %v5568, %v5881
          %v5937 = vadd.f32 %v5569, %v5883
          %v5938 = vadd.f32 %v5570, %v5885
          %v5939 = vadd.f32 %v5571, %v5887
          %v5940 = vadd.f32 %v5572, %v5889
          %v5941 = vadd.f32 %v5573, %v5891
          %v5942 = vadd.f32 %v5574, %v5893
          %v5943 = vadd.f32 %v5575, %v5895
          %5960 = vrot.lane.b32.xlu0 %v5912, 127
          %v5961 = vpop.permute.xlu0 %5960
          %5962 = vrot.lane.b32.xlu0 %v5913, 127
          %v5963 = vpop.permute.xlu0 %5962
          %5964 = vrot.lane.b32.xlu0 %v5914, 127
          %v5965 = vpop.permute.xlu0 %5964
          %5966 = vrot.lane.b32.xlu0 %v5915, 127
          %v5967 = vpop.permute.xlu0 %5966
          %5968 = vrot.lane.b32.xlu0 %v5916, 127
          %v5969 = vpop.permute.xlu0 %5968
          %5970 = vrot.lane.b32.xlu0 %v5917, 127
          %v5971 = vpop.permute.xlu0 %5970
          %5972 = vrot.lane.b32.xlu0 %v5918, 127
          %v5973 = vpop.permute.xlu0 %5972
          %5974 = vrot.lane.b32.xlu0 %v5919, 127
          %v5975 = vpop.permute.xlu0 %5974
          %5976 = vrot.lane.b32.xlu0 %v5920, 127
          %v5977 = vpop.permute.xlu0 %5976
          %5978 = vrot.lane.b32.xlu0 %v5921, 127
          %v5979 = vpop.permute.xlu0 %5978
          %5980 = vrot.lane.b32.xlu0 %v5922, 127
          %v5981 = vpop.permute.xlu0 %5980
          %5982 = vrot.lane.b32.xlu0 %v5923, 127
          %v5983 = vpop.permute.xlu0 %5982
          %5984 = vrot.lane.b32.xlu0 %v5924, 127
          %v5985 = vpop.permute.xlu0 %5984
          %5986 = vrot.lane.b32.xlu0 %v5925, 127
          %v5987 = vpop.permute.xlu0 %5986
          %5988 = vrot.lane.b32.xlu0 %v5926, 127
          %v5989 = vpop.permute.xlu0 %5988
          %5990 = vrot.lane.b32.xlu0 %v5927, 127
          %v5991 = vpop.permute.xlu0 %5990
          %6024 = vrot.lane.b32.xlu0 %v5928, 1
          %v6025 = vpop.permute.xlu0 %6024
          %6026 = vrot.lane.b32.xlu0 %v5929, 1
          %v6027 = vpop.permute.xlu0 %6026
          %6028 = vrot.lane.b32.xlu0 %v5930, 1
          %v6029 = vpop.permute.xlu0 %6028
          %6030 = vrot.lane.b32.xlu0 %v5931, 1
          %v6031 = vpop.permute.xlu0 %6030
          %6032 = vrot.lane.b32.xlu0 %v5932, 1
          %v6033 = vpop.permute.xlu0 %6032
          %6034 = vrot.lane.b32.xlu0 %v5933, 1
          %v6035 = vpop.permute.xlu0 %6034
          %6036 = vrot.lane.b32.xlu0 %v5934, 1
          %v6037 = vpop.permute.xlu0 %6036
          %6038 = vrot.lane.b32.xlu0 %v5935, 1
          %v6039 = vpop.permute.xlu0 %6038
          %6040 = vrot.lane.b32.xlu0 %v5936, 1
          %v6041 = vpop.permute.xlu0 %6040
          %6042 = vrot.lane.b32.xlu0 %v5937, 1
          %v6043 = vpop.permute.xlu0 %6042
          %6044 = vrot.lane.b32.xlu0 %v5938, 1
          %v6045 = vpop.permute.xlu0 %6044
          %6046 = vrot.lane.b32.xlu0 %v5939, 1
          %v6047 = vpop.permute.xlu0 %6046
          %6048 = vrot.lane.b32.xlu0 %v5940, 1
          %v6049 = vpop.permute.xlu0 %6048
          %6050 = vrot.lane.b32.xlu0 %v5941, 1
          %v6051 = vpop.permute.xlu0 %6050
          %6052 = vrot.lane.b32.xlu0 %v5942, 1
          %v6053 = vpop.permute.xlu0 %6052
          %6054 = vrot.lane.b32.xlu0 %v5943, 1
          %v6055 = vpop.permute.xlu0 %6054
          %6088 = vrot.lane.b32.xlu0 %v5816, 3
          %v6089 = vpop.permute.xlu0 %6088
          %6090 = vrot.lane.b32.xlu0 %v5817, 3
          %v6091 = vpop.permute.xlu0 %6090
          %6092 = vrot.lane.b32.xlu0 %v5818, 3
          %v6093 = vpop.permute.xlu0 %6092
          %6094 = vrot.lane.b32.xlu0 %v5819, 3
          %v6095 = vpop.permute.xlu0 %6094
          %6096 = vrot.lane.b32.xlu0 %v5820, 3
          %v6097 = vpop.permute.xlu0 %6096
          %6098 = vrot.lane.b32.xlu0 %v5821, 3
          %v6099 = vpop.permute.xlu0 %6098
          %6100 = vrot.lane.b32.xlu0 %v5822, 3
          %v6101 = vpop.permute.xlu0 %6100
          %6102 = vrot.lane.b32.xlu0 %v5823, 3
          %v6103 = vpop.permute.xlu0 %6102
          %6104 = vrot.lane.b32.xlu0 %v5824, 3
          %v6105 = vpop.permute.xlu0 %6104
          %6106 = vrot.lane.b32.xlu0 %v5825, 3
          %v6107 = vpop.permute.xlu0 %6106
          %6108 = vrot.lane.b32.xlu0 %v5826, 3
          %v6109 = vpop.permute.xlu0 %6108
          %6110 = vrot.lane.b32.xlu0 %v5827, 3
          %v6111 = vpop.permute.xlu0 %6110
          %6112 = vrot.lane.b32.xlu0 %v5828, 3
          %v6113 = vpop.permute.xlu0 %6112
          %6114 = vrot.lane.b32.xlu0 %v5829, 3
          %v6115 = vpop.permute.xlu0 %6114
          %6116 = vrot.lane.b32.xlu0 %v5830, 3
          %v6117 = vpop.permute.xlu0 %6116
          %6118 = vrot.lane.b32.xlu0 %v5831, 3
          %v6119 = vpop.permute.xlu0 %6118
          %6152 = vrot.lane.b32.xlu0 %v5128, 5
          %v6153 = vpop.permute.xlu0 %6152
          %6154 = vrot.lane.b32.xlu0 %v5129, 5
          %v6155 = vpop.permute.xlu0 %6154
          %6156 = vrot.lane.b32.xlu0 %v5130, 5
          %v6157 = vpop.permute.xlu0 %6156
          %6158 = vrot.lane.b32.xlu0 %v5131, 5
          %v6159 = vpop.permute.xlu0 %6158
          %6160 = vrot.lane.b32.xlu0 %v5132, 5
          %v6161 = vpop.permute.xlu0 %6160
          %6162 = vrot.lane.b32.xlu0 %v5133, 5
          %v6163 = vpop.permute.xlu0 %6162
          %6164 = vrot.lane.b32.xlu0 %v5134, 5
          %v6165 = vpop.permute.xlu0 %6164
          %6166 = vrot.lane.b32.xlu0 %v5135, 5
          %v6167 = vpop.permute.xlu0 %6166
          %6168 = vrot.lane.b32.xlu0 %v5136, 5
          %v6169 = vpop.permute.xlu0 %6168
          %6170 = vrot.lane.b32.xlu0 %v5137, 5
          %v6171 = vpop.permute.xlu0 %6170
          %6172 = vrot.lane.b32.xlu0 %v5138, 5
          %v6173 = vpop.permute.xlu0 %6172
          %6174 = vrot.lane.b32.xlu0 %v5139, 5
          %v6175 = vpop.permute.xlu0 %6174
          %6176 = vrot.lane.b32.xlu0 %v5140, 5
          %v6177 = vpop.permute.xlu0 %6176
          %6178 = vrot.lane.b32.xlu0 %v5141, 5
          %v6179 = vpop.permute.xlu0 %6178
          %6180 = vrot.lane.b32.xlu0 %v5142, 5
          %v6181 = vpop.permute.xlu0 %6180
          %6182 = vrot.lane.b32.xlu0 %v5143, 5
          %v6183 = vpop.permute.xlu0 %6182
          %vm6200 = vcmask 15360
          %v6201 = vsel %vm6200, %v5961, %v6025
          %v6202 = vsel %vm6200, %v5963, %v6027
          %v6203 = vsel %vm6200, %v5965, %v6029
          %v6204 = vsel %vm6200, %v5967, %v6031
          %v6205 = vsel %vm6200, %v5969, %v6033
          %v6206 = vsel %vm6200, %v5971, %v6035
          %v6207 = vsel %vm6200, %v5973, %v6037
          %v6208 = vsel %vm6200, %v5975, %v6039
          %v6209 = vsel %vm6200, %v5977, %v6041
          %v6210 = vsel %vm6200, %v5979, %v6043
          %v6211 = vsel %vm6200, %v5981, %v6045
          %v6212 = vsel %vm6200, %v5983, %v6047
          %v6213 = vsel %vm6200, %v5985, %v6049
          %v6214 = vsel %vm6200, %v5987, %v6051
          %v6215 = vsel %vm6200, %v5989, %v6053
          %v6216 = vsel %vm6200, %v5991, %v6055
          %v6217 = vsel %vm4967, %v6201, %v6025
          %v6218 = vsel %vm4967, %v6202, %v6027
          %v6219 = vsel %vm4967, %v6203, %v6029
          %v6220 = vsel %vm4967, %v6204, %v6031
          %v6221 = vsel %vm4967, %v6205, %v6033
          %v6222 = vsel %vm4967, %v6206, %v6035
          %v6223 = vsel %vm4967, %v6207, %v6037
          %v6224 = vsel %vm4967, %v6208, %v6039
          %v6225 = vsel %vm4967, %v6209, %v6041
          %v6226 = vsel %vm4967, %v6210, %v6043
          %v6227 = vsel %vm4967, %v6211, %v6045
          %v6228 = vsel %vm4967, %v6212, %v6047
          %v6229 = vsel %vm4967, %v6213, %v6049
          %v6230 = vsel %vm4967, %v6214, %v6051
          %v6231 = vsel %vm4967, %v6215, %v6053
          %v6232 = vsel %vm4967, %v6216, %v6055
          %vm6233 = vcmask 31744
          %v6234 = vsel %vm6233, %v6217, %v6089
          %v6235 = vsel %vm6233, %v6218, %v6091
          %v6236 = vsel %vm6233, %v6219, %v6093
          %v6237 = vsel %vm6233, %v6220, %v6095
          %v6238 = vsel %vm6233, %v6221, %v6097
          %v6239 = vsel %vm6233, %v6222, %v6099
          %v6240 = vsel %vm6233, %v6223, %v6101
          %v6241 = vsel %vm6233, %v6224, %v6103
          %v6242 = vsel %vm6233, %v6225, %v6105
          %v6243 = vsel %vm6233, %v6226, %v6107
          %v6244 = vsel %vm6233, %v6227, %v6109
          %v6245 = vsel %vm6233, %v6228, %v6111
          %v6246 = vsel %vm6233, %v6229, %v6113
          %v6247 = vsel %vm6233, %v6230, %v6115
          %v6248 = vsel %vm6233, %v6231, %v6117
          %v6249 = vsel %vm6233, %v6232, %v6119
          %vm6250 = vcmask 39936
          %v6251 = vsel %vm6250, %v6234, %v6089
          %v6252 = vsel %vm6250, %v6235, %v6091
          %v6253 = vsel %vm6250, %v6236, %v6093
          %v6254 = vsel %vm6250, %v6237, %v6095
          %v6255 = vsel %vm6250, %v6238, %v6097
          %v6256 = vsel %vm6250, %v6239, %v6099
          %v6257 = vsel %vm6250, %v6240, %v6101
          %v6258 = vsel %vm6250, %v6241, %v6103
          %v6259 = vsel %vm6250, %v6242, %v6105
          %v6260 = vsel %vm6250, %v6243, %v6107
          %v6261 = vsel %vm6250, %v6244, %v6109
          %v6262 = vsel %vm6250, %v6245, %v6111
          %v6263 = vsel %vm6250, %v6246, %v6113
          %v6264 = vsel %vm6250, %v6247, %v6115
          %v6265 = vsel %vm6250, %v6248, %v6117
          %v6266 = vsel %vm6250, %v6249, %v6119
          %vm6267 = vcmask 48128
          %v6268 = vsel %vm6267, %v6251, %v6153
          %v6269 = vsel %vm6267, %v6252, %v6155
          %v6270 = vsel %vm6267, %v6253, %v6157
          %v6271 = vsel %vm6267, %v6254, %v6159
          %v6272 = vsel %vm6267, %v6255, %v6161
          %v6273 = vsel %vm6267, %v6256, %v6163
          %v6274 = vsel %vm6267, %v6257, %v6165
          %v6275 = vsel %vm6267, %v6258, %v6167
          %v6276 = vsel %vm6267, %v6259, %v6169
          %v6277 = vsel %vm6267, %v6260, %v6171
          %v6278 = vsel %vm6267, %v6261, %v6173
          %v6279 = vsel %vm6267, %v6262, %v6175
          %v6280 = vsel %vm6267, %v6263, %v6177
          %v6281 = vsel %vm6267, %v6264, %v6179
          %v6282 = vsel %vm6267, %v6265, %v6181
          %v6283 = vsel %vm6267, %v6266, %v6183
          %vm6284 = vcmask 56320
          %v6285 = vsel %vm6284, %v6268, 1.0
          %v6286 = vsel %vm6284, %v6269, 1.0
          %v6287 = vsel %vm6284, %v6270, 1.0
          %v6288 = vsel %vm6284, %v6271, 1.0
          %v6289 = vsel %vm6284, %v6272, 1.0
          %v6290 = vsel %vm6284, %v6273, 1.0
          %v6291 = vsel %vm6284, %v6274, 1.0
          %v6292 = vsel %vm6284, %v6275, 1.0
          %v6293 = vsel %vm6284, %v6276, 1.0
          %v6294 = vsel %vm6284, %v6277, 1.0
          %v6295 = vsel %vm6284, %v6278, 1.0
          %v6296 = vsel %vm6284, %v6279, 1.0
          %v6297 = vsel %vm6284, %v6280, 1.0
          %v6298 = vsel %vm6284, %v6281, 1.0
          %v6299 = vsel %vm6284, %v6282, 1.0
          %v6300 = vsel %vm6284, %v6283, 1.0
          %6301 = vrot.lane.b32.xlu0 %v5240, 8
          %v6302 = vpop.permute.xlu0 %6301
          %6303 = vrot.lane.b32.xlu0 %v5241, 8
          %v6304 = vpop.permute.xlu0 %6303
          %6305 = vrot.lane.b32.xlu0 %v5242, 8
          %v6306 = vpop.permute.xlu0 %6305
          %6307 = vrot.lane.b32.xlu0 %v5243, 8
          %v6308 = vpop.permute.xlu0 %6307
          %6309 = vrot.lane.b32.xlu0 %v5244, 8
          %v6310 = vpop.permute.xlu0 %6309
          %6311 = vrot.lane.b32.xlu0 %v5245, 8
          %v6312 = vpop.permute.xlu0 %6311
          %6313 = vrot.lane.b32.xlu0 %v5246, 8
          %v6314 = vpop.permute.xlu0 %6313
          %6315 = vrot.lane.b32.xlu0 %v5247, 8
          %v6316 = vpop.permute.xlu0 %6315
          %6317 = vrot.lane.b32.xlu0 %v5248, 8
          %v6318 = vpop.permute.xlu0 %6317
          %6319 = vrot.lane.b32.xlu0 %v5249, 8
          %v6320 = vpop.permute.xlu0 %6319
          %6321 = vrot.lane.b32.xlu0 %v5250, 8
          %v6322 = vpop.permute.xlu0 %6321
          %6323 = vrot.lane.b32.xlu0 %v5251, 8
          %v6324 = vpop.permute.xlu0 %6323
          %6325 = vrot.lane.b32.xlu0 %v5252, 8
          %v6326 = vpop.permute.xlu0 %6325
          %6327 = vrot.lane.b32.xlu0 %v5253, 8
          %v6328 = vpop.permute.xlu0 %6327
          %6329 = vrot.lane.b32.xlu0 %v5254, 8
          %v6330 = vpop.permute.xlu0 %6329
          %6331 = vrot.lane.b32.xlu0 %v5255, 8
          %v6332 = vpop.permute.xlu0 %6331
          %v6349 = vmul.f32 %v5368, %v6302
          %v6350 = vmul.f32 %v5369, %v6304
          %v6351 = vmul.f32 %v5370, %v6306
          %v6352 = vmul.f32 %v5371, %v6308
          %v6353 = vmul.f32 %v5372, %v6310
          %v6354 = vmul.f32 %v5373, %v6312
          %v6355 = vmul.f32 %v5374, %v6314
          %v6356 = vmul.f32 %v5375, %v6316
          %v6357 = vmul.f32 %v5376, %v6318
          %v6358 = vmul.f32 %v5377, %v6320
          %v6359 = vmul.f32 %v5378, %v6322
          %v6360 = vmul.f32 %v5379, %v6324
          %v6361 = vmul.f32 %v5380, %v6326
          %v6362 = vmul.f32 %v5381, %v6328
          %v6363 = vmul.f32 %v5382, %v6330
          %v6364 = vmul.f32 %v5383, %v6332
          %6381 = vrot.lane.b32.xlu0 %v6349, 118
          %v6382 = vpop.permute.xlu0 %6381
          %6383 = vrot.lane.b32.xlu0 %v6350, 118
          %v6384 = vpop.permute.xlu0 %6383
          %6385 = vrot.lane.b32.xlu0 %v6351, 118
          %v6386 = vpop.permute.xlu0 %6385
          %6387 = vrot.lane.b32.xlu0 %v6352, 118
          %v6388 = vpop.permute.xlu0 %6387
          %6389 = vrot.lane.b32.xlu0 %v6353, 118
          %v6390 = vpop.permute.xlu0 %6389
          %6391 = vrot.lane.b32.xlu0 %v6354, 118
          %v6392 = vpop.permute.xlu0 %6391
          %6393 = vrot.lane.b32.xlu0 %v6355, 118
          %v6394 = vpop.permute.xlu0 %6393
          %6395 = vrot.lane.b32.xlu0 %v6356, 118
          %v6396 = vpop.permute.xlu0 %6395
          %6397 = vrot.lane.b32.xlu0 %v6357, 118
          %v6398 = vpop.permute.xlu0 %6397
          %6399 = vrot.lane.b32.xlu0 %v6358, 118
          %v6400 = vpop.permute.xlu0 %6399
          %6401 = vrot.lane.b32.xlu0 %v6359, 118
          %v6402 = vpop.permute.xlu0 %6401
          %6403 = vrot.lane.b32.xlu0 %v6360, 118
          %v6404 = vpop.permute.xlu0 %6403
          %6405 = vrot.lane.b32.xlu0 %v6361, 118
          %v6406 = vpop.permute.xlu0 %6405
          %6407 = vrot.lane.b32.xlu0 %v6362, 118
          %v6408 = vpop.permute.xlu0 %6407
          %6409 = vrot.lane.b32.xlu0 %v6363, 118
          %v6410 = vpop.permute.xlu0 %6409
          %6411 = vrot.lane.b32.xlu0 %v6364, 118
          %v6412 = vpop.permute.xlu0 %6411
          %v6429 = vadd.f32 %v5336, %v6382
          %v6430 = vadd.f32 %v5337, %v6384
          %v6431 = vadd.f32 %v5338, %v6386
          %v6432 = vadd.f32 %v5339, %v6388
          %v6433 = vadd.f32 %v5340, %v6390
          %v6434 = vadd.f32 %v5341, %v6392
          %v6435 = vadd.f32 %v5342, %v6394
          %v6436 = vadd.f32 %v5343, %v6396
          %v6437 = vadd.f32 %v5344, %v6398
          %v6438 = vadd.f32 %v5345, %v6400
          %v6439 = vadd.f32 %v5346, %v6402
          %v6440 = vadd.f32 %v5347, %v6404
          %v6441 = vadd.f32 %v5348, %v6406
          %v6442 = vadd.f32 %v5349, %v6408
          %v6443 = vadd.f32 %v5350, %v6410
          %v6444 = vadd.f32 %v5351, %v6412
          %6445 = vrot.lane.b32.xlu0 %v5577, 118
          %v6446 = vpop.permute.xlu0 %6445
          %6447 = vrot.lane.b32.xlu0 %v5579, 118
          %v6448 = vpop.permute.xlu0 %6447
          %6449 = vrot.lane.b32.xlu0 %v5581, 118
          %v6450 = vpop.permute.xlu0 %6449
          %6451 = vrot.lane.b32.xlu0 %v5583, 118
          %v6452 = vpop.permute.xlu0 %6451
          %6453 = vrot.lane.b32.xlu0 %v5585, 118
          %v6454 = vpop.permute.xlu0 %6453
          %6455 = vrot.lane.b32.xlu0 %v5587, 118
          %v6456 = vpop.permute.xlu0 %6455
          %6457 = vrot.lane.b32.xlu0 %v5589, 118
          %v6458 = vpop.permute.xlu0 %6457
          %6459 = vrot.lane.b32.xlu0 %v5591, 118
          %v6460 = vpop.permute.xlu0 %6459
          %6461 = vrot.lane.b32.xlu0 %v5593, 118
          %v6462 = vpop.permute.xlu0 %6461
          %6463 = vrot.lane.b32.xlu0 %v5595, 118
          %v6464 = vpop.permute.xlu0 %6463
          %6465 = vrot.lane.b32.xlu0 %v5597, 118
          %v6466 = vpop.permute.xlu0 %6465
          %6467 = vrot.lane.b32.xlu0 %v5599, 118
          %v6468 = vpop.permute.xlu0 %6467
          %6469 = vrot.lane.b32.xlu0 %v5601, 118
          %v6470 = vpop.permute.xlu0 %6469
          %6471 = vrot.lane.b32.xlu0 %v5603, 118
          %v6472 = vpop.permute.xlu0 %6471
          %6473 = vrot.lane.b32.xlu0 %v5605, 118
          %v6474 = vpop.permute.xlu0 %6473
          %6475 = vrot.lane.b32.xlu0 %v5607, 118
          %v6476 = vpop.permute.xlu0 %6475
          %v6493 = vmul.f32 %v5240, %v6446
          %v6494 = vmul.f32 %v5241, %v6448
          %v6495 = vmul.f32 %v5242, %v6450
          %v6496 = vmul.f32 %v5243, %v6452
          %v6497 = vmul.f32 %v5244, %v6454
          %v6498 = vmul.f32 %v5245, %v6456
          %v6499 = vmul.f32 %v5246, %v6458
          %v6500 = vmul.f32 %v5247, %v6460
          %v6501 = vmul.f32 %v5248, %v6462
          %v6502 = vmul.f32 %v5249, %v6464
          %v6503 = vmul.f32 %v5250, %v6466
          %v6504 = vmul.f32 %v5251, %v6468
          %v6505 = vmul.f32 %v5252, %v6470
          %v6506 = vmul.f32 %v5253, %v6472
          %v6507 = vmul.f32 %v5254, %v6474
          %v6508 = vmul.f32 %v5255, %v6476
          %6509 = vrot.lane.b32.xlu0 %v5240, 16
          %v6510 = vpop.permute.xlu0 %6509
          %6511 = vrot.lane.b32.xlu0 %v5241, 16
          %v6512 = vpop.permute.xlu0 %6511
          %6513 = vrot.lane.b32.xlu0 %v5242, 16
          %v6514 = vpop.permute.xlu0 %6513
          %6515 = vrot.lane.b32.xlu0 %v5243, 16
          %v6516 = vpop.permute.xlu0 %6515
          %6517 = vrot.lane.b32.xlu0 %v5244, 16
          %v6518 = vpop.permute.xlu0 %6517
          %6519 = vrot.lane.b32.xlu0 %v5245, 16
          %v6520 = vpop.permute.xlu0 %6519
          %6521 = vrot.lane.b32.xlu0 %v5246, 16
          %v6522 = vpop.permute.xlu0 %6521
          %6523 = vrot.lane.b32.xlu0 %v5247, 16
          %v6524 = vpop.permute.xlu0 %6523
          %6525 = vrot.lane.b32.xlu0 %v5248, 16
          %v6526 = vpop.permute.xlu0 %6525
          %6527 = vrot.lane.b32.xlu0 %v5249, 16
          %v6528 = vpop.permute.xlu0 %6527
          %6529 = vrot.lane.b32.xlu0 %v5250, 16
          %v6530 = vpop.permute.xlu0 %6529
          %6531 = vrot.lane.b32.xlu0 %v5251, 16
          %v6532 = vpop.permute.xlu0 %6531
          %6533 = vrot.lane.b32.xlu0 %v5252, 16
          %v6534 = vpop.permute.xlu0 %6533
          %6535 = vrot.lane.b32.xlu0 %v5253, 16
          %v6536 = vpop.permute.xlu0 %6535
          %6537 = vrot.lane.b32.xlu0 %v5254, 16
          %v6538 = vpop.permute.xlu0 %6537
          %6539 = vrot.lane.b32.xlu0 %v5255, 16
          %v6540 = vpop.permute.xlu0 %6539
          %v6557 = vmul.f32 %v5368, %v6510
          %v6558 = vmul.f32 %v5369, %v6512
          %v6559 = vmul.f32 %v5370, %v6514
          %v6560 = vmul.f32 %v5371, %v6516
          %v6561 = vmul.f32 %v5372, %v6518
          %v6562 = vmul.f32 %v5373, %v6520
          %v6563 = vmul.f32 %v5374, %v6522
          %v6564 = vmul.f32 %v5375, %v6524
          %v6565 = vmul.f32 %v5376, %v6526
          %v6566 = vmul.f32 %v5377, %v6528
          %v6567 = vmul.f32 %v5378, %v6530
          %v6568 = vmul.f32 %v5379, %v6532
          %v6569 = vmul.f32 %v5380, %v6534
          %v6570 = vmul.f32 %v5381, %v6536
          %v6571 = vmul.f32 %v5382, %v6538
          %v6572 = vmul.f32 %v5383, %v6540
          %6589 = vrot.lane.b32.xlu0 %v6557, 110
          %v6590 = vpop.permute.xlu0 %6589
          %6591 = vrot.lane.b32.xlu0 %v6558, 110
          %v6592 = vpop.permute.xlu0 %6591
          %6593 = vrot.lane.b32.xlu0 %v6559, 110
          %v6594 = vpop.permute.xlu0 %6593
          %6595 = vrot.lane.b32.xlu0 %v6560, 110
          %v6596 = vpop.permute.xlu0 %6595
          %6597 = vrot.lane.b32.xlu0 %v6561, 110
          %v6598 = vpop.permute.xlu0 %6597
          %6599 = vrot.lane.b32.xlu0 %v6562, 110
          %v6600 = vpop.permute.xlu0 %6599
          %6601 = vrot.lane.b32.xlu0 %v6563, 110
          %v6602 = vpop.permute.xlu0 %6601
          %6603 = vrot.lane.b32.xlu0 %v6564, 110
          %v6604 = vpop.permute.xlu0 %6603
          %6605 = vrot.lane.b32.xlu0 %v6565, 110
          %v6606 = vpop.permute.xlu0 %6605
          %6607 = vrot.lane.b32.xlu0 %v6566, 110
          %v6608 = vpop.permute.xlu0 %6607
          %6609 = vrot.lane.b32.xlu0 %v6567, 110
          %v6610 = vpop.permute.xlu0 %6609
          %6611 = vrot.lane.b32.xlu0 %v6568, 110
          %v6612 = vpop.permute.xlu0 %6611
          %6613 = vrot.lane.b32.xlu0 %v6569, 110
          %v6614 = vpop.permute.xlu0 %6613
          %6615 = vrot.lane.b32.xlu0 %v6570, 110
          %v6616 = vpop.permute.xlu0 %6615
          %6617 = vrot.lane.b32.xlu0 %v6571, 110
          %v6618 = vpop.permute.xlu0 %6617
          %6619 = vrot.lane.b32.xlu0 %v6572, 110
          %v6620 = vpop.permute.xlu0 %6619
          %v6637 = vadd.f32 %v5336, %v6590
          %v6638 = vadd.f32 %v5337, %v6592
          %v6639 = vadd.f32 %v5338, %v6594
          %v6640 = vadd.f32 %v5339, %v6596
          %v6641 = vadd.f32 %v5340, %v6598
          %v6642 = vadd.f32 %v5341, %v6600
          %v6643 = vadd.f32 %v5342, %v6602
          %v6644 = vadd.f32 %v5343, %v6604
          %v6645 = vadd.f32 %v5344, %v6606
          %v6646 = vadd.f32 %v5345, %v6608
          %v6647 = vadd.f32 %v5346, %v6610
          %v6648 = vadd.f32 %v5347, %v6612
          %v6649 = vadd.f32 %v5348, %v6614
          %v6650 = vadd.f32 %v5349, %v6616
          %v6651 = vadd.f32 %v5350, %v6618
          %v6652 = vadd.f32 %v5351, %v6620
          %v6653 = vmul.f32 %v6493, 0.5
          %v6654 = vmul.f32 %v6494, 0.5
          %v6655 = vmul.f32 %v6495, 0.5
          %v6656 = vmul.f32 %v6496, 0.5
          %v6657 = vmul.f32 %v6497, 0.5
          %v6658 = vmul.f32 %v6498, 0.5
          %v6659 = vmul.f32 %v6499, 0.5
          %v6660 = vmul.f32 %v6500, 0.5
          %v6661 = vmul.f32 %v6501, 0.5
          %v6662 = vmul.f32 %v6502, 0.5
          %v6663 = vmul.f32 %v6503, 0.5
          %v6664 = vmul.f32 %v6504, 0.5
          %v6665 = vmul.f32 %v6505, 0.5
          %v6666 = vmul.f32 %v6506, 0.5
          %v6667 = vmul.f32 %v6507, 0.5
          %v6668 = vmul.f32 %v6508, 0.5
          %6685 = vrot.lane.b32.xlu0 %v6653, 126
          %v6686 = vpop.permute.xlu0 %6685
          %6687 = vrot.lane.b32.xlu0 %v6654, 126
          %v6688 = vpop.permute.xlu0 %6687
          %6689 = vrot.lane.b32.xlu0 %v6655, 126
          %v6690 = vpop.permute.xlu0 %6689
          %6691 = vrot.lane.b32.xlu0 %v6656, 126
          %v6692 = vpop.permute.xlu0 %6691
          %6693 = vrot.lane.b32.xlu0 %v6657, 126
          %v6694 = vpop.permute.xlu0 %6693
          %6695 = vrot.lane.b32.xlu0 %v6658, 126
          %v6696 = vpop.permute.xlu0 %6695
          %6697 = vrot.lane.b32.xlu0 %v6659, 126
          %v6698 = vpop.permute.xlu0 %6697
          %6699 = vrot.lane.b32.xlu0 %v6660, 126
          %v6700 = vpop.permute.xlu0 %6699
          %6701 = vrot.lane.b32.xlu0 %v6661, 126
          %v6702 = vpop.permute.xlu0 %6701
          %6703 = vrot.lane.b32.xlu0 %v6662, 126
          %v6704 = vpop.permute.xlu0 %6703
          %6705 = vrot.lane.b32.xlu0 %v6663, 126
          %v6706 = vpop.permute.xlu0 %6705
          %6707 = vrot.lane.b32.xlu0 %v6664, 126
          %v6708 = vpop.permute.xlu0 %6707
          %6709 = vrot.lane.b32.xlu0 %v6665, 126
          %v6710 = vpop.permute.xlu0 %6709
          %6711 = vrot.lane.b32.xlu0 %v6666, 126
          %v6712 = vpop.permute.xlu0 %6711
          %6713 = vrot.lane.b32.xlu0 %v6667, 126
          %v6714 = vpop.permute.xlu0 %6713
          %6715 = vrot.lane.b32.xlu0 %v6668, 126
          %v6716 = vpop.permute.xlu0 %6715
          %v6733 = vsub.f32 %v6429, %v6686
          %v6734 = vsub.f32 %v6430, %v6688
          %v6735 = vsub.f32 %v6431, %v6690
          %v6736 = vsub.f32 %v6432, %v6692
          %v6737 = vsub.f32 %v6433, %v6694
          %v6738 = vsub.f32 %v6434, %v6696
          %v6739 = vsub.f32 %v6435, %v6698
          %v6740 = vsub.f32 %v6436, %v6700
          %v6741 = vsub.f32 %v6437, %v6702
          %v6742 = vsub.f32 %v6438, %v6704
          %v6743 = vsub.f32 %v6439, %v6706
          %v6744 = vsub.f32 %v6440, %v6708
          %v6745 = vsub.f32 %v6441, %v6710
          %v6746 = vsub.f32 %v6442, %v6712
          %v6747 = vsub.f32 %v6443, %v6714
          %v6748 = vsub.f32 %v6444, %v6716
          %v6749 = vadd.f32 %v6429, %v6686
          %v6750 = vadd.f32 %v6430, %v6688
          %v6751 = vadd.f32 %v6431, %v6690
          %v6752 = vadd.f32 %v6432, %v6692
          %v6753 = vadd.f32 %v6433, %v6694
          %v6754 = vadd.f32 %v6434, %v6696
          %v6755 = vadd.f32 %v6435, %v6698
          %v6756 = vadd.f32 %v6436, %v6700
          %v6757 = vadd.f32 %v6437, %v6702
          %v6758 = vadd.f32 %v6438, %v6704
          %v6759 = vadd.f32 %v6439, %v6706
          %v6760 = vadd.f32 %v6440, %v6708
          %v6761 = vadd.f32 %v6441, %v6710
          %v6762 = vadd.f32 %v6442, %v6712
          %v6763 = vadd.f32 %v6443, %v6714
          %v6764 = vadd.f32 %v6444, %v6716
          %6781 = vrot.lane.b32.xlu0 %v6733, 127
          %v6782 = vpop.permute.xlu0 %6781
          %6783 = vrot.lane.b32.xlu0 %v6734, 127
          %v6784 = vpop.permute.xlu0 %6783
          %6785 = vrot.lane.b32.xlu0 %v6735, 127
          %v6786 = vpop.permute.xlu0 %6785
          %6787 = vrot.lane.b32.xlu0 %v6736, 127
          %v6788 = vpop.permute.xlu0 %6787
          %6789 = vrot.lane.b32.xlu0 %v6737, 127
          %v6790 = vpop.permute.xlu0 %6789
          %6791 = vrot.lane.b32.xlu0 %v6738, 127
          %v6792 = vpop.permute.xlu0 %6791
          %6793 = vrot.lane.b32.xlu0 %v6739, 127
          %v6794 = vpop.permute.xlu0 %6793
          %6795 = vrot.lane.b32.xlu0 %v6740, 127
          %v6796 = vpop.permute.xlu0 %6795
          %6797 = vrot.lane.b32.xlu0 %v6741, 127
          %v6798 = vpop.permute.xlu0 %6797
          %6799 = vrot.lane.b32.xlu0 %v6742, 127
          %v6800 = vpop.permute.xlu0 %6799
          %6801 = vrot.lane.b32.xlu0 %v6743, 127
          %v6802 = vpop.permute.xlu0 %6801
          %6803 = vrot.lane.b32.xlu0 %v6744, 127
          %v6804 = vpop.permute.xlu0 %6803
          %6805 = vrot.lane.b32.xlu0 %v6745, 127
          %v6806 = vpop.permute.xlu0 %6805
          %6807 = vrot.lane.b32.xlu0 %v6746, 127
          %v6808 = vpop.permute.xlu0 %6807
          %6809 = vrot.lane.b32.xlu0 %v6747, 127
          %v6810 = vpop.permute.xlu0 %6809
          %6811 = vrot.lane.b32.xlu0 %v6748, 127
          %v6812 = vpop.permute.xlu0 %6811
          %6845 = vrot.lane.b32.xlu0 %v6749, 1
          %v6846 = vpop.permute.xlu0 %6845
          %6847 = vrot.lane.b32.xlu0 %v6750, 1
          %v6848 = vpop.permute.xlu0 %6847
          %6849 = vrot.lane.b32.xlu0 %v6751, 1
          %v6850 = vpop.permute.xlu0 %6849
          %6851 = vrot.lane.b32.xlu0 %v6752, 1
          %v6852 = vpop.permute.xlu0 %6851
          %6853 = vrot.lane.b32.xlu0 %v6753, 1
          %v6854 = vpop.permute.xlu0 %6853
          %6855 = vrot.lane.b32.xlu0 %v6754, 1
          %v6856 = vpop.permute.xlu0 %6855
          %6857 = vrot.lane.b32.xlu0 %v6755, 1
          %v6858 = vpop.permute.xlu0 %6857
          %6859 = vrot.lane.b32.xlu0 %v6756, 1
          %v6860 = vpop.permute.xlu0 %6859
          %6861 = vrot.lane.b32.xlu0 %v6757, 1
          %v6862 = vpop.permute.xlu0 %6861
          %6863 = vrot.lane.b32.xlu0 %v6758, 1
          %v6864 = vpop.permute.xlu0 %6863
          %6865 = vrot.lane.b32.xlu0 %v6759, 1
          %v6866 = vpop.permute.xlu0 %6865
          %6867 = vrot.lane.b32.xlu0 %v6760, 1
          %v6868 = vpop.permute.xlu0 %6867
          %6869 = vrot.lane.b32.xlu0 %v6761, 1
          %v6870 = vpop.permute.xlu0 %6869
          %6871 = vrot.lane.b32.xlu0 %v6762, 1
          %v6872 = vpop.permute.xlu0 %6871
          %6873 = vrot.lane.b32.xlu0 %v6763, 1
          %v6874 = vpop.permute.xlu0 %6873
          %6875 = vrot.lane.b32.xlu0 %v6764, 1
          %v6876 = vpop.permute.xlu0 %6875
          %6909 = vrot.lane.b32.xlu0 %v6637, 3
          %v6910 = vpop.permute.xlu0 %6909
          %6911 = vrot.lane.b32.xlu0 %v6638, 3
          %v6912 = vpop.permute.xlu0 %6911
          %6913 = vrot.lane.b32.xlu0 %v6639, 3
          %v6914 = vpop.permute.xlu0 %6913
          %6915 = vrot.lane.b32.xlu0 %v6640, 3
          %v6916 = vpop.permute.xlu0 %6915
          %6917 = vrot.lane.b32.xlu0 %v6641, 3
          %v6918 = vpop.permute.xlu0 %6917
          %6919 = vrot.lane.b32.xlu0 %v6642, 3
          %v6920 = vpop.permute.xlu0 %6919
          %6921 = vrot.lane.b32.xlu0 %v6643, 3
          %v6922 = vpop.permute.xlu0 %6921
          %6923 = vrot.lane.b32.xlu0 %v6644, 3
          %v6924 = vpop.permute.xlu0 %6923
          %6925 = vrot.lane.b32.xlu0 %v6645, 3
          %v6926 = vpop.permute.xlu0 %6925
          %6927 = vrot.lane.b32.xlu0 %v6646, 3
          %v6928 = vpop.permute.xlu0 %6927
          %6929 = vrot.lane.b32.xlu0 %v6647, 3
          %v6930 = vpop.permute.xlu0 %6929
          %6931 = vrot.lane.b32.xlu0 %v6648, 3
          %v6932 = vpop.permute.xlu0 %6931
          %6933 = vrot.lane.b32.xlu0 %v6649, 3
          %v6934 = vpop.permute.xlu0 %6933
          %6935 = vrot.lane.b32.xlu0 %v6650, 3
          %v6936 = vpop.permute.xlu0 %6935
          %6937 = vrot.lane.b32.xlu0 %v6651, 3
          %v6938 = vpop.permute.xlu0 %6937
          %6939 = vrot.lane.b32.xlu0 %v6652, 3
          %v6940 = vpop.permute.xlu0 %6939
          %6957 = vrot.lane.b32.xlu0 %v5128, 4
          %v6958 = vpop.permute.xlu0 %6957
          %6959 = vrot.lane.b32.xlu0 %v5129, 4
          %v6960 = vpop.permute.xlu0 %6959
          %6961 = vrot.lane.b32.xlu0 %v5130, 4
          %v6962 = vpop.permute.xlu0 %6961
          %6963 = vrot.lane.b32.xlu0 %v5131, 4
          %v6964 = vpop.permute.xlu0 %6963
          %6965 = vrot.lane.b32.xlu0 %v5132, 4
          %v6966 = vpop.permute.xlu0 %6965
          %6967 = vrot.lane.b32.xlu0 %v5133, 4
          %v6968 = vpop.permute.xlu0 %6967
          %6969 = vrot.lane.b32.xlu0 %v5134, 4
          %v6970 = vpop.permute.xlu0 %6969
          %6971 = vrot.lane.b32.xlu0 %v5135, 4
          %v6972 = vpop.permute.xlu0 %6971
          %6973 = vrot.lane.b32.xlu0 %v5136, 4
          %v6974 = vpop.permute.xlu0 %6973
          %6975 = vrot.lane.b32.xlu0 %v5137, 4
          %v6976 = vpop.permute.xlu0 %6975
          %6977 = vrot.lane.b32.xlu0 %v5138, 4
          %v6978 = vpop.permute.xlu0 %6977
          %6979 = vrot.lane.b32.xlu0 %v5139, 4
          %v6980 = vpop.permute.xlu0 %6979
          %6981 = vrot.lane.b32.xlu0 %v5140, 4
          %v6982 = vpop.permute.xlu0 %6981
          %6983 = vrot.lane.b32.xlu0 %v5141, 4
          %v6984 = vpop.permute.xlu0 %6983
          %6985 = vrot.lane.b32.xlu0 %v5142, 4
          %v6986 = vpop.permute.xlu0 %6985
          %6987 = vrot.lane.b32.xlu0 %v5143, 4
          %v6988 = vpop.permute.xlu0 %6987
          %v7005 = vsel %vm6200, %v6782, %v6846
          %v7006 = vsel %vm6200, %v6784, %v6848
          %v7007 = vsel %vm6200, %v6786, %v6850
          %v7008 = vsel %vm6200, %v6788, %v6852
          %v7009 = vsel %vm6200, %v6790, %v6854
          %v7010 = vsel %vm6200, %v6792, %v6856
          %v7011 = vsel %vm6200, %v6794, %v6858
          %v7012 = vsel %vm6200, %v6796, %v6860
          %v7013 = vsel %vm6200, %v6798, %v6862
          %v7014 = vsel %vm6200, %v6800, %v6864
          %v7015 = vsel %vm6200, %v6802, %v6866
          %v7016 = vsel %vm6200, %v6804, %v6868
          %v7017 = vsel %vm6200, %v6806, %v6870
          %v7018 = vsel %vm6200, %v6808, %v6872
          %v7019 = vsel %vm6200, %v6810, %v6874
          %v7020 = vsel %vm6200, %v6812, %v6876
          %v7021 = vsel %vm4967, %v7005, %v6846
          %v7022 = vsel %vm4967, %v7006, %v6848
          %v7023 = vsel %vm4967, %v7007, %v6850
          %v7024 = vsel %vm4967, %v7008, %v6852
          %v7025 = vsel %vm4967, %v7009, %v6854
          %v7026 = vsel %vm4967, %v7010, %v6856
          %v7027 = vsel %vm4967, %v7011, %v6858
          %v7028 = vsel %vm4967, %v7012, %v6860
          %v7029 = vsel %vm4967, %v7013, %v6862
          %v7030 = vsel %vm4967, %v7014, %v6864
          %v7031 = vsel %vm4967, %v7015, %v6866
          %v7032 = vsel %vm4967, %v7016, %v6868
          %v7033 = vsel %vm4967, %v7017, %v6870
          %v7034 = vsel %vm4967, %v7018, %v6872
          %v7035 = vsel %vm4967, %v7019, %v6874
          %v7036 = vsel %vm4967, %v7020, %v6876
          %v7037 = vsel %vm6233, %v7021, %v6910
          %v7038 = vsel %vm6233, %v7022, %v6912
          %v7039 = vsel %vm6233, %v7023, %v6914
          %v7040 = vsel %vm6233, %v7024, %v6916
          %v7041 = vsel %vm6233, %v7025, %v6918
          %v7042 = vsel %vm6233, %v7026, %v6920
          %v7043 = vsel %vm6233, %v7027, %v6922
          %v7044 = vsel %vm6233, %v7028, %v6924
          %v7045 = vsel %vm6233, %v7029, %v6926
          %v7046 = vsel %vm6233, %v7030, %v6928
          %v7047 = vsel %vm6233, %v7031, %v6930
          %v7048 = vsel %vm6233, %v7032, %v6932
          %v7049 = vsel %vm6233, %v7033, %v6934
          %v7050 = vsel %vm6233, %v7034, %v6936
          %v7051 = vsel %vm6233, %v7035, %v6938
          %v7052 = vsel %vm6233, %v7036, %v6940
          %v7053 = vsel %vm6250, %v7037, %v6910
          %v7054 = vsel %vm6250, %v7038, %v6912
          %v7055 = vsel %vm6250, %v7039, %v6914
          %v7056 = vsel %vm6250, %v7040, %v6916
          %v7057 = vsel %vm6250, %v7041, %v6918
          %v7058 = vsel %vm6250, %v7042, %v6920
          %v7059 = vsel %vm6250, %v7043, %v6922
          %v7060 = vsel %vm6250, %v7044, %v6924
          %v7061 = vsel %vm6250, %v7045, %v6926
          %v7062 = vsel %vm6250, %v7046, %v6928
          %v7063 = vsel %vm6250, %v7047, %v6930
          %v7064 = vsel %vm6250, %v7048, %v6932
          %v7065 = vsel %vm6250, %v7049, %v6934
          %v7066 = vsel %vm6250, %v7050, %v6936
          %v7067 = vsel %vm6250, %v7051, %v6938
          %v7068 = vsel %vm6250, %v7052, %v6940
          %v7069 = vsel %vm6267, %v7053, %v6958
          %v7070 = vsel %vm6267, %v7054, %v6960
          %v7071 = vsel %vm6267, %v7055, %v6962
          %v7072 = vsel %vm6267, %v7056, %v6964
          %v7073 = vsel %vm6267, %v7057, %v6966
          %v7074 = vsel %vm6267, %v7058, %v6968
          %v7075 = vsel %vm6267, %v7059, %v6970
          %v7076 = vsel %vm6267, %v7060, %v6972
          %v7077 = vsel %vm6267, %v7061, %v6974
          %v7078 = vsel %vm6267, %v7062, %v6976
          %v7079 = vsel %vm6267, %v7063, %v6978
          %v7080 = vsel %vm6267, %v7064, %v6980
          %v7081 = vsel %vm6267, %v7065, %v6982
          %v7082 = vsel %vm6267, %v7066, %v6984
          %v7083 = vsel %vm6267, %v7067, %v6986
          %v7084 = vsel %vm6267, %v7068, %v6988
          %v7085 = vsel %vm6284, %v7069, 2.0
          %v7086 = vsel %vm6284, %v7070, 2.0
          %v7087 = vsel %vm6284, %v7071, 2.0
          %v7088 = vsel %vm6284, %v7072, 2.0
          %v7089 = vsel %vm6284, %v7073, 2.0
          %v7090 = vsel %vm6284, %v7074, 2.0
          %v7091 = vsel %vm6284, %v7075, 2.0
          %v7092 = vsel %vm6284, %v7076, 2.0
          %v7093 = vsel %vm6284, %v7077, 2.0
          %v7094 = vsel %vm6284, %v7078, 2.0
          %v7095 = vsel %vm6284, %v7079, 2.0
          %v7096 = vsel %vm6284, %v7080, 2.0
          %v7097 = vsel %vm6284, %v7081, 2.0
          %v7098 = vsel %vm6284, %v7082, 2.0
          %v7099 = vsel %vm6284, %v7083, 2.0
          %v7100 = vsel %vm6284, %v7084, 2.0
          %7117 = vrot.lane.b32.xlu0 %v7085, 8
          %v7118 = vpop.permute.xlu0 %7117
          %7119 = vrot.lane.b32.xlu0 %v7086, 8
          %v7120 = vpop.permute.xlu0 %7119
          %7121 = vrot.lane.b32.xlu0 %v7087, 8
          %v7122 = vpop.permute.xlu0 %7121
          %7123 = vrot.lane.b32.xlu0 %v7088, 8
          %v7124 = vpop.permute.xlu0 %7123
          %7125 = vrot.lane.b32.xlu0 %v7089, 8
          %v7126 = vpop.permute.xlu0 %7125
          %7127 = vrot.lane.b32.xlu0 %v7090, 8
          %v7128 = vpop.permute.xlu0 %7127
          %7129 = vrot.lane.b32.xlu0 %v7091, 8
          %v7130 = vpop.permute.xlu0 %7129
          %7131 = vrot.lane.b32.xlu0 %v7092, 8
          %v7132 = vpop.permute.xlu0 %7131
          %7133 = vrot.lane.b32.xlu0 %v7093, 8
          %v7134 = vpop.permute.xlu0 %7133
          %7135 = vrot.lane.b32.xlu0 %v7094, 8
          %v7136 = vpop.permute.xlu0 %7135
          %7137 = vrot.lane.b32.xlu0 %v7095, 8
          %v7138 = vpop.permute.xlu0 %7137
          %7139 = vrot.lane.b32.xlu0 %v7096, 8
          %v7140 = vpop.permute.xlu0 %7139
          %7141 = vrot.lane.b32.xlu0 %v7097, 8
          %v7142 = vpop.permute.xlu0 %7141
          %7143 = vrot.lane.b32.xlu0 %v7098, 8
          %v7144 = vpop.permute.xlu0 %7143
          %7145 = vrot.lane.b32.xlu0 %v7099, 8
          %v7146 = vpop.permute.xlu0 %7145
          %7147 = vrot.lane.b32.xlu0 %v7100, 8
          %v7148 = vpop.permute.xlu0 %7147
          %7181 = vrot.lane.b32.xlu0 %v4905, 16
          %v7182 = vpop.permute.xlu0 %7181
          %7183 = vrot.lane.b32.xlu0 %v4908, 16
          %v7184 = vpop.permute.xlu0 %7183
          %7185 = vrot.lane.b32.xlu0 %v4913, 16
          %v7186 = vpop.permute.xlu0 %7185
          %7187 = vrot.lane.b32.xlu0 %v4916, 16
          %v7188 = vpop.permute.xlu0 %7187
          %7189 = vrot.lane.b32.xlu0 %v4921, 16
          %v7190 = vpop.permute.xlu0 %7189
          %7191 = vrot.lane.b32.xlu0 %v4924, 16
          %v7192 = vpop.permute.xlu0 %7191
          %7193 = vrot.lane.b32.xlu0 %v4929, 16
          %v7194 = vpop.permute.xlu0 %7193
          %7195 = vrot.lane.b32.xlu0 %v4932, 16
          %v7196 = vpop.permute.xlu0 %7195
          %7197 = vrot.lane.b32.xlu0 %v4937, 16
          %v7198 = vpop.permute.xlu0 %7197
          %7199 = vrot.lane.b32.xlu0 %v4940, 16
          %v7200 = vpop.permute.xlu0 %7199
          %7201 = vrot.lane.b32.xlu0 %v4945, 16
          %v7202 = vpop.permute.xlu0 %7201
          %7203 = vrot.lane.b32.xlu0 %v4948, 16
          %v7204 = vpop.permute.xlu0 %7203
          %7205 = vrot.lane.b32.xlu0 %v4953, 16
          %v7206 = vpop.permute.xlu0 %7205
          %7207 = vrot.lane.b32.xlu0 %v4956, 16
          %v7208 = vpop.permute.xlu0 %7207
          %7209 = vrot.lane.b32.xlu0 %v4961, 16
          %v7210 = vpop.permute.xlu0 %7209
          %7211 = vrot.lane.b32.xlu0 %v4964, 16
          %v7212 = vpop.permute.xlu0 %7211
          %vm7229 = vcmask 64512
          %v7230 = vsel %vm7229, %v6285, %v7118
          %v7231 = vsel %vm7229, %v6286, %v7120
          %v7232 = vsel %vm7229, %v6287, %v7122
          %v7233 = vsel %vm7229, %v6288, %v7124
          %v7234 = vsel %vm7229, %v6289, %v7126
          %v7235 = vsel %vm7229, %v6290, %v7128
          %v7236 = vsel %vm7229, %v6291, %v7130
          %v7237 = vsel %vm7229, %v6292, %v7132
          %v7238 = vsel %vm7229, %v6293, %v7134
          %v7239 = vsel %vm7229, %v6294, %v7136
          %v7240 = vsel %vm7229, %v6295, %v7138
          %v7241 = vsel %vm7229, %v6296, %v7140
          %v7242 = vsel %vm7229, %v6297, %v7142
          %v7243 = vsel %vm7229, %v6298, %v7144
          %v7244 = vsel %vm7229, %v6299, %v7146
          %v7245 = vsel %vm7229, %v6300, %v7148
          %vm7246 = vcmask 130048
          %v7247 = vsel %vm7246, %v7230, %v7182
          %v7248 = vsel %vm7246, %v7231, %v7184
          %v7249 = vsel %vm7246, %v7232, %v7186
          %v7250 = vsel %vm7246, %v7233, %v7188
          %v7251 = vsel %vm7246, %v7234, %v7190
          %v7252 = vsel %vm7246, %v7235, %v7192
          %v7253 = vsel %vm7246, %v7236, %v7194
          %v7254 = vsel %vm7246, %v7237, %v7196
          %v7255 = vsel %vm7246, %v7238, %v7198
          %v7256 = vsel %vm7246, %v7239, %v7200
          %v7257 = vsel %vm7246, %v7240, %v7202
          %v7258 = vsel %vm7246, %v7241, %v7204
          %v7259 = vsel %vm7246, %v7242, %v7206
          %v7260 = vsel %vm7246, %v7243, %v7208
          %v7261 = vsel %vm7246, %v7244, %v7210
          %v7262 = vsel %vm7246, %v7245, %v7212
          %vm7263 = vcmask 392192
          %v7264 = vsel %vm7263, %v7247, 0.0
          %v7265 = vsel %vm7263, %v7248, 0.0
          %v7266 = vsel %vm7263, %v7249, 0.0
          %v7267 = vsel %vm7263, %v7250, 0.0
          %v7268 = vsel %vm7263, %v7251, 0.0
          %v7269 = vsel %vm7263, %v7252, 0.0
          %v7270 = vsel %vm7263, %v7253, 0.0
          %v7271 = vsel %vm7263, %v7254, 0.0
          %v7272 = vsel %vm7263, %v7255, 0.0
          %v7273 = vsel %vm7263, %v7256, 0.0
          %v7274 = vsel %vm7263, %v7257, 0.0
          %v7275 = vsel %vm7263, %v7258, 0.0
          %v7276 = vsel %vm7263, %v7259, 0.0
          %v7277 = vsel %vm7263, %v7260, 0.0
          %v7278 = vsel %vm7263, %v7261, 0.0
          %v7279 = vsel %vm7263, %v7262, 0.0
          %7280 = vst [vmem:[%s14] sm:$0xff] %v7264
          %7281 = vst [vmem:[%s14 + $0x8] sm:$0xff] %v7265
          %7282 = vst [vmem:[%s14 + $0x10] sm:$0xff] %v7266
          %7283 = vst [vmem:[%s14 + $0x18] sm:$0xff] %v7267
          %7284 = vst [vmem:[%s14 + $0x20] sm:$0xff] %v7268
          %7285 = vst [vmem:[%s14 + $0x28] sm:$0xff] %v7269
          %7286 = vst [vmem:[%s14 + $0x30] sm:$0xff] %v7270
          %7287 = vst [vmem:[%s14 + $0x38] sm:$0xff] %v7271
          %7288 = vst [vmem:[%s14 + $0x40] sm:$0xff] %v7272
          %7289 = vst [vmem:[%s14 + $0x48] sm:$0xff] %v7273
          %7290 = vst [vmem:[%s14 + $0x50] sm:$0xff] %v7274
          %7291 = vst [vmem:[%s14 + $0x58] sm:$0xff] %v7275
          %7292 = vst [vmem:[%s14 + $0x60] sm:$0xff] %v7276
          %7293 = vst [vmem:[%s14 + $0x68] sm:$0xff] %v7277
          %7294 = vst [vmem:[%s14 + $0x70] sm:$0xff] %v7278
          %7295 = vst [vmem:[%s14 + $0x78] sm:$0xff] %v7279
        $region110: #{network_forward_test.3} parent=97 // pred_fallthru
          _
        // Predicated region
        $region111: #{network_forward_test.3} parent=97 // pred_check
          %p7296 = pneg %p347
        $region112: #{network_forward_test.3} parent=97 // pred_check_branch
          %7298 = sbr.rel (%p7296) target = $region114
        $region113: #{network_forward_test.3} parent=97 // pred_region
          _
        $region114: #{network_forward_test.3} parent=97 // pred_fallthru
          _
        // Predicated region
        $region115: #{network_forward_test.3} parent=97 // pred_check
          %p7299 = pneg %p347
        $region116: #{network_forward_test.3} parent=97 // pred_check_branch
          %7301 = sbr.rel (%p7299) target = $region118
        $region117: #{network_forward_test.3} parent=97 // pred_region
          _
        $region118: #{network_forward_test.3} parent=97 // pred_fallthru
          _
      $region98: #{network_forward_test.3} parent=5 // pred_fallthru
        _
      %p7302 = scmp.le.s32.totalorder 2, %s20
      // Predicated region
      $region119: #{network_forward_test.3} parent=5 // pred_check
        %p7303 = pneg %p7302
      $region120: #{network_forward_test.3} parent=5 // pred_check_branch
        %7305 = sbr.rel (%p7303) target = $region122
      $region121: #{network_forward_test.3} parent=5 // pred_region
        %s7306 = ssub.s32 %s20, 2
      $region122: #{network_forward_test.3} parent=5 // pred_fallthru
        _
    $region6: #{network_forward_test.3} parent=1 // loop_footer
      %s24 = sadd.s32 1, %s20
    $region7: #{network_forward_test.3} parent=1 // loop_footer_branch
      %19 = sbr.rel target = $region3
    $region8: #{network_forward_test.3} parent=1 // loop_exit
      _

</llo_original>
